<compile_context>
chip_gen: v5e
topology: v5e:2x2
jax: 0.10.0
libtpu: 0.0.40
codegen_flags: <defaults>
</compile_context>

<pallas_src>
import jax
import jax.numpy as jnp
import numpy as np
from jax import lax
from jax.experimental import pallas as pl
from jax.experimental.pallas import tpu as pltpu


# ---------------------------------------------------------------------------
# Fused DCN kernel (offset/mask conv + modulated deformable conv).
# ---------------------------------------------------------------------------
def _make_dcn_kernel(*, Hp, Wp, C_in, C_out, kh, kw, TR, Wo):
    K = kh * kw
    TILE_P = TR * Wo
    WpC = Wp * C_in

    def kernel(xrow_ref, x4_ref, bh_ref, bw_ref, col_ref,
               wom_ref, bom_ref, wbig_ref, bias_ref, o_ref):
        # -------- stage 1: offset/mask conv via in-VMEM im2col ---------------
        t = pl.program_id(1)
        row0 = pl.multiple_of(t * TR, TR)      # first padded row of this tile

        band = x4_ref[0, pl.ds(row0, TR + kh - 1), :, :]      # (TR+kh-1, Wp, Cin)
        taps = []
        for ki in range(kh):
            for kj in range(kw):
                tap = band[ki:ki + TR, kj:kj + Wo, :]          # (TR, Wo, Cin)
                # Wo is a multiple of 8 -> this collapse is a free re-tiling.
                taps.append(tap.reshape(TILE_P, C_in))
        patches = jnp.concatenate(taps, axis=1)                # (TILE_P, K*Cin)

        # Tiny coordinate-producing matmul: keep full f32 (errors here get
        # amplified through the bilinear positions); the big matmuls below run
        # at default MXU precision.
        om = jnp.dot(patches, wom_ref[...],
                     preferred_element_type=jnp.float32,
                     precision=jax.lax.Precision.HIGHEST) + bom_ref[...]
        # columns were permuted at trace time: [dy_0..K-1 | dx_0..K-1 | mask]
        dy = om[:, 0:K]
        dx = om[:, K:2 * K]
        mask = jax.nn.sigmoid(om[:, 2 * K:3 * K])              # (TILE_P, K)

        # sampling positions in PADDED coordinates (pad ring is zero, so
        # out-of-image corners contribute 0, matching torchvision semantics).
        sy = bh_ref[...] + dy                                  # (TILE_P, K)
        sx = bw_ref[...] + dx

        # -------- stage 2: separable bilinear gather + modulation + matmul ---
        xrow = xrow_ref[0]                                     # (Hp, Wp*Cin)
        r_lane = lax.broadcasted_iota(jnp.int32, (1, Hp), 1).astype(jnp.float32)
        c_lane = col_ref[...]                                  # (1, Wp*Cin): lane -> padded col

        pieces = []
        for k in range(K):                                     # static unroll over taps
            h = sy[:, k:k + 1]                                 # (TILE_P, 1)
            w = sx[:, k:k + 1]
            mk = mask[:, k:k + 1]
            h0 = jnp.floor(h)
            w0 = jnp.floor(w)
            lh = h - h0
            lw = w - w0
            wa = (1.0 - lh) * mk                               # modulation folded in
            wb = lh * mk
            # row-interpolation matrix (TILE_P, Hp): one-hot rows * weights
            rh = (jnp.where(r_lane == h0, wa, 0.0)
                  + jnp.where(r_lane == h0 + 1.0, wb, 0.0))
            # column-interpolation mask expanded over channels (TILE_P, Wp*Cin)
            cw = (jnp.where(c_lane == w0, 1.0 - lw, 0.0)
                  + jnp.where(c_lane == w0 + 1.0, lw, 0.0))
            rowg = jnp.dot(rh, xrow,
                           preferred_element_type=jnp.float32)  # (TILE_P, Wp*Cin)
            pieces.append(rowg * cw)

        big = jnp.concatenate(pieces, axis=1)                  # (TILE_P, K*Wp*Cin)
        # per-pixel column/channel reduction is folded into the Wp-tiled weight
        out = jnp.dot(big, wbig_ref[...],
                      preferred_element_type=jnp.float32)      # (TILE_P, Cout)
        out = out + bias_ref[...]
        o_ref[0] = out.T                                       # lane-dense (Cout, TILE_P)

    return kernel


def _pick_tile_rows(Ho, Wo):
    """Largest row tile whose pixel count is a multiple of 128 (lane-dense
    stores) and <= 512; prefer >= 2 tiles so the spatial grid axis can shard
    across megacore TensorCores.  Falls back to a single tile."""
    cands = [tr for tr in range(1, Ho + 1)
             if Ho % tr == 0 and (tr * Wo) % 128 == 0 and tr * Wo <= 512]
    if cands:
        multi = [tr for tr in cands if Ho // tr >= 2]
        return max(multi) if multi else max(cands)
    return Ho


# ---------------------------------------------------------------------------
# Forward wrapper: layout plumbing + trace-time weight rearrangement only.
# ---------------------------------------------------------------------------
def dcn_forward(x_nchw, params, *, kernel_size=3, stride=1, padding=1, dilation=1):
    if stride != 1 or dilation != 1:
        # TODO(synk): general stride/dilation needs strided in-kernel im2col
        # slices and a strided base grid; the LORE DCN uses stride=1, dilation=1.
        raise NotImplementedError("Pallas DCN kernel implements stride=1, dilation=1")

    B, C_in, H, W = x_nchw.shape
    kh = kw = int(kernel_size)
    K = kh * kw
    pad = int(padding)
    C_out = params["weight"].shape[0]
    C_om = params["w_om"].shape[0]                      # 3*K (deformable_groups=1)

    Ho = H + 2 * pad - kh + 1
    Wo = W + 2 * pad - kw + 1
    Hp, Wp = H + 2 * pad, W + 2 * pad
    P = Ho * Wo
    WpC = Wp * C_in

    TR = _pick_tile_rows(Ho, Wo)
    TILE_P = TR * Wo
    n_tiles = Ho // TR

    # padded input in the two layouts the kernel consumes (avoids any in-kernel
    # lane<->sublane relayout; x is the small tensor, so the extra DMA is cheap)
    x_nhwc = jnp.transpose(x_nchw, (0, 2, 3, 1)).astype(jnp.float32)
    x_pad = jnp.pad(x_nhwc, ((0, 0), (pad, pad), (pad, pad), (0, 0)))
    x4 = x_pad                                          # (B, Hp, Wp, Cin)  im2col slices
    xrow = x_pad.reshape(B, Hp, WpC)                    # (B, Hp, Wp*Cin)   row-gather matmul

    # static base sampling grid in PADDED coordinates, per output pixel / tap
    bh = (jnp.arange(Ho)[:, None, None, None] * stride
          + jnp.arange(kh)[None, None, :, None] * dilation)
    bh = jnp.broadcast_to(bh, (Ho, Wo, kh, kw)).reshape(P, K).astype(jnp.float32)
    bw = (jnp.arange(Wo)[None, :, None, None] * stride
          + jnp.arange(kw)[None, None, None, :] * dilation)
    bw = jnp.broadcast_to(bw, (Ho, Wo, kh, kw)).reshape(P, K).astype(jnp.float32)

    # lane -> padded-column map used for the column-interpolation mask
    col_of_lane = jnp.repeat(jnp.arange(Wp), C_in).astype(jnp.float32)[None, :]  # (1, WpC)

    # offset/mask conv weights: rows in patch (tap, channel) order, columns
    # permuted so om comes out as [dy_0..K-1 | dx_0..K-1 | mask_0..K-1]
    # (torchvision convention: offset channel 2k = dy_k, 2k+1 = dx_k).
    perm = np.concatenate([np.arange(0, 2 * K, 2),
                           np.arange(1, 2 * K, 2),
                           np.arange(2 * K, 3 * K)])
    w_om_mat = jnp.transpose(params["w_om"], (2, 3, 1, 0)).reshape(K * C_in, C_om)[:, perm]
    b_om_row = params["b_om"][perm][None, :]

    # main conv weight, Wp-tiled so the per-pixel column/channel sum of the
    # separable gather folds into one matmul
    w_t = jnp.transpose(params["weight"], (2, 3, 1, 0)).reshape(K, C_in, C_out)
    w_big = jnp.broadcast_to(w_t[:, None, :, :], (K, Wp, C_in, C_out)).reshape(K * WpC, C_out)
    bias_row = params["bias"][None, :].astype(jnp.float32)

    kernel = _make_dcn_kernel(Hp=Hp, Wp=Wp, C_in=C_in, C_out=C_out,
                              kh=kh, kw=kw, TR=TR, Wo=Wo)

    y_flat = pl.pallas_call(
        kernel,
        out_shape=jax.ShapeDtypeStruct((B, C_out, P), jnp.float32),
        grid=(B, n_tiles),
        in_specs=[
            pl.BlockSpec((1, Hp, WpC), lambda b, t: (b, 0, 0)),           # xrow
            pl.BlockSpec((1, Hp, Wp, C_in), lambda b, t: (b, 0, 0, 0)),   # x4 (im2col)
            pl.BlockSpec((TILE_P, K), lambda b, t: (t, 0)),               # base rows
            pl.BlockSpec((TILE_P, K), lambda b, t: (t, 0)),               # base cols
            pl.BlockSpec((1, WpC), lambda b, t: (0, 0)),                  # lane->col map
            pl.BlockSpec((K * C_in, C_om), lambda b, t: (0, 0)),          # offset-conv W
            pl.BlockSpec((1, C_om), lambda b, t: (0, 0)),                 # offset-conv b
            pl.BlockSpec((K * WpC, C_out), lambda b, t: (0, 0)),          # Wp-tiled main W
            pl.BlockSpec((1, C_out), lambda b, t: (0, 0)),                # main bias
        ],
        out_specs=pl.BlockSpec((1, C_out, TILE_P), lambda b, t: (b, 0, t)),
        compiler_params=pltpu.CompilerParams(
            # both axes independent -> megacore shards over batch AND tiles;
            # blocks are small, so the default scoped-VMEM limit suffices
            # (re-derive TILE_P / set vmem_limit_bytes for large C_in on v7x).
            dimension_semantics=("parallel", "parallel")),
    )(xrow, x4, bh, bw, col_of_lane, w_om_mat, b_om_row, w_big, bias_row)

    return y_flat.reshape(B, C_out, Ho, Wo)             # already NCHW, no transpose


# ---------------------------------------------------------------------------
# Pure-JAX reference (correctness checking only).
# ---------------------------------------------------------------------------
def _dcn_reference(x_nchw, params, *, kernel_size, stride, padding, dilation):
    B, C_in, H, W = x_nchw.shape
    kh = kw = int(kernel_size)
    K = kh * kw
    s, p, d = stride, padding, dilation
    C_out = params["weight"].shape[0]

    x32 = x_nchw.astype(jnp.float32)
    om = lax.conv_general_dilated(
        x32, params["w_om"], window_strides=(s, s), padding=((p, p), (p, p)),
        dimension_numbers=("NCHW", "OIHW", "NCHW"),
        precision=jax.lax.Precision.HIGHEST)
    om = om + params["b_om"][None, :, None, None]
    _, _, Ho, Wo = om.shape
    P = Ho * Wo

    o1, o2, mraw = om[:, :K], om[:, K:2 * K], om[:, 2 * K:]
    offset = jnp.concatenate([o1, o2], axis=1)                       # (B, 2K, Ho, Wo)
    dy = offset[:, 0::2].transpose(0, 2, 3, 1).reshape(B, P, K)
    dx = offset[:, 1::2].transpose(0, 2, 3, 1).reshape(B, P, K)
    mask = jax.nn.sigmoid(mraw).transpose(0, 2, 3, 1).reshape(B, P, K)

    oh = jnp.arange(Ho) * s - p
    ow = jnp.arange(Wo) * s - p
    base_h = jnp.broadcast_to(
        oh[:, None, None, None] + (jnp.arange(kh) * d)[None, None, :, None],
        (Ho, Wo, kh, kw)).reshape(P, K)
    base_w = jnp.broadcast_to(
        ow[None, :, None, None] + (jnp.arange(kw) * d)[None, None, None, :],
        (Ho, Wo, kh, kw)).reshape(P, K)
    sy = base_h[None].astype(jnp.float32) + dy
    sx = base_w[None].astype(jnp.float32) + dx

    x_flat = x32.transpose(0, 2, 3, 1).reshape(B, H * W, C_in)
    h0 = jnp.floor(sy)
    w0 = jnp.floor(sx)
    lh = sy - h0
    lw = sx - w0
    sample = jnp.zeros((B, P, K, C_in), jnp.float32)
    for dh in (0, 1):
        for dw in (0, 1):
            hh = h0 + dh
            ww = w0 + dw
            wt = (lh if dh else 1.0 - lh) * (lw if dw else 1.0 - lw)
            valid = (hh >= 0) & (hh < H) & (ww >= 0) & (ww < W)
            idx = (jnp.clip(hh, 0, H - 1).astype(jnp.int32) * W
                   + jnp.clip(ww, 0, W - 1).astype(jnp.int32))
            vals = jax.vmap(lambda xb, ib: xb[ib])(x_flat, idx)      # (B, P, K, Cin)
            sample = sample + jnp.where(valid, wt, 0.0)[..., None] * vals
    col = sample * mask[..., None]
    w2 = jnp.transpose(params["weight"], (2, 3, 1, 0)).reshape(K, C_in, C_out)
    out = jnp.einsum("bpkc,kco->bpo", col, w2,
                     precision=jax.lax.Precision.HIGHEST) + params["bias"][None, None, :]
    return out.reshape(B, Ho, Wo, C_out).transpose(0, 3, 1, 2)


if __name__ == "__main__":
    B, C_in, H, W = 2, 4, 16, 16
    C_out, ksz, stride, padding, dilation = 8, 3, 1, 1, 1
    K = ksz * ksz
    C_om = 3 * K                        # deformable_groups = 1

    key = jax.random.PRNGKey(0)
    k1, k2, k3, k4, k5 = jax.random.split(key, 5)
    stdv = 1.0 / (C_in * K) ** 0.5
    # NOTE: the PyTorch module zero-inits conv_offset_mask weights/bias (which
    # would make offsets 0 and mask 0.5); small deterministic random values are
    # used instead so the deformable sampling path is actually exercised.
    params = {
        "weight": jax.random.uniform(k1, (C_out, C_in, ksz, ksz),
                                     jnp.float32, -stdv, stdv),
        "bias": jax.random.uniform(k2, (C_out,), jnp.float32, -stdv, stdv),
        "w_om": 0.1 * jax.random.normal(k3, (C_om, C_in, ksz, ksz), jnp.float32),
        "b_om": 0.05 * jax.random.normal(k4, (C_om,), jnp.float32),
    }
    x = jax.random.normal(k5, (B, C_in, H, W), jnp.float32)

    y = dcn_forward(x, params, kernel_size=ksz, stride=stride,
                    padding=padding, dilation=dilation)
    y = jax.block_until_ready(y)
    assert y.shape == (B, C_out, H, W)

    y_ref = _dcn_reference(x, params, kernel_size=ksz, stride=stride,
                           padding=padding, dilation=dilation)
    # The large sampling / output matmuls run at default (bf16-path) MXU
    # precision, so tolerances are set accordingly.
    err = jnp.abs(y - y_ref)
    assert float(jnp.mean(err)) < 1e-2, f"mean abs err {float(jnp.mean(err))}"
    assert bool(jnp.allclose(y, y_ref, atol=5e-2, rtol=5e-2)), (
        f"deformable conv mismatch: max abs err {float(jnp.max(err))}")
    print("KERNEL_OK")
</pallas_src>

<mosaic_0001>
module attributes {stable_mosaic.version = 11 : i64} {
  func.func @kernel(%arg0: i32, %arg1: i32, %arg2: memref<1x18x72xf32, #tpu.memory_space<vmem>>, %arg3: memref<1x18x18x4xf32, #tpu.memory_space<vmem>>, %arg4: memref<128x9xf32, #tpu.memory_space<vmem>>, %arg5: memref<128x9xf32, #tpu.memory_space<vmem>>, %arg6: memref<1x72xf32, #tpu.memory_space<vmem>>, %arg7: memref<36x27xf32, #tpu.memory_space<vmem>>, %arg8: memref<1x27xf32, #tpu.memory_space<vmem>>, %arg9: memref<648x8xf32, #tpu.memory_space<vmem>>, %arg10: memref<1x8xf32, #tpu.memory_space<vmem>>, %arg11: memref<1x8x128xf32, #tpu.memory_space<vmem>>) attributes {dimension_semantics = [#tpu.dimension_semantics<parallel>, #tpu.dimension_semantics<parallel>], iteration_bounds = array<i64: 2, 2>, scalar_prefetch = 0 : i64, scratch_operands = 0 : i64, tpu.core_type = #tpu.core_type<tc>, window_params = [{transform_indices = @transform_0, window_bounds = array<i64: 1, 18, 72>}, {transform_indices = @transform_1, window_bounds = array<i64: 1, 18, 18, 4>}, {transform_indices = @transform_2, window_bounds = array<i64: 128, 9>}, {transform_indices = @transform_3, window_bounds = array<i64: 128, 9>}, {pipeline_mode = #tpu.pipeline_mode<synchronous>, transform_indices = @transform_4, window_bounds = array<i64: 1, 72>}, {pipeline_mode = #tpu.pipeline_mode<synchronous>, transform_indices = @transform_5, window_bounds = array<i64: 36, 27>}, {pipeline_mode = #tpu.pipeline_mode<synchronous>, transform_indices = @transform_6, window_bounds = array<i64: 1, 27>}, {pipeline_mode = #tpu.pipeline_mode<synchronous>, transform_indices = @transform_7, window_bounds = array<i64: 648, 8>}, {pipeline_mode = #tpu.pipeline_mode<synchronous>, transform_indices = @transform_8, window_bounds = array<i64: 1, 8>}, {transform_indices = @transform_9, window_bounds = array<i64: 1, 8, 128>}]} {
    %c8_i32 = arith.constant 8 : i32
    %0 = arith.muli %arg1, %c8_i32 : i32
    %1 = tpu.assume_multiple %0, 8 : i32
    %c0 = arith.constant 0 : index
    %2 = arith.index_cast %1 : i32 to index
    %c0_0 = arith.constant 0 : index
    %c0_1 = arith.constant 0 : index
    %3 = vector.load %arg3[%c0, %2, %c0_0, %c0_1] : memref<1x18x18x4xf32, #tpu.memory_space<vmem>>, vector<1x10x18x4xf32>
    %4 = vector.shape_cast %3 : vector<1x10x18x4xf32> to vector<10x18x4xf32>
    %5 = vector.extract_strided_slice %4 {offsets = [0, 0, 0], sizes = [8, 16, 4], strides = [1, 1, 1]} : vector<10x18x4xf32> to vector<8x16x4xf32>
    %6 = vector.shape_cast %5 : vector<8x16x4xf32> to vector<128x4xf32>
    %7 = vector.extract_strided_slice %4 {offsets = [0, 1, 0], sizes = [8, 16, 4], strides = [1, 1, 1]} : vector<10x18x4xf32> to vector<8x16x4xf32>
    %8 = vector.shape_cast %7 : vector<8x16x4xf32> to vector<128x4xf32>
    %9 = vector.extract_strided_slice %4 {offsets = [0, 2, 0], sizes = [8, 16, 4], strides = [1, 1, 1]} : vector<10x18x4xf32> to vector<8x16x4xf32>
    %10 = vector.shape_cast %9 : vector<8x16x4xf32> to vector<128x4xf32>
    %11 = vector.extract_strided_slice %4 {offsets = [1, 0, 0], sizes = [8, 16, 4], strides = [1, 1, 1]} : vector<10x18x4xf32> to vector<8x16x4xf32>
    %12 = vector.shape_cast %11 : vector<8x16x4xf32> to vector<128x4xf32>
    %13 = vector.extract_strided_slice %4 {offsets = [1, 1, 0], sizes = [8, 16, 4], strides = [1, 1, 1]} : vector<10x18x4xf32> to vector<8x16x4xf32>
    %14 = vector.shape_cast %13 : vector<8x16x4xf32> to vector<128x4xf32>
    %15 = vector.extract_strided_slice %4 {offsets = [1, 2, 0], sizes = [8, 16, 4], strides = [1, 1, 1]} : vector<10x18x4xf32> to vector<8x16x4xf32>
    %16 = vector.shape_cast %15 : vector<8x16x4xf32> to vector<128x4xf32>
    %17 = vector.extract_strided_slice %4 {offsets = [2, 0, 0], sizes = [8, 16, 4], strides = [1, 1, 1]} : vector<10x18x4xf32> to vector<8x16x4xf32>
    %18 = vector.shape_cast %17 : vector<8x16x4xf32> to vector<128x4xf32>
    %19 = vector.extract_strided_slice %4 {offsets = [2, 1, 0], sizes = [8, 16, 4], strides = [1, 1, 1]} : vector<10x18x4xf32> to vector<8x16x4xf32>
    %20 = vector.shape_cast %19 : vector<8x16x4xf32> to vector<128x4xf32>
    %21 = vector.extract_strided_slice %4 {offsets = [2, 2, 0], sizes = [8, 16, 4], strides = [1, 1, 1]} : vector<10x18x4xf32> to vector<8x16x4xf32>
    %22 = vector.shape_cast %21 : vector<8x16x4xf32> to vector<128x4xf32>
    %23 = tpu.concatenate %6, %8, %10, %12, %14, %16, %18, %20, %22 in 1 : vector<128x4xf32>, vector<128x4xf32>, vector<128x4xf32>, vector<128x4xf32>, vector<128x4xf32>, vector<128x4xf32>, vector<128x4xf32>, vector<128x4xf32>, vector<128x4xf32> -> vector<128x36xf32>
    %c0_2 = arith.constant 0 : index
    %c0_3 = arith.constant 0 : index
    %24 = vector.load %arg7[%c0_2, %c0_3] : memref<36x27xf32, #tpu.memory_space<vmem>>, vector<36x27xf32>
    %cst = arith.constant dense<0.000000e+00> : vector<128x27xf32>
    %25 = tpu.matmul %23, %24, %cst {dimension_numbers = #tpu.dot_dimension_numbers<[1], [0], [0], [1], [0, 0, 1, 1], [], []>, precision = #tpu.contract_precision<fp32>} : vector<128x36xf32>, vector<36x27xf32>, vector<128x27xf32> -> vector<128x27xf32>
    %c0_4 = arith.constant 0 : index
    %c0_5 = arith.constant 0 : index
    %26 = vector.load %arg8[%c0_4, %c0_5] : memref<1x27xf32, #tpu.memory_space<vmem>>, vector<1x27xf32>
    %27 = vector.broadcast %26 : vector<1x27xf32> to vector<128x27xf32>
    %28 = arith.addf %25, %27 : vector<128x27xf32>
    %29 = vector.extract_strided_slice %28 {offsets = [0, 0], sizes = [128, 9], strides = [1, 1]} : vector<128x27xf32> to vector<128x9xf32>
    %30 = vector.extract_strided_slice %28 {offsets = [0, 9], sizes = [128, 9], strides = [1, 1]} : vector<128x27xf32> to vector<128x9xf32>
    %31 = vector.extract_strided_slice %28 {offsets = [0, 18], sizes = [128, 9], strides = [1, 1]} : vector<128x27xf32> to vector<128x9xf32>
    %32 = arith.negf %31 : vector<128x9xf32>
    %33 = math.exp %32 : vector<128x9xf32>
    %cst_6 = arith.constant 1.000000e+00 : f32
    %34 = vector.broadcast %cst_6 : f32 to vector<128x9xf32>
    %35 = arith.addf %34, %33 : vector<128x9xf32>
    %36 = arith.divf %34, %35 : vector<128x9xf32>
    %c0_7 = arith.constant 0 : index
    %c0_8 = arith.constant 0 : index
    %37 = vector.load %arg4[%c0_7, %c0_8] : memref<128x9xf32, #tpu.memory_space<vmem>>, vector<128x9xf32>
    %38 = arith.addf %37, %29 : vector<128x9xf32>
    %c0_9 = arith.constant 0 : index
    %c0_10 = arith.constant 0 : index
    %39 = vector.load %arg5[%c0_9, %c0_10] : memref<128x9xf32, #tpu.memory_space<vmem>>, vector<128x9xf32>
    %40 = arith.addf %39, %30 : vector<128x9xf32>
    %c0_11 = arith.constant 0 : index
    %c0_12 = arith.constant 0 : index
    %c0_13 = arith.constant 0 : index
    %41 = vector.load %arg2[%c0_11, %c0_12, %c0_13] : memref<1x18x72xf32, #tpu.memory_space<vmem>>, vector<1x18x72xf32>
    %42 = vector.shape_cast %41 : vector<1x18x72xf32> to vector<18x72xf32>
    %43 = tpu.iota {dimensions = array<i32: 1>} : vector<1x18xi32>
    %44 = arith.sitofp %43 : vector<1x18xi32> to vector<1x18xf32>
    %c0_14 = arith.constant 0 : index
    %c0_15 = arith.constant 0 : index
    %45 = vector.load %arg6[%c0_14, %c0_15] : memref<1x72xf32, #tpu.memory_space<vmem>>, vector<1x72xf32>
    %46 = vector.extract_strided_slice %38 {offsets = [0, 0], sizes = [128, 1], strides = [1, 1]} : vector<128x9xf32> to vector<128x1xf32>
    %47 = vector.extract_strided_slice %40 {offsets = [0, 0], sizes = [128, 1], strides = [1, 1]} : vector<128x9xf32> to vector<128x1xf32>
    %48 = vector.extract_strided_slice %36 {offsets = [0, 0], sizes = [128, 1], strides = [1, 1]} : vector<128x9xf32> to vector<128x1xf32>
    %49 = math.floor %46 : vector<128x1xf32>
    %50 = math.floor %47 : vector<128x1xf32>
    %51 = arith.subf %46, %49 : vector<128x1xf32>
    %52 = arith.subf %47, %50 : vector<128x1xf32>
    %cst_16 = arith.constant 1.000000e+00 : f32
    %53 = vector.broadcast %cst_16 : f32 to vector<128x1xf32>
    %54 = arith.subf %53, %51 : vector<128x1xf32>
    %55 = arith.mulf %54, %48 : vector<128x1xf32>
    %56 = arith.mulf %51, %48 : vector<128x1xf32>
    %57 = vector.broadcast %44 : vector<1x18xf32> to vector<128x18xf32>
    %58 = vector.broadcast %49 : vector<128x1xf32> to vector<128x18xf32>
    %59 = arith.cmpf oeq, %57, %58 : vector<128x18xf32>
    %cst_17 = arith.constant 0.000000e+00 : f32
    %60 = vector.shape_cast %55 : vector<128x1xf32> to vector<128x1xf32>
    %61 = vector.broadcast %60 : vector<128x1xf32> to vector<128x18xf32>
    %62 = vector.broadcast %cst_17 : f32 to vector<128x18xf32>
    %63 = arith.select %59, %61, %62 : vector<128x18xi1>, vector<128x18xf32>
    %cst_18 = arith.constant 1.000000e+00 : f32
    %64 = vector.broadcast %cst_18 : f32 to vector<128x1xf32>
    %65 = arith.addf %49, %64 : vector<128x1xf32>
    %66 = vector.broadcast %44 : vector<1x18xf32> to vector<128x18xf32>
    %67 = vector.broadcast %65 : vector<128x1xf32> to vector<128x18xf32>
    %68 = arith.cmpf oeq, %66, %67 : vector<128x18xf32>
    %cst_19 = arith.constant 0.000000e+00 : f32
    %69 = vector.shape_cast %56 : vector<128x1xf32> to vector<128x1xf32>
    %70 = vector.broadcast %69 : vector<128x1xf32> to vector<128x18xf32>
    %71 = vector.broadcast %cst_19 : f32 to vector<128x18xf32>
    %72 = arith.select %68, %70, %71 : vector<128x18xi1>, vector<128x18xf32>
    %73 = arith.addf %63, %72 : vector<128x18xf32>
    %74 = vector.broadcast %45 : vector<1x72xf32> to vector<128x72xf32>
    %75 = vector.broadcast %50 : vector<128x1xf32> to vector<128x72xf32>
    %76 = arith.cmpf oeq, %74, %75 : vector<128x72xf32>
    %cst_20 = arith.constant 1.000000e+00 : f32
    %77 = vector.broadcast %cst_20 : f32 to vector<128x1xf32>
    %78 = arith.subf %77, %52 : vector<128x1xf32>
    %cst_21 = arith.constant 0.000000e+00 : f32
    %79 = vector.shape_cast %78 : vector<128x1xf32> to vector<128x1xf32>
    %80 = vector.broadcast %79 : vector<128x1xf32> to vector<128x72xf32>
    %81 = vector.broadcast %cst_21 : f32 to vector<128x72xf32>
    %82 = arith.select %76, %80, %81 : vector<128x72xi1>, vector<128x72xf32>
    %cst_22 = arith.constant 1.000000e+00 : f32
    %83 = vector.broadcast %cst_22 : f32 to vector<128x1xf32>
    %84 = arith.addf %50, %83 : vector<128x1xf32>
    %85 = vector.broadcast %45 : vector<1x72xf32> to vector<128x72xf32>
    %86 = vector.broadcast %84 : vector<128x1xf32> to vector<128x72xf32>
    %87 = arith.cmpf oeq, %85, %86 : vector<128x72xf32>
    %cst_23 = arith.constant 0.000000e+00 : f32
    %88 = vector.shape_cast %52 : vector<128x1xf32> to vector<128x1xf32>
    %89 = vector.broadcast %88 : vector<128x1xf32> to vector<128x72xf32>
    %90 = vector.broadcast %cst_23 : f32 to vector<128x72xf32>
    %91 = arith.select %87, %89, %90 : vector<128x72xi1>, vector<128x72xf32>
    %92 = arith.addf %82, %91 : vector<128x72xf32>
    %cst_24 = arith.constant dense<0.000000e+00> : vector<128x72xf32>
    %93 = tpu.matmul %73, %42, %cst_24 {dimension_numbers = #tpu.dot_dimension_numbers<[1], [0], [0], [1], [0, 0, 1, 1], [], []>} : vector<128x18xf32>, vector<18x72xf32>, vector<128x72xf32> -> vector<128x72xf32>
    %94 = arith.mulf %93, %92 : vector<128x72xf32>
    %95 = vector.extract_strided_slice %38 {offsets = [0, 1], sizes = [128, 1], strides = [1, 1]} : vector<128x9xf32> to vector<128x1xf32>
    %96 = vector.extract_strided_slice %40 {offsets = [0, 1], sizes = [128, 1], strides = [1, 1]} : vector<128x9xf32> to vector<128x1xf32>
    %97 = vector.extract_strided_slice %36 {offsets = [0, 1], sizes = [128, 1], strides = [1, 1]} : vector<128x9xf32> to vector<128x1xf32>
    %98 = math.floor %95 : vector<128x1xf32>
    %99 = math.floor %96 : vector<128x1xf32>
    %100 = arith.subf %95, %98 : vector<128x1xf32>
    %101 = arith.subf %96, %99 : vector<128x1xf32>
    %cst_25 = arith.constant 1.000000e+00 : f32
    %102 = vector.broadcast %cst_25 : f32 to vector<128x1xf32>
    %103 = arith.subf %102, %100 : vector<128x1xf32>
    %104 = arith.mulf %103, %97 : vector<128x1xf32>
    %105 = arith.mulf %100, %97 : vector<128x1xf32>
    %106 = vector.broadcast %44 : vector<1x18xf32> to vector<128x18xf32>
    %107 = vector.broadcast %98 : vector<128x1xf32> to vector<128x18xf32>
    %108 = arith.cmpf oeq, %106, %107 : vector<128x18xf32>
    %cst_26 = arith.constant 0.000000e+00 : f32
    %109 = vector.shape_cast %104 : vector<128x1xf32> to vector<128x1xf32>
    %110 = vector.broadcast %109 : vector<128x1xf32> to vector<128x18xf32>
    %111 = vector.broadcast %cst_26 : f32 to vector<128x18xf32>
    %112 = arith.select %108, %110, %111 : vector<128x18xi1>, vector<128x18xf32>
    %cst_27 = arith.constant 1.000000e+00 : f32
    %113 = vector.broadcast %cst_27 : f32 to vector<128x1xf32>
    %114 = arith.addf %98, %113 : vector<128x1xf32>
    %115 = vector.broadcast %44 : vector<1x18xf32> to vector<128x18xf32>
    %116 = vector.broadcast %114 : vector<128x1xf32> to vector<128x18xf32>
    %117 = arith.cmpf oeq, %115, %116 : vector<128x18xf32>
    %cst_28 = arith.constant 0.000000e+00 : f32
    %118 = vector.shape_cast %105 : vector<128x1xf32> to vector<128x1xf32>
    %119 = vector.broadcast %118 : vector<128x1xf32> to vector<128x18xf32>
    %120 = vector.broadcast %cst_28 : f32 to vector<128x18xf32>
    %121 = arith.select %117, %119, %120 : vector<128x18xi1>, vector<128x18xf32>
    %122 = arith.addf %112, %121 : vector<128x18xf32>
    %123 = vector.broadcast %45 : vector<1x72xf32> to vector<128x72xf32>
    %124 = vector.broadcast %99 : vector<128x1xf32> to vector<128x72xf32>
    %125 = arith.cmpf oeq, %123, %124 : vector<128x72xf32>
    %cst_29 = arith.constant 1.000000e+00 : f32
    %126 = vector.broadcast %cst_29 : f32 to vector<128x1xf32>
    %127 = arith.subf %126, %101 : vector<128x1xf32>
    %cst_30 = arith.constant 0.000000e+00 : f32
    %128 = vector.shape_cast %127 : vector<128x1xf32> to vector<128x1xf32>
    %129 = vector.broadcast %128 : vector<128x1xf32> to vector<128x72xf32>
    %130 = vector.broadcast %cst_30 : f32 to vector<128x72xf32>
    %131 = arith.select %125, %129, %130 : vector<128x72xi1>, vector<128x72xf32>
    %cst_31 = arith.constant 1.000000e+00 : f32
    %132 = vector.broadcast %cst_31 : f32 to vector<128x1xf32>
    %133 = arith.addf %99, %132 : vector<128x1xf32>
    %134 = vector.broadcast %45 : vector<1x72xf32> to vector<128x72xf32>
    %135 = vector.broadcast %133 : vector<128x1xf32> to vector<128x72xf32>
    %136 = arith.cmpf oeq, %134, %135 : vector<128x72xf32>
    %cst_32 = arith.constant 0.000000e+00 : f32
    %137 = vector.shape_cast %101 : vector<128x1xf32> to vector<128x1xf32>
    %138 = vector.broadcast %137 : vector<128x1xf32> to vector<128x72xf32>
    %139 = vector.broadcast %cst_32 : f32 to vector<128x72xf32>
    %140 = arith.select %136, %138, %139 : vector<128x72xi1>, vector<128x72xf32>
    %141 = arith.addf %131, %140 : vector<128x72xf32>
    %cst_33 = arith.constant dense<0.000000e+00> : vector<128x72xf32>
    %142 = tpu.matmul %122, %42, %cst_33 {dimension_numbers = #tpu.dot_dimension_numbers<[1], [0], [0], [1], [0, 0, 1, 1], [], []>} : vector<128x18xf32>, vector<18x72xf32>, vector<128x72xf32> -> vector<128x72xf32>
    %143 = arith.mulf %142, %141 : vector<128x72xf32>
    %144 = vector.extract_strided_slice %38 {offsets = [0, 2], sizes = [128, 1], strides = [1, 1]} : vector<128x9xf32> to vector<128x1xf32>
    %145 = vector.extract_strided_slice %40 {offsets = [0, 2], sizes = [128, 1], strides = [1, 1]} : vector<128x9xf32> to vector<128x1xf32>
    %146 = vector.extract_strided_slice %36 {offsets = [0, 2], sizes = [128, 1], strides = [1, 1]} : vector<128x9xf32> to vector<128x1xf32>
    %147 = math.floor %144 : vector<128x1xf32>
    %148 = math.floor %145 : vector<128x1xf32>
    %149 = arith.subf %144, %147 : vector<128x1xf32>
    %150 = arith.subf %145, %148 : vector<128x1xf32>
    %cst_34 = arith.constant 1.000000e+00 : f32
    %151 = vector.broadcast %cst_34 : f32 to vector<128x1xf32>
    %152 = arith.subf %151, %149 : vector<128x1xf32>
    %153 = arith.mulf %152, %146 : vector<128x1xf32>
    %154 = arith.mulf %149, %146 : vector<128x1xf32>
    %155 = vector.broadcast %44 : vector<1x18xf32> to vector<128x18xf32>
    %156 = vector.broadcast %147 : vector<128x1xf32> to vector<128x18xf32>
    %157 = arith.cmpf oeq, %155, %156 : vector<128x18xf32>
    %cst_35 = arith.constant 0.000000e+00 : f32
    %158 = vector.shape_cast %153 : vector<128x1xf32> to vector<128x1xf32>
    %159 = vector.broadcast %158 : vector<128x1xf32> to vector<128x18xf32>
    %160 = vector.broadcast %cst_35 : f32 to vector<128x18xf32>
    %161 = arith.select %157, %159, %160 : vector<128x18xi1>, vector<128x18xf32>
    %cst_36 = arith.constant 1.000000e+00 : f32
    %162 = vector.broadcast %cst_36 : f32 to vector<128x1xf32>
    %163 = arith.addf %147, %162 : vector<128x1xf32>
    %164 = vector.broadcast %44 : vector<1x18xf32> to vector<128x18xf32>
    %165 = vector.broadcast %163 : vector<128x1xf32> to vector<128x18xf32>
    %166 = arith.cmpf oeq, %164, %165 : vector<128x18xf32>
    %cst_37 = arith.constant 0.000000e+00 : f32
    %167 = vector.shape_cast %154 : vector<128x1xf32> to vector<128x1xf32>
    %168 = vector.broadcast %167 : vector<128x1xf32> to vector<128x18xf32>
    %169 = vector.broadcast %cst_37 : f32 to vector<128x18xf32>
    %170 = arith.select %166, %168, %169 : vector<128x18xi1>, vector<128x18xf32>
    %171 = arith.addf %161, %170 : vector<128x18xf32>
    %172 = vector.broadcast %45 : vector<1x72xf32> to vector<128x72xf32>
    %173 = vector.broadcast %148 : vector<128x1xf32> to vector<128x72xf32>
    %174 = arith.cmpf oeq, %172, %173 : vector<128x72xf32>
    %cst_38 = arith.constant 1.000000e+00 : f32
    %175 = vector.broadcast %cst_38 : f32 to vector<128x1xf32>
    %176 = arith.subf %175, %150 : vector<128x1xf32>
    %cst_39 = arith.constant 0.000000e+00 : f32
    %177 = vector.shape_cast %176 : vector<128x1xf32> to vector<128x1xf32>
    %178 = vector.broadcast %177 : vector<128x1xf32> to vector<128x72xf32>
    %179 = vector.broadcast %cst_39 : f32 to vector<128x72xf32>
    %180 = arith.select %174, %178, %179 : vector<128x72xi1>, vector<128x72xf32>
    %cst_40 = arith.constant 1.000000e+00 : f32
    %181 = vector.broadcast %cst_40 : f32 to vector<128x1xf32>
    %182 = arith.addf %148, %181 : vector<128x1xf32>
    %183 = vector.broadcast %45 : vector<1x72xf32> to vector<128x72xf32>
    %184 = vector.broadcast %182 : vector<128x1xf32> to vector<128x72xf32>
    %185 = arith.cmpf oeq, %183, %184 : vector<128x72xf32>
    %cst_41 = arith.constant 0.000000e+00 : f32
    %186 = vector.shape_cast %150 : vector<128x1xf32> to vector<128x1xf32>
    %187 = vector.broadcast %186 : vector<128x1xf32> to vector<128x72xf32>
    %188 = vector.broadcast %cst_41 : f32 to vector<128x72xf32>
    %189 = arith.select %185, %187, %188 : vector<128x72xi1>, vector<128x72xf32>
    %190 = arith.addf %180, %189 : vector<128x72xf32>
    %cst_42 = arith.constant dense<0.000000e+00> : vector<128x72xf32>
    %191 = tpu.matmul %171, %42, %cst_42 {dimension_numbers = #tpu.dot_dimension_numbers<[1], [0], [0], [1], [0, 0, 1, 1], [], []>} : vector<128x18xf32>, vector<18x72xf32>, vector<128x72xf32> -> vector<128x72xf32>
    %192 = arith.mulf %191, %190 : vector<128x72xf32>
    %193 = vector.extract_strided_slice %38 {offsets = [0, 3], sizes = [128, 1], strides = [1, 1]} : vector<128x9xf32> to vector<128x1xf32>
    %194 = vector.extract_strided_slice %40 {offsets = [0, 3], sizes = [128, 1], strides = [1, 1]} : vector<128x9xf32> to vector<128x1xf32>
    %195 = vector.extract_strided_slice %36 {offsets = [0, 3], sizes = [128, 1], strides = [1, 1]} : vector<128x9xf32> to vector<128x1xf32>
    %196 = math.floor %193 : vector<128x1xf32>
    %197 = math.floor %194 : vector<128x1xf32>
    %198 = arith.subf %193, %196 : vector<128x1xf32>
    %199 = arith.subf %194, %197 : vector<128x1xf32>
    %cst_43 = arith.constant 1.000000e+00 : f32
    %200 = vector.broadcast %cst_43 : f32 to vector<128x1xf32>
    %201 = arith.subf %200, %198 : vector<128x1xf32>
    %202 = arith.mulf %201, %195 : vector<128x1xf32>
    %203 = arith.mulf %198, %195 : vector<128x1xf32>
    %204 = vector.broadcast %44 : vector<1x18xf32> to vector<128x18xf32>
    %205 = vector.broadcast %196 : vector<128x1xf32> to vector<128x18xf32>
    %206 = arith.cmpf oeq, %204, %205 : vector<128x18xf32>
    %cst_44 = arith.constant 0.000000e+00 : f32
    %207 = vector.shape_cast %202 : vector<128x1xf32> to vector<128x1xf32>
    %208 = vector.broadcast %207 : vector<128x1xf32> to vector<128x18xf32>
    %209 = vector.broadcast %cst_44 : f32 to vector<128x18xf32>
    %210 = arith.select %206, %208, %209 : vector<128x18xi1>, vector<128x18xf32>
    %cst_45 = arith.constant 1.000000e+00 : f32
    %211 = vector.broadcast %cst_45 : f32 to vector<128x1xf32>
    %212 = arith.addf %196, %211 : vector<128x1xf32>
    %213 = vector.broadcast %44 : vector<1x18xf32> to vector<128x18xf32>
    %214 = vector.broadcast %212 : vector<128x1xf32> to vector<128x18xf32>
    %215 = arith.cmpf oeq, %213, %214 : vector<128x18xf32>
    %cst_46 = arith.constant 0.000000e+00 : f32
    %216 = vector.shape_cast %203 : vector<128x1xf32> to vector<128x1xf32>
    %217 = vector.broadcast %216 : vector<128x1xf32> to vector<128x18xf32>
    %218 = vector.broadcast %cst_46 : f32 to vector<128x18xf32>
    %219 = arith.select %215, %217, %218 : vector<128x18xi1>, vector<128x18xf32>
    %220 = arith.addf %210, %219 : vector<128x18xf32>
    %221 = vector.broadcast %45 : vector<1x72xf32> to vector<128x72xf32>
    %222 = vector.broadcast %197 : vector<128x1xf32> to vector<128x72xf32>
    %223 = arith.cmpf oeq, %221, %222 : vector<128x72xf32>
    %cst_47 = arith.constant 1.000000e+00 : f32
    %224 = vector.broadcast %cst_47 : f32 to vector<128x1xf32>
    %225 = arith.subf %224, %199 : vector<128x1xf32>
    %cst_48 = arith.constant 0.000000e+00 : f32
    %226 = vector.shape_cast %225 : vector<128x1xf32> to vector<128x1xf32>
    %227 = vector.broadcast %226 : vector<128x1xf32> to vector<128x72xf32>
    %228 = vector.broadcast %cst_48 : f32 to vector<128x72xf32>
    %229 = arith.select %223, %227, %228 : vector<128x72xi1>, vector<128x72xf32>
    %cst_49 = arith.constant 1.000000e+00 : f32
    %230 = vector.broadcast %cst_49 : f32 to vector<128x1xf32>
    %231 = arith.addf %197, %230 : vector<128x1xf32>
    %232 = vector.broadcast %45 : vector<1x72xf32> to vector<128x72xf32>
    %233 = vector.broadcast %231 : vector<128x1xf32> to vector<128x72xf32>
    %234 = arith.cmpf oeq, %232, %233 : vector<128x72xf32>
    %cst_50 = arith.constant 0.000000e+00 : f32
    %235 = vector.shape_cast %199 : vector<128x1xf32> to vector<128x1xf32>
    %236 = vector.broadcast %235 : vector<128x1xf32> to vector<128x72xf32>
    %237 = vector.broadcast %cst_50 : f32 to vector<128x72xf32>
    %238 = arith.select %234, %236, %237 : vector<128x72xi1>, vector<128x72xf32>
    %239 = arith.addf %229, %238 : vector<128x72xf32>
    %cst_51 = arith.constant dense<0.000000e+00> : vector<128x72xf32>
    %240 = tpu.matmul %220, %42, %cst_51 {dimension_numbers = #tpu.dot_dimension_numbers<[1], [0], [0], [1], [0, 0, 1, 1], [], []>} : vector<128x18xf32>, vector<18x72xf32>, vector<128x72xf32> -> vector<128x72xf32>
    %241 = arith.mulf %240, %239 : vector<128x72xf32>
    %242 = vector.extract_strided_slice %38 {offsets = [0, 4], sizes = [128, 1], strides = [1, 1]} : vector<128x9xf32> to vector<128x1xf32>
    %243 = vector.extract_strided_slice %40 {offsets = [0, 4], sizes = [128, 1], strides = [1, 1]} : vector<128x9xf32> to vector<128x1xf32>
    %244 = vector.extract_strided_slice %36 {offsets = [0, 4], sizes = [128, 1], strides = [1, 1]} : vector<128x9xf32> to vector<128x1xf32>
    %245 = math.floor %242 : vector<128x1xf32>
    %246 = math.floor %243 : vector<128x1xf32>
    %247 = arith.subf %242, %245 : vector<128x1xf32>
    %248 = arith.subf %243, %246 : vector<128x1xf32>
    %cst_52 = arith.constant 1.000000e+00 : f32
    %249 = vector.broadcast %cst_52 : f32 to vector<128x1xf32>
    %250 = arith.subf %249, %247 : vector<128x1xf32>
    %251 = arith.mulf %250, %244 : vector<128x1xf32>
    %252 = arith.mulf %247, %244 : vector<128x1xf32>
    %253 = vector.broadcast %44 : vector<1x18xf32> to vector<128x18xf32>
    %254 = vector.broadcast %245 : vector<128x1xf32> to vector<128x18xf32>
    %255 = arith.cmpf oeq, %253, %254 : vector<128x18xf32>
    %cst_53 = arith.constant 0.000000e+00 : f32
    %256 = vector.shape_cast %251 : vector<128x1xf32> to vector<128x1xf32>
    %257 = vector.broadcast %256 : vector<128x1xf32> to vector<128x18xf32>
    %258 = vector.broadcast %cst_53 : f32 to vector<128x18xf32>
    %259 = arith.select %255, %257, %258 : vector<128x18xi1>, vector<128x18xf32>
    %cst_54 = arith.constant 1.000000e+00 : f32
    %260 = vector.broadcast %cst_54 : f32 to vector<128x1xf32>
    %261 = arith.addf %245, %260 : vector<128x1xf32>
    %262 = vector.broadcast %44 : vector<1x18xf32> to vector<128x18xf32>
    %263 = vector.broadcast %261 : vector<128x1xf32> to vector<128x18xf32>
    %264 = arith.cmpf oeq, %262, %263 : vector<128x18xf32>
    %cst_55 = arith.constant 0.000000e+00 : f32
    %265 = vector.shape_cast %252 : vector<128x1xf32> to vector<128x1xf32>
    %266 = vector.broadcast %265 : vector<128x1xf32> to vector<128x18xf32>
    %267 = vector.broadcast %cst_55 : f32 to vector<128x18xf32>
    %268 = arith.select %264, %266, %267 : vector<128x18xi1>, vector<128x18xf32>
    %269 = arith.addf %259, %268 : vector<128x18xf32>
    %270 = vector.broadcast %45 : vector<1x72xf32> to vector<128x72xf32>
    %271 = vector.broadcast %246 : vector<128x1xf32> to vector<128x72xf32>
    %272 = arith.cmpf oeq, %270, %271 : vector<128x72xf32>
    %cst_56 = arith.constant 1.000000e+00 : f32
    %273 = vector.broadcast %cst_56 : f32 to vector<128x1xf32>
    %274 = arith.subf %273, %248 : vector<128x1xf32>
    %cst_57 = arith.constant 0.000000e+00 : f32
    %275 = vector.shape_cast %274 : vector<128x1xf32> to vector<128x1xf32>
    %276 = vector.broadcast %275 : vector<128x1xf32> to vector<128x72xf32>
    %277 = vector.broadcast %cst_57 : f32 to vector<128x72xf32>
    %278 = arith.select %272, %276, %277 : vector<128x72xi1>, vector<128x72xf32>
    %cst_58 = arith.constant 1.000000e+00 : f32
    %279 = vector.broadcast %cst_58 : f32 to vector<128x1xf32>
    %280 = arith.addf %246, %279 : vector<128x1xf32>
    %281 = vector.broadcast %45 : vector<1x72xf32> to vector<128x72xf32>
    %282 = vector.broadcast %280 : vector<128x1xf32> to vector<128x72xf32>
    %283 = arith.cmpf oeq, %281, %282 : vector<128x72xf32>
    %cst_59 = arith.constant 0.000000e+00 : f32
    %284 = vector.shape_cast %248 : vector<128x1xf32> to vector<128x1xf32>
    %285 = vector.broadcast %284 : vector<128x1xf32> to vector<128x72xf32>
    %286 = vector.broadcast %cst_59 : f32 to vector<128x72xf32>
    %287 = arith.select %283, %285, %286 : vector<128x72xi1>, vector<128x72xf32>
    %288 = arith.addf %278, %287 : vector<128x72xf32>
    %cst_60 = arith.constant dense<0.000000e+00> : vector<128x72xf32>
    %289 = tpu.matmul %269, %42, %cst_60 {dimension_numbers = #tpu.dot_dimension_numbers<[1], [0], [0], [1], [0, 0, 1, 1], [], []>} : vector<128x18xf32>, vector<18x72xf32>, vector<128x72xf32> -> vector<128x72xf32>
    %290 = arith.mulf %289, %288 : vector<128x72xf32>
    %291 = vector.extract_strided_slice %38 {offsets = [0, 5], sizes = [128, 1], strides = [1, 1]} : vector<128x9xf32> to vector<128x1xf32>
    %292 = vector.extract_strided_slice %40 {offsets = [0, 5], sizes = [128, 1], strides = [1, 1]} : vector<128x9xf32> to vector<128x1xf32>
    %293 = vector.extract_strided_slice %36 {offsets = [0, 5], sizes = [128, 1], strides = [1, 1]} : vector<128x9xf32> to vector<128x1xf32>
    %294 = math.floor %291 : vector<128x1xf32>
    %295 = math.floor %292 : vector<128x1xf32>
    %296 = arith.subf %291, %294 : vector<128x1xf32>
    %297 = arith.subf %292, %295 : vector<128x1xf32>
    %cst_61 = arith.constant 1.000000e+00 : f32
    %298 = vector.broadcast %cst_61 : f32 to vector<128x1xf32>
    %299 = arith.subf %298, %296 : vector<128x1xf32>
    %300 = arith.mulf %299, %293 : vector<128x1xf32>
    %301 = arith.mulf %296, %293 : vector<128x1xf32>
    %302 = vector.broadcast %44 : vector<1x18xf32> to vector<128x18xf32>
    %303 = vector.broadcast %294 : vector<128x1xf32> to vector<128x18xf32>
    %304 = arith.cmpf oeq, %302, %303 : vector<128x18xf32>
    %cst_62 = arith.constant 0.000000e+00 : f32
    %305 = vector.shape_cast %300 : vector<128x1xf32> to vector<128x1xf32>
    %306 = vector.broadcast %305 : vector<128x1xf32> to vector<128x18xf32>
    %307 = vector.broadcast %cst_62 : f32 to vector<128x18xf32>
    %308 = arith.select %304, %306, %307 : vector<128x18xi1>, vector<128x18xf32>
    %cst_63 = arith.constant 1.000000e+00 : f32
    %309 = vector.broadcast %cst_63 : f32 to vector<128x1xf32>
    %310 = arith.addf %294, %309 : vector<128x1xf32>
    %311 = vector.broadcast %44 : vector<1x18xf32> to vector<128x18xf32>
    %312 = vector.broadcast %310 : vector<128x1xf32> to vector<128x18xf32>
    %313 = arith.cmpf oeq, %311, %312 : vector<128x18xf32>
    %cst_64 = arith.constant 0.000000e+00 : f32
    %314 = vector.shape_cast %301 : vector<128x1xf32> to vector<128x1xf32>
    %315 = vector.broadcast %314 : vector<128x1xf32> to vector<128x18xf32>
    %316 = vector.broadcast %cst_64 : f32 to vector<128x18xf32>
    %317 = arith.select %313, %315, %316 : vector<128x18xi1>, vector<128x18xf32>
    %318 = arith.addf %308, %317 : vector<128x18xf32>
    %319 = vector.broadcast %45 : vector<1x72xf32> to vector<128x72xf32>
    %320 = vector.broadcast %295 : vector<128x1xf32> to vector<128x72xf32>
    %321 = arith.cmpf oeq, %319, %320 : vector<128x72xf32>
    %cst_65 = arith.constant 1.000000e+00 : f32
    %322 = vector.broadcast %cst_65 : f32 to vector<128x1xf32>
    %323 = arith.subf %322, %297 : vector<128x1xf32>
    %cst_66 = arith.constant 0.000000e+00 : f32
    %324 = vector.shape_cast %323 : vector<128x1xf32> to vector<128x1xf32>
    %325 = vector.broadcast %324 : vector<128x1xf32> to vector<128x72xf32>
    %326 = vector.broadcast %cst_66 : f32 to vector<128x72xf32>
    %327 = arith.select %321, %325, %326 : vector<128x72xi1>, vector<128x72xf32>
    %cst_67 = arith.constant 1.000000e+00 : f32
    %328 = vector.broadcast %cst_67 : f32 to vector<128x1xf32>
    %329 = arith.addf %295, %328 : vector<128x1xf32>
    %330 = vector.broadcast %45 : vector<1x72xf32> to vector<128x72xf32>
    %331 = vector.broadcast %329 : vector<128x1xf32> to vector<128x72xf32>
    %332 = arith.cmpf oeq, %330, %331 : vector<128x72xf32>
    %cst_68 = arith.constant 0.000000e+00 : f32
    %333 = vector.shape_cast %297 : vector<128x1xf32> to vector<128x1xf32>
    %334 = vector.broadcast %333 : vector<128x1xf32> to vector<128x72xf32>
    %335 = vector.broadcast %cst_68 : f32 to vector<128x72xf32>
    %336 = arith.select %332, %334, %335 : vector<128x72xi1>, vector<128x72xf32>
    %337 = arith.addf %327, %336 : vector<128x72xf32>
    %cst_69 = arith.constant dense<0.000000e+00> : vector<128x72xf32>
    %338 = tpu.matmul %318, %42, %cst_69 {dimension_numbers = #tpu.dot_dimension_numbers<[1], [0], [0], [1], [0, 0, 1, 1], [], []>} : vector<128x18xf32>, vector<18x72xf32>, vector<128x72xf32> -> vector<128x72xf32>
    %339 = arith.mulf %338, %337 : vector<128x72xf32>
    %340 = vector.extract_strided_slice %38 {offsets = [0, 6], sizes = [128, 1], strides = [1, 1]} : vector<128x9xf32> to vector<128x1xf32>
    %341 = vector.extract_strided_slice %40 {offsets = [0, 6], sizes = [128, 1], strides = [1, 1]} : vector<128x9xf32> to vector<128x1xf32>
    %342 = vector.extract_strided_slice %36 {offsets = [0, 6], sizes = [128, 1], strides = [1, 1]} : vector<128x9xf32> to vector<128x1xf32>
    %343 = math.floor %340 : vector<128x1xf32>
    %344 = math.floor %341 : vector<128x1xf32>
    %345 = arith.subf %340, %343 : vector<128x1xf32>
    %346 = arith.subf %341, %344 : vector<128x1xf32>
    %cst_70 = arith.constant 1.000000e+00 : f32
    %347 = vector.broadcast %cst_70 : f32 to vector<128x1xf32>
    %348 = arith.subf %347, %345 : vector<128x1xf32>
    %349 = arith.mulf %348, %342 : vector<128x1xf32>
    %350 = arith.mulf %345, %342 : vector<128x1xf32>
    %351 = vector.broadcast %44 : vector<1x18xf32> to vector<128x18xf32>
    %352 = vector.broadcast %343 : vector<128x1xf32> to vector<128x18xf32>
    %353 = arith.cmpf oeq, %351, %352 : vector<128x18xf32>
    %cst_71 = arith.constant 0.000000e+00 : f32
    %354 = vector.shape_cast %349 : vector<128x1xf32> to vector<128x1xf32>
    %355 = vector.broadcast %354 : vector<128x1xf32> to vector<128x18xf32>
    %356 = vector.broadcast %cst_71 : f32 to vector<128x18xf32>
    %357 = arith.select %353, %355, %356 : vector<128x18xi1>, vector<128x18xf32>
    %cst_72 = arith.constant 1.000000e+00 : f32
    %358 = vector.broadcast %cst_72 : f32 to vector<128x1xf32>
    %359 = arith.addf %343, %358 : vector<128x1xf32>
    %360 = vector.broadcast %44 : vector<1x18xf32> to vector<128x18xf32>
    %361 = vector.broadcast %359 : vector<128x1xf32> to vector<128x18xf32>
    %362 = arith.cmpf oeq, %360, %361 : vector<128x18xf32>
    %cst_73 = arith.constant 0.000000e+00 : f32
    %363 = vector.shape_cast %350 : vector<128x1xf32> to vector<128x1xf32>
    %364 = vector.broadcast %363 : vector<128x1xf32> to vector<128x18xf32>
    %365 = vector.broadcast %cst_73 : f32 to vector<128x18xf32>
    %366 = arith.select %362, %364, %365 : vector<128x18xi1>, vector<128x18xf32>
    %367 = arith.addf %357, %366 : vector<128x18xf32>
    %368 = vector.broadcast %45 : vector<1x72xf32> to vector<128x72xf32>
    %369 = vector.broadcast %344 : vector<128x1xf32> to vector<128x72xf32>
    %370 = arith.cmpf oeq, %368, %369 : vector<128x72xf32>
    %cst_74 = arith.constant 1.000000e+00 : f32
    %371 = vector.broadcast %cst_74 : f32 to vector<128x1xf32>
    %372 = arith.subf %371, %346 : vector<128x1xf32>
    %cst_75 = arith.constant 0.000000e+00 : f32
    %373 = vector.shape_cast %372 : vector<128x1xf32> to vector<128x1xf32>
    %374 = vector.broadcast %373 : vector<128x1xf32> to vector<128x72xf32>
    %375 = vector.broadcast %cst_75 : f32 to vector<128x72xf32>
    %376 = arith.select %370, %374, %375 : vector<128x72xi1>, vector<128x72xf32>
    %cst_76 = arith.constant 1.000000e+00 : f32
    %377 = vector.broadcast %cst_76 : f32 to vector<128x1xf32>
    %378 = arith.addf %344, %377 : vector<128x1xf32>
    %379 = vector.broadcast %45 : vector<1x72xf32> to vector<128x72xf32>
    %380 = vector.broadcast %378 : vector<128x1xf32> to vector<128x72xf32>
    %381 = arith.cmpf oeq, %379, %380 : vector<128x72xf32>
    %cst_77 = arith.constant 0.000000e+00 : f32
    %382 = vector.shape_cast %346 : vector<128x1xf32> to vector<128x1xf32>
    %383 = vector.broadcast %382 : vector<128x1xf32> to vector<128x72xf32>
    %384 = vector.broadcast %cst_77 : f32 to vector<128x72xf32>
    %385 = arith.select %381, %383, %384 : vector<128x72xi1>, vector<128x72xf32>
    %386 = arith.addf %376, %385 : vector<128x72xf32>
    %cst_78 = arith.constant dense<0.000000e+00> : vector<128x72xf32>
    %387 = tpu.matmul %367, %42, %cst_78 {dimension_numbers = #tpu.dot_dimension_numbers<[1], [0], [0], [1], [0, 0, 1, 1], [], []>} : vector<128x18xf32>, vector<18x72xf32>, vector<128x72xf32> -> vector<128x72xf32>
    %388 = arith.mulf %387, %386 : vector<128x72xf32>
    %389 = vector.extract_strided_slice %38 {offsets = [0, 7], sizes = [128, 1], strides = [1, 1]} : vector<128x9xf32> to vector<128x1xf32>
    %390 = vector.extract_strided_slice %40 {offsets = [0, 7], sizes = [128, 1], strides = [1, 1]} : vector<128x9xf32> to vector<128x1xf32>
    %391 = vector.extract_strided_slice %36 {offsets = [0, 7], sizes = [128, 1], strides = [1, 1]} : vector<128x9xf32> to vector<128x1xf32>
    %392 = math.floor %389 : vector<128x1xf32>
    %393 = math.floor %390 : vector<128x1xf32>
    %394 = arith.subf %389, %392 : vector<128x1xf32>
    %395 = arith.subf %390, %393 : vector<128x1xf32>
    %cst_79 = arith.constant 1.000000e+00 : f32
    %396 = vector.broadcast %cst_79 : f32 to vector<128x1xf32>
    %397 = arith.subf %396, %394 : vector<128x1xf32>
    %398 = arith.mulf %397, %391 : vector<128x1xf32>
    %399 = arith.mulf %394, %391 : vector<128x1xf32>
    %400 = vector.broadcast %44 : vector<1x18xf32> to vector<128x18xf32>
    %401 = vector.broadcast %392 : vector<128x1xf32> to vector<128x18xf32>
    %402 = arith.cmpf oeq, %400, %401 : vector<128x18xf32>
    %cst_80 = arith.constant 0.000000e+00 : f32
    %403 = vector.shape_cast %398 : vector<128x1xf32> to vector<128x1xf32>
    %404 = vector.broadcast %403 : vector<128x1xf32> to vector<128x18xf32>
    %405 = vector.broadcast %cst_80 : f32 to vector<128x18xf32>
    %406 = arith.select %402, %404, %405 : vector<128x18xi1>, vector<128x18xf32>
    %cst_81 = arith.constant 1.000000e+00 : f32
    %407 = vector.broadcast %cst_81 : f32 to vector<128x1xf32>
    %408 = arith.addf %392, %407 : vector<128x1xf32>
    %409 = vector.broadcast %44 : vector<1x18xf32> to vector<128x18xf32>
    %410 = vector.broadcast %408 : vector<128x1xf32> to vector<128x18xf32>
    %411 = arith.cmpf oeq, %409, %410 : vector<128x18xf32>
    %cst_82 = arith.constant 0.000000e+00 : f32
    %412 = vector.shape_cast %399 : vector<128x1xf32> to vector<128x1xf32>
    %413 = vector.broadcast %412 : vector<128x1xf32> to vector<128x18xf32>
    %414 = vector.broadcast %cst_82 : f32 to vector<128x18xf32>
    %415 = arith.select %411, %413, %414 : vector<128x18xi1>, vector<128x18xf32>
    %416 = arith.addf %406, %415 : vector<128x18xf32>
    %417 = vector.broadcast %45 : vector<1x72xf32> to vector<128x72xf32>
    %418 = vector.broadcast %393 : vector<128x1xf32> to vector<128x72xf32>
    %419 = arith.cmpf oeq, %417, %418 : vector<128x72xf32>
    %cst_83 = arith.constant 1.000000e+00 : f32
    %420 = vector.broadcast %cst_83 : f32 to vector<128x1xf32>
    %421 = arith.subf %420, %395 : vector<128x1xf32>
    %cst_84 = arith.constant 0.000000e+00 : f32
    %422 = vector.shape_cast %421 : vector<128x1xf32> to vector<128x1xf32>
    %423 = vector.broadcast %422 : vector<128x1xf32> to vector<128x72xf32>
    %424 = vector.broadcast %cst_84 : f32 to vector<128x72xf32>
    %425 = arith.select %419, %423, %424 : vector<128x72xi1>, vector<128x72xf32>
    %cst_85 = arith.constant 1.000000e+00 : f32
    %426 = vector.broadcast %cst_85 : f32 to vector<128x1xf32>
    %427 = arith.addf %393, %426 : vector<128x1xf32>
    %428 = vector.broadcast %45 : vector<1x72xf32> to vector<128x72xf32>
    %429 = vector.broadcast %427 : vector<128x1xf32> to vector<128x72xf32>
    %430 = arith.cmpf oeq, %428, %429 : vector<128x72xf32>
    %cst_86 = arith.constant 0.000000e+00 : f32
    %431 = vector.shape_cast %395 : vector<128x1xf32> to vector<128x1xf32>
    %432 = vector.broadcast %431 : vector<128x1xf32> to vector<128x72xf32>
    %433 = vector.broadcast %cst_86 : f32 to vector<128x72xf32>
    %434 = arith.select %430, %432, %433 : vector<128x72xi1>, vector<128x72xf32>
    %435 = arith.addf %425, %434 : vector<128x72xf32>
    %cst_87 = arith.constant dense<0.000000e+00> : vector<128x72xf32>
    %436 = tpu.matmul %416, %42, %cst_87 {dimension_numbers = #tpu.dot_dimension_numbers<[1], [0], [0], [1], [0, 0, 1, 1], [], []>} : vector<128x18xf32>, vector<18x72xf32>, vector<128x72xf32> -> vector<128x72xf32>
    %437 = arith.mulf %436, %435 : vector<128x72xf32>
    %438 = vector.extract_strided_slice %38 {offsets = [0, 8], sizes = [128, 1], strides = [1, 1]} : vector<128x9xf32> to vector<128x1xf32>
    %439 = vector.extract_strided_slice %40 {offsets = [0, 8], sizes = [128, 1], strides = [1, 1]} : vector<128x9xf32> to vector<128x1xf32>
    %440 = vector.extract_strided_slice %36 {offsets = [0, 8], sizes = [128, 1], strides = [1, 1]} : vector<128x9xf32> to vector<128x1xf32>
    %441 = math.floor %438 : vector<128x1xf32>
    %442 = math.floor %439 : vector<128x1xf32>
    %443 = arith.subf %438, %441 : vector<128x1xf32>
    %444 = arith.subf %439, %442 : vector<128x1xf32>
    %cst_88 = arith.constant 1.000000e+00 : f32
    %445 = vector.broadcast %cst_88 : f32 to vector<128x1xf32>
    %446 = arith.subf %445, %443 : vector<128x1xf32>
    %447 = arith.mulf %446, %440 : vector<128x1xf32>
    %448 = arith.mulf %443, %440 : vector<128x1xf32>
    %449 = vector.broadcast %44 : vector<1x18xf32> to vector<128x18xf32>
    %450 = vector.broadcast %441 : vector<128x1xf32> to vector<128x18xf32>
    %451 = arith.cmpf oeq, %449, %450 : vector<128x18xf32>
    %cst_89 = arith.constant 0.000000e+00 : f32
    %452 = vector.shape_cast %447 : vector<128x1xf32> to vector<128x1xf32>
    %453 = vector.broadcast %452 : vector<128x1xf32> to vector<128x18xf32>
    %454 = vector.broadcast %cst_89 : f32 to vector<128x18xf32>
    %455 = arith.select %451, %453, %454 : vector<128x18xi1>, vector<128x18xf32>
    %cst_90 = arith.constant 1.000000e+00 : f32
    %456 = vector.broadcast %cst_90 : f32 to vector<128x1xf32>
    %457 = arith.addf %441, %456 : vector<128x1xf32>
    %458 = vector.broadcast %44 : vector<1x18xf32> to vector<128x18xf32>
    %459 = vector.broadcast %457 : vector<128x1xf32> to vector<128x18xf32>
    %460 = arith.cmpf oeq, %458, %459 : vector<128x18xf32>
    %cst_91 = arith.constant 0.000000e+00 : f32
    %461 = vector.shape_cast %448 : vector<128x1xf32> to vector<128x1xf32>
    %462 = vector.broadcast %461 : vector<128x1xf32> to vector<128x18xf32>
    %463 = vector.broadcast %cst_91 : f32 to vector<128x18xf32>
    %464 = arith.select %460, %462, %463 : vector<128x18xi1>, vector<128x18xf32>
    %465 = arith.addf %455, %464 : vector<128x18xf32>
    %466 = vector.broadcast %45 : vector<1x72xf32> to vector<128x72xf32>
    %467 = vector.broadcast %442 : vector<128x1xf32> to vector<128x72xf32>
    %468 = arith.cmpf oeq, %466, %467 : vector<128x72xf32>
    %cst_92 = arith.constant 1.000000e+00 : f32
    %469 = vector.broadcast %cst_92 : f32 to vector<128x1xf32>
    %470 = arith.subf %469, %444 : vector<128x1xf32>
    %cst_93 = arith.constant 0.000000e+00 : f32
    %471 = vector.shape_cast %470 : vector<128x1xf32> to vector<128x1xf32>
    %472 = vector.broadcast %471 : vector<128x1xf32> to vector<128x72xf32>
    %473 = vector.broadcast %cst_93 : f32 to vector<128x72xf32>
    %474 = arith.select %468, %472, %473 : vector<128x72xi1>, vector<128x72xf32>
    %cst_94 = arith.constant 1.000000e+00 : f32
    %475 = vector.broadcast %cst_94 : f32 to vector<128x1xf32>
    %476 = arith.addf %442, %475 : vector<128x1xf32>
    %477 = vector.broadcast %45 : vector<1x72xf32> to vector<128x72xf32>
    %478 = vector.broadcast %476 : vector<128x1xf32> to vector<128x72xf32>
    %479 = arith.cmpf oeq, %477, %478 : vector<128x72xf32>
    %cst_95 = arith.constant 0.000000e+00 : f32
    %480 = vector.shape_cast %444 : vector<128x1xf32> to vector<128x1xf32>
    %481 = vector.broadcast %480 : vector<128x1xf32> to vector<128x72xf32>
    %482 = vector.broadcast %cst_95 : f32 to vector<128x72xf32>
    %483 = arith.select %479, %481, %482 : vector<128x72xi1>, vector<128x72xf32>
    %484 = arith.addf %474, %483 : vector<128x72xf32>
    %cst_96 = arith.constant dense<0.000000e+00> : vector<128x72xf32>
    %485 = tpu.matmul %465, %42, %cst_96 {dimension_numbers = #tpu.dot_dimension_numbers<[1], [0], [0], [1], [0, 0, 1, 1], [], []>} : vector<128x18xf32>, vector<18x72xf32>, vector<128x72xf32> -> vector<128x72xf32>
    %486 = arith.mulf %485, %484 : vector<128x72xf32>
    %487 = tpu.concatenate %94, %143, %192, %241, %290, %339, %388, %437, %486 in 1 : vector<128x72xf32>, vector<128x72xf32>, vector<128x72xf32>, vector<128x72xf32>, vector<128x72xf32>, vector<128x72xf32>, vector<128x72xf32>, vector<128x72xf32>, vector<128x72xf32> -> vector<128x648xf32>
    %c0_97 = arith.constant 0 : index
    %c0_98 = arith.constant 0 : index
    %488 = vector.load %arg9[%c0_97, %c0_98] : memref<648x8xf32, #tpu.memory_space<vmem>>, vector<648x8xf32>
    %cst_99 = arith.constant dense<0.000000e+00> : vector<128x8xf32>
    %489 = tpu.matmul %487, %488, %cst_99 {dimension_numbers = #tpu.dot_dimension_numbers<[1], [0], [0], [1], [0, 0, 1, 1], [], []>} : vector<128x648xf32>, vector<648x8xf32>, vector<128x8xf32> -> vector<128x8xf32>
    %c0_100 = arith.constant 0 : index
    %c0_101 = arith.constant 0 : index
    %490 = vector.load %arg10[%c0_100, %c0_101] : memref<1x8xf32, #tpu.memory_space<vmem>>, vector<1x8xf32>
    %491 = vector.broadcast %490 : vector<1x8xf32> to vector<128x8xf32>
    %492 = arith.addf %489, %491 : vector<128x8xf32>
    %493 = tpu.transpose %492, [1, 0] : vector<128x8xf32> -> vector<8x128xf32>
    %c0_102 = arith.constant 0 : index
    %c0_103 = arith.constant 0 : index
    %c0_104 = arith.constant 0 : index
    %494 = vector.load %arg11[%c0_102, %c0_103, %c0_104] : memref<1x8x128xf32, #tpu.memory_space<vmem>>, vector<1x8x128xf32>
    %495 = vector.shape_cast %494 : vector<1x8x128xf32> to vector<8x128xf32>
    %496 = vector.shape_cast %493 : vector<8x128xf32> to vector<1x8x128xf32>
    tpu.vector_store %arg11[%c0_102, %c0_103, %c0_104], %496 {strides = array<i32>} : memref<1x8x128xf32, #tpu.memory_space<vmem>>, vector<1x8x128xf32>,
    return
  }
  func.func @transform_0(%arg0: i32, %arg1: i32) -> (i32, i32, i32) {
    %c0_i32 = arith.constant 0 : i32
    %c0_i32_0 = arith.constant 0 : i32
    %c0_i32_1 = arith.constant 0 : i32
    return %arg0, %c0_i32, %c0_i32_0 : i32, i32, i32
  }
  func.func @transform_1(%arg0: i32, %arg1: i32) -> (i32, i32, i32, i32) {
    %c0_i32 = arith.constant 0 : i32
    %c0_i32_0 = arith.constant 0 : i32
    %c0_i32_1 = arith.constant 0 : i32
    %c0_i32_2 = arith.constant 0 : i32
    return %arg0, %c0_i32, %c0_i32_0, %c0_i32_1 : i32, i32, i32, i32
  }
  func.func @transform_2(%arg0: i32, %arg1: i32) -> (i32, i32) {
    %c0_i32 = arith.constant 0 : i32
    %c0_i32_0 = arith.constant 0 : i32
    return %arg1, %c0_i32 : i32, i32
  }
  func.func @transform_3(%arg0: i32, %arg1: i32) -> (i32, i32) {
    %c0_i32 = arith.constant 0 : i32
    %c0_i32_0 = arith.constant 0 : i32
    return %arg1, %c0_i32 : i32, i32
  }
  func.func @transform_4(%arg0: i32, %arg1: i32) -> (i32, i32) {
    %c0_i32 = arith.constant 0 : i32
    %c0_i32_0 = arith.constant 0 : i32
    %c0_i32_1 = arith.constant 0 : i32
    return %c0_i32, %c0_i32_0 : i32, i32
  }
  func.func @transform_5(%arg0: i32, %arg1: i32) -> (i32, i32) {
    %c0_i32 = arith.constant 0 : i32
    %c0_i32_0 = arith.constant 0 : i32
    %c0_i32_1 = arith.constant 0 : i32
    return %c0_i32, %c0_i32_0 : i32, i32
  }
  func.func @transform_6(%arg0: i32, %arg1: i32) -> (i32, i32) {
    %c0_i32 = arith.constant 0 : i32
    %c0_i32_0 = arith.constant 0 : i32
    %c0_i32_1 = arith.constant 0 : i32
    return %c0_i32, %c0_i32_0 : i32, i32
  }
  func.func @transform_7(%arg0: i32, %arg1: i32) -> (i32, i32) {
    %c0_i32 = arith.constant 0 : i32
    %c0_i32_0 = arith.constant 0 : i32
    %c0_i32_1 = arith.constant 0 : i32
    return %c0_i32, %c0_i32_0 : i32, i32
  }
  func.func @transform_8(%arg0: i32, %arg1: i32) -> (i32, i32) {
    %c0_i32 = arith.constant 0 : i32
    %c0_i32_0 = arith.constant 0 : i32
    %c0_i32_1 = arith.constant 0 : i32
    return %c0_i32, %c0_i32_0 : i32, i32
  }
  func.func @transform_9(%arg0: i32, %arg1: i32) -> (i32, i32, i32) {
    %c0_i32 = arith.constant 0 : i32
    %c0_i32_0 = arith.constant 0 : i32
    return %arg0, %c0_i32, %arg1 : i32, i32, i32
  }
}

</mosaic_0001>

<llo_original>
// kernel: tpu_custom_call.1
$region0: #{tpu_custom_call.1}
  #allocation0 [shape = 'u32[]', space=smem, size = 0x4, offset = 0x4, fixed_abs, tag = 'smem constant byte address 0x4 - core index']
  #allocation1 [shape = 'u32[72,128]{1,0:T(1,128)}', space=vmem, size = 0x9000, scoped, tag = 'internal scratch']
  %s0 = inlined_call_operand.vmem [shape: f32[2,18,72], index: 0, kind: input, shape index: {}]
  %s1 = inlined_call_operand.vmem [shape: f32[2,18,18,4], index: 1, kind: input, shape index: {}]
  %s2 = inlined_call_operand.vmem [shape: f32[256,9], index: 2, kind: input, shape index: {}]
  %s3 = inlined_call_operand.vmem [shape: f32[256,9], index: 3, kind: input, shape index: {}]
  %s4 = inlined_call_operand.vmem [shape: f32[1,72], index: 4, kind: input, shape index: {}]
  %s5 = inlined_call_operand.vmem [shape: f32[36,27], index: 5, kind: input, shape index: {}]
  %s6 = inlined_call_operand.vmem [shape: f32[1,27], index: 6, kind: input, shape index: {}]
  %s7 = inlined_call_operand.vmem [shape: f32[648,8], index: 7, kind: input, shape index: {}]
  %s8 = inlined_call_operand.vmem [shape: f32[1,8], index: 8, kind: input, shape index: {}]
  %s9 = inlined_call_operand.hbm [shape: f32[2,8,256], index: 9, kind: output, shape index: {}]
  %s10 = sld [smem:[#allocation0]]
  $region69: #{tpu_custom_call.1} parent=0
    _
  %s12 = ssub.s32 1, %s10
  %s13 = scalar_select 0, %s12, %s10
  $region1: #{tpu_custom_call.1} parent=0
    #allocation2 [shape = 'u8[8192]{0}', space=vmem, size = 0x2000, scoped, tag = 'output window, operand 0']
    #allocation3 [shape = 's32[2]{0}', space=sflag, size = 0x8, scoped, tag = 'scoped memory for tpu_custom_call.1']
    %14 = vsyncpa [#allocation3], 0
    %s15 = scalar_lea.sflag [#allocation3], 1
    %16 = vsyncpa %s15, 0
    loop: start=0, step=1, limit=6
    $region2: #{tpu_custom_call.1} parent=1 // loop_pre_header
      _
    $region3: #{tpu_custom_call.1} parent=1 // loop_header
      %s18 = sphi 0, %s22
      %p19 = scmp.ge.s32.totalorder %s18, 6
      %s25 = sphi 0, %s37
      %s26 = sphi 0, %s33
      %s27 = sphi 0, %s25
      %s28 = sphi 0, %s26
      %s29 = sphi 0, %s27
      %s30 = sphi 0, %s28
      %s40 = sphi 0, %s42
      %s43 = sphi 0, %s40
      %s44 = sphi 0, %s43
      %s60 = sphi 0, %s44
      %s66 = sphi 0, %s68
      %s69 = sphi 0, %s66
      %s70 = sphi 0, %s69
      %s86 = sphi 0, %s70
      %s92 = sphi 0, %s94
      %s95 = sphi 0, %s92
      %s96 = sphi 0, %s95
      %s112 = sphi 0, %s96
      %s118 = sphi 0, %s120
      %s121 = sphi 0, %s118
      %s122 = sphi 0, %s121
      %s138 = sphi 0, %s122
      %s142 = sphi 0, %s142
      %s144 = sphi 0, %s142
      %s145 = sphi 0, %s144
      %s159 = sphi 0, %s145
      %s163 = sphi 0, %s163
      %s165 = sphi 0, %s163
      %s166 = sphi 0, %s165
      %s180 = sphi 0, %s166
      %s184 = sphi 0, %s184
      %s186 = sphi 0, %s184
      %s187 = sphi 0, %s186
      %s201 = sphi 0, %s187
      %s205 = sphi 0, %s205
      %s207 = sphi 0, %s205
      %s208 = sphi 0, %s207
      %s222 = sphi 0, %s208
      %s226 = sphi 0, %s226
      %s228 = sphi 0, %s226
      %s229 = sphi 0, %s228
      %s243 = sphi 0, %s229
      %s251 = sphi 0, %s253
      %s254 = sphi 0, %s251
      %s255 = sphi 0, %s254
      %s271 = sphi 0, %s255
    $region4: #{tpu_custom_call.1} parent=1 // loop_header_branch
      %21 = sbr.rel (%p19) target = $region8
    $region5: #{tpu_custom_call.1} parent=1 // loop_body
      %s23 = ssub.s32 %s18, 1
      %s24 = ssub.s32 %s18, 2
      %s31 = sadd.s32 1, %s26
      %p32 = scmp.ge.s32.totalorder %s31, 2
      %s33 = scalar_select %p32, 0, %s31
      %s34 = sadd.s32 1, %s25
      %s35 = scalar_select %p32, %s34, %s25
      %p36 = scmp.ge.s32.totalorder %s35, 2
      %s37 = scalar_select %p36, 0, %s35
      %s38 = ssub.s32 %s25, %s37
      %p39 = scmp.eq.s32.totalorder %s38, 0
      %s41 = sadd.s32 %s40, 1
      %s42 = scalar_select %p39, %s40, %s41
      %p45 = pneg %p39
      %p46 = scmp.eq.s32.totalorder %s18, 3
      %p47 = por %p45, %p46
      %p48 = scmp.ne.s32.totalorder %s40, %s43
      %p49 = scmp.eq.s32.totalorder %s18, 0
      %p50 = por %p48, %p49
      %p51 = scmp.ne.s32.totalorder %s40, %s43
      %p52 = scmp.eq.s32.totalorder %s23, 3
      %p53 = por %p51, %p52
      %p54 = scmp.ne.s32.totalorder %s43, %s44
      %p55 = scmp.eq.s32.totalorder %s23, 0
      %p56 = por %p54, %p55
      %p57 = scmp.ne.s32.totalorder %s43, %s44
      %p58 = scmp.eq.s32.totalorder %s24, 3
      %p59 = por %p57, %p58
      %p61 = scmp.ne.s32.totalorder %s44, %s60
      %p62 = scmp.eq.s32.totalorder %s24, 0
      %p63 = por %p61, %p62
      %s64 = ssub.s32 %s25, %s37
      %p65 = scmp.eq.s32.totalorder %s64, 0
      %s67 = sadd.s32 %s66, 1
      %s68 = scalar_select %p65, %s66, %s67
      %p71 = pneg %p65
      %p72 = scmp.eq.s32.totalorder %s18, 3
      %p73 = por %p71, %p72
      %p74 = scmp.ne.s32.totalorder %s66, %s69
      %p75 = scmp.eq.s32.totalorder %s18, 0
      %p76 = por %p74, %p75
      %p77 = scmp.ne.s32.totalorder %s66, %s69
      %p78 = scmp.eq.s32.totalorder %s23, 3
      %p79 = por %p77, %p78
      %p80 = scmp.ne.s32.totalorder %s69, %s70
      %p81 = scmp.eq.s32.totalorder %s23, 0
      %p82 = por %p80, %p81
      %p83 = scmp.ne.s32.totalorder %s69, %s70
      %p84 = scmp.eq.s32.totalorder %s24, 3
      %p85 = por %p83, %p84
      %p87 = scmp.ne.s32.totalorder %s70, %s86
      %p88 = scmp.eq.s32.totalorder %s24, 0
      %p89 = por %p87, %p88
      %s90 = ssub.s32 %s26, %s33
      %p91 = scmp.eq.s32.totalorder %s90, 0
      %s93 = sadd.s32 %s92, 1
      %s94 = scalar_select %p91, %s92, %s93
      %p97 = pneg %p91
      %p98 = scmp.eq.s32.totalorder %s18, 3
      %p99 = por %p97, %p98
      %p100 = scmp.ne.s32.totalorder %s92, %s95
      %p101 = scmp.eq.s32.totalorder %s18, 0
      %p102 = por %p100, %p101
      %p103 = scmp.ne.s32.totalorder %s92, %s95
      %p104 = scmp.eq.s32.totalorder %s23, 3
      %p105 = por %p103, %p104
      %p106 = scmp.ne.s32.totalorder %s95, %s96
      %p107 = scmp.eq.s32.totalorder %s23, 0
      %p108 = por %p106, %p107
      %p109 = scmp.ne.s32.totalorder %s95, %s96
      %p110 = scmp.eq.s32.totalorder %s24, 3
      %p111 = por %p109, %p110
      %p113 = scmp.ne.s32.totalorder %s96, %s112
      %p114 = scmp.eq.s32.totalorder %s24, 0
      %p115 = por %p113, %p114
      %s116 = ssub.s32 %s26, %s33
      %p117 = scmp.eq.s32.totalorder %s116, 0
      %s119 = sadd.s32 %s118, 1
      %s120 = scalar_select %p117, %s118, %s119
      %p123 = pneg %p117
      %p124 = scmp.eq.s32.totalorder %s18, 3
      %p125 = por %p123, %p124
      %p126 = scmp.ne.s32.totalorder %s118, %s121
      %p127 = scmp.eq.s32.totalorder %s18, 0
      %p128 = por %p126, %p127
      %p129 = scmp.ne.s32.totalorder %s118, %s121
      %p130 = scmp.eq.s32.totalorder %s23, 3
      %p131 = por %p129, %p130
      %p132 = scmp.ne.s32.totalorder %s121, %s122
      %p133 = scmp.eq.s32.totalorder %s23, 0
      %p134 = por %p132, %p133
      %p135 = scmp.ne.s32.totalorder %s121, %s122
      %p136 = scmp.eq.s32.totalorder %s24, 3
      %p137 = por %p135, %p136
      %p139 = scmp.ne.s32.totalorder %s122, %s138
      %p140 = scmp.eq.s32.totalorder %s24, 0
      %p141 = por %p139, %p140
      %s143 = sadd.s32 %s142, 1
      %p146 = scmp.eq.s32.totalorder %s18, 3
      %p147 = scmp.ne.s32.totalorder %s142, %s144
      %p148 = scmp.eq.s32.totalorder %s18, 0
      %p149 = por %p147, %p148
      %p150 = scmp.ne.s32.totalorder %s142, %s144
      %p151 = scmp.eq.s32.totalorder %s23, 3
      %p152 = por %p150, %p151
      %p153 = scmp.ne.s32.totalorder %s144, %s145
      %p154 = scmp.eq.s32.totalorder %s23, 0
      %p155 = por %p153, %p154
      %p156 = scmp.ne.s32.totalorder %s144, %s145
      %p157 = scmp.eq.s32.totalorder %s24, 3
      %p158 = por %p156, %p157
      %p160 = scmp.ne.s32.totalorder %s145, %s159
      %p161 = scmp.eq.s32.totalorder %s24, 0
      %p162 = por %p160, %p161
      %s164 = sadd.s32 %s163, 1
      %p167 = scmp.eq.s32.totalorder %s18, 3
      %p168 = scmp.ne.s32.totalorder %s163, %s165
      %p169 = scmp.eq.s32.totalorder %s18, 0
      %p170 = por %p168, %p169
      %p171 = scmp.ne.s32.totalorder %s163, %s165
      %p172 = scmp.eq.s32.totalorder %s23, 3
      %p173 = por %p171, %p172
      %p174 = scmp.ne.s32.totalorder %s165, %s166
      %p175 = scmp.eq.s32.totalorder %s23, 0
      %p176 = por %p174, %p175
      %p177 = scmp.ne.s32.totalorder %s165, %s166
      %p178 = scmp.eq.s32.totalorder %s24, 3
      %p179 = por %p177, %p178
      %p181 = scmp.ne.s32.totalorder %s166, %s180
      %p182 = scmp.eq.s32.totalorder %s24, 0
      %p183 = por %p181, %p182
      %s185 = sadd.s32 %s184, 1
      %p188 = scmp.eq.s32.totalorder %s18, 3
      %p189 = scmp.ne.s32.totalorder %s184, %s186
      %p190 = scmp.eq.s32.totalorder %s18, 0
      %p191 = por %p189, %p190
      %p192 = scmp.ne.s32.totalorder %s184, %s186
      %p193 = scmp.eq.s32.totalorder %s23, 3
      %p194 = por %p192, %p193
      %p195 = scmp.ne.s32.totalorder %s186, %s187
      %p196 = scmp.eq.s32.totalorder %s23, 0
      %p197 = por %p195, %p196
      %p198 = scmp.ne.s32.totalorder %s186, %s187
      %p199 = scmp.eq.s32.totalorder %s24, 3
      %p200 = por %p198, %p199
      %p202 = scmp.ne.s32.totalorder %s187, %s201
      %p203 = scmp.eq.s32.totalorder %s24, 0
      %p204 = por %p202, %p203
      %s206 = sadd.s32 %s205, 1
      %p209 = scmp.eq.s32.totalorder %s18, 3
      %p210 = scmp.ne.s32.totalorder %s205, %s207
      %p211 = scmp.eq.s32.totalorder %s18, 0
      %p212 = por %p210, %p211
      %p213 = scmp.ne.s32.totalorder %s205, %s207
      %p214 = scmp.eq.s32.totalorder %s23, 3
      %p215 = por %p213, %p214
      %p216 = scmp.ne.s32.totalorder %s207, %s208
      %p217 = scmp.eq.s32.totalorder %s23, 0
      %p218 = por %p216, %p217
      %p219 = scmp.ne.s32.totalorder %s207, %s208
      %p220 = scmp.eq.s32.totalorder %s24, 3
      %p221 = por %p219, %p220
      %p223 = scmp.ne.s32.totalorder %s208, %s222
      %p224 = scmp.eq.s32.totalorder %s24, 0
      %p225 = por %p223, %p224
      %s227 = sadd.s32 %s226, 1
      %p230 = scmp.eq.s32.totalorder %s18, 3
      %p231 = scmp.ne.s32.totalorder %s226, %s228
      %p232 = scmp.eq.s32.totalorder %s18, 0
      %p233 = por %p231, %p232
      %p234 = scmp.ne.s32.totalorder %s226, %s228
      %p235 = scmp.eq.s32.totalorder %s23, 3
      %p236 = por %p234, %p235
      %p237 = scmp.ne.s32.totalorder %s228, %s229
      %p238 = scmp.eq.s32.totalorder %s23, 0
      %p239 = por %p237, %p238
      %p240 = scmp.ne.s32.totalorder %s228, %s229
      %p241 = scmp.eq.s32.totalorder %s24, 3
      %p242 = por %p240, %p241
      %p244 = scmp.ne.s32.totalorder %s229, %s243
      %p245 = scmp.eq.s32.totalorder %s24, 0
      %p246 = por %p244, %p245
      %s247 = ssub.s32 %s25, %s37
      %s248 = ssub.s32 %s26, %s33
      %s249 = sor.u32 %s247, %s248
      %p250 = scmp.eq.s32.totalorder %s249, 0
      %s252 = sadd.s32 %s251, 1
      %s253 = scalar_select %p250, %s251, %s252
      %p256 = pneg %p250
      %p257 = scmp.eq.s32.totalorder %s18, 3
      %p258 = por %p256, %p257
      %p259 = scmp.ne.s32.totalorder %s251, %s254
      %p260 = scmp.eq.s32.totalorder %s18, 0
      %p261 = por %p259, %p260
      %p262 = scmp.ne.s32.totalorder %s251, %s254
      %p263 = scmp.eq.s32.totalorder %s23, 3
      %p264 = por %p262, %p263
      %p265 = scmp.ne.s32.totalorder %s254, %s255
      %p266 = scmp.eq.s32.totalorder %s23, 0
      %p267 = por %p265, %p266
      %p268 = scmp.ne.s32.totalorder %s254, %s255
      %p269 = scmp.eq.s32.totalorder %s24, 3
      %p270 = por %p268, %p269
      %p272 = scmp.ne.s32.totalorder %s255, %s271
      %p273 = scmp.eq.s32.totalorder %s24, 0
      %p274 = por %p272, %p273
      %p275 = scmp.le.s32.totalorder 1, %s18
      %p276 = scmp.lt.s32.totalorder %s18, 5
      %p277 = pnand %p275, %p276
      %p278 = pneg %p277
      // Predicated region
      $region9: #{tpu_custom_call.1} parent=5 // pred_check
        _
      $region10: #{tpu_custom_call.1} parent=5 // pred_check_branch
        %280 = sbr.rel (%p277) target = $region12
      $region11: #{tpu_custom_call.1} parent=5 // pred_region
        %s281 = ssub.s32 %s18, 1
        // Predicated region
        $region13: #{tpu_custom_call.1} parent=11 // pred_check
          %p282 = pneg %p155
        $region14: #{tpu_custom_call.1} parent=11 // pred_check_branch
          %284 = sbr.rel (%p282) target = $region16
        $region15: #{tpu_custom_call.1} parent=11 // pred_region
          _
        $region16: #{tpu_custom_call.1} parent=11 // pred_fallthru
          _
        // Predicated region
        $region17: #{tpu_custom_call.1} parent=11 // pred_check
          %p285 = pneg %p176
        $region18: #{tpu_custom_call.1} parent=11 // pred_check_branch
          %287 = sbr.rel (%p285) target = $region20
        $region19: #{tpu_custom_call.1} parent=11 // pred_region
          _
        $region20: #{tpu_custom_call.1} parent=11 // pred_fallthru
          _
        // Predicated region
        $region21: #{tpu_custom_call.1} parent=11 // pred_check
          %p288 = pneg %p197
        $region22: #{tpu_custom_call.1} parent=11 // pred_check_branch
          %290 = sbr.rel (%p288) target = $region24
        $region23: #{tpu_custom_call.1} parent=11 // pred_region
          _
        $region24: #{tpu_custom_call.1} parent=11 // pred_fallthru
          _
        // Predicated region
        $region25: #{tpu_custom_call.1} parent=11 // pred_check
          %p291 = pneg %p218
        $region26: #{tpu_custom_call.1} parent=11 // pred_check_branch
          %293 = sbr.rel (%p291) target = $region28
        $region27: #{tpu_custom_call.1} parent=11 // pred_region
          _
        $region28: #{tpu_custom_call.1} parent=11 // pred_fallthru
          _
        // Predicated region
        $region29: #{tpu_custom_call.1} parent=11 // pred_check
          %p294 = pneg %p239
        $region30: #{tpu_custom_call.1} parent=11 // pred_check_branch
          %296 = sbr.rel (%p294) target = $region32
        $region31: #{tpu_custom_call.1} parent=11 // pred_region
          _
        $region32: #{tpu_custom_call.1} parent=11 // pred_fallthru
          _
      $region12: #{tpu_custom_call.1} parent=5 // pred_fallthru
        _
      %p297 = scmp.lt.s32.totalorder %s18, 4
      // Predicated region
      $region33: #{tpu_custom_call.1} parent=5 // pred_check
        %p298 = pneg %p297
      $region34: #{tpu_custom_call.1} parent=5 // pred_check_branch
        %300 = sbr.rel (%p298) target = $region36
      $region35: #{tpu_custom_call.1} parent=5 // pred_region
        // Predicated region
        $region37: #{tpu_custom_call.1} parent=35 // pred_check
          %p301 = pneg %p50
        $region38: #{tpu_custom_call.1} parent=35 // pred_check_branch
          %303 = sbr.rel (%p301) target = $region40
        $region39: #{tpu_custom_call.1} parent=35 // pred_region
          %p304 = scmp.lt.s32.totalorder %s25, 1
          %s305 = scalar_select %p304, %s25, 1
          %s306 = smul.addr %s305, 3
          %s307 = smul.addr %s306, 8
          %s308 = scalar_lea.vmem %s0, %s307
        $region40: #{tpu_custom_call.1} parent=35 // pred_fallthru
          _
        // Predicated region
        $region41: #{tpu_custom_call.1} parent=35 // pred_check
          %p309 = pneg %p76
        $region42: #{tpu_custom_call.1} parent=35 // pred_check_branch
          %311 = sbr.rel (%p309) target = $region44
        $region43: #{tpu_custom_call.1} parent=35 // pred_region
          %p312 = scmp.lt.s32.totalorder %s25, 1
          %s313 = scalar_select %p312, %s25, 1
          %s314 = smul.addr %s313, 54
          %s315 = smul.addr %s314, 8
          %s316 = scalar_lea.vmem %s1, %s315
        $region44: #{tpu_custom_call.1} parent=35 // pred_fallthru
          _
        // Predicated region
        $region45: #{tpu_custom_call.1} parent=35 // pred_check
          %p317 = pneg %p102
        $region46: #{tpu_custom_call.1} parent=35 // pred_check_branch
          %319 = sbr.rel (%p317) target = $region48
        $region47: #{tpu_custom_call.1} parent=35 // pred_region
          %s320 = smul.u32 16, %s26
          %p321 = scmp.lt.s32.totalorder %s320, 31
          %s322 = scalar_select %p321, %s320, 31
          %s323 = smul.addr %s322, 8
          %s324 = scalar_lea.vmem %s2, %s323
          %s325 = smul.u32 16, %s26
        $region48: #{tpu_custom_call.1} parent=35 // pred_fallthru
          _
        // Predicated region
        $region49: #{tpu_custom_call.1} parent=35 // pred_check
          %p326 = pneg %p128
        $region50: #{tpu_custom_call.1} parent=35 // pred_check_branch
          %328 = sbr.rel (%p326) target = $region52
        $region51: #{tpu_custom_call.1} parent=35 // pred_region
          %s329 = smul.u32 16, %s26
          %p330 = scmp.lt.s32.totalorder %s329, 31
          %s331 = scalar_select %p330, %s329, 31
          %s332 = smul.addr %s331, 8
          %s333 = scalar_lea.vmem %s3, %s332
          %s334 = smul.u32 16, %s26
        $region52: #{tpu_custom_call.1} parent=35 // pred_fallthru
          _
      $region36: #{tpu_custom_call.1} parent=5 // pred_fallthru
        _
      %p335 = scmp.le.s32.totalorder 1, %s18
      %p336 = scmp.lt.s32.totalorder %s18, 5
      %p337 = pnand %p335, %p336
      %p338 = pneg %p337
      // Predicated region
      $region53: #{tpu_custom_call.1} parent=5 // pred_check
        _
      $region54: #{tpu_custom_call.1} parent=5 // pred_check_branch
        %340 = sbr.rel (%p337) target = $region56
      $region55: #{tpu_custom_call.1} parent=5 // pred_region
        %s341 = ssub.s32 %s18, 1
        %p342 = scmp.lt.s32.totalorder %s27, 1
        %s343 = scalar_select %p342, %s27, 1
        %s344 = smul.addr %s343, 3
        %s345 = smul.addr %s344, 8
        %s346 = scalar_lea.vmem %s0, %s345
        %p347 = pneg %p56
        %p348 = pneg %p53
        %p349 = scmp.lt.s32.totalorder %s27, 1
        %s350 = scalar_select %p349, %s27, 1
        %s351 = smul.addr %s350, 54
        %s352 = smul.addr %s351, 8
        %s353 = scalar_lea.vmem %s1, %s352
        %p354 = pneg %p82
        %p355 = pneg %p79
        %s356 = smul.u32 16, %s28
        %p357 = scmp.lt.s32.totalorder %s356, 31
        %s358 = scalar_select %p357, %s356, 31
        %s359 = smul.addr %s358, 8
        %s360 = scalar_lea.vmem %s2, %s359
        %p361 = pneg %p108
        %p362 = pneg %p105
        %s363 = smul.u32 16, %s28
        %p364 = scmp.lt.s32.totalorder %s363, 31
        %s365 = scalar_select %p364, %s363, 31
        %s366 = smul.addr %s365, 8
        %s367 = scalar_lea.vmem %s3, %s366
        %p368 = pneg %p134
        %p369 = pneg %p131
        %p370 = pneg %p155
        %p371 = pneg %p152
        %p372 = pneg %p176
        %p373 = pneg %p173
        %p374 = pneg %p197
        %p375 = pneg %p194
        %p376 = pneg %p218
        %p377 = pneg %p215
        %p378 = pneg %p239
        %p379 = pneg %p236
        %p380 = pneg %p267
        %p381 = pneg %p264
        %s382 = sand.u32 %s254, 1
        %s383 = scalar_lea.sflag [#allocation3], %s382
        %s384 = sand.u32 %s254, 1
        %s385 = smul.addr %s384, 8
        %s386 = scalar_lea.vmem [#allocation2], %s385
        %p387 = scmp.lt.s32.totalorder %s27, 1
        %s388 = scalar_select %p387, %s27, 1
        %s389 = smul.addr %s388, 3
        %s390 = smul.addr %s389, 8
        %s391 = scalar_lea.vmem %s0, %s390
        %p392 = scmp.lt.s32.totalorder %s27, 1
        %s393 = scalar_select %p392, %s27, 1
        %s394 = smul.addr %s393, 54
        %s395 = smul.addr %s394, 8
        %s396 = scalar_lea.vmem %s1, %s395
        %s397 = smul.u32 16, %s28
        %p398 = scmp.lt.s32.totalorder %s397, 31
        %s399 = scalar_select %p398, %s397, 31
        %s400 = smul.addr %s399, 8
        %s401 = scalar_lea.vmem %s2, %s400
        %s402 = smul.u32 16, %s28
        %s403 = smul.u32 16, %s28
        %p404 = scmp.lt.s32.totalorder %s403, 31
        %s405 = scalar_select %p404, %s403, 31
        %s406 = smul.addr %s405, 8
        %s407 = scalar_lea.vmem %s3, %s406
        %s408 = smul.u32 16, %s28
        %s409 = smul.u32 %s28, 8
        %s410 = smul.u32 %s409, 24
        %s411 = scalar_lea.vmem %s396, %s410
        %v412 = vld [vmem:[%s411] sm:$0xff]
        %v413 = vld [vmem:[%s411 + $0x8] sm:$0xff]
        %v414 = vld [vmem:[%s411 + $0x10] sm:$0x3]
        %v415 = vld [vmem:[%s411 + $0x18] sm:$0xff]
        %v416 = vld [vmem:[%s411 + $0x20] sm:$0xff]
        %v417 = vld [vmem:[%s411 + $0x28] sm:$0x3]
        %v418 = vld [vmem:[%s411 + $0x30] sm:$0xff]
        %v419 = vld [vmem:[%s411 + $0x38] sm:$0xff]
        %v420 = vld [vmem:[%s411 + $0x40] sm:$0x3]
        %v421 = vld [vmem:[%s411 + $0x48] sm:$0xff]
        %v422 = vld [vmem:[%s411 + $0x50] sm:$0xff]
        %v423 = vld [vmem:[%s411 + $0x58] sm:$0x3]
        %v424 = vld [vmem:[%s411 + $0x60] sm:$0xff]
        %v425 = vld [vmem:[%s411 + $0x68] sm:$0xff]
        %v426 = vld [vmem:[%s411 + $0x70] sm:$0x3]
        %v427 = vld [vmem:[%s411 + $0x78] sm:$0xff]
        %v428 = vld [vmem:[%s411 + $0x80] sm:$0xff]
        %v429 = vld [vmem:[%s411 + $0x88] sm:$0x3]
        %v430 = vld [vmem:[%s411 + $0x90] sm:$0xff]
        %v431 = vld [vmem:[%s411 + $0x98] sm:$0xff]
        %v432 = vld [vmem:[%s411 + $0xa0] sm:$0x3]
        %v433 = vld [vmem:[%s411 + $0xa8] sm:$0xff]
        %v434 = vld [vmem:[%s411 + $0xb0] sm:$0xff]
        %v435 = vld [vmem:[%s411 + $0xb8] sm:$0x3]
        %v436 = vld [vmem:[%s411 + $0xc0] sm:$0xff]
        %v437 = vld [vmem:[%s411 + $0xc8] sm:$0xff]
        %v438 = vld [vmem:[%s411 + $0xd0] sm:$0x3]
        %v439 = vld [vmem:[%s411 + $0xd8] sm:$0xff]
        %v440 = vld [vmem:[%s411 + $0xe0] sm:$0xff]
        %v441 = vld [vmem:[%s411 + $0xe8] sm:$0x3]
        %vm466 = vcmask 1046528
        %v467 = vrot.slane %v412, 1
        %v468 = vrot.slane %v413, 1
        %v469 = vsel %vm466, %v467, %v468
        %v470 = vrot.slane %v414, 1
        %v471 = vsel %vm466, %v468, %v470
        %v472 = vrot.slane %v415, 1
        %v473 = vrot.slane %v416, 1
        %v474 = vsel %vm466, %v472, %v473
        %v475 = vrot.slane %v417, 1
        %v476 = vsel %vm466, %v473, %v475
        %v477 = vrot.slane %v418, 1
        %v478 = vrot.slane %v419, 1
        %v479 = vsel %vm466, %v477, %v478
        %v480 = vrot.slane %v420, 1
        %v481 = vsel %vm466, %v478, %v480
        %v482 = vrot.slane %v421, 1
        %v483 = vrot.slane %v422, 1
        %v484 = vsel %vm466, %v482, %v483
        %v485 = vrot.slane %v423, 1
        %v486 = vsel %vm466, %v483, %v485
        %v487 = vrot.slane %v424, 1
        %v488 = vrot.slane %v425, 1
        %v489 = vsel %vm466, %v487, %v488
        %v490 = vrot.slane %v426, 1
        %v491 = vsel %vm466, %v488, %v490
        %v492 = vrot.slane %v427, 1
        %v493 = vrot.slane %v428, 1
        %v494 = vsel %vm466, %v492, %v493
        %v495 = vrot.slane %v429, 1
        %v496 = vsel %vm466, %v493, %v495
        %v497 = vrot.slane %v430, 1
        %v498 = vrot.slane %v431, 1
        %v499 = vsel %vm466, %v497, %v498
        %v500 = vrot.slane %v432, 1
        %v501 = vsel %vm466, %v498, %v500
        %v502 = vrot.slane %v433, 1
        %v503 = vrot.slane %v434, 1
        %v504 = vsel %vm466, %v502, %v503
        %v505 = vrot.slane %v435, 1
        %v506 = vsel %vm466, %v503, %v505
        %vm507 = vcmask 1045504
        %v508 = vrot.slane %v412, 2
        %v509 = vrot.slane %v413, 2
        %v510 = vsel %vm507, %v508, %v509
        %v511 = vrot.slane %v414, 2
        %v512 = vsel %vm507, %v509, %v511
        %v513 = vrot.slane %v415, 2
        %v514 = vrot.slane %v416, 2
        %v515 = vsel %vm507, %v513, %v514
        %v516 = vrot.slane %v417, 2
        %v517 = vsel %vm507, %v514, %v516
        %v518 = vrot.slane %v418, 2
        %v519 = vrot.slane %v419, 2
        %v520 = vsel %vm507, %v518, %v519
        %v521 = vrot.slane %v420, 2
        %v522 = vsel %vm507, %v519, %v521
        %v523 = vrot.slane %v421, 2
        %v524 = vrot.slane %v422, 2
        %v525 = vsel %vm507, %v523, %v524
        %v526 = vrot.slane %v423, 2
        %v527 = vsel %vm507, %v524, %v526
        %v528 = vrot.slane %v424, 2
        %v529 = vrot.slane %v425, 2
        %v530 = vsel %vm507, %v528, %v529
        %v531 = vrot.slane %v426, 2
        %v532 = vsel %vm507, %v529, %v531
        %v533 = vrot.slane %v427, 2
        %v534 = vrot.slane %v428, 2
        %v535 = vsel %vm507, %v533, %v534
        %v536 = vrot.slane %v429, 2
        %v537 = vsel %vm507, %v534, %v536
        %v538 = vrot.slane %v430, 2
        %v539 = vrot.slane %v431, 2
        %v540 = vsel %vm507, %v538, %v539
        %v541 = vrot.slane %v432, 2
        %v542 = vsel %vm507, %v539, %v541
        %v543 = vrot.slane %v433, 2
        %v544 = vrot.slane %v434, 2
        %v545 = vsel %vm507, %v543, %v544
        %v546 = vrot.slane %v435, 2
        %v547 = vsel %vm507, %v544, %v546
        %v551 = vrot.slane %v436, 1
        %v552 = vrot.slane %v437, 1
        %v553 = vsel %vm466, %v551, %v552
        %v554 = vrot.slane %v438, 1
        %v555 = vsel %vm466, %v552, %v554
        %v556 = vrot.slane %v436, 2
        %v557 = vrot.slane %v437, 2
        %v558 = vsel %vm507, %v556, %v557
        %v559 = vrot.slane %v438, 2
        %v560 = vsel %vm507, %v557, %v559
        %v564 = vrot.slane %v439, 1
        %v565 = vrot.slane %v440, 1
        %v566 = vsel %vm466, %v564, %v565
        %v567 = vrot.slane %v441, 1
        %v568 = vsel %vm466, %v565, %v567
        %v569 = vrot.slane %v439, 2
        %v570 = vrot.slane %v440, 2
        %v571 = vsel %vm507, %v569, %v570
        %v572 = vrot.slane %v441, 2
        %v573 = vsel %vm507, %v570, %v572
        %574 = vrot.lane.b32.xlu0 %v469, 4
        %v575 = vpop.permute.xlu0 %574
        %576 = vrot.lane.b32.xlu0 %v471, 4
        %v577 = vpop.permute.xlu0 %576
        %578 = vrot.lane.b32.xlu0 %v474, 4
        %v579 = vpop.permute.xlu0 %578
        %580 = vrot.lane.b32.xlu0 %v476, 4
        %v581 = vpop.permute.xlu0 %580
        %582 = vrot.lane.b32.xlu0 %v479, 4
        %v583 = vpop.permute.xlu0 %582
        %584 = vrot.lane.b32.xlu0 %v481, 4
        %v585 = vpop.permute.xlu0 %584
        %586 = vrot.lane.b32.xlu0 %v484, 4
        %v587 = vpop.permute.xlu0 %586
        %588 = vrot.lane.b32.xlu0 %v486, 4
        %v589 = vpop.permute.xlu0 %588
        %590 = vrot.lane.b32.xlu0 %v489, 4
        %v591 = vpop.permute.xlu0 %590
        %592 = vrot.lane.b32.xlu0 %v491, 4
        %v593 = vpop.permute.xlu0 %592
        %594 = vrot.lane.b32.xlu0 %v494, 4
        %v595 = vpop.permute.xlu0 %594
        %596 = vrot.lane.b32.xlu0 %v496, 4
        %v597 = vpop.permute.xlu0 %596
        %598 = vrot.lane.b32.xlu0 %v499, 4
        %v599 = vpop.permute.xlu0 %598
        %600 = vrot.lane.b32.xlu0 %v501, 4
        %v601 = vpop.permute.xlu0 %600
        %602 = vrot.lane.b32.xlu0 %v504, 4
        %v603 = vpop.permute.xlu0 %602
        %604 = vrot.lane.b32.xlu0 %v506, 4
        %v605 = vpop.permute.xlu0 %604
        %622 = vrot.lane.b32.xlu0 %v510, 8
        %v623 = vpop.permute.xlu0 %622
        %624 = vrot.lane.b32.xlu0 %v512, 8
        %v625 = vpop.permute.xlu0 %624
        %626 = vrot.lane.b32.xlu0 %v515, 8
        %v627 = vpop.permute.xlu0 %626
        %628 = vrot.lane.b32.xlu0 %v517, 8
        %v629 = vpop.permute.xlu0 %628
        %630 = vrot.lane.b32.xlu0 %v520, 8
        %v631 = vpop.permute.xlu0 %630
        %632 = vrot.lane.b32.xlu0 %v522, 8
        %v633 = vpop.permute.xlu0 %632
        %634 = vrot.lane.b32.xlu0 %v525, 8
        %v635 = vpop.permute.xlu0 %634
        %636 = vrot.lane.b32.xlu0 %v527, 8
        %v637 = vpop.permute.xlu0 %636
        %638 = vrot.lane.b32.xlu0 %v530, 8
        %v639 = vpop.permute.xlu0 %638
        %640 = vrot.lane.b32.xlu0 %v532, 8
        %v641 = vpop.permute.xlu0 %640
        %642 = vrot.lane.b32.xlu0 %v535, 8
        %v643 = vpop.permute.xlu0 %642
        %644 = vrot.lane.b32.xlu0 %v537, 8
        %v645 = vpop.permute.xlu0 %644
        %646 = vrot.lane.b32.xlu0 %v540, 8
        %v647 = vpop.permute.xlu0 %646
        %648 = vrot.lane.b32.xlu0 %v542, 8
        %v649 = vpop.permute.xlu0 %648
        %650 = vrot.lane.b32.xlu0 %v545, 8
        %v651 = vpop.permute.xlu0 %650
        %652 = vrot.lane.b32.xlu0 %v547, 8
        %v653 = vpop.permute.xlu0 %652
        %670 = vrot.lane.b32.xlu0 %v415, 12
        %v671 = vpop.permute.xlu0 %670
        %672 = vrot.lane.b32.xlu0 %v416, 12
        %v673 = vpop.permute.xlu0 %672
        %674 = vrot.lane.b32.xlu0 %v418, 12
        %v675 = vpop.permute.xlu0 %674
        %676 = vrot.lane.b32.xlu0 %v419, 12
        %v677 = vpop.permute.xlu0 %676
        %678 = vrot.lane.b32.xlu0 %v421, 12
        %v679 = vpop.permute.xlu0 %678
        %680 = vrot.lane.b32.xlu0 %v422, 12
        %v681 = vpop.permute.xlu0 %680
        %682 = vrot.lane.b32.xlu0 %v424, 12
        %v683 = vpop.permute.xlu0 %682
        %684 = vrot.lane.b32.xlu0 %v425, 12
        %v685 = vpop.permute.xlu0 %684
        %686 = vrot.lane.b32.xlu0 %v427, 12
        %v687 = vpop.permute.xlu0 %686
        %688 = vrot.lane.b32.xlu0 %v428, 12
        %v689 = vpop.permute.xlu0 %688
        %690 = vrot.lane.b32.xlu0 %v430, 12
        %v691 = vpop.permute.xlu0 %690
        %692 = vrot.lane.b32.xlu0 %v431, 12
        %v693 = vpop.permute.xlu0 %692
        %694 = vrot.lane.b32.xlu0 %v433, 12
        %v695 = vpop.permute.xlu0 %694
        %696 = vrot.lane.b32.xlu0 %v434, 12
        %v697 = vpop.permute.xlu0 %696
        %698 = vrot.lane.b32.xlu0 %v436, 12
        %v699 = vpop.permute.xlu0 %698
        %700 = vrot.lane.b32.xlu0 %v437, 12
        %v701 = vpop.permute.xlu0 %700
        %718 = vrot.lane.b32.xlu0 %v474, 16
        %v719 = vpop.permute.xlu0 %718
        %720 = vrot.lane.b32.xlu0 %v476, 16
        %v721 = vpop.permute.xlu0 %720
        %722 = vrot.lane.b32.xlu0 %v479, 16
        %v723 = vpop.permute.xlu0 %722
        %724 = vrot.lane.b32.xlu0 %v481, 16
        %v725 = vpop.permute.xlu0 %724
        %726 = vrot.lane.b32.xlu0 %v484, 16
        %v727 = vpop.permute.xlu0 %726
        %728 = vrot.lane.b32.xlu0 %v486, 16
        %v729 = vpop.permute.xlu0 %728
        %730 = vrot.lane.b32.xlu0 %v489, 16
        %v731 = vpop.permute.xlu0 %730
        %732 = vrot.lane.b32.xlu0 %v491, 16
        %v733 = vpop.permute.xlu0 %732
        %734 = vrot.lane.b32.xlu0 %v494, 16
        %v735 = vpop.permute.xlu0 %734
        %736 = vrot.lane.b32.xlu0 %v496, 16
        %v737 = vpop.permute.xlu0 %736
        %738 = vrot.lane.b32.xlu0 %v499, 16
        %v739 = vpop.permute.xlu0 %738
        %740 = vrot.lane.b32.xlu0 %v501, 16
        %v741 = vpop.permute.xlu0 %740
        %742 = vrot.lane.b32.xlu0 %v504, 16
        %v743 = vpop.permute.xlu0 %742
        %744 = vrot.lane.b32.xlu0 %v506, 16
        %v745 = vpop.permute.xlu0 %744
        %746 = vrot.lane.b32.xlu0 %v553, 16
        %v747 = vpop.permute.xlu0 %746
        %748 = vrot.lane.b32.xlu0 %v555, 16
        %v749 = vpop.permute.xlu0 %748
        %766 = vrot.lane.b32.xlu0 %v515, 20
        %v767 = vpop.permute.xlu0 %766
        %768 = vrot.lane.b32.xlu0 %v517, 20
        %v769 = vpop.permute.xlu0 %768
        %770 = vrot.lane.b32.xlu0 %v520, 20
        %v771 = vpop.permute.xlu0 %770
        %772 = vrot.lane.b32.xlu0 %v522, 20
        %v773 = vpop.permute.xlu0 %772
        %774 = vrot.lane.b32.xlu0 %v525, 20
        %v775 = vpop.permute.xlu0 %774
        %776 = vrot.lane.b32.xlu0 %v527, 20
        %v777 = vpop.permute.xlu0 %776
        %778 = vrot.lane.b32.xlu0 %v530, 20
        %v779 = vpop.permute.xlu0 %778
        %780 = vrot.lane.b32.xlu0 %v532, 20
        %v781 = vpop.permute.xlu0 %780
        %782 = vrot.lane.b32.xlu0 %v535, 20
        %v783 = vpop.permute.xlu0 %782
        %784 = vrot.lane.b32.xlu0 %v537, 20
        %v785 = vpop.permute.xlu0 %784
        %786 = vrot.lane.b32.xlu0 %v540, 20
        %v787 = vpop.permute.xlu0 %786
        %788 = vrot.lane.b32.xlu0 %v542, 20
        %v789 = vpop.permute.xlu0 %788
        %790 = vrot.lane.b32.xlu0 %v545, 20
        %v791 = vpop.permute.xlu0 %790
        %792 = vrot.lane.b32.xlu0 %v547, 20
        %v793 = vpop.permute.xlu0 %792
        %794 = vrot.lane.b32.xlu0 %v558, 20
        %v795 = vpop.permute.xlu0 %794
        %796 = vrot.lane.b32.xlu0 %v560, 20
        %v797 = vpop.permute.xlu0 %796
        %814 = vrot.lane.b32.xlu0 %v418, 24
        %v815 = vpop.permute.xlu0 %814
        %816 = vrot.lane.b32.xlu0 %v419, 24
        %v817 = vpop.permute.xlu0 %816
        %818 = vrot.lane.b32.xlu0 %v421, 24
        %v819 = vpop.permute.xlu0 %818
        %820 = vrot.lane.b32.xlu0 %v422, 24
        %v821 = vpop.permute.xlu0 %820
        %822 = vrot.lane.b32.xlu0 %v424, 24
        %v823 = vpop.permute.xlu0 %822
        %824 = vrot.lane.b32.xlu0 %v425, 24
        %v825 = vpop.permute.xlu0 %824
        %826 = vrot.lane.b32.xlu0 %v427, 24
        %v827 = vpop.permute.xlu0 %826
        %828 = vrot.lane.b32.xlu0 %v428, 24
        %v829 = vpop.permute.xlu0 %828
        %830 = vrot.lane.b32.xlu0 %v430, 24
        %v831 = vpop.permute.xlu0 %830
        %832 = vrot.lane.b32.xlu0 %v431, 24
        %v833 = vpop.permute.xlu0 %832
        %834 = vrot.lane.b32.xlu0 %v433, 24
        %v835 = vpop.permute.xlu0 %834
        %836 = vrot.lane.b32.xlu0 %v434, 24
        %v837 = vpop.permute.xlu0 %836
        %838 = vrot.lane.b32.xlu0 %v436, 24
        %v839 = vpop.permute.xlu0 %838
        %840 = vrot.lane.b32.xlu0 %v437, 24
        %v841 = vpop.permute.xlu0 %840
        %842 = vrot.lane.b32.xlu0 %v439, 24
        %v843 = vpop.permute.xlu0 %842
        %844 = vrot.lane.b32.xlu0 %v440, 24
        %v845 = vpop.permute.xlu0 %844
        %862 = vrot.lane.b32.xlu0 %v479, 28
        %v863 = vpop.permute.xlu0 %862
        %864 = vrot.lane.b32.xlu0 %v481, 28
        %v865 = vpop.permute.xlu0 %864
        %866 = vrot.lane.b32.xlu0 %v484, 28
        %v867 = vpop.permute.xlu0 %866
        %868 = vrot.lane.b32.xlu0 %v486, 28
        %v869 = vpop.permute.xlu0 %868
        %870 = vrot.lane.b32.xlu0 %v489, 28
        %v871 = vpop.permute.xlu0 %870
        %872 = vrot.lane.b32.xlu0 %v491, 28
        %v873 = vpop.permute.xlu0 %872
        %874 = vrot.lane.b32.xlu0 %v494, 28
        %v875 = vpop.permute.xlu0 %874
        %876 = vrot.lane.b32.xlu0 %v496, 28
        %v877 = vpop.permute.xlu0 %876
        %878 = vrot.lane.b32.xlu0 %v499, 28
        %v879 = vpop.permute.xlu0 %878
        %880 = vrot.lane.b32.xlu0 %v501, 28
        %v881 = vpop.permute.xlu0 %880
        %882 = vrot.lane.b32.xlu0 %v504, 28
        %v883 = vpop.permute.xlu0 %882
        %884 = vrot.lane.b32.xlu0 %v506, 28
        %v885 = vpop.permute.xlu0 %884
        %886 = vrot.lane.b32.xlu0 %v553, 28
        %v887 = vpop.permute.xlu0 %886
        %888 = vrot.lane.b32.xlu0 %v555, 28
        %v889 = vpop.permute.xlu0 %888
        %890 = vrot.lane.b32.xlu0 %v566, 28
        %v891 = vpop.permute.xlu0 %890
        %892 = vrot.lane.b32.xlu0 %v568, 28
        %v893 = vpop.permute.xlu0 %892
        %910 = vrot.lane.b32.xlu0 %v520, 32
        %v911 = vpop.permute.xlu0 %910
        %912 = vrot.lane.b32.xlu0 %v522, 32
        %v913 = vpop.permute.xlu0 %912
        %914 = vrot.lane.b32.xlu0 %v525, 32
        %v915 = vpop.permute.xlu0 %914
        %916 = vrot.lane.b32.xlu0 %v527, 32
        %v917 = vpop.permute.xlu0 %916
        %918 = vrot.lane.b32.xlu0 %v530, 32
        %v919 = vpop.permute.xlu0 %918
        %920 = vrot.lane.b32.xlu0 %v532, 32
        %v921 = vpop.permute.xlu0 %920
        %922 = vrot.lane.b32.xlu0 %v535, 32
        %v923 = vpop.permute.xlu0 %922
        %924 = vrot.lane.b32.xlu0 %v537, 32
        %v925 = vpop.permute.xlu0 %924
        %926 = vrot.lane.b32.xlu0 %v540, 32
        %v927 = vpop.permute.xlu0 %926
        %928 = vrot.lane.b32.xlu0 %v542, 32
        %v929 = vpop.permute.xlu0 %928
        %930 = vrot.lane.b32.xlu0 %v545, 32
        %v931 = vpop.permute.xlu0 %930
        %932 = vrot.lane.b32.xlu0 %v547, 32
        %v933 = vpop.permute.xlu0 %932
        %934 = vrot.lane.b32.xlu0 %v558, 32
        %v935 = vpop.permute.xlu0 %934
        %936 = vrot.lane.b32.xlu0 %v560, 32
        %v937 = vpop.permute.xlu0 %936
        %938 = vrot.lane.b32.xlu0 %v571, 32
        %v939 = vpop.permute.xlu0 %938
        %940 = vrot.lane.b32.xlu0 %v573, 32
        %v941 = vpop.permute.xlu0 %940
        %vm958 = vcmask 31744
        %v959 = vsel %vm958, %v412, %v575
        %v960 = vsel %vm958, %v413, %v577
        %v961 = vsel %vm958, %v415, %v579
        %v962 = vsel %vm958, %v416, %v581
        %v963 = vsel %vm958, %v418, %v583
        %v964 = vsel %vm958, %v419, %v585
        %v965 = vsel %vm958, %v421, %v587
        %v966 = vsel %vm958, %v422, %v589
        %v967 = vsel %vm958, %v424, %v591
        %v968 = vsel %vm958, %v425, %v593
        %v969 = vsel %vm958, %v427, %v595
        %v970 = vsel %vm958, %v428, %v597
        %v971 = vsel %vm958, %v430, %v599
        %v972 = vsel %vm958, %v431, %v601
        %v973 = vsel %vm958, %v433, %v603
        %v974 = vsel %vm958, %v434, %v605
        %vm975 = vcmask 64512
        %v976 = vsel %vm975, %v959, %v623
        %v977 = vsel %vm975, %v960, %v625
        %v978 = vsel %vm975, %v961, %v627
        %v979 = vsel %vm975, %v962, %v629
        %v980 = vsel %vm975, %v963, %v631
        %v981 = vsel %vm975, %v964, %v633
        %v982 = vsel %vm975, %v965, %v635
        %v983 = vsel %vm975, %v966, %v637
        %v984 = vsel %vm975, %v967, %v639
        %v985 = vsel %vm975, %v968, %v641
        %v986 = vsel %vm975, %v969, %v643
        %v987 = vsel %vm975, %v970, %v645
        %v988 = vsel %vm975, %v971, %v647
        %v989 = vsel %vm975, %v972, %v649
        %v990 = vsel %vm975, %v973, %v651
        %v991 = vsel %vm975, %v974, %v653
        %vm992 = vcmask 97280
        %v993 = vsel %vm992, %v976, %v671
        %v994 = vsel %vm992, %v977, %v673
        %v995 = vsel %vm992, %v978, %v675
        %v996 = vsel %vm992, %v979, %v677
        %v997 = vsel %vm992, %v980, %v679
        %v998 = vsel %vm992, %v981, %v681
        %v999 = vsel %vm992, %v982, %v683
        %v1000 = vsel %vm992, %v983, %v685
        %v1001 = vsel %vm992, %v984, %v687
        %v1002 = vsel %vm992, %v985, %v689
        %v1003 = vsel %vm992, %v986, %v691
        %v1004 = vsel %vm992, %v987, %v693
        %v1005 = vsel %vm992, %v988, %v695
        %v1006 = vsel %vm992, %v989, %v697
        %v1007 = vsel %vm992, %v990, %v699
        %v1008 = vsel %vm992, %v991, %v701
        %vm1009 = vcmask 130048
        %v1010 = vsel %vm1009, %v993, %v719
        %v1011 = vsel %vm1009, %v994, %v721
        %v1012 = vsel %vm1009, %v995, %v723
        %v1013 = vsel %vm1009, %v996, %v725
        %v1014 = vsel %vm1009, %v997, %v727
        %v1015 = vsel %vm1009, %v998, %v729
        %v1016 = vsel %vm1009, %v999, %v731
        %v1017 = vsel %vm1009, %v1000, %v733
        %v1018 = vsel %vm1009, %v1001, %v735
        %v1019 = vsel %vm1009, %v1002, %v737
        %v1020 = vsel %vm1009, %v1003, %v739
        %v1021 = vsel %vm1009, %v1004, %v741
        %v1022 = vsel %vm1009, %v1005, %v743
        %v1023 = vsel %vm1009, %v1006, %v745
        %v1024 = vsel %vm1009, %v1007, %v747
        %v1025 = vsel %vm1009, %v1008, %v749
        %vm1026 = vcmask 162816
        %v1027 = vsel %vm1026, %v1010, %v767
        %v1028 = vsel %vm1026, %v1011, %v769
        %v1029 = vsel %vm1026, %v1012, %v771
        %v1030 = vsel %vm1026, %v1013, %v773
        %v1031 = vsel %vm1026, %v1014, %v775
        %v1032 = vsel %vm1026, %v1015, %v777
        %v1033 = vsel %vm1026, %v1016, %v779
        %v1034 = vsel %vm1026, %v1017, %v781
        %v1035 = vsel %vm1026, %v1018, %v783
        %v1036 = vsel %vm1026, %v1019, %v785
        %v1037 = vsel %vm1026, %v1020, %v787
        %v1038 = vsel %vm1026, %v1021, %v789
        %v1039 = vsel %vm1026, %v1022, %v791
        %v1040 = vsel %vm1026, %v1023, %v793
        %v1041 = vsel %vm1026, %v1024, %v795
        %v1042 = vsel %vm1026, %v1025, %v797
        %vm1043 = vcmask 195584
        %v1044 = vsel %vm1043, %v1027, %v815
        %v1045 = vsel %vm1043, %v1028, %v817
        %v1046 = vsel %vm1043, %v1029, %v819
        %v1047 = vsel %vm1043, %v1030, %v821
        %v1048 = vsel %vm1043, %v1031, %v823
        %v1049 = vsel %vm1043, %v1032, %v825
        %v1050 = vsel %vm1043, %v1033, %v827
        %v1051 = vsel %vm1043, %v1034, %v829
        %v1052 = vsel %vm1043, %v1035, %v831
        %v1053 = vsel %vm1043, %v1036, %v833
        %v1054 = vsel %vm1043, %v1037, %v835
        %v1055 = vsel %vm1043, %v1038, %v837
        %v1056 = vsel %vm1043, %v1039, %v839
        %v1057 = vsel %vm1043, %v1040, %v841
        %v1058 = vsel %vm1043, %v1041, %v843
        %v1059 = vsel %vm1043, %v1042, %v845
        %vm1060 = vcmask 228352
        %v1061 = vsel %vm1060, %v1044, %v863
        %v1062 = vsel %vm1060, %v1045, %v865
        %v1063 = vsel %vm1060, %v1046, %v867
        %v1064 = vsel %vm1060, %v1047, %v869
        %v1065 = vsel %vm1060, %v1048, %v871
        %v1066 = vsel %vm1060, %v1049, %v873
        %v1067 = vsel %vm1060, %v1050, %v875
        %v1068 = vsel %vm1060, %v1051, %v877
        %v1069 = vsel %vm1060, %v1052, %v879
        %v1070 = vsel %vm1060, %v1053, %v881
        %v1071 = vsel %vm1060, %v1054, %v883
        %v1072 = vsel %vm1060, %v1055, %v885
        %v1073 = vsel %vm1060, %v1056, %v887
        %v1074 = vsel %vm1060, %v1057, %v889
        %v1075 = vsel %vm1060, %v1058, %v891
        %v1076 = vsel %vm1060, %v1059, %v893
        %vm1077 = vcmask 261120
        %v1078 = vsel %vm1077, %v1061, %v911
        %v1079 = vsel %vm1077, %v1062, %v913
        %v1080 = vsel %vm1077, %v1063, %v915
        %v1081 = vsel %vm1077, %v1064, %v917
        %v1082 = vsel %vm1077, %v1065, %v919
        %v1083 = vsel %vm1077, %v1066, %v921
        %v1084 = vsel %vm1077, %v1067, %v923
        %v1085 = vsel %vm1077, %v1068, %v925
        %v1086 = vsel %vm1077, %v1069, %v927
        %v1087 = vsel %vm1077, %v1070, %v929
        %v1088 = vsel %vm1077, %v1071, %v931
        %v1089 = vsel %vm1077, %v1072, %v933
        %v1090 = vsel %vm1077, %v1073, %v935
        %v1091 = vsel %vm1077, %v1074, %v937
        %v1092 = vsel %vm1077, %v1075, %v939
        %v1093 = vsel %vm1077, %v1076, %v941
        %v1094 = vld [vmem:[%s5] sm:$0xff]
        %v1095 = vld [vmem:[%s5 + $0x8] sm:$0xff]
        %v1096 = vld [vmem:[%s5 + $0x10] sm:$0xff]
        %v1097 = vld [vmem:[%s5 + $0x18] sm:$0xff]
        %v1098 = vld [vmem:[%s5 + $0x20] sm:$0xf]
        %v1099 = vld [vmem:[%s6] sm:$0x1]
        %v1101 = vperm.slane %v1099, 0
        %vm1103 = vcmask 293888
        %v1105 = vsel %vm1103, %v1078, 0
        %v1108 = vsel %vm1103, %v1079, 0
        %v1111 = vsel %vm1103, %v1080, 0
        %v1114 = vsel %vm1103, %v1081, 0
        %v1117 = vsel %vm1103, %v1082, 0
        %v1120 = vsel %vm1103, %v1083, 0
        %v1123 = vsel %vm1103, %v1084, 0
        %v1126 = vsel %vm1103, %v1085, 0
        %v1129 = vsel %vm1103, %v1086, 0
        %v1132 = vsel %vm1103, %v1087, 0
        %v1135 = vsel %vm1103, %v1088, 0
        %v1138 = vsel %vm1103, %v1089, 0
        %v1141 = vsel %vm1103, %v1090, 0
        %v1144 = vsel %vm1103, %v1091, 0
        %v1147 = vsel %vm1103, %v1092, 0
        %v1150 = vsel %vm1103, %v1093, 0
        %vm1152 = vcmask 1043456
        %v1154 = vsel %vm1152, %v1098, 0
        %1156 = vmatpush.msra.mxu0 0.0
        %1157 = vmatpush.msra.mxu0 0.0
        %1158 = vmatpush.msra.mxu0 0.0
        %1159 = vmatpush.msra.mxu0 0.0
        %1160 = vmatpush.msra.mxu0 0.0
        %1161 = vmatpush.msra.mxu0 0.0
        %1162 = vmatpush.msra.mxu0 0.0
        %1163 = vmatpush.msra.mxu0 0.0
        %1164 = vmatpush.msra.mxu0 0.0
        %1165 = vmatpush.msra.mxu0 0.0
        %1166 = vmatpush.msra.mxu0 0.0
        %v1167 = vand.u32 %v1154, 4294901760
        %1168 = vmatpush.msra.mxu0 %v1167
        %v1169 = vand.u32 %v1097, 4294901760
        %1170 = vmatpush.msra.mxu0 %v1169
        %v1171 = vand.u32 %v1096, 4294901760
        %1172 = vmatpush.msra.mxu0 %v1171
        %v1173 = vand.u32 %v1095, 4294901760
        %1174 = vmatpush.msra.mxu0 %v1173
        %v1175 = vand.u32 %v1094, 4294901760
        %1176 = vmatpush.msra.mxu0 %v1175
        %v1177 = vand.u32 %v1105, 4294901760
        %v1178 = vsub.f32 %v1105, %v1177
        %v1179 = vand.u32 %v1178, 4294901760
        %v1180 = vsub.f32 %v1178, %v1179
        %v1181 = vand.u32 %v1180, 4294901760
        %1182 = vmatmul.f32.gmra.mxu0 %v1181
        %v1183 = vpop.f32.mrf.mxu0
        %v1184 = vadd.f32 %v1101, %v1183
        %v1185 = vand.u32 %v1108, 4294901760
        %v1186 = vsub.f32 %v1108, %v1185
        %v1187 = vand.u32 %v1186, 4294901760
        %v1188 = vsub.f32 %v1186, %v1187
        %v1189 = vand.u32 %v1188, 4294901760
        %1190 = vmatmul.f32.gmra.mxu0 %v1189
        %v1191 = vpop.f32.mrf.mxu0
        %v1192 = vadd.f32 %v1101, %v1191
        %v1193 = vand.u32 %v1111, 4294901760
        %v1194 = vsub.f32 %v1111, %v1193
        %v1195 = vand.u32 %v1194, 4294901760
        %v1196 = vsub.f32 %v1194, %v1195
        %v1197 = vand.u32 %v1196, 4294901760
        %1198 = vmatmul.f32.gmra.mxu0 %v1197
        %v1199 = vpop.f32.mrf.mxu0
        %v1200 = vadd.f32 %v1101, %v1199
        %v1201 = vand.u32 %v1114, 4294901760
        %v1202 = vsub.f32 %v1114, %v1201
        %v1203 = vand.u32 %v1202, 4294901760
        %v1204 = vsub.f32 %v1202, %v1203
        %v1205 = vand.u32 %v1204, 4294901760
        %1206 = vmatmul.f32.gmra.mxu0 %v1205
        %v1207 = vpop.f32.mrf.mxu0
        %v1208 = vadd.f32 %v1101, %v1207
        %v1209 = vand.u32 %v1117, 4294901760
        %v1210 = vsub.f32 %v1117, %v1209
        %v1211 = vand.u32 %v1210, 4294901760
        %v1212 = vsub.f32 %v1210, %v1211
        %v1213 = vand.u32 %v1212, 4294901760
        %1214 = vmatmul.f32.gmra.mxu0 %v1213
        %v1215 = vpop.f32.mrf.mxu0
        %v1216 = vadd.f32 %v1101, %v1215
        %v1217 = vand.u32 %v1120, 4294901760
        %v1218 = vsub.f32 %v1120, %v1217
        %v1219 = vand.u32 %v1218, 4294901760
        %v1220 = vsub.f32 %v1218, %v1219
        %v1221 = vand.u32 %v1220, 4294901760
        %1222 = vmatmul.f32.gmra.mxu0 %v1221
        %v1223 = vpop.f32.mrf.mxu0
        %v1224 = vadd.f32 %v1101, %v1223
        %v1225 = vand.u32 %v1123, 4294901760
        %v1226 = vsub.f32 %v1123, %v1225
        %v1227 = vand.u32 %v1226, 4294901760
        %v1228 = vsub.f32 %v1226, %v1227
        %v1229 = vand.u32 %v1228, 4294901760
        %1230 = vmatmul.f32.gmra.mxu0 %v1229
        %v1231 = vpop.f32.mrf.mxu0
        %v1232 = vadd.f32 %v1101, %v1231
        %v1233 = vand.u32 %v1126, 4294901760
        %v1234 = vsub.f32 %v1126, %v1233
        %v1235 = vand.u32 %v1234, 4294901760
        %v1236 = vsub.f32 %v1234, %v1235
        %v1237 = vand.u32 %v1236, 4294901760
        %1238 = vmatmul.f32.gmra.mxu0 %v1237
        %v1239 = vpop.f32.mrf.mxu0
        %v1240 = vadd.f32 %v1101, %v1239
        %v1241 = vand.u32 %v1129, 4294901760
        %v1242 = vsub.f32 %v1129, %v1241
        %v1243 = vand.u32 %v1242, 4294901760
        %v1244 = vsub.f32 %v1242, %v1243
        %v1245 = vand.u32 %v1244, 4294901760
        %1246 = vmatmul.f32.gmra.mxu0 %v1245
        %v1247 = vpop.f32.mrf.mxu0
        %v1248 = vadd.f32 %v1101, %v1247
        %v1249 = vand.u32 %v1132, 4294901760
        %v1250 = vsub.f32 %v1132, %v1249
        %v1251 = vand.u32 %v1250, 4294901760
        %v1252 = vsub.f32 %v1250, %v1251
        %v1253 = vand.u32 %v1252, 4294901760
        %1254 = vmatmul.f32.gmra.mxu0 %v1253
        %v1255 = vpop.f32.mrf.mxu0
        %v1256 = vadd.f32 %v1101, %v1255
        %v1257 = vand.u32 %v1135, 4294901760
        %v1258 = vsub.f32 %v1135, %v1257
        %v1259 = vand.u32 %v1258, 4294901760
        %v1260 = vsub.f32 %v1258, %v1259
        %v1261 = vand.u32 %v1260, 4294901760
        %1262 = vmatmul.f32.gmra.mxu0 %v1261
        %v1263 = vpop.f32.mrf.mxu0
        %v1264 = vadd.f32 %v1101, %v1263
        %v1265 = vand.u32 %v1138, 4294901760
        %v1266 = vsub.f32 %v1138, %v1265
        %v1267 = vand.u32 %v1266, 4294901760
        %v1268 = vsub.f32 %v1266, %v1267
        %v1269 = vand.u32 %v1268, 4294901760
        %1270 = vmatmul.f32.gmra.mxu0 %v1269
        %v1271 = vpop.f32.mrf.mxu0
        %v1272 = vadd.f32 %v1101, %v1271
        %v1273 = vand.u32 %v1141, 4294901760
        %v1274 = vsub.f32 %v1141, %v1273
        %v1275 = vand.u32 %v1274, 4294901760
        %v1276 = vsub.f32 %v1274, %v1275
        %v1277 = vand.u32 %v1276, 4294901760
        %1278 = vmatmul.f32.gmra.mxu0 %v1277
        %v1279 = vpop.f32.mrf.mxu0
        %v1280 = vadd.f32 %v1101, %v1279
        %v1281 = vand.u32 %v1144, 4294901760
        %v1282 = vsub.f32 %v1144, %v1281
        %v1283 = vand.u32 %v1282, 4294901760
        %v1284 = vsub.f32 %v1282, %v1283
        %v1285 = vand.u32 %v1284, 4294901760
        %1286 = vmatmul.f32.gmra.mxu0 %v1285
        %v1287 = vpop.f32.mrf.mxu0
        %v1288 = vadd.f32 %v1101, %v1287
        %v1289 = vand.u32 %v1147, 4294901760
        %v1290 = vsub.f32 %v1147, %v1289
        %v1291 = vand.u32 %v1290, 4294901760
        %v1292 = vsub.f32 %v1290, %v1291
        %v1293 = vand.u32 %v1292, 4294901760
        %1294 = vmatmul.f32.gmra.mxu0 %v1293
        %v1295 = vpop.f32.mrf.mxu0
        %v1296 = vadd.f32 %v1101, %v1295
        %v1297 = vand.u32 %v1150, 4294901760
        %v1298 = vsub.f32 %v1150, %v1297
        %v1299 = vand.u32 %v1298, 4294901760
        %v1300 = vsub.f32 %v1298, %v1299
        %v1301 = vand.u32 %v1300, 4294901760
        %1302 = vmatmul.f32.gmra.mxu0 %v1301
        %v1303 = vpop.f32.mrf.mxu0
        %v1304 = vadd.f32 %v1101, %v1303
        %1305 = vdwg.mxu0
        %1306 = vmatpush.msra.mxu0 0.0
        %1307 = vmatpush.msra.mxu0 0.0
        %1308 = vmatpush.msra.mxu0 0.0
        %1309 = vmatpush.msra.mxu0 0.0
        %1310 = vmatpush.msra.mxu0 0.0
        %1311 = vmatpush.msra.mxu0 0.0
        %1312 = vmatpush.msra.mxu0 0.0
        %1313 = vmatpush.msra.mxu0 0.0
        %1314 = vmatpush.msra.mxu0 0.0
        %1315 = vmatpush.msra.mxu0 0.0
        %1316 = vmatpush.msra.mxu0 0.0
        %v1317 = vand.u32 %v1154, 4294901760
        %v1318 = vsub.f32 %v1154, %v1317
        %v1319 = vand.u32 %v1318, 4294901760
        %v1320 = vsub.f32 %v1318, %v1319
        %v1321 = vand.u32 %v1320, 4294901760
        %1322 = vmatpush.msra.mxu0 %v1321
        %v1323 = vand.u32 %v1097, 4294901760
        %v1324 = vsub.f32 %v1097, %v1323
        %v1325 = vand.u32 %v1324, 4294901760
        %v1326 = vsub.f32 %v1324, %v1325
        %v1327 = vand.u32 %v1326, 4294901760
        %1328 = vmatpush.msra.mxu0 %v1327
        %v1329 = vand.u32 %v1096, 4294901760
        %v1330 = vsub.f32 %v1096, %v1329
        %v1331 = vand.u32 %v1330, 4294901760
        %v1332 = vsub.f32 %v1330, %v1331
        %v1333 = vand.u32 %v1332, 4294901760
        %1334 = vmatpush.msra.mxu0 %v1333
        %v1335 = vand.u32 %v1095, 4294901760
        %v1336 = vsub.f32 %v1095, %v1335
        %v1337 = vand.u32 %v1336, 4294901760
        %v1338 = vsub.f32 %v1336, %v1337
        %v1339 = vand.u32 %v1338, 4294901760
        %1340 = vmatpush.msra.mxu0 %v1339
        %v1341 = vand.u32 %v1094, 4294901760
        %v1342 = vsub.f32 %v1094, %v1341
        %v1343 = vand.u32 %v1342, 4294901760
        %v1344 = vsub.f32 %v1342, %v1343
        %v1345 = vand.u32 %v1344, 4294901760
        %1346 = vmatpush.msra.mxu0 %v1345
        %v1347 = vand.u32 %v1105, 4294901760
        %1348 = vmatmul.f32.gmra.mxu0 %v1347
        %v1349 = vpop.f32.mrf.mxu0
        %v1350 = vadd.f32 %v1184, %v1349
        %v1351 = vand.u32 %v1108, 4294901760
        %1352 = vmatmul.f32.gmra.mxu0 %v1351
        %v1353 = vpop.f32.mrf.mxu0
        %v1354 = vadd.f32 %v1192, %v1353
        %v1355 = vand.u32 %v1111, 4294901760
        %1356 = vmatmul.f32.gmra.mxu0 %v1355
        %v1357 = vpop.f32.mrf.mxu0
        %v1358 = vadd.f32 %v1200, %v1357
        %v1359 = vand.u32 %v1114, 4294901760
        %1360 = vmatmul.f32.gmra.mxu0 %v1359
        %v1361 = vpop.f32.mrf.mxu0
        %v1362 = vadd.f32 %v1208, %v1361
        %v1363 = vand.u32 %v1117, 4294901760
        %1364 = vmatmul.f32.gmra.mxu0 %v1363
        %v1365 = vpop.f32.mrf.mxu0
        %v1366 = vadd.f32 %v1216, %v1365
        %v1367 = vand.u32 %v1120, 4294901760
        %1368 = vmatmul.f32.gmra.mxu0 %v1367
        %v1369 = vpop.f32.mrf.mxu0
        %v1370 = vadd.f32 %v1224, %v1369
        %v1371 = vand.u32 %v1123, 4294901760
        %1372 = vmatmul.f32.gmra.mxu0 %v1371
        %v1373 = vpop.f32.mrf.mxu0
        %v1374 = vadd.f32 %v1232, %v1373
        %v1375 = vand.u32 %v1126, 4294901760
        %1376 = vmatmul.f32.gmra.mxu0 %v1375
        %v1377 = vpop.f32.mrf.mxu0
        %v1378 = vadd.f32 %v1240, %v1377
        %v1379 = vand.u32 %v1129, 4294901760
        %1380 = vmatmul.f32.gmra.mxu0 %v1379
        %v1381 = vpop.f32.mrf.mxu0
        %v1382 = vadd.f32 %v1248, %v1381
        %v1383 = vand.u32 %v1132, 4294901760
        %1384 = vmatmul.f32.gmra.mxu0 %v1383
        %v1385 = vpop.f32.mrf.mxu0
        %v1386 = vadd.f32 %v1256, %v1385
        %v1387 = vand.u32 %v1135, 4294901760
        %1388 = vmatmul.f32.gmra.mxu0 %v1387
        %v1389 = vpop.f32.mrf.mxu0
        %v1390 = vadd.f32 %v1264, %v1389
        %v1391 = vand.u32 %v1138, 4294901760
        %1392 = vmatmul.f32.gmra.mxu0 %v1391
        %v1393 = vpop.f32.mrf.mxu0
        %v1394 = vadd.f32 %v1272, %v1393
        %v1395 = vand.u32 %v1141, 4294901760
        %1396 = vmatmul.f32.gmra.mxu0 %v1395
        %v1397 = vpop.f32.mrf.mxu0
        %v1398 = vadd.f32 %v1280, %v1397
        %v1399 = vand.u32 %v1144, 4294901760
        %1400 = vmatmul.f32.gmra.mxu0 %v1399
        %v1401 = vpop.f32.mrf.mxu0
        %v1402 = vadd.f32 %v1288, %v1401
        %v1403 = vand.u32 %v1147, 4294901760
        %1404 = vmatmul.f32.gmra.mxu0 %v1403
        %v1405 = vpop.f32.mrf.mxu0
        %v1406 = vadd.f32 %v1296, %v1405
        %v1407 = vand.u32 %v1150, 4294901760
        %1408 = vmatmul.f32.gmra.mxu0 %v1407
        %v1409 = vpop.f32.mrf.mxu0
        %v1410 = vadd.f32 %v1304, %v1409
        %1411 = vdwg.mxu0
        %1412 = vmatpush.msra.mxu0 0.0
        %1413 = vmatpush.msra.mxu0 0.0
        %1414 = vmatpush.msra.mxu0 0.0
        %1415 = vmatpush.msra.mxu0 0.0
        %1416 = vmatpush.msra.mxu0 0.0
        %1417 = vmatpush.msra.mxu0 0.0
        %1418 = vmatpush.msra.mxu0 0.0
        %1419 = vmatpush.msra.mxu0 0.0
        %1420 = vmatpush.msra.mxu0 0.0
        %1421 = vmatpush.msra.mxu0 0.0
        %1422 = vmatpush.msra.mxu0 0.0
        %v1423 = vand.u32 %v1154, 4294901760
        %v1424 = vsub.f32 %v1154, %v1423
        %1425 = vmatpush.msra.mxu0 %v1424
        %v1426 = vand.u32 %v1097, 4294901760
        %v1427 = vsub.f32 %v1097, %v1426
        %1428 = vmatpush.msra.mxu0 %v1427
        %v1429 = vand.u32 %v1096, 4294901760
        %v1430 = vsub.f32 %v1096, %v1429
        %1431 = vmatpush.msra.mxu0 %v1430
        %v1432 = vand.u32 %v1095, 4294901760
        %v1433 = vsub.f32 %v1095, %v1432
        %1434 = vmatpush.msra.mxu0 %v1433
        %v1435 = vand.u32 %v1094, 4294901760
        %v1436 = vsub.f32 %v1094, %v1435
        %1437 = vmatpush.msra.mxu0 %v1436
        %v1438 = vand.u32 %v1105, 4294901760
        %v1439 = vsub.f32 %v1105, %v1438
        %1440 = vmatmul.f32.gmra.mxu0 %v1439
        %v1441 = vpop.f32.mrf.mxu0
        %v1442 = vadd.f32 %v1350, %v1441
        %v1443 = vand.u32 %v1108, 4294901760
        %v1444 = vsub.f32 %v1108, %v1443
        %1445 = vmatmul.f32.gmra.mxu0 %v1444
        %v1446 = vpop.f32.mrf.mxu0
        %v1447 = vadd.f32 %v1354, %v1446
        %v1448 = vand.u32 %v1111, 4294901760
        %v1449 = vsub.f32 %v1111, %v1448
        %1450 = vmatmul.f32.gmra.mxu0 %v1449
        %v1451 = vpop.f32.mrf.mxu0
        %v1452 = vadd.f32 %v1358, %v1451
        %v1453 = vand.u32 %v1114, 4294901760
        %v1454 = vsub.f32 %v1114, %v1453
        %1455 = vmatmul.f32.gmra.mxu0 %v1454
        %v1456 = vpop.f32.mrf.mxu0
        %v1457 = vadd.f32 %v1362, %v1456
        %v1458 = vand.u32 %v1117, 4294901760
        %v1459 = vsub.f32 %v1117, %v1458
        %1460 = vmatmul.f32.gmra.mxu0 %v1459
        %v1461 = vpop.f32.mrf.mxu0
        %v1462 = vadd.f32 %v1366, %v1461
        %v1463 = vand.u32 %v1120, 4294901760
        %v1464 = vsub.f32 %v1120, %v1463
        %1465 = vmatmul.f32.gmra.mxu0 %v1464
        %v1466 = vpop.f32.mrf.mxu0
        %v1467 = vadd.f32 %v1370, %v1466
        %v1468 = vand.u32 %v1123, 4294901760
        %v1469 = vsub.f32 %v1123, %v1468
        %1470 = vmatmul.f32.gmra.mxu0 %v1469
        %v1471 = vpop.f32.mrf.mxu0
        %v1472 = vadd.f32 %v1374, %v1471
        %v1473 = vand.u32 %v1126, 4294901760
        %v1474 = vsub.f32 %v1126, %v1473
        %1475 = vmatmul.f32.gmra.mxu0 %v1474
        %v1476 = vpop.f32.mrf.mxu0
        %v1477 = vadd.f32 %v1378, %v1476
        %v1478 = vand.u32 %v1129, 4294901760
        %v1479 = vsub.f32 %v1129, %v1478
        %1480 = vmatmul.f32.gmra.mxu0 %v1479
        %v1481 = vpop.f32.mrf.mxu0
        %v1482 = vadd.f32 %v1382, %v1481
        %v1483 = vand.u32 %v1132, 4294901760
        %v1484 = vsub.f32 %v1132, %v1483
        %1485 = vmatmul.f32.gmra.mxu0 %v1484
        %v1486 = vpop.f32.mrf.mxu0
        %v1487 = vadd.f32 %v1386, %v1486
        %v1488 = vand.u32 %v1135, 4294901760
        %v1489 = vsub.f32 %v1135, %v1488
        %1490 = vmatmul.f32.gmra.mxu0 %v1489
        %v1491 = vpop.f32.mrf.mxu0
        %v1492 = vadd.f32 %v1390, %v1491
        %v1493 = vand.u32 %v1138, 4294901760
        %v1494 = vsub.f32 %v1138, %v1493
        %1495 = vmatmul.f32.gmra.mxu0 %v1494
        %v1496 = vpop.f32.mrf.mxu0
        %v1497 = vadd.f32 %v1394, %v1496
        %v1498 = vand.u32 %v1141, 4294901760
        %v1499 = vsub.f32 %v1141, %v1498
        %1500 = vmatmul.f32.gmra.mxu0 %v1499
        %v1501 = vpop.f32.mrf.mxu0
        %v1502 = vadd.f32 %v1398, %v1501
        %v1503 = vand.u32 %v1144, 4294901760
        %v1504 = vsub.f32 %v1144, %v1503
        %1505 = vmatmul.f32.gmra.mxu0 %v1504
        %v1506 = vpop.f32.mrf.mxu0
        %v1507 = vadd.f32 %v1402, %v1506
        %v1508 = vand.u32 %v1147, 4294901760
        %v1509 = vsub.f32 %v1147, %v1508
        %1510 = vmatmul.f32.gmra.mxu0 %v1509
        %v1511 = vpop.f32.mrf.mxu0
        %v1512 = vadd.f32 %v1406, %v1511
        %v1513 = vand.u32 %v1150, 4294901760
        %v1514 = vsub.f32 %v1150, %v1513
        %1515 = vmatmul.f32.gmra.mxu0 %v1514
        %v1516 = vpop.f32.mrf.mxu0
        %v1517 = vadd.f32 %v1410, %v1516
        %1518 = vdwg.mxu0
        %1519 = vmatpush.msra.mxu0 0.0
        %1520 = vmatpush.msra.mxu0 0.0
        %1521 = vmatpush.msra.mxu0 0.0
        %1522 = vmatpush.msra.mxu0 0.0
        %1523 = vmatpush.msra.mxu0 0.0
        %1524 = vmatpush.msra.mxu0 0.0
        %1525 = vmatpush.msra.mxu0 0.0
        %1526 = vmatpush.msra.mxu0 0.0
        %1527 = vmatpush.msra.mxu0 0.0
        %1528 = vmatpush.msra.mxu0 0.0
        %1529 = vmatpush.msra.mxu0 0.0
        %v1530 = vand.u32 %v1154, 4294901760
        %1531 = vmatpush.msra.mxu0 %v1530
        %v1532 = vand.u32 %v1097, 4294901760
        %1533 = vmatpush.msra.mxu0 %v1532
        %v1534 = vand.u32 %v1096, 4294901760
        %1535 = vmatpush.msra.mxu0 %v1534
        %v1536 = vand.u32 %v1095, 4294901760
        %1537 = vmatpush.msra.mxu0 %v1536
        %v1538 = vand.u32 %v1094, 4294901760
        %1539 = vmatpush.msra.mxu0 %v1538
        %v1540 = vand.u32 %v1105, 4294901760
        %v1541 = vsub.f32 %v1105, %v1540
        %v1542 = vand.u32 %v1541, 4294901760
        %1543 = vmatmul.f32.gmra.mxu0 %v1542
        %v1544 = vpop.f32.mrf.mxu0
        %v1545 = vadd.f32 %v1442, %v1544
        %v1546 = vand.u32 %v1108, 4294901760
        %v1547 = vsub.f32 %v1108, %v1546
        %v1548 = vand.u32 %v1547, 4294901760
        %1549 = vmatmul.f32.gmra.mxu0 %v1548
        %v1550 = vpop.f32.mrf.mxu0
        %v1551 = vadd.f32 %v1447, %v1550
        %v1552 = vand.u32 %v1111, 4294901760
        %v1553 = vsub.f32 %v1111, %v1552
        %v1554 = vand.u32 %v1553, 4294901760
        %1555 = vmatmul.f32.gmra.mxu0 %v1554
        %v1556 = vpop.f32.mrf.mxu0
        %v1557 = vadd.f32 %v1452, %v1556
        %v1558 = vand.u32 %v1114, 4294901760
        %v1559 = vsub.f32 %v1114, %v1558
        %v1560 = vand.u32 %v1559, 4294901760
        %1561 = vmatmul.f32.gmra.mxu0 %v1560
        %v1562 = vpop.f32.mrf.mxu0
        %v1563 = vadd.f32 %v1457, %v1562
        %v1564 = vand.u32 %v1117, 4294901760
        %v1565 = vsub.f32 %v1117, %v1564
        %v1566 = vand.u32 %v1565, 4294901760
        %1567 = vmatmul.f32.gmra.mxu0 %v1566
        %v1568 = vpop.f32.mrf.mxu0
        %v1569 = vadd.f32 %v1462, %v1568
        %v1570 = vand.u32 %v1120, 4294901760
        %v1571 = vsub.f32 %v1120, %v1570
        %v1572 = vand.u32 %v1571, 4294901760
        %1573 = vmatmul.f32.gmra.mxu0 %v1572
        %v1574 = vpop.f32.mrf.mxu0
        %v1575 = vadd.f32 %v1467, %v1574
        %v1576 = vand.u32 %v1123, 4294901760
        %v1577 = vsub.f32 %v1123, %v1576
        %v1578 = vand.u32 %v1577, 4294901760
        %1579 = vmatmul.f32.gmra.mxu0 %v1578
        %v1580 = vpop.f32.mrf.mxu0
        %v1581 = vadd.f32 %v1472, %v1580
        %v1582 = vand.u32 %v1126, 4294901760
        %v1583 = vsub.f32 %v1126, %v1582
        %v1584 = vand.u32 %v1583, 4294901760
        %1585 = vmatmul.f32.gmra.mxu0 %v1584
        %v1586 = vpop.f32.mrf.mxu0
        %v1587 = vadd.f32 %v1477, %v1586
        %v1588 = vand.u32 %v1129, 4294901760
        %v1589 = vsub.f32 %v1129, %v1588
        %v1590 = vand.u32 %v1589, 4294901760
        %1591 = vmatmul.f32.gmra.mxu0 %v1590
        %v1592 = vpop.f32.mrf.mxu0
        %v1593 = vadd.f32 %v1482, %v1592
        %v1594 = vand.u32 %v1132, 4294901760
        %v1595 = vsub.f32 %v1132, %v1594
        %v1596 = vand.u32 %v1595, 4294901760
        %1597 = vmatmul.f32.gmra.mxu0 %v1596
        %v1598 = vpop.f32.mrf.mxu0
        %v1599 = vadd.f32 %v1487, %v1598
        %v1600 = vand.u32 %v1135, 4294901760
        %v1601 = vsub.f32 %v1135, %v1600
        %v1602 = vand.u32 %v1601, 4294901760
        %1603 = vmatmul.f32.gmra.mxu0 %v1602
        %v1604 = vpop.f32.mrf.mxu0
        %v1605 = vadd.f32 %v1492, %v1604
        %v1606 = vand.u32 %v1138, 4294901760
        %v1607 = vsub.f32 %v1138, %v1606
        %v1608 = vand.u32 %v1607, 4294901760
        %1609 = vmatmul.f32.gmra.mxu0 %v1608
        %v1610 = vpop.f32.mrf.mxu0
        %v1611 = vadd.f32 %v1497, %v1610
        %v1612 = vand.u32 %v1141, 4294901760
        %v1613 = vsub.f32 %v1141, %v1612
        %v1614 = vand.u32 %v1613, 4294901760
        %1615 = vmatmul.f32.gmra.mxu0 %v1614
        %v1616 = vpop.f32.mrf.mxu0
        %v1617 = vadd.f32 %v1502, %v1616
        %v1618 = vand.u32 %v1144, 4294901760
        %v1619 = vsub.f32 %v1144, %v1618
        %v1620 = vand.u32 %v1619, 4294901760
        %1621 = vmatmul.f32.gmra.mxu0 %v1620
        %v1622 = vpop.f32.mrf.mxu0
        %v1623 = vadd.f32 %v1507, %v1622
        %v1624 = vand.u32 %v1147, 4294901760
        %v1625 = vsub.f32 %v1147, %v1624
        %v1626 = vand.u32 %v1625, 4294901760
        %1627 = vmatmul.f32.gmra.mxu0 %v1626
        %v1628 = vpop.f32.mrf.mxu0
        %v1629 = vadd.f32 %v1512, %v1628
        %v1630 = vand.u32 %v1150, 4294901760
        %v1631 = vsub.f32 %v1150, %v1630
        %v1632 = vand.u32 %v1631, 4294901760
        %1633 = vmatmul.f32.gmra.mxu0 %v1632
        %v1634 = vpop.f32.mrf.mxu0
        %v1635 = vadd.f32 %v1517, %v1634
        %1636 = vdwg.mxu0
        %1637 = vmatpush.msra.mxu0 0.0
        %1638 = vmatpush.msra.mxu0 0.0
        %1639 = vmatpush.msra.mxu0 0.0
        %1640 = vmatpush.msra.mxu0 0.0
        %1641 = vmatpush.msra.mxu0 0.0
        %1642 = vmatpush.msra.mxu0 0.0
        %1643 = vmatpush.msra.mxu0 0.0
        %1644 = vmatpush.msra.mxu0 0.0
        %1645 = vmatpush.msra.mxu0 0.0
        %1646 = vmatpush.msra.mxu0 0.0
        %1647 = vmatpush.msra.mxu0 0.0
        %v1648 = vand.u32 %v1154, 4294901760
        %v1649 = vsub.f32 %v1154, %v1648
        %v1650 = vand.u32 %v1649, 4294901760
        %1651 = vmatpush.msra.mxu0 %v1650
        %v1652 = vand.u32 %v1097, 4294901760
        %v1653 = vsub.f32 %v1097, %v1652
        %v1654 = vand.u32 %v1653, 4294901760
        %1655 = vmatpush.msra.mxu0 %v1654
        %v1656 = vand.u32 %v1096, 4294901760
        %v1657 = vsub.f32 %v1096, %v1656
        %v1658 = vand.u32 %v1657, 4294901760
        %1659 = vmatpush.msra.mxu0 %v1658
        %v1660 = vand.u32 %v1095, 4294901760
        %v1661 = vsub.f32 %v1095, %v1660
        %v1662 = vand.u32 %v1661, 4294901760
        %1663 = vmatpush.msra.mxu0 %v1662
        %v1664 = vand.u32 %v1094, 4294901760
        %v1665 = vsub.f32 %v1094, %v1664
        %v1666 = vand.u32 %v1665, 4294901760
        %1667 = vmatpush.msra.mxu0 %v1666
        %v1668 = vand.u32 %v1105, 4294901760
        %1669 = vmatmul.f32.gmra.mxu0 %v1668
        %v1670 = vpop.f32.mrf.mxu0
        %v1671 = vadd.f32 %v1545, %v1670
        %v1672 = vand.u32 %v1108, 4294901760
        %1673 = vmatmul.f32.gmra.mxu0 %v1672
        %v1674 = vpop.f32.mrf.mxu0
        %v1675 = vadd.f32 %v1551, %v1674
        %v1676 = vand.u32 %v1111, 4294901760
        %1677 = vmatmul.f32.gmra.mxu0 %v1676
        %v1678 = vpop.f32.mrf.mxu0
        %v1679 = vadd.f32 %v1557, %v1678
        %v1680 = vand.u32 %v1114, 4294901760
        %1681 = vmatmul.f32.gmra.mxu0 %v1680
        %v1682 = vpop.f32.mrf.mxu0
        %v1683 = vadd.f32 %v1563, %v1682
        %v1684 = vand.u32 %v1117, 4294901760
        %1685 = vmatmul.f32.gmra.mxu0 %v1684
        %v1686 = vpop.f32.mrf.mxu0
        %v1687 = vadd.f32 %v1569, %v1686
        %v1688 = vand.u32 %v1120, 4294901760
        %1689 = vmatmul.f32.gmra.mxu0 %v1688
        %v1690 = vpop.f32.mrf.mxu0
        %v1691 = vadd.f32 %v1575, %v1690
        %v1692 = vand.u32 %v1123, 4294901760
        %1693 = vmatmul.f32.gmra.mxu0 %v1692
        %v1694 = vpop.f32.mrf.mxu0
        %v1695 = vadd.f32 %v1581, %v1694
        %v1696 = vand.u32 %v1126, 4294901760
        %1697 = vmatmul.f32.gmra.mxu0 %v1696
        %v1698 = vpop.f32.mrf.mxu0
        %v1699 = vadd.f32 %v1587, %v1698
        %v1700 = vand.u32 %v1129, 4294901760
        %1701 = vmatmul.f32.gmra.mxu0 %v1700
        %v1702 = vpop.f32.mrf.mxu0
        %v1703 = vadd.f32 %v1593, %v1702
        %v1704 = vand.u32 %v1132, 4294901760
        %1705 = vmatmul.f32.gmra.mxu0 %v1704
        %v1706 = vpop.f32.mrf.mxu0
        %v1707 = vadd.f32 %v1599, %v1706
        %v1708 = vand.u32 %v1135, 4294901760
        %1709 = vmatmul.f32.gmra.mxu0 %v1708
        %v1710 = vpop.f32.mrf.mxu0
        %v1711 = vadd.f32 %v1605, %v1710
        %v1712 = vand.u32 %v1138, 4294901760
        %1713 = vmatmul.f32.gmra.mxu0 %v1712
        %v1714 = vpop.f32.mrf.mxu0
        %v1715 = vadd.f32 %v1611, %v1714
        %v1716 = vand.u32 %v1141, 4294901760
        %1717 = vmatmul.f32.gmra.mxu0 %v1716
        %v1718 = vpop.f32.mrf.mxu0
        %v1719 = vadd.f32 %v1617, %v1718
        %v1720 = vand.u32 %v1144, 4294901760
        %1721 = vmatmul.f32.gmra.mxu0 %v1720
        %v1722 = vpop.f32.mrf.mxu0
        %v1723 = vadd.f32 %v1623, %v1722
        %v1724 = vand.u32 %v1147, 4294901760
        %1725 = vmatmul.f32.gmra.mxu0 %v1724
        %v1726 = vpop.f32.mrf.mxu0
        %v1727 = vadd.f32 %v1629, %v1726
        %v1728 = vand.u32 %v1150, 4294901760
        %1729 = vmatmul.f32.gmra.mxu0 %v1728
        %v1730 = vpop.f32.mrf.mxu0
        %v1731 = vadd.f32 %v1635, %v1730
        %1732 = vdwg.mxu0
        %1733 = vmatpush.msra.mxu0 0.0
        %1734 = vmatpush.msra.mxu0 0.0
        %1735 = vmatpush.msra.mxu0 0.0
        %1736 = vmatpush.msra.mxu0 0.0
        %1737 = vmatpush.msra.mxu0 0.0
        %1738 = vmatpush.msra.mxu0 0.0
        %1739 = vmatpush.msra.mxu0 0.0
        %1740 = vmatpush.msra.mxu0 0.0
        %1741 = vmatpush.msra.mxu0 0.0
        %1742 = vmatpush.msra.mxu0 0.0
        %1743 = vmatpush.msra.mxu0 0.0
        %v1744 = vand.u32 %v1154, 4294901760
        %1745 = vmatpush.msra.mxu0 %v1744
        %v1746 = vand.u32 %v1097, 4294901760
        %1747 = vmatpush.msra.mxu0 %v1746
        %v1748 = vand.u32 %v1096, 4294901760
        %1749 = vmatpush.msra.mxu0 %v1748
        %v1750 = vand.u32 %v1095, 4294901760
        %1751 = vmatpush.msra.mxu0 %v1750
        %v1752 = vand.u32 %v1094, 4294901760
        %1753 = vmatpush.msra.mxu0 %v1752
        %v1754 = vand.u32 %v1105, 4294901760
        %1755 = vmatmul.f32.gmra.mxu0 %v1754
        %v1756 = vpop.f32.mrf.mxu0
        %v1757 = vadd.f32 %v1671, %v1756
        %v1758 = vand.u32 %v1108, 4294901760
        %1759 = vmatmul.f32.gmra.mxu0 %v1758
        %v1760 = vpop.f32.mrf.mxu0
        %v1761 = vadd.f32 %v1675, %v1760
        %v1762 = vand.u32 %v1111, 4294901760
        %1763 = vmatmul.f32.gmra.mxu0 %v1762
        %v1764 = vpop.f32.mrf.mxu0
        %v1765 = vadd.f32 %v1679, %v1764
        %v1766 = vand.u32 %v1114, 4294901760
        %1767 = vmatmul.f32.gmra.mxu0 %v1766
        %v1768 = vpop.f32.mrf.mxu0
        %v1769 = vadd.f32 %v1683, %v1768
        %v1770 = vand.u32 %v1117, 4294901760
        %1771 = vmatmul.f32.gmra.mxu0 %v1770
        %v1772 = vpop.f32.mrf.mxu0
        %v1773 = vadd.f32 %v1687, %v1772
        %v1774 = vand.u32 %v1120, 4294901760
        %1775 = vmatmul.f32.gmra.mxu0 %v1774
        %v1776 = vpop.f32.mrf.mxu0
        %v1777 = vadd.f32 %v1691, %v1776
        %v1778 = vand.u32 %v1123, 4294901760
        %1779 = vmatmul.f32.gmra.mxu0 %v1778
        %v1780 = vpop.f32.mrf.mxu0
        %v1781 = vadd.f32 %v1695, %v1780
        %v1782 = vand.u32 %v1126, 4294901760
        %1783 = vmatmul.f32.gmra.mxu0 %v1782
        %v1784 = vpop.f32.mrf.mxu0
        %v1785 = vadd.f32 %v1699, %v1784
        %v1786 = vand.u32 %v1129, 4294901760
        %1787 = vmatmul.f32.gmra.mxu0 %v1786
        %v1788 = vpop.f32.mrf.mxu0
        %v1789 = vadd.f32 %v1703, %v1788
        %v1790 = vand.u32 %v1132, 4294901760
        %1791 = vmatmul.f32.gmra.mxu0 %v1790
        %v1792 = vpop.f32.mrf.mxu0
        %v1793 = vadd.f32 %v1707, %v1792
        %v1794 = vand.u32 %v1135, 4294901760
        %1795 = vmatmul.f32.gmra.mxu0 %v1794
        %v1796 = vpop.f32.mrf.mxu0
        %v1797 = vadd.f32 %v1711, %v1796
        %v1798 = vand.u32 %v1138, 4294901760
        %1799 = vmatmul.f32.gmra.mxu0 %v1798
        %v1800 = vpop.f32.mrf.mxu0
        %v1801 = vadd.f32 %v1715, %v1800
        %v1802 = vand.u32 %v1141, 4294901760
        %1803 = vmatmul.f32.gmra.mxu0 %v1802
        %v1804 = vpop.f32.mrf.mxu0
        %v1805 = vadd.f32 %v1719, %v1804
        %v1806 = vand.u32 %v1144, 4294901760
        %1807 = vmatmul.f32.gmra.mxu0 %v1806
        %v1808 = vpop.f32.mrf.mxu0
        %v1809 = vadd.f32 %v1723, %v1808
        %v1810 = vand.u32 %v1147, 4294901760
        %1811 = vmatmul.f32.gmra.mxu0 %v1810
        %v1812 = vpop.f32.mrf.mxu0
        %v1813 = vadd.f32 %v1727, %v1812
        %v1814 = vand.u32 %v1150, 4294901760
        %1815 = vmatmul.f32.gmra.mxu0 %v1814
        %v1816 = vpop.f32.mrf.mxu0
        %v1817 = vadd.f32 %v1731, %v1816
        %1818 = vdwg.mxu0
        %v1819 = vxor.u32 %v1757, 2147483648
        %v1820 = vxor.u32 %v1761, 2147483648
        %v1821 = vxor.u32 %v1765, 2147483648
        %v1822 = vxor.u32 %v1769, 2147483648
        %v1823 = vxor.u32 %v1773, 2147483648
        %v1824 = vxor.u32 %v1777, 2147483648
        %v1825 = vxor.u32 %v1781, 2147483648
        %v1826 = vxor.u32 %v1785, 2147483648
        %v1827 = vxor.u32 %v1789, 2147483648
        %v1828 = vxor.u32 %v1793, 2147483648
        %v1829 = vxor.u32 %v1797, 2147483648
        %v1830 = vxor.u32 %v1801, 2147483648
        %v1831 = vxor.u32 %v1805, 2147483648
        %v1832 = vxor.u32 %v1809, 2147483648
        %v1833 = vxor.u32 %v1813, 2147483648
        %v1834 = vxor.u32 %v1817, 2147483648
        %v1835 = vmul.f32 %v1819, 1.442695
        %v1836 = vpow.pop %v1835
        %v1837 = vmul.f32 %v1820, 1.442695
        %v1838 = vpow.pop %v1837
        %v1839 = vmul.f32 %v1821, 1.442695
        %v1840 = vpow.pop %v1839
        %v1841 = vmul.f32 %v1822, 1.442695
        %v1842 = vpow.pop %v1841
        %v1843 = vmul.f32 %v1823, 1.442695
        %v1844 = vpow.pop %v1843
        %v1845 = vmul.f32 %v1824, 1.442695
        %v1846 = vpow.pop %v1845
        %v1847 = vmul.f32 %v1825, 1.442695
        %v1848 = vpow.pop %v1847
        %v1849 = vmul.f32 %v1826, 1.442695
        %v1850 = vpow.pop %v1849
        %v1851 = vmul.f32 %v1827, 1.442695
        %v1852 = vpow.pop %v1851
        %v1853 = vmul.f32 %v1828, 1.442695
        %v1854 = vpow.pop %v1853
        %v1855 = vmul.f32 %v1829, 1.442695
        %v1856 = vpow.pop %v1855
        %v1857 = vmul.f32 %v1830, 1.442695
        %v1858 = vpow.pop %v1857
        %v1859 = vmul.f32 %v1831, 1.442695
        %v1860 = vpow.pop %v1859
        %v1861 = vmul.f32 %v1832, 1.442695
        %v1862 = vpow.pop %v1861
        %v1863 = vmul.f32 %v1833, 1.442695
        %v1864 = vpow.pop %v1863
        %v1865 = vmul.f32 %v1834, 1.442695
        %v1866 = vpow.pop %v1865
        %v1867 = vadd.f32 %v1836, 1.0
        %v1868 = vadd.f32 %v1838, 1.0
        %v1869 = vadd.f32 %v1840, 1.0
        %v1870 = vadd.f32 %v1842, 1.0
        %v1871 = vadd.f32 %v1844, 1.0
        %v1872 = vadd.f32 %v1846, 1.0
        %v1873 = vadd.f32 %v1848, 1.0
        %v1874 = vadd.f32 %v1850, 1.0
        %v1875 = vadd.f32 %v1852, 1.0
        %v1876 = vadd.f32 %v1854, 1.0
        %v1877 = vadd.f32 %v1856, 1.0
        %v1878 = vadd.f32 %v1858, 1.0
        %v1879 = vadd.f32 %v1860, 1.0
        %v1880 = vadd.f32 %v1862, 1.0
        %v1881 = vadd.f32 %v1864, 1.0
        %v1882 = vadd.f32 %v1866, 1.0
        %v1883 = vrcp.pop %v1867
        %v1884 = vmul.f32 %v1867, %v1883
        %v1885 = vsub.f32 1.0, %v1884
        %v1886 = vmul.f32 %v1883, %v1885
        %v1887 = vadd.f32 %v1883, %v1886
        %vm1888 = vweird.f32 %v1867
        %vm1889 = vweird.f32 %v1883
        %vm1890 = vmor %vm1888, %vm1889
        %v1891 = vsel %vm1890, %v1883, %v1887
        %v1892 = vand.u32 2147483647, %v1867
        %vm1893 = vcmp.eq.f32.partialorder %v1892, 8.507059e+37
        %v1894 = vand.u32 %v1867, 2147483648
        %v1895 = vor.u32 1.1754944e-38, %v1894
        %v1896 = vsel %vm1893, %v1895, %v1891
        %v1897 = vmul.f32 1.0, %v1896
        %v1898 = vrcp.pop %v1868
        %v1899 = vmul.f32 %v1868, %v1898
        %v1900 = vsub.f32 1.0, %v1899
        %v1901 = vmul.f32 %v1898, %v1900
        %v1902 = vadd.f32 %v1898, %v1901
        %vm1903 = vweird.f32 %v1868
        %vm1904 = vweird.f32 %v1898
        %vm1905 = vmor %vm1903, %vm1904
        %v1906 = vsel %vm1905, %v1898, %v1902
        %v1907 = vand.u32 2147483647, %v1868
        %vm1908 = vcmp.eq.f32.partialorder %v1907, 8.507059e+37
        %v1909 = vand.u32 %v1868, 2147483648
        %v1910 = vor.u32 1.1754944e-38, %v1909
        %v1911 = vsel %vm1908, %v1910, %v1906
        %v1912 = vmul.f32 1.0, %v1911
        %v1913 = vrcp.pop %v1869
        %v1914 = vmul.f32 %v1869, %v1913
        %v1915 = vsub.f32 1.0, %v1914
        %v1916 = vmul.f32 %v1913, %v1915
        %v1917 = vadd.f32 %v1913, %v1916
        %vm1918 = vweird.f32 %v1869
        %vm1919 = vweird.f32 %v1913
        %vm1920 = vmor %vm1918, %vm1919
        %v1921 = vsel %vm1920, %v1913, %v1917
        %v1922 = vand.u32 2147483647, %v1869
        %vm1923 = vcmp.eq.f32.partialorder %v1922, 8.507059e+37
        %v1924 = vand.u32 %v1869, 2147483648
        %v1925 = vor.u32 1.1754944e-38, %v1924
        %v1926 = vsel %vm1923, %v1925, %v1921
        %v1927 = vmul.f32 1.0, %v1926
        %v1928 = vrcp.pop %v1870
        %v1929 = vmul.f32 %v1870, %v1928
        %v1930 = vsub.f32 1.0, %v1929
        %v1931 = vmul.f32 %v1928, %v1930
        %v1932 = vadd.f32 %v1928, %v1931
        %vm1933 = vweird.f32 %v1870
        %vm1934 = vweird.f32 %v1928
        %vm1935 = vmor %vm1933, %vm1934
        %v1936 = vsel %vm1935, %v1928, %v1932
        %v1937 = vand.u32 2147483647, %v1870
        %vm1938 = vcmp.eq.f32.partialorder %v1937, 8.507059e+37
        %v1939 = vand.u32 %v1870, 2147483648
        %v1940 = vor.u32 1.1754944e-38, %v1939
        %v1941 = vsel %vm1938, %v1940, %v1936
        %v1942 = vmul.f32 1.0, %v1941
        %v1943 = vrcp.pop %v1871
        %v1944 = vmul.f32 %v1871, %v1943
        %v1945 = vsub.f32 1.0, %v1944
        %v1946 = vmul.f32 %v1943, %v1945
        %v1947 = vadd.f32 %v1943, %v1946
        %vm1948 = vweird.f32 %v1871
        %vm1949 = vweird.f32 %v1943
        %vm1950 = vmor %vm1948, %vm1949
        %v1951 = vsel %vm1950, %v1943, %v1947
        %v1952 = vand.u32 2147483647, %v1871
        %vm1953 = vcmp.eq.f32.partialorder %v1952, 8.507059e+37
        %v1954 = vand.u32 %v1871, 2147483648
        %v1955 = vor.u32 1.1754944e-38, %v1954
        %v1956 = vsel %vm1953, %v1955, %v1951
        %v1957 = vmul.f32 1.0, %v1956
        %v1958 = vrcp.pop %v1872
        %v1959 = vmul.f32 %v1872, %v1958
        %v1960 = vsub.f32 1.0, %v1959
        %v1961 = vmul.f32 %v1958, %v1960
        %v1962 = vadd.f32 %v1958, %v1961
        %vm1963 = vweird.f32 %v1872
        %vm1964 = vweird.f32 %v1958
        %vm1965 = vmor %vm1963, %vm1964
        %v1966 = vsel %vm1965, %v1958, %v1962
        %v1967 = vand.u32 2147483647, %v1872
        %vm1968 = vcmp.eq.f32.partialorder %v1967, 8.507059e+37
        %v1969 = vand.u32 %v1872, 2147483648
        %v1970 = vor.u32 1.1754944e-38, %v1969
        %v1971 = vsel %vm1968, %v1970, %v1966
        %v1972 = vmul.f32 1.0, %v1971
        %v1973 = vrcp.pop %v1873
        %v1974 = vmul.f32 %v1873, %v1973
        %v1975 = vsub.f32 1.0, %v1974
        %v1976 = vmul.f32 %v1973, %v1975
        %v1977 = vadd.f32 %v1973, %v1976
        %vm1978 = vweird.f32 %v1873
        %vm1979 = vweird.f32 %v1973
        %vm1980 = vmor %vm1978, %vm1979
        %v1981 = vsel %vm1980, %v1973, %v1977
        %v1982 = vand.u32 2147483647, %v1873
        %vm1983 = vcmp.eq.f32.partialorder %v1982, 8.507059e+37
        %v1984 = vand.u32 %v1873, 2147483648
        %v1985 = vor.u32 1.1754944e-38, %v1984
        %v1986 = vsel %vm1983, %v1985, %v1981
        %v1987 = vmul.f32 1.0, %v1986
        %v1988 = vrcp.pop %v1874
        %v1989 = vmul.f32 %v1874, %v1988
        %v1990 = vsub.f32 1.0, %v1989
        %v1991 = vmul.f32 %v1988, %v1990
        %v1992 = vadd.f32 %v1988, %v1991
        %vm1993 = vweird.f32 %v1874
        %vm1994 = vweird.f32 %v1988
        %vm1995 = vmor %vm1993, %vm1994
        %v1996 = vsel %vm1995, %v1988, %v1992
        %v1997 = vand.u32 2147483647, %v1874
        %vm1998 = vcmp.eq.f32.partialorder %v1997, 8.507059e+37
        %v1999 = vand.u32 %v1874, 2147483648
        %v2000 = vor.u32 1.1754944e-38, %v1999
        %v2001 = vsel %vm1998, %v2000, %v1996
        %v2002 = vmul.f32 1.0, %v2001
        %v2003 = vrcp.pop %v1875
        %v2004 = vmul.f32 %v1875, %v2003
        %v2005 = vsub.f32 1.0, %v2004
        %v2006 = vmul.f32 %v2003, %v2005
        %v2007 = vadd.f32 %v2003, %v2006
        %vm2008 = vweird.f32 %v1875
        %vm2009 = vweird.f32 %v2003
        %vm2010 = vmor %vm2008, %vm2009
        %v2011 = vsel %vm2010, %v2003, %v2007
        %v2012 = vand.u32 2147483647, %v1875
        %vm2013 = vcmp.eq.f32.partialorder %v2012, 8.507059e+37
        %v2014 = vand.u32 %v1875, 2147483648
        %v2015 = vor.u32 1.1754944e-38, %v2014
        %v2016 = vsel %vm2013, %v2015, %v2011
        %v2017 = vmul.f32 1.0, %v2016
        %v2018 = vrcp.pop %v1876
        %v2019 = vmul.f32 %v1876, %v2018
        %v2020 = vsub.f32 1.0, %v2019
        %v2021 = vmul.f32 %v2018, %v2020
        %v2022 = vadd.f32 %v2018, %v2021
        %vm2023 = vweird.f32 %v1876
        %vm2024 = vweird.f32 %v2018
        %vm2025 = vmor %vm2023, %vm2024
        %v2026 = vsel %vm2025, %v2018, %v2022
        %v2027 = vand.u32 2147483647, %v1876
        %vm2028 = vcmp.eq.f32.partialorder %v2027, 8.507059e+37
        %v2029 = vand.u32 %v1876, 2147483648
        %v2030 = vor.u32 1.1754944e-38, %v2029
        %v2031 = vsel %vm2028, %v2030, %v2026
        %v2032 = vmul.f32 1.0, %v2031
        %v2033 = vrcp.pop %v1877
        %v2034 = vmul.f32 %v1877, %v2033
        %v2035 = vsub.f32 1.0, %v2034
        %v2036 = vmul.f32 %v2033, %v2035
        %v2037 = vadd.f32 %v2033, %v2036
        %vm2038 = vweird.f32 %v1877
        %vm2039 = vweird.f32 %v2033
        %vm2040 = vmor %vm2038, %vm2039
        %v2041 = vsel %vm2040, %v2033, %v2037
        %v2042 = vand.u32 2147483647, %v1877
        %vm2043 = vcmp.eq.f32.partialorder %v2042, 8.507059e+37
        %v2044 = vand.u32 %v1877, 2147483648
        %v2045 = vor.u32 1.1754944e-38, %v2044
        %v2046 = vsel %vm2043, %v2045, %v2041
        %v2047 = vmul.f32 1.0, %v2046
        %v2048 = vrcp.pop %v1878
        %v2049 = vmul.f32 %v1878, %v2048
        %v2050 = vsub.f32 1.0, %v2049
        %v2051 = vmul.f32 %v2048, %v2050
        %v2052 = vadd.f32 %v2048, %v2051
        %vm2053 = vweird.f32 %v1878
        %vm2054 = vweird.f32 %v2048
        %vm2055 = vmor %vm2053, %vm2054
        %v2056 = vsel %vm2055, %v2048, %v2052
        %v2057 = vand.u32 2147483647, %v1878
        %vm2058 = vcmp.eq.f32.partialorder %v2057, 8.507059e+37
        %v2059 = vand.u32 %v1878, 2147483648
        %v2060 = vor.u32 1.1754944e-38, %v2059
        %v2061 = vsel %vm2058, %v2060, %v2056
        %v2062 = vmul.f32 1.0, %v2061
        %v2063 = vrcp.pop %v1879
        %v2064 = vmul.f32 %v1879, %v2063
        %v2065 = vsub.f32 1.0, %v2064
        %v2066 = vmul.f32 %v2063, %v2065
        %v2067 = vadd.f32 %v2063, %v2066
        %vm2068 = vweird.f32 %v1879
        %vm2069 = vweird.f32 %v2063
        %vm2070 = vmor %vm2068, %vm2069
        %v2071 = vsel %vm2070, %v2063, %v2067
        %v2072 = vand.u32 2147483647, %v1879
        %vm2073 = vcmp.eq.f32.partialorder %v2072, 8.507059e+37
        %v2074 = vand.u32 %v1879, 2147483648
        %v2075 = vor.u32 1.1754944e-38, %v2074
        %v2076 = vsel %vm2073, %v2075, %v2071
        %v2077 = vmul.f32 1.0, %v2076
        %v2078 = vrcp.pop %v1880
        %v2079 = vmul.f32 %v1880, %v2078
        %v2080 = vsub.f32 1.0, %v2079
        %v2081 = vmul.f32 %v2078, %v2080
        %v2082 = vadd.f32 %v2078, %v2081
        %vm2083 = vweird.f32 %v1880
        %vm2084 = vweird.f32 %v2078
        %vm2085 = vmor %vm2083, %vm2084
        %v2086 = vsel %vm2085, %v2078, %v2082
        %v2087 = vand.u32 2147483647, %v1880
        %vm2088 = vcmp.eq.f32.partialorder %v2087, 8.507059e+37
        %v2089 = vand.u32 %v1880, 2147483648
        %v2090 = vor.u32 1.1754944e-38, %v2089
        %v2091 = vsel %vm2088, %v2090, %v2086
        %v2092 = vmul.f32 1.0, %v2091
        %v2093 = vrcp.pop %v1881
        %v2094 = vmul.f32 %v1881, %v2093
        %v2095 = vsub.f32 1.0, %v2094
        %v2096 = vmul.f32 %v2093, %v2095
        %v2097 = vadd.f32 %v2093, %v2096
        %vm2098 = vweird.f32 %v1881
        %vm2099 = vweird.f32 %v2093
        %vm2100 = vmor %vm2098, %vm2099
        %v2101 = vsel %vm2100, %v2093, %v2097
        %v2102 = vand.u32 2147483647, %v1881
        %vm2103 = vcmp.eq.f32.partialorder %v2102, 8.507059e+37
        %v2104 = vand.u32 %v1881, 2147483648
        %v2105 = vor.u32 1.1754944e-38, %v2104
        %v2106 = vsel %vm2103, %v2105, %v2101
        %v2107 = vmul.f32 1.0, %v2106
        %v2108 = vrcp.pop %v1882
        %v2109 = vmul.f32 %v1882, %v2108
        %v2110 = vsub.f32 1.0, %v2109
        %v2111 = vmul.f32 %v2108, %v2110
        %v2112 = vadd.f32 %v2108, %v2111
        %vm2113 = vweird.f32 %v1882
        %vm2114 = vweird.f32 %v2108
        %vm2115 = vmor %vm2113, %vm2114
        %v2116 = vsel %vm2115, %v2108, %v2112
        %v2117 = vand.u32 2147483647, %v1882
        %vm2118 = vcmp.eq.f32.partialorder %v2117, 8.507059e+37
        %v2119 = vand.u32 %v1882, 2147483648
        %v2120 = vor.u32 1.1754944e-38, %v2119
        %v2121 = vsel %vm2118, %v2120, %v2116
        %v2122 = vmul.f32 1.0, %v2121
        %v2123 = vld [vmem:[%s401] sm:$0xff]
        %v2124 = vld [vmem:[%s401 + $0x8] sm:$0xff]
        %v2125 = vld [vmem:[%s401 + $0x10] sm:$0xff]
        %v2126 = vld [vmem:[%s401 + $0x18] sm:$0xff]
        %v2127 = vld [vmem:[%s401 + $0x20] sm:$0xff]
        %v2128 = vld [vmem:[%s401 + $0x28] sm:$0xff]
        %v2129 = vld [vmem:[%s401 + $0x30] sm:$0xff]
        %v2130 = vld [vmem:[%s401 + $0x38] sm:$0xff]
        %v2131 = vld [vmem:[%s401 + $0x40] sm:$0xff]
        %v2132 = vld [vmem:[%s401 + $0x48] sm:$0xff]
        %v2133 = vld [vmem:[%s401 + $0x50] sm:$0xff]
        %v2134 = vld [vmem:[%s401 + $0x58] sm:$0xff]
        %v2135 = vld [vmem:[%s401 + $0x60] sm:$0xff]
        %v2136 = vld [vmem:[%s401 + $0x68] sm:$0xff]
        %v2137 = vld [vmem:[%s401 + $0x70] sm:$0xff]
        %v2138 = vld [vmem:[%s401 + $0x78] sm:$0xff]
        %v2139 = vadd.f32 %v2123, %v1757
        %v2140 = vadd.f32 %v2124, %v1761
        %v2141 = vadd.f32 %v2125, %v1765
        %v2142 = vadd.f32 %v2126, %v1769
        %v2143 = vadd.f32 %v2127, %v1773
        %v2144 = vadd.f32 %v2128, %v1777
        %v2145 = vadd.f32 %v2129, %v1781
        %v2146 = vadd.f32 %v2130, %v1785
        %v2147 = vadd.f32 %v2131, %v1789
        %v2148 = vadd.f32 %v2132, %v1793
        %v2149 = vadd.f32 %v2133, %v1797
        %v2150 = vadd.f32 %v2134, %v1801
        %v2151 = vadd.f32 %v2135, %v1805
        %v2152 = vadd.f32 %v2136, %v1809
        %v2153 = vadd.f32 %v2137, %v1813
        %v2154 = vadd.f32 %v2138, %v1817
        %v2155 = vld [vmem:[%s407] sm:$0xff]
        %v2156 = vld [vmem:[%s407 + $0x8] sm:$0xff]
        %v2157 = vld [vmem:[%s407 + $0x10] sm:$0xff]
        %v2158 = vld [vmem:[%s407 + $0x18] sm:$0xff]
        %v2159 = vld [vmem:[%s407 + $0x20] sm:$0xff]
        %v2160 = vld [vmem:[%s407 + $0x28] sm:$0xff]
        %v2161 = vld [vmem:[%s407 + $0x30] sm:$0xff]
        %v2162 = vld [vmem:[%s407 + $0x38] sm:$0xff]
        %v2163 = vld [vmem:[%s407 + $0x40] sm:$0xff]
        %v2164 = vld [vmem:[%s407 + $0x48] sm:$0xff]
        %v2165 = vld [vmem:[%s407 + $0x50] sm:$0xff]
        %v2166 = vld [vmem:[%s407 + $0x58] sm:$0xff]
        %v2167 = vld [vmem:[%s407 + $0x60] sm:$0xff]
        %v2168 = vld [vmem:[%s407 + $0x68] sm:$0xff]
        %v2169 = vld [vmem:[%s407 + $0x70] sm:$0xff]
        %v2170 = vld [vmem:[%s407 + $0x78] sm:$0xff]
        %2187 = vrot.lane.b32.xlu0 %v1757, 119
        %v2188 = vpop.permute.xlu0 %2187
        %2189 = vrot.lane.b32.xlu0 %v1761, 119
        %v2190 = vpop.permute.xlu0 %2189
        %2191 = vrot.lane.b32.xlu0 %v1765, 119
        %v2192 = vpop.permute.xlu0 %2191
        %2193 = vrot.lane.b32.xlu0 %v1769, 119
        %v2194 = vpop.permute.xlu0 %2193
        %2195 = vrot.lane.b32.xlu0 %v1773, 119
        %v2196 = vpop.permute.xlu0 %2195
        %2197 = vrot.lane.b32.xlu0 %v1777, 119
        %v2198 = vpop.permute.xlu0 %2197
        %2199 = vrot.lane.b32.xlu0 %v1781, 119
        %v2200 = vpop.permute.xlu0 %2199
        %2201 = vrot.lane.b32.xlu0 %v1785, 119
        %v2202 = vpop.permute.xlu0 %2201
        %2203 = vrot.lane.b32.xlu0 %v1789, 119
        %v2204 = vpop.permute.xlu0 %2203
        %2205 = vrot.lane.b32.xlu0 %v1793, 119
        %v2206 = vpop.permute.xlu0 %2205
        %2207 = vrot.lane.b32.xlu0 %v1797, 119
        %v2208 = vpop.permute.xlu0 %2207
        %2209 = vrot.lane.b32.xlu0 %v1801, 119
        %v2210 = vpop.permute.xlu0 %2209
        %2211 = vrot.lane.b32.xlu0 %v1805, 119
        %v2212 = vpop.permute.xlu0 %2211
        %2213 = vrot.lane.b32.xlu0 %v1809, 119
        %v2214 = vpop.permute.xlu0 %2213
        %2215 = vrot.lane.b32.xlu0 %v1813, 119
        %v2216 = vpop.permute.xlu0 %2215
        %2217 = vrot.lane.b32.xlu0 %v1817, 119
        %v2218 = vpop.permute.xlu0 %2217
        %v2235 = vadd.f32 %v2155, %v2188
        %v2236 = vadd.f32 %v2156, %v2190
        %v2237 = vadd.f32 %v2157, %v2192
        %v2238 = vadd.f32 %v2158, %v2194
        %v2239 = vadd.f32 %v2159, %v2196
        %v2240 = vadd.f32 %v2160, %v2198
        %v2241 = vadd.f32 %v2161, %v2200
        %v2242 = vadd.f32 %v2162, %v2202
        %v2243 = vadd.f32 %v2163, %v2204
        %v2244 = vadd.f32 %v2164, %v2206
        %v2245 = vadd.f32 %v2165, %v2208
        %v2246 = vadd.f32 %v2166, %v2210
        %v2247 = vadd.f32 %v2167, %v2212
        %v2248 = vadd.f32 %v2168, %v2214
        %v2249 = vadd.f32 %v2169, %v2216
        %v2250 = vadd.f32 %v2170, %v2218
        %v2251 = vld [vmem:[%s391] sm:$0xff]
        %v2252 = vld [vmem:[%s391 + $0x8] sm:$0xff]
        %v2253 = vld [vmem:[%s391 + $0x10] sm:$0x3]
        %v2254 = vlaneseq
        %v2255 = vand.u32 %v2254, 127
        %v2256 = vcvt.s32.f32 %v2255
        %v2257 = vld [vmem:[%s4] sm:$0x1]
        %v2258 = vfloor.f32 %v2139
        %v2259 = vfloor.f32 %v2140
        %v2260 = vfloor.f32 %v2141
        %v2261 = vfloor.f32 %v2142
        %v2262 = vfloor.f32 %v2143
        %v2263 = vfloor.f32 %v2144
        %v2264 = vfloor.f32 %v2145
        %v2265 = vfloor.f32 %v2146
        %v2266 = vfloor.f32 %v2147
        %v2267 = vfloor.f32 %v2148
        %v2268 = vfloor.f32 %v2149
        %v2269 = vfloor.f32 %v2150
        %v2270 = vfloor.f32 %v2151
        %v2271 = vfloor.f32 %v2152
        %v2272 = vfloor.f32 %v2153
        %v2273 = vfloor.f32 %v2154
        %v2274 = vfloor.f32 %v2235
        %v2275 = vfloor.f32 %v2236
        %v2276 = vfloor.f32 %v2237
        %v2277 = vfloor.f32 %v2238
        %v2278 = vfloor.f32 %v2239
        %v2279 = vfloor.f32 %v2240
        %v2280 = vfloor.f32 %v2241
        %v2281 = vfloor.f32 %v2242
        %v2282 = vfloor.f32 %v2243
        %v2283 = vfloor.f32 %v2244
        %v2284 = vfloor.f32 %v2245
        %v2285 = vfloor.f32 %v2246
        %v2286 = vfloor.f32 %v2247
        %v2287 = vfloor.f32 %v2248
        %v2288 = vfloor.f32 %v2249
        %v2289 = vfloor.f32 %v2250
        %v2290 = vsub.f32 %v2139, %v2258
        %v2291 = vsub.f32 %v2140, %v2259
        %v2292 = vsub.f32 %v2141, %v2260
        %v2293 = vsub.f32 %v2142, %v2261
        %v2294 = vsub.f32 %v2143, %v2262
        %v2295 = vsub.f32 %v2144, %v2263
        %v2296 = vsub.f32 %v2145, %v2264
        %v2297 = vsub.f32 %v2146, %v2265
        %v2298 = vsub.f32 %v2147, %v2266
        %v2299 = vsub.f32 %v2148, %v2267
        %v2300 = vsub.f32 %v2149, %v2268
        %v2301 = vsub.f32 %v2150, %v2269
        %v2302 = vsub.f32 %v2151, %v2270
        %v2303 = vsub.f32 %v2152, %v2271
        %v2304 = vsub.f32 %v2153, %v2272
        %v2305 = vsub.f32 %v2154, %v2273
        %v2306 = vsub.f32 %v2235, %v2274
        %v2307 = vsub.f32 %v2236, %v2275
        %v2308 = vsub.f32 %v2237, %v2276
        %v2309 = vsub.f32 %v2238, %v2277
        %v2310 = vsub.f32 %v2239, %v2278
        %v2311 = vsub.f32 %v2240, %v2279
        %v2312 = vsub.f32 %v2241, %v2280
        %v2313 = vsub.f32 %v2242, %v2281
        %v2314 = vsub.f32 %v2243, %v2282
        %v2315 = vsub.f32 %v2244, %v2283
        %v2316 = vsub.f32 %v2245, %v2284
        %v2317 = vsub.f32 %v2246, %v2285
        %v2318 = vsub.f32 %v2247, %v2286
        %v2319 = vsub.f32 %v2248, %v2287
        %v2320 = vsub.f32 %v2249, %v2288
        %v2321 = vsub.f32 %v2250, %v2289
        %v2322 = vsub.f32 1.0, %v2290
        %v2323 = vsub.f32 1.0, %v2291
        %v2324 = vsub.f32 1.0, %v2292
        %v2325 = vsub.f32 1.0, %v2293
        %v2326 = vsub.f32 1.0, %v2294
        %v2327 = vsub.f32 1.0, %v2295
        %v2328 = vsub.f32 1.0, %v2296
        %v2329 = vsub.f32 1.0, %v2297
        %v2330 = vsub.f32 1.0, %v2298
        %v2331 = vsub.f32 1.0, %v2299
        %v2332 = vsub.f32 1.0, %v2300
        %v2333 = vsub.f32 1.0, %v2301
        %v2334 = vsub.f32 1.0, %v2302
        %v2335 = vsub.f32 1.0, %v2303
        %v2336 = vsub.f32 1.0, %v2304
        %v2337 = vsub.f32 1.0, %v2305
        %2354 = vrot.lane.b32.xlu0 %v1897, 110
        %v2355 = vpop.permute.xlu0 %2354
        %2356 = vrot.lane.b32.xlu0 %v1912, 110
        %v2357 = vpop.permute.xlu0 %2356
        %2358 = vrot.lane.b32.xlu0 %v1927, 110
        %v2359 = vpop.permute.xlu0 %2358
        %2360 = vrot.lane.b32.xlu0 %v1942, 110
        %v2361 = vpop.permute.xlu0 %2360
        %2362 = vrot.lane.b32.xlu0 %v1957, 110
        %v2363 = vpop.permute.xlu0 %2362
        %2364 = vrot.lane.b32.xlu0 %v1972, 110
        %v2365 = vpop.permute.xlu0 %2364
        %2366 = vrot.lane.b32.xlu0 %v1987, 110
        %v2367 = vpop.permute.xlu0 %2366
        %2368 = vrot.lane.b32.xlu0 %v2002, 110
        %v2369 = vpop.permute.xlu0 %2368
        %2370 = vrot.lane.b32.xlu0 %v2017, 110
        %v2371 = vpop.permute.xlu0 %2370
        %2372 = vrot.lane.b32.xlu0 %v2032, 110
        %v2373 = vpop.permute.xlu0 %2372
        %2374 = vrot.lane.b32.xlu0 %v2047, 110
        %v2375 = vpop.permute.xlu0 %2374
        %2376 = vrot.lane.b32.xlu0 %v2062, 110
        %v2377 = vpop.permute.xlu0 %2376
        %2378 = vrot.lane.b32.xlu0 %v2077, 110
        %v2379 = vpop.permute.xlu0 %2378
        %2380 = vrot.lane.b32.xlu0 %v2092, 110
        %v2381 = vpop.permute.xlu0 %2380
        %2382 = vrot.lane.b32.xlu0 %v2107, 110
        %v2383 = vpop.permute.xlu0 %2382
        %2384 = vrot.lane.b32.xlu0 %v2122, 110
        %v2385 = vpop.permute.xlu0 %2384
        %v2402 = vmul.f32 %v2322, %v2355
        %v2403 = vmul.f32 %v2323, %v2357
        %v2404 = vmul.f32 %v2324, %v2359
        %v2405 = vmul.f32 %v2325, %v2361
        %v2406 = vmul.f32 %v2326, %v2363
        %v2407 = vmul.f32 %v2327, %v2365
        %v2408 = vmul.f32 %v2328, %v2367
        %v2409 = vmul.f32 %v2329, %v2369
        %v2410 = vmul.f32 %v2330, %v2371
        %v2411 = vmul.f32 %v2331, %v2373
        %v2412 = vmul.f32 %v2332, %v2375
        %v2413 = vmul.f32 %v2333, %v2377
        %v2414 = vmul.f32 %v2334, %v2379
        %v2415 = vmul.f32 %v2335, %v2381
        %v2416 = vmul.f32 %v2336, %v2383
        %v2417 = vmul.f32 %v2337, %v2385
        %v2418 = vmul.f32 %v2290, %v2355
        %v2419 = vmul.f32 %v2291, %v2357
        %v2420 = vmul.f32 %v2292, %v2359
        %v2421 = vmul.f32 %v2293, %v2361
        %v2422 = vmul.f32 %v2294, %v2363
        %v2423 = vmul.f32 %v2295, %v2365
        %v2424 = vmul.f32 %v2296, %v2367
        %v2425 = vmul.f32 %v2297, %v2369
        %v2426 = vmul.f32 %v2298, %v2371
        %v2427 = vmul.f32 %v2299, %v2373
        %v2428 = vmul.f32 %v2300, %v2375
        %v2429 = vmul.f32 %v2301, %v2377
        %v2430 = vmul.f32 %v2302, %v2379
        %v2431 = vmul.f32 %v2303, %v2381
        %v2432 = vmul.f32 %v2304, %v2383
        %v2433 = vmul.f32 %v2305, %v2385
        %2435 = vset.pattern.permute.xlu0 0
        %2436 = vperm.xlu0 %2435, %v2258
        %v2437 = vpop.permute.xlu0 %2436
        %2440 = vset.pattern.permute.xlu0 0
        %2441 = vperm.xlu0 %2440, %v2259
        %v2442 = vpop.permute.xlu0 %2441
        %2445 = vset.pattern.permute.xlu0 0
        %2446 = vperm.xlu0 %2445, %v2260
        %v2447 = vpop.permute.xlu0 %2446
        %2450 = vset.pattern.permute.xlu0 0
        %2451 = vperm.xlu0 %2450, %v2261
        %v2452 = vpop.permute.xlu0 %2451
        %2455 = vset.pattern.permute.xlu0 0
        %2456 = vperm.xlu0 %2455, %v2262
        %v2457 = vpop.permute.xlu0 %2456
        %2460 = vset.pattern.permute.xlu0 0
        %2461 = vperm.xlu0 %2460, %v2263
        %v2462 = vpop.permute.xlu0 %2461
        %2465 = vset.pattern.permute.xlu0 0
        %2466 = vperm.xlu0 %2465, %v2264
        %v2467 = vpop.permute.xlu0 %2466
        %2470 = vset.pattern.permute.xlu0 0
        %2471 = vperm.xlu0 %2470, %v2265
        %v2472 = vpop.permute.xlu0 %2471
        %2475 = vset.pattern.permute.xlu0 0
        %2476 = vperm.xlu0 %2475, %v2266
        %v2477 = vpop.permute.xlu0 %2476
        %2480 = vset.pattern.permute.xlu0 0
        %2481 = vperm.xlu0 %2480, %v2267
        %v2482 = vpop.permute.xlu0 %2481
        %2485 = vset.pattern.permute.xlu0 0
        %2486 = vperm.xlu0 %2485, %v2268
        %v2487 = vpop.permute.xlu0 %2486
        %2490 = vset.pattern.permute.xlu0 0
        %2491 = vperm.xlu0 %2490, %v2269
        %v2492 = vpop.permute.xlu0 %2491
        %2495 = vset.pattern.permute.xlu0 0
        %2496 = vperm.xlu0 %2495, %v2270
        %v2497 = vpop.permute.xlu0 %2496
        %2500 = vset.pattern.permute.xlu0 0
        %2501 = vperm.xlu0 %2500, %v2271
        %v2502 = vpop.permute.xlu0 %2501
        %2505 = vset.pattern.permute.xlu0 0
        %2506 = vperm.xlu0 %2505, %v2272
        %v2507 = vpop.permute.xlu0 %2506
        %2510 = vset.pattern.permute.xlu0 0
        %2511 = vperm.xlu0 %2510, %v2273
        %v2512 = vpop.permute.xlu0 %2511
        %vm2514 = vcmp.eq.f32.partialorder %v2256, %v2437
        %vm2515 = vcmp.eq.f32.partialorder %v2256, %v2442
        %vm2516 = vcmp.eq.f32.partialorder %v2256, %v2447
        %vm2517 = vcmp.eq.f32.partialorder %v2256, %v2452
        %vm2518 = vcmp.eq.f32.partialorder %v2256, %v2457
        %vm2519 = vcmp.eq.f32.partialorder %v2256, %v2462
        %vm2520 = vcmp.eq.f32.partialorder %v2256, %v2467
        %vm2521 = vcmp.eq.f32.partialorder %v2256, %v2472
        %vm2522 = vcmp.eq.f32.partialorder %v2256, %v2477
        %vm2523 = vcmp.eq.f32.partialorder %v2256, %v2482
        %vm2524 = vcmp.eq.f32.partialorder %v2256, %v2487
        %vm2525 = vcmp.eq.f32.partialorder %v2256, %v2492
        %vm2526 = vcmp.eq.f32.partialorder %v2256, %v2497
        %vm2527 = vcmp.eq.f32.partialorder %v2256, %v2502
        %vm2528 = vcmp.eq.f32.partialorder %v2256, %v2507
        %vm2529 = vcmp.eq.f32.partialorder %v2256, %v2512
        %2531 = vset.pattern.permute.xlu0 0
        %2532 = vperm.xlu0 %2531, %v2402
        %v2533 = vpop.permute.xlu0 %2532
        %2536 = vset.pattern.permute.xlu0 0
        %2537 = vperm.xlu0 %2536, %v2403
        %v2538 = vpop.permute.xlu0 %2537
        %2541 = vset.pattern.permute.xlu0 0
        %2542 = vperm.xlu0 %2541, %v2404
        %v2543 = vpop.permute.xlu0 %2542
        %2546 = vset.pattern.permute.xlu0 0
        %2547 = vperm.xlu0 %2546, %v2405
        %v2548 = vpop.permute.xlu0 %2547
        %2551 = vset.pattern.permute.xlu0 0
        %2552 = vperm.xlu0 %2551, %v2406
        %v2553 = vpop.permute.xlu0 %2552
        %2556 = vset.pattern.permute.xlu0 0
        %2557 = vperm.xlu0 %2556, %v2407
        %v2558 = vpop.permute.xlu0 %2557
        %2561 = vset.pattern.permute.xlu0 0
        %2562 = vperm.xlu0 %2561, %v2408
        %v2563 = vpop.permute.xlu0 %2562
        %2566 = vset.pattern.permute.xlu0 0
        %2567 = vperm.xlu0 %2566, %v2409
        %v2568 = vpop.permute.xlu0 %2567
        %2571 = vset.pattern.permute.xlu0 0
        %2572 = vperm.xlu0 %2571, %v2410
        %v2573 = vpop.permute.xlu0 %2572
        %2576 = vset.pattern.permute.xlu0 0
        %2577 = vperm.xlu0 %2576, %v2411
        %v2578 = vpop.permute.xlu0 %2577
        %2581 = vset.pattern.permute.xlu0 0
        %2582 = vperm.xlu0 %2581, %v2412
        %v2583 = vpop.permute.xlu0 %2582
        %2586 = vset.pattern.permute.xlu0 0
        %2587 = vperm.xlu0 %2586, %v2413
        %v2588 = vpop.permute.xlu0 %2587
        %2591 = vset.pattern.permute.xlu0 0
        %2592 = vperm.xlu0 %2591, %v2414
        %v2593 = vpop.permute.xlu0 %2592
        %2596 = vset.pattern.permute.xlu0 0
        %2597 = vperm.xlu0 %2596, %v2415
        %v2598 = vpop.permute.xlu0 %2597
        %2601 = vset.pattern.permute.xlu0 0
        %2602 = vperm.xlu0 %2601, %v2416
        %v2603 = vpop.permute.xlu0 %2602
        %2606 = vset.pattern.permute.xlu0 0
        %2607 = vperm.xlu0 %2606, %v2417
        %v2608 = vpop.permute.xlu0 %2607
        %v2610 = vsel %vm2514, %v2533, 0.0
        %v2611 = vsel %vm2515, %v2538, 0.0
        %v2612 = vsel %vm2516, %v2543, 0.0
        %v2613 = vsel %vm2517, %v2548, 0.0
        %v2614 = vsel %vm2518, %v2553, 0.0
        %v2615 = vsel %vm2519, %v2558, 0.0
        %v2616 = vsel %vm2520, %v2563, 0.0
        %v2617 = vsel %vm2521, %v2568, 0.0
        %v2618 = vsel %vm2522, %v2573, 0.0
        %v2619 = vsel %vm2523, %v2578, 0.0
        %v2620 = vsel %vm2524, %v2583, 0.0
        %v2621 = vsel %vm2525, %v2588, 0.0
        %v2622 = vsel %vm2526, %v2593, 0.0
        %v2623 = vsel %vm2527, %v2598, 0.0
        %v2624 = vsel %vm2528, %v2603, 0.0
        %v2625 = vsel %vm2529, %v2608, 0.0
        %v2626 = vadd.f32 %v2258, 1.0
        %v2627 = vadd.f32 %v2259, 1.0
        %v2628 = vadd.f32 %v2260, 1.0
        %v2629 = vadd.f32 %v2261, 1.0
        %v2630 = vadd.f32 %v2262, 1.0
        %v2631 = vadd.f32 %v2263, 1.0
        %v2632 = vadd.f32 %v2264, 1.0
        %v2633 = vadd.f32 %v2265, 1.0
        %v2634 = vadd.f32 %v2266, 1.0
        %v2635 = vadd.f32 %v2267, 1.0
        %v2636 = vadd.f32 %v2268, 1.0
        %v2637 = vadd.f32 %v2269, 1.0
        %v2638 = vadd.f32 %v2270, 1.0
        %v2639 = vadd.f32 %v2271, 1.0
        %v2640 = vadd.f32 %v2272, 1.0
        %v2641 = vadd.f32 %v2273, 1.0
        %2643 = vset.pattern.permute.xlu0 0
        %2644 = vperm.xlu0 %2643, %v2626
        %v2645 = vpop.permute.xlu0 %2644
        %2648 = vset.pattern.permute.xlu0 0
        %2649 = vperm.xlu0 %2648, %v2627
        %v2650 = vpop.permute.xlu0 %2649
        %2653 = vset.pattern.permute.xlu0 0
        %2654 = vperm.xlu0 %2653, %v2628
        %v2655 = vpop.permute.xlu0 %2654
        %2658 = vset.pattern.permute.xlu0 0
        %2659 = vperm.xlu0 %2658, %v2629
        %v2660 = vpop.permute.xlu0 %2659
        %2663 = vset.pattern.permute.xlu0 0
        %2664 = vperm.xlu0 %2663, %v2630
        %v2665 = vpop.permute.xlu0 %2664
        %2668 = vset.pattern.permute.xlu0 0
        %2669 = vperm.xlu0 %2668, %v2631
        %v2670 = vpop.permute.xlu0 %2669
        %2673 = vset.pattern.permute.xlu0 0
        %2674 = vperm.xlu0 %2673, %v2632
        %v2675 = vpop.permute.xlu0 %2674
        %2678 = vset.pattern.permute.xlu0 0
        %2679 = vperm.xlu0 %2678, %v2633
        %v2680 = vpop.permute.xlu0 %2679
        %2683 = vset.pattern.permute.xlu0 0
        %2684 = vperm.xlu0 %2683, %v2634
        %v2685 = vpop.permute.xlu0 %2684
        %2688 = vset.pattern.permute.xlu0 0
        %2689 = vperm.xlu0 %2688, %v2635
        %v2690 = vpop.permute.xlu0 %2689
        %2693 = vset.pattern.permute.xlu0 0
        %2694 = vperm.xlu0 %2693, %v2636
        %v2695 = vpop.permute.xlu0 %2694
        %2698 = vset.pattern.permute.xlu0 0
        %2699 = vperm.xlu0 %2698, %v2637
        %v2700 = vpop.permute.xlu0 %2699
        %2703 = vset.pattern.permute.xlu0 0
        %2704 = vperm.xlu0 %2703, %v2638
        %v2705 = vpop.permute.xlu0 %2704
        %2708 = vset.pattern.permute.xlu0 0
        %2709 = vperm.xlu0 %2708, %v2639
        %v2710 = vpop.permute.xlu0 %2709
        %2713 = vset.pattern.permute.xlu0 0
        %2714 = vperm.xlu0 %2713, %v2640
        %v2715 = vpop.permute.xlu0 %2714
        %2718 = vset.pattern.permute.xlu0 0
        %2719 = vperm.xlu0 %2718, %v2641
        %v2720 = vpop.permute.xlu0 %2719
        %vm2722 = vcmp.eq.f32.partialorder %v2256, %v2645
        %vm2723 = vcmp.eq.f32.partialorder %v2256, %v2650
        %vm2724 = vcmp.eq.f32.partialorder %v2256, %v2655
        %vm2725 = vcmp.eq.f32.partialorder %v2256, %v2660
        %vm2726 = vcmp.eq.f32.partialorder %v2256, %v2665
        %vm2727 = vcmp.eq.f32.partialorder %v2256, %v2670
        %vm2728 = vcmp.eq.f32.partialorder %v2256, %v2675
        %vm2729 = vcmp.eq.f32.partialorder %v2256, %v2680
        %vm2730 = vcmp.eq.f32.partialorder %v2256, %v2685
        %vm2731 = vcmp.eq.f32.partialorder %v2256, %v2690
        %vm2732 = vcmp.eq.f32.partialorder %v2256, %v2695
        %vm2733 = vcmp.eq.f32.partialorder %v2256, %v2700
        %vm2734 = vcmp.eq.f32.partialorder %v2256, %v2705
        %vm2735 = vcmp.eq.f32.partialorder %v2256, %v2710
        %vm2736 = vcmp.eq.f32.partialorder %v2256, %v2715
        %vm2737 = vcmp.eq.f32.partialorder %v2256, %v2720
        %2739 = vset.pattern.permute.xlu0 0
        %2740 = vperm.xlu0 %2739, %v2418
        %v2741 = vpop.permute.xlu0 %2740
        %2744 = vset.pattern.permute.xlu0 0
        %2745 = vperm.xlu0 %2744, %v2419
        %v2746 = vpop.permute.xlu0 %2745
        %2749 = vset.pattern.permute.xlu0 0
        %2750 = vperm.xlu0 %2749, %v2420
        %v2751 = vpop.permute.xlu0 %2750
        %2754 = vset.pattern.permute.xlu0 0
        %2755 = vperm.xlu0 %2754, %v2421
        %v2756 = vpop.permute.xlu0 %2755
        %2759 = vset.pattern.permute.xlu0 0
        %2760 = vperm.xlu0 %2759, %v2422
        %v2761 = vpop.permute.xlu0 %2760
        %2764 = vset.pattern.permute.xlu0 0
        %2765 = vperm.xlu0 %2764, %v2423
        %v2766 = vpop.permute.xlu0 %2765
        %2769 = vset.pattern.permute.xlu0 0
        %2770 = vperm.xlu0 %2769, %v2424
        %v2771 = vpop.permute.xlu0 %2770
        %2774 = vset.pattern.permute.xlu0 0
        %2775 = vperm.xlu0 %2774, %v2425
        %v2776 = vpop.permute.xlu0 %2775
        %2779 = vset.pattern.permute.xlu0 0
        %2780 = vperm.xlu0 %2779, %v2426
        %v2781 = vpop.permute.xlu0 %2780
        %2784 = vset.pattern.permute.xlu0 0
        %2785 = vperm.xlu0 %2784, %v2427
        %v2786 = vpop.permute.xlu0 %2785
        %2789 = vset.pattern.permute.xlu0 0
        %2790 = vperm.xlu0 %2789, %v2428
        %v2791 = vpop.permute.xlu0 %2790
        %2794 = vset.pattern.permute.xlu0 0
        %2795 = vperm.xlu0 %2794, %v2429
        %v2796 = vpop.permute.xlu0 %2795
        %2799 = vset.pattern.permute.xlu0 0
        %2800 = vperm.xlu0 %2799, %v2430
        %v2801 = vpop.permute.xlu0 %2800
        %2804 = vset.pattern.permute.xlu0 0
        %2805 = vperm.xlu0 %2804, %v2431
        %v2806 = vpop.permute.xlu0 %2805
        %2809 = vset.pattern.permute.xlu0 0
        %2810 = vperm.xlu0 %2809, %v2432
        %v2811 = vpop.permute.xlu0 %2810
        %2814 = vset.pattern.permute.xlu0 0
        %2815 = vperm.xlu0 %2814, %v2433
        %v2816 = vpop.permute.xlu0 %2815
        %v2818 = vsel %vm2722, %v2741, 0.0
        %v2819 = vsel %vm2723, %v2746, 0.0
        %v2820 = vsel %vm2724, %v2751, 0.0
        %v2821 = vsel %vm2725, %v2756, 0.0
        %v2822 = vsel %vm2726, %v2761, 0.0
        %v2823 = vsel %vm2727, %v2766, 0.0
        %v2824 = vsel %vm2728, %v2771, 0.0
        %v2825 = vsel %vm2729, %v2776, 0.0
        %v2826 = vsel %vm2730, %v2781, 0.0
        %v2827 = vsel %vm2731, %v2786, 0.0
        %v2828 = vsel %vm2732, %v2791, 0.0
        %v2829 = vsel %vm2733, %v2796, 0.0
        %v2830 = vsel %vm2734, %v2801, 0.0
        %v2831 = vsel %vm2735, %v2806, 0.0
        %v2832 = vsel %vm2736, %v2811, 0.0
        %v2833 = vsel %vm2737, %v2816, 0.0
        %v2834 = vadd.f32 %v2610, %v2818
        %v2835 = vadd.f32 %v2611, %v2819
        %v2836 = vadd.f32 %v2612, %v2820
        %v2837 = vadd.f32 %v2613, %v2821
        %v2838 = vadd.f32 %v2614, %v2822
        %v2839 = vadd.f32 %v2615, %v2823
        %v2840 = vadd.f32 %v2616, %v2824
        %v2841 = vadd.f32 %v2617, %v2825
        %v2842 = vadd.f32 %v2618, %v2826
        %v2843 = vadd.f32 %v2619, %v2827
        %v2844 = vadd.f32 %v2620, %v2828
        %v2845 = vadd.f32 %v2621, %v2829
        %v2846 = vadd.f32 %v2622, %v2830
        %v2847 = vadd.f32 %v2623, %v2831
        %v2848 = vadd.f32 %v2624, %v2832
        %v2849 = vadd.f32 %v2625, %v2833
        %v2851 = vperm.slane %v2257, 0
        %2854 = vset.pattern.permute.xlu0 0
        %2855 = vperm.xlu0 %2854, %v2274
        %v2856 = vpop.permute.xlu0 %2855
        %2859 = vset.pattern.permute.xlu0 0
        %2860 = vperm.xlu0 %2859, %v2275
        %v2861 = vpop.permute.xlu0 %2860
        %2864 = vset.pattern.permute.xlu0 0
        %2865 = vperm.xlu0 %2864, %v2276
        %v2866 = vpop.permute.xlu0 %2865
        %2869 = vset.pattern.permute.xlu0 0
        %2870 = vperm.xlu0 %2869, %v2277
        %v2871 = vpop.permute.xlu0 %2870
        %2874 = vset.pattern.permute.xlu0 0
        %2875 = vperm.xlu0 %2874, %v2278
        %v2876 = vpop.permute.xlu0 %2875
        %2879 = vset.pattern.permute.xlu0 0
        %2880 = vperm.xlu0 %2879, %v2279
        %v2881 = vpop.permute.xlu0 %2880
        %2884 = vset.pattern.permute.xlu0 0
        %2885 = vperm.xlu0 %2884, %v2280
        %v2886 = vpop.permute.xlu0 %2885
        %2889 = vset.pattern.permute.xlu0 0
        %2890 = vperm.xlu0 %2889, %v2281
        %v2891 = vpop.permute.xlu0 %2890
        %2894 = vset.pattern.permute.xlu0 0
        %2895 = vperm.xlu0 %2894, %v2282
        %v2896 = vpop.permute.xlu0 %2895
        %2899 = vset.pattern.permute.xlu0 0
        %2900 = vperm.xlu0 %2899, %v2283
        %v2901 = vpop.permute.xlu0 %2900
        %2904 = vset.pattern.permute.xlu0 0
        %2905 = vperm.xlu0 %2904, %v2284
        %v2906 = vpop.permute.xlu0 %2905
        %2909 = vset.pattern.permute.xlu0 0
        %2910 = vperm.xlu0 %2909, %v2285
        %v2911 = vpop.permute.xlu0 %2910
        %2914 = vset.pattern.permute.xlu0 0
        %2915 = vperm.xlu0 %2914, %v2286
        %v2916 = vpop.permute.xlu0 %2915
        %2919 = vset.pattern.permute.xlu0 0
        %2920 = vperm.xlu0 %2919, %v2287
        %v2921 = vpop.permute.xlu0 %2920
        %2924 = vset.pattern.permute.xlu0 0
        %2925 = vperm.xlu0 %2924, %v2288
        %v2926 = vpop.permute.xlu0 %2925
        %2929 = vset.pattern.permute.xlu0 0
        %2930 = vperm.xlu0 %2929, %v2289
        %v2931 = vpop.permute.xlu0 %2930
        %vm2933 = vcmp.eq.f32.partialorder %v2851, %v2856
        %vm2934 = vcmp.eq.f32.partialorder %v2851, %v2861
        %vm2935 = vcmp.eq.f32.partialorder %v2851, %v2866
        %vm2936 = vcmp.eq.f32.partialorder %v2851, %v2871
        %vm2937 = vcmp.eq.f32.partialorder %v2851, %v2876
        %vm2938 = vcmp.eq.f32.partialorder %v2851, %v2881
        %vm2939 = vcmp.eq.f32.partialorder %v2851, %v2886
        %vm2940 = vcmp.eq.f32.partialorder %v2851, %v2891
        %vm2941 = vcmp.eq.f32.partialorder %v2851, %v2896
        %vm2942 = vcmp.eq.f32.partialorder %v2851, %v2901
        %vm2943 = vcmp.eq.f32.partialorder %v2851, %v2906
        %vm2944 = vcmp.eq.f32.partialorder %v2851, %v2911
        %vm2945 = vcmp.eq.f32.partialorder %v2851, %v2916
        %vm2946 = vcmp.eq.f32.partialorder %v2851, %v2921
        %vm2947 = vcmp.eq.f32.partialorder %v2851, %v2926
        %vm2948 = vcmp.eq.f32.partialorder %v2851, %v2931
        %v2949 = vsub.f32 1.0, %v2306
        %v2950 = vsub.f32 1.0, %v2307
        %v2951 = vsub.f32 1.0, %v2308
        %v2952 = vsub.f32 1.0, %v2309
        %v2953 = vsub.f32 1.0, %v2310
        %v2954 = vsub.f32 1.0, %v2311
        %v2955 = vsub.f32 1.0, %v2312
        %v2956 = vsub.f32 1.0, %v2313
        %v2957 = vsub.f32 1.0, %v2314
        %v2958 = vsub.f32 1.0, %v2315
        %v2959 = vsub.f32 1.0, %v2316
        %v2960 = vsub.f32 1.0, %v2317
        %v2961 = vsub.f32 1.0, %v2318
        %v2962 = vsub.f32 1.0, %v2319
        %v2963 = vsub.f32 1.0, %v2320
        %v2964 = vsub.f32 1.0, %v2321
        %2966 = vset.pattern.permute.xlu0 0
        %2967 = vperm.xlu0 %2966, %v2949
        %v2968 = vpop.permute.xlu0 %2967
        %2971 = vset.pattern.permute.xlu0 0
        %2972 = vperm.xlu0 %2971, %v2950
        %v2973 = vpop.permute.xlu0 %2972
        %2976 = vset.pattern.permute.xlu0 0
        %2977 = vperm.xlu0 %2976, %v2951
        %v2978 = vpop.permute.xlu0 %2977
        %2981 = vset.pattern.permute.xlu0 0
        %2982 = vperm.xlu0 %2981, %v2952
        %v2983 = vpop.permute.xlu0 %2982
        %2986 = vset.pattern.permute.xlu0 0
        %2987 = vperm.xlu0 %2986, %v2953
        %v2988 = vpop.permute.xlu0 %2987
        %2991 = vset.pattern.permute.xlu0 0
        %2992 = vperm.xlu0 %2991, %v2954
        %v2993 = vpop.permute.xlu0 %2992
        %2996 = vset.pattern.permute.xlu0 0
        %2997 = vperm.xlu0 %2996, %v2955
        %v2998 = vpop.permute.xlu0 %2997
        %3001 = vset.pattern.permute.xlu0 0
        %3002 = vperm.xlu0 %3001, %v2956
        %v3003 = vpop.permute.xlu0 %3002
        %3006 = vset.pattern.permute.xlu0 0
        %3007 = vperm.xlu0 %3006, %v2957
        %v3008 = vpop.permute.xlu0 %3007
        %3011 = vset.pattern.permute.xlu0 0
        %3012 = vperm.xlu0 %3011, %v2958
        %v3013 = vpop.permute.xlu0 %3012
        %3016 = vset.pattern.permute.xlu0 0
        %3017 = vperm.xlu0 %3016, %v2959
        %v3018 = vpop.permute.xlu0 %3017
        %3021 = vset.pattern.permute.xlu0 0
        %3022 = vperm.xlu0 %3021, %v2960
        %v3023 = vpop.permute.xlu0 %3022
        %3026 = vset.pattern.permute.xlu0 0
        %3027 = vperm.xlu0 %3026, %v2961
        %v3028 = vpop.permute.xlu0 %3027
        %3031 = vset.pattern.permute.xlu0 0
        %3032 = vperm.xlu0 %3031, %v2962
        %v3033 = vpop.permute.xlu0 %3032
        %3036 = vset.pattern.permute.xlu0 0
        %3037 = vperm.xlu0 %3036, %v2963
        %v3038 = vpop.permute.xlu0 %3037
        %3041 = vset.pattern.permute.xlu0 0
        %3042 = vperm.xlu0 %3041, %v2964
        %v3043 = vpop.permute.xlu0 %3042
        %v3045 = vsel %vm2933, %v2968, 0.0
        %v3046 = vsel %vm2934, %v2973, 0.0
        %v3047 = vsel %vm2935, %v2978, 0.0
        %v3048 = vsel %vm2936, %v2983, 0.0
        %v3049 = vsel %vm2937, %v2988, 0.0
        %v3050 = vsel %vm2938, %v2993, 0.0
        %v3051 = vsel %vm2939, %v2998, 0.0
        %v3052 = vsel %vm2940, %v3003, 0.0
        %v3053 = vsel %vm2941, %v3008, 0.0
        %v3054 = vsel %vm2942, %v3013, 0.0
        %v3055 = vsel %vm2943, %v3018, 0.0
        %v3056 = vsel %vm2944, %v3023, 0.0
        %v3057 = vsel %vm2945, %v3028, 0.0
        %v3058 = vsel %vm2946, %v3033, 0.0
        %v3059 = vsel %vm2947, %v3038, 0.0
        %v3060 = vsel %vm2948, %v3043, 0.0
        %v3061 = vadd.f32 %v2274, 1.0
        %v3062 = vadd.f32 %v2275, 1.0
        %v3063 = vadd.f32 %v2276, 1.0
        %v3064 = vadd.f32 %v2277, 1.0
        %v3065 = vadd.f32 %v2278, 1.0
        %v3066 = vadd.f32 %v2279, 1.0
        %v3067 = vadd.f32 %v2280, 1.0
        %v3068 = vadd.f32 %v2281, 1.0
        %v3069 = vadd.f32 %v2282, 1.0
        %v3070 = vadd.f32 %v2283, 1.0
        %v3071 = vadd.f32 %v2284, 1.0
        %v3072 = vadd.f32 %v2285, 1.0
        %v3073 = vadd.f32 %v2286, 1.0
        %v3074 = vadd.f32 %v2287, 1.0
        %v3075 = vadd.f32 %v2288, 1.0
        %v3076 = vadd.f32 %v2289, 1.0
        %3078 = vset.pattern.permute.xlu0 0
        %3079 = vperm.xlu0 %3078, %v3061
        %v3080 = vpop.permute.xlu0 %3079
        %3083 = vset.pattern.permute.xlu0 0
        %3084 = vperm.xlu0 %3083, %v3062
        %v3085 = vpop.permute.xlu0 %3084
        %3088 = vset.pattern.permute.xlu0 0
        %3089 = vperm.xlu0 %3088, %v3063
        %v3090 = vpop.permute.xlu0 %3089
        %3093 = vset.pattern.permute.xlu0 0
        %3094 = vperm.xlu0 %3093, %v3064
        %v3095 = vpop.permute.xlu0 %3094
        %3098 = vset.pattern.permute.xlu0 0
        %3099 = vperm.xlu0 %3098, %v3065
        %v3100 = vpop.permute.xlu0 %3099
        %3103 = vset.pattern.permute.xlu0 0
        %3104 = vperm.xlu0 %3103, %v3066
        %v3105 = vpop.permute.xlu0 %3104
        %3108 = vset.pattern.permute.xlu0 0
        %3109 = vperm.xlu0 %3108, %v3067
        %v3110 = vpop.permute.xlu0 %3109
        %3113 = vset.pattern.permute.xlu0 0
        %3114 = vperm.xlu0 %3113, %v3068
        %v3115 = vpop.permute.xlu0 %3114
        %3118 = vset.pattern.permute.xlu0 0
        %3119 = vperm.xlu0 %3118, %v3069
        %v3120 = vpop.permute.xlu0 %3119
        %3123 = vset.pattern.permute.xlu0 0
        %3124 = vperm.xlu0 %3123, %v3070
        %v3125 = vpop.permute.xlu0 %3124
        %3128 = vset.pattern.permute.xlu0 0
        %3129 = vperm.xlu0 %3128, %v3071
        %v3130 = vpop.permute.xlu0 %3129
        %3133 = vset.pattern.permute.xlu0 0
        %3134 = vperm.xlu0 %3133, %v3072
        %v3135 = vpop.permute.xlu0 %3134
        %3138 = vset.pattern.permute.xlu0 0
        %3139 = vperm.xlu0 %3138, %v3073
        %v3140 = vpop.permute.xlu0 %3139
        %3143 = vset.pattern.permute.xlu0 0
        %3144 = vperm.xlu0 %3143, %v3074
        %v3145 = vpop.permute.xlu0 %3144
        %3148 = vset.pattern.permute.xlu0 0
        %3149 = vperm.xlu0 %3148, %v3075
        %v3150 = vpop.permute.xlu0 %3149
        %3153 = vset.pattern.permute.xlu0 0
        %3154 = vperm.xlu0 %3153, %v3076
        %v3155 = vpop.permute.xlu0 %3154
        %vm3157 = vcmp.eq.f32.partialorder %v2851, %v3080
        %vm3158 = vcmp.eq.f32.partialorder %v2851, %v3085
        %vm3159 = vcmp.eq.f32.partialorder %v2851, %v3090
        %vm3160 = vcmp.eq.f32.partialorder %v2851, %v3095
        %vm3161 = vcmp.eq.f32.partialorder %v2851, %v3100
        %vm3162 = vcmp.eq.f32.partialorder %v2851, %v3105
        %vm3163 = vcmp.eq.f32.partialorder %v2851, %v3110
        %vm3164 = vcmp.eq.f32.partialorder %v2851, %v3115
        %vm3165 = vcmp.eq.f32.partialorder %v2851, %v3120
        %vm3166 = vcmp.eq.f32.partialorder %v2851, %v3125
        %vm3167 = vcmp.eq.f32.partialorder %v2851, %v3130
        %vm3168 = vcmp.eq.f32.partialorder %v2851, %v3135
        %vm3169 = vcmp.eq.f32.partialorder %v2851, %v3140
        %vm3170 = vcmp.eq.f32.partialorder %v2851, %v3145
        %vm3171 = vcmp.eq.f32.partialorder %v2851, %v3150
        %vm3172 = vcmp.eq.f32.partialorder %v2851, %v3155
        %3174 = vset.pattern.permute.xlu0 0
        %3175 = vperm.xlu0 %3174, %v2306
        %v3176 = vpop.permute.xlu0 %3175
        %3179 = vset.pattern.permute.xlu0 0
        %3180 = vperm.xlu0 %3179, %v2307
        %v3181 = vpop.permute.xlu0 %3180
        %3184 = vset.pattern.permute.xlu0 0
        %3185 = vperm.xlu0 %3184, %v2308
        %v3186 = vpop.permute.xlu0 %3185
        %3189 = vset.pattern.permute.xlu0 0
        %3190 = vperm.xlu0 %3189, %v2309
        %v3191 = vpop.permute.xlu0 %3190
        %3194 = vset.pattern.permute.xlu0 0
        %3195 = vperm.xlu0 %3194, %v2310
        %v3196 = vpop.permute.xlu0 %3195
        %3199 = vset.pattern.permute.xlu0 0
        %3200 = vperm.xlu0 %3199, %v2311
        %v3201 = vpop.permute.xlu0 %3200
        %3204 = vset.pattern.permute.xlu0 0
        %3205 = vperm.xlu0 %3204, %v2312
        %v3206 = vpop.permute.xlu0 %3205
        %3209 = vset.pattern.permute.xlu0 0
        %3210 = vperm.xlu0 %3209, %v2313
        %v3211 = vpop.permute.xlu0 %3210
        %3214 = vset.pattern.permute.xlu0 0
        %3215 = vperm.xlu0 %3214, %v2314
        %v3216 = vpop.permute.xlu0 %3215
        %3219 = vset.pattern.permute.xlu0 0
        %3220 = vperm.xlu0 %3219, %v2315
        %v3221 = vpop.permute.xlu0 %3220
        %3224 = vset.pattern.permute.xlu0 0
        %3225 = vperm.xlu0 %3224, %v2316
        %v3226 = vpop.permute.xlu0 %3225
        %3229 = vset.pattern.permute.xlu0 0
        %3230 = vperm.xlu0 %3229, %v2317
        %v3231 = vpop.permute.xlu0 %3230
        %3234 = vset.pattern.permute.xlu0 0
        %3235 = vperm.xlu0 %3234, %v2318
        %v3236 = vpop.permute.xlu0 %3235
        %3239 = vset.pattern.permute.xlu0 0
        %3240 = vperm.xlu0 %3239, %v2319
        %v3241 = vpop.permute.xlu0 %3240
        %3244 = vset.pattern.permute.xlu0 0
        %3245 = vperm.xlu0 %3244, %v2320
        %v3246 = vpop.permute.xlu0 %3245
        %3249 = vset.pattern.permute.xlu0 0
        %3250 = vperm.xlu0 %3249, %v2321
        %v3251 = vpop.permute.xlu0 %3250
        %v3253 = vsel %vm3157, %v3176, 0.0
        %v3254 = vsel %vm3158, %v3181, 0.0
        %v3255 = vsel %vm3159, %v3186, 0.0
        %v3256 = vsel %vm3160, %v3191, 0.0
        %v3257 = vsel %vm3161, %v3196, 0.0
        %v3258 = vsel %vm3162, %v3201, 0.0
        %v3259 = vsel %vm3163, %v3206, 0.0
        %v3260 = vsel %vm3164, %v3211, 0.0
        %v3261 = vsel %vm3165, %v3216, 0.0
        %v3262 = vsel %vm3166, %v3221, 0.0
        %v3263 = vsel %vm3167, %v3226, 0.0
        %v3264 = vsel %vm3168, %v3231, 0.0
        %v3265 = vsel %vm3169, %v3236, 0.0
        %v3266 = vsel %vm3170, %v3241, 0.0
        %v3267 = vsel %vm3171, %v3246, 0.0
        %v3268 = vsel %vm3172, %v3251, 0.0
        %v3269 = vadd.f32 %v3045, %v3253
        %v3270 = vadd.f32 %v3046, %v3254
        %v3271 = vadd.f32 %v3047, %v3255
        %v3272 = vadd.f32 %v3048, %v3256
        %v3273 = vadd.f32 %v3049, %v3257
        %v3274 = vadd.f32 %v3050, %v3258
        %v3275 = vadd.f32 %v3051, %v3259
        %v3276 = vadd.f32 %v3052, %v3260
        %v3277 = vadd.f32 %v3053, %v3261
        %v3278 = vadd.f32 %v3054, %v3262
        %v3279 = vadd.f32 %v3055, %v3263
        %v3280 = vadd.f32 %v3056, %v3264
        %v3281 = vadd.f32 %v3057, %v3265
        %v3282 = vadd.f32 %v3058, %v3266
        %v3283 = vadd.f32 %v3059, %v3267
        %v3284 = vadd.f32 %v3060, %v3268
        %vm3285 = vcmask 146432
        %v3287 = vsel %vm3285, %v2834, 0
        %v3290 = vsel %vm3285, %v2835, 0
        %v3293 = vsel %vm3285, %v2836, 0
        %v3296 = vsel %vm3285, %v2837, 0
        %v3299 = vsel %vm3285, %v2838, 0
        %v3302 = vsel %vm3285, %v2839, 0
        %v3305 = vsel %vm3285, %v2840, 0
        %v3308 = vsel %vm3285, %v2841, 0
        %v3311 = vsel %vm3285, %v2842, 0
        %v3314 = vsel %vm3285, %v2843, 0
        %v3317 = vsel %vm3285, %v2844, 0
        %v3320 = vsel %vm3285, %v2845, 0
        %v3323 = vsel %vm3285, %v2846, 0
        %v3326 = vsel %vm3285, %v2847, 0
        %v3329 = vsel %vm3285, %v2848, 0
        %v3332 = vsel %vm3285, %v2849, 0
        %vm3334 = vcmask 1041408
        %v3336 = vsel %vm3334, %v2253, 0
        %3338 = vmatpush.msra.mxu0 0.0
        %3339 = vmatpush.msra.mxu0 0.0
        %3340 = vmatpush.msra.mxu0 0.0
        %3341 = vmatpush.msra.mxu0 0.0
        %3342 = vmatpush.msra.mxu0 0.0
        %3343 = vmatpush.msra.mxu0 0.0
        %3344 = vmatpush.msra.mxu0 0.0
        %3345 = vmatpush.msra.mxu0 0.0
        %3346 = vmatpush.msra.mxu0 0.0
        %3347 = vmatpush.msra.mxu0 0.0
        %3348 = vmatpush.msra.mxu0 0.0
        %3349 = vmatpush.msra.mxu0 0.0
        %3350 = vmatpush.msra.mxu0 0.0
        %3351 = vmatpush.msra.mxu0 %v3336
        %3352 = vmatpush.msra.mxu0 %v2252
        %3353 = vmatpush.msra.mxu0 %v2251
        %3354 = vmatmul.f32.gmra.mxu0 %v3287
        %v3355 = vpop.f32.mrf.mxu0
        %v3356 = vadd.f32 0.0, %v3355
        %3357 = vmatmul.f32.gmra.mxu0 %v3290
        %v3358 = vpop.f32.mrf.mxu0
        %v3359 = vadd.f32 0.0, %v3358
        %3360 = vmatmul.f32.gmra.mxu0 %v3293
        %v3361 = vpop.f32.mrf.mxu0
        %v3362 = vadd.f32 0.0, %v3361
        %3363 = vmatmul.f32.gmra.mxu0 %v3296
        %v3364 = vpop.f32.mrf.mxu0
        %v3365 = vadd.f32 0.0, %v3364
        %3366 = vmatmul.f32.gmra.mxu0 %v3299
        %v3367 = vpop.f32.mrf.mxu0
        %v3368 = vadd.f32 0.0, %v3367
        %3369 = vmatmul.f32.gmra.mxu0 %v3302
        %v3370 = vpop.f32.mrf.mxu0
        %v3371 = vadd.f32 0.0, %v3370
        %3372 = vmatmul.f32.gmra.mxu0 %v3305
        %v3373 = vpop.f32.mrf.mxu0
        %v3374 = vadd.f32 0.0, %v3373
        %3375 = vmatmul.f32.gmra.mxu0 %v3308
        %v3376 = vpop.f32.mrf.mxu0
        %v3377 = vadd.f32 0.0, %v3376
        %3378 = vmatmul.f32.gmra.mxu0 %v3311
        %v3379 = vpop.f32.mrf.mxu0
        %v3380 = vadd.f32 0.0, %v3379
        %3381 = vmatmul.f32.gmra.mxu0 %v3314
        %v3382 = vpop.f32.mrf.mxu0
        %v3383 = vadd.f32 0.0, %v3382
        %3384 = vmatmul.f32.gmra.mxu0 %v3317
        %v3385 = vpop.f32.mrf.mxu0
        %v3386 = vadd.f32 0.0, %v3385
        %3387 = vmatmul.f32.gmra.mxu0 %v3320
        %v3388 = vpop.f32.mrf.mxu0
        %v3389 = vadd.f32 0.0, %v3388
        %3390 = vmatmul.f32.gmra.mxu0 %v3323
        %v3391 = vpop.f32.mrf.mxu0
        %v3392 = vadd.f32 0.0, %v3391
        %3393 = vmatmul.f32.gmra.mxu0 %v3326
        %v3394 = vpop.f32.mrf.mxu0
        %v3395 = vadd.f32 0.0, %v3394
        %3396 = vmatmul.f32.gmra.mxu0 %v3329
        %v3397 = vpop.f32.mrf.mxu0
        %v3398 = vadd.f32 0.0, %v3397
        %3399 = vmatmul.f32.gmra.mxu0 %v3332
        %v3400 = vpop.f32.mrf.mxu0
        %v3401 = vadd.f32 0.0, %v3400
        %3402 = vdwg.mxu0
        %v3403 = vmul.f32 %v3356, %v3269
        %v3404 = vmul.f32 %v3359, %v3270
        %v3405 = vmul.f32 %v3362, %v3271
        %v3406 = vmul.f32 %v3365, %v3272
        %v3407 = vmul.f32 %v3368, %v3273
        %v3408 = vmul.f32 %v3371, %v3274
        %v3409 = vmul.f32 %v3374, %v3275
        %v3410 = vmul.f32 %v3377, %v3276
        %v3411 = vmul.f32 %v3380, %v3277
        %v3412 = vmul.f32 %v3383, %v3278
        %v3413 = vmul.f32 %v3386, %v3279
        %v3414 = vmul.f32 %v3389, %v3280
        %v3415 = vmul.f32 %v3392, %v3281
        %v3416 = vmul.f32 %v3395, %v3282
        %v3417 = vmul.f32 %v3398, %v3283
        %v3418 = vmul.f32 %v3401, %v3284
        %3419 = vset.pattern.permute.xlu0 1
        %3420 = vperm.xlu0 %3419, %v2258
        %v3421 = vpop.permute.xlu0 %3420
        %3423 = vset.pattern.permute.xlu0 1
        %3424 = vperm.xlu0 %3423, %v2259
        %v3425 = vpop.permute.xlu0 %3424
        %3427 = vset.pattern.permute.xlu0 1
        %3428 = vperm.xlu0 %3427, %v2260
        %v3429 = vpop.permute.xlu0 %3428
        %3431 = vset.pattern.permute.xlu0 1
        %3432 = vperm.xlu0 %3431, %v2261
        %v3433 = vpop.permute.xlu0 %3432
        %3435 = vset.pattern.permute.xlu0 1
        %3436 = vperm.xlu0 %3435, %v2262
        %v3437 = vpop.permute.xlu0 %3436
        %3439 = vset.pattern.permute.xlu0 1
        %3440 = vperm.xlu0 %3439, %v2263
        %v3441 = vpop.permute.xlu0 %3440
        %3443 = vset.pattern.permute.xlu0 1
        %3444 = vperm.xlu0 %3443, %v2264
        %v3445 = vpop.permute.xlu0 %3444
        %3447 = vset.pattern.permute.xlu0 1
        %3448 = vperm.xlu0 %3447, %v2265
        %v3449 = vpop.permute.xlu0 %3448
        %3451 = vset.pattern.permute.xlu0 1
        %3452 = vperm.xlu0 %3451, %v2266
        %v3453 = vpop.permute.xlu0 %3452
        %3455 = vset.pattern.permute.xlu0 1
        %3456 = vperm.xlu0 %3455, %v2267
        %v3457 = vpop.permute.xlu0 %3456
        %3459 = vset.pattern.permute.xlu0 1
        %3460 = vperm.xlu0 %3459, %v2268
        %v3461 = vpop.permute.xlu0 %3460
        %3463 = vset.pattern.permute.xlu0 1
        %3464 = vperm.xlu0 %3463, %v2269
        %v3465 = vpop.permute.xlu0 %3464
        %3467 = vset.pattern.permute.xlu0 1
        %3468 = vperm.xlu0 %3467, %v2270
        %v3469 = vpop.permute.xlu0 %3468
        %3471 = vset.pattern.permute.xlu0 1
        %3472 = vperm.xlu0 %3471, %v2271
        %v3473 = vpop.permute.xlu0 %3472
        %3475 = vset.pattern.permute.xlu0 1
        %3476 = vperm.xlu0 %3475, %v2272
        %v3477 = vpop.permute.xlu0 %3476
        %3479 = vset.pattern.permute.xlu0 1
        %3480 = vperm.xlu0 %3479, %v2273
        %v3481 = vpop.permute.xlu0 %3480
        %vm3483 = vcmp.eq.f32.partialorder %v2256, %v3421
        %vm3484 = vcmp.eq.f32.partialorder %v2256, %v3425
        %vm3485 = vcmp.eq.f32.partialorder %v2256, %v3429
        %vm3486 = vcmp.eq.f32.partialorder %v2256, %v3433
        %vm3487 = vcmp.eq.f32.partialorder %v2256, %v3437
        %vm3488 = vcmp.eq.f32.partialorder %v2256, %v3441
        %vm3489 = vcmp.eq.f32.partialorder %v2256, %v3445
        %vm3490 = vcmp.eq.f32.partialorder %v2256, %v3449
        %vm3491 = vcmp.eq.f32.partialorder %v2256, %v3453
        %vm3492 = vcmp.eq.f32.partialorder %v2256, %v3457
        %vm3493 = vcmp.eq.f32.partialorder %v2256, %v3461
        %vm3494 = vcmp.eq.f32.partialorder %v2256, %v3465
        %vm3495 = vcmp.eq.f32.partialorder %v2256, %v3469
        %vm3496 = vcmp.eq.f32.partialorder %v2256, %v3473
        %vm3497 = vcmp.eq.f32.partialorder %v2256, %v3477
        %vm3498 = vcmp.eq.f32.partialorder %v2256, %v3481
        %3499 = vset.pattern.permute.xlu0 1
        %3500 = vperm.xlu0 %3499, %v2402
        %v3501 = vpop.permute.xlu0 %3500
        %3503 = vset.pattern.permute.xlu0 1
        %3504 = vperm.xlu0 %3503, %v2403
        %v3505 = vpop.permute.xlu0 %3504
        %3507 = vset.pattern.permute.xlu0 1
        %3508 = vperm.xlu0 %3507, %v2404
        %v3509 = vpop.permute.xlu0 %3508
        %3511 = vset.pattern.permute.xlu0 1
        %3512 = vperm.xlu0 %3511, %v2405
        %v3513 = vpop.permute.xlu0 %3512
        %3515 = vset.pattern.permute.xlu0 1
        %3516 = vperm.xlu0 %3515, %v2406
        %v3517 = vpop.permute.xlu0 %3516
        %3519 = vset.pattern.permute.xlu0 1
        %3520 = vperm.xlu0 %3519, %v2407
        %v3521 = vpop.permute.xlu0 %3520
        %3523 = vset.pattern.permute.xlu0 1
        %3524 = vperm.xlu0 %3523, %v2408
        %v3525 = vpop.permute.xlu0 %3524
        %3527 = vset.pattern.permute.xlu0 1
        %3528 = vperm.xlu0 %3527, %v2409
        %v3529 = vpop.permute.xlu0 %3528
        %3531 = vset.pattern.permute.xlu0 1
        %3532 = vperm.xlu0 %3531, %v2410
        %v3533 = vpop.permute.xlu0 %3532
        %3535 = vset.pattern.permute.xlu0 1
        %3536 = vperm.xlu0 %3535, %v2411
        %v3537 = vpop.permute.xlu0 %3536
        %3539 = vset.pattern.permute.xlu0 1
        %3540 = vperm.xlu0 %3539, %v2412
        %v3541 = vpop.permute.xlu0 %3540
        %3543 = vset.pattern.permute.xlu0 1
        %3544 = vperm.xlu0 %3543, %v2413
        %v3545 = vpop.permute.xlu0 %3544
        %3547 = vset.pattern.permute.xlu0 1
        %3548 = vperm.xlu0 %3547, %v2414
        %v3549 = vpop.permute.xlu0 %3548
        %3551 = vset.pattern.permute.xlu0 1
        %3552 = vperm.xlu0 %3551, %v2415
        %v3553 = vpop.permute.xlu0 %3552
        %3555 = vset.pattern.permute.xlu0 1
        %3556 = vperm.xlu0 %3555, %v2416
        %v3557 = vpop.permute.xlu0 %3556
        %3559 = vset.pattern.permute.xlu0 1
        %3560 = vperm.xlu0 %3559, %v2417
        %v3561 = vpop.permute.xlu0 %3560
        %v3563 = vsel %vm3483, %v3501, 0.0
        %v3564 = vsel %vm3484, %v3505, 0.0
        %v3565 = vsel %vm3485, %v3509, 0.0
        %v3566 = vsel %vm3486, %v3513, 0.0
        %v3567 = vsel %vm3487, %v3517, 0.0
        %v3568 = vsel %vm3488, %v3521, 0.0
        %v3569 = vsel %vm3489, %v3525, 0.0
        %v3570 = vsel %vm3490, %v3529, 0.0
        %v3571 = vsel %vm3491, %v3533, 0.0
        %v3572 = vsel %vm3492, %v3537, 0.0
        %v3573 = vsel %vm3493, %v3541, 0.0
        %v3574 = vsel %vm3494, %v3545, 0.0
        %v3575 = vsel %vm3495, %v3549, 0.0
        %v3576 = vsel %vm3496, %v3553, 0.0
        %v3577 = vsel %vm3497, %v3557, 0.0
        %v3578 = vsel %vm3498, %v3561, 0.0
        %3579 = vset.pattern.permute.xlu0 1
        %3580 = vperm.xlu0 %3579, %v2626
        %v3581 = vpop.permute.xlu0 %3580
        %3583 = vset.pattern.permute.xlu0 1
        %3584 = vperm.xlu0 %3583, %v2627
        %v3585 = vpop.permute.xlu0 %3584
        %3587 = vset.pattern.permute.xlu0 1
        %3588 = vperm.xlu0 %3587, %v2628
        %v3589 = vpop.permute.xlu0 %3588
        %3591 = vset.pattern.permute.xlu0 1
        %3592 = vperm.xlu0 %3591, %v2629
        %v3593 = vpop.permute.xlu0 %3592
        %3595 = vset.pattern.permute.xlu0 1
        %3596 = vperm.xlu0 %3595, %v2630
        %v3597 = vpop.permute.xlu0 %3596
        %3599 = vset.pattern.permute.xlu0 1
        %3600 = vperm.xlu0 %3599, %v2631
        %v3601 = vpop.permute.xlu0 %3600
        %3603 = vset.pattern.permute.xlu0 1
        %3604 = vperm.xlu0 %3603, %v2632
        %v3605 = vpop.permute.xlu0 %3604
        %3607 = vset.pattern.permute.xlu0 1
        %3608 = vperm.xlu0 %3607, %v2633
        %v3609 = vpop.permute.xlu0 %3608
        %3611 = vset.pattern.permute.xlu0 1
        %3612 = vperm.xlu0 %3611, %v2634
        %v3613 = vpop.permute.xlu0 %3612
        %3615 = vset.pattern.permute.xlu0 1
        %3616 = vperm.xlu0 %3615, %v2635
        %v3617 = vpop.permute.xlu0 %3616
        %3619 = vset.pattern.permute.xlu0 1
        %3620 = vperm.xlu0 %3619, %v2636
        %v3621 = vpop.permute.xlu0 %3620
        %3623 = vset.pattern.permute.xlu0 1
        %3624 = vperm.xlu0 %3623, %v2637
        %v3625 = vpop.permute.xlu0 %3624
        %3627 = vset.pattern.permute.xlu0 1
        %3628 = vperm.xlu0 %3627, %v2638
        %v3629 = vpop.permute.xlu0 %3628
        %3631 = vset.pattern.permute.xlu0 1
        %3632 = vperm.xlu0 %3631, %v2639
        %v3633 = vpop.permute.xlu0 %3632
        %3635 = vset.pattern.permute.xlu0 1
        %3636 = vperm.xlu0 %3635, %v2640
        %v3637 = vpop.permute.xlu0 %3636
        %3639 = vset.pattern.permute.xlu0 1
        %3640 = vperm.xlu0 %3639, %v2641
        %v3641 = vpop.permute.xlu0 %3640
        %vm3643 = vcmp.eq.f32.partialorder %v2256, %v3581
        %vm3644 = vcmp.eq.f32.partialorder %v2256, %v3585
        %vm3645 = vcmp.eq.f32.partialorder %v2256, %v3589
        %vm3646 = vcmp.eq.f32.partialorder %v2256, %v3593
        %vm3647 = vcmp.eq.f32.partialorder %v2256, %v3597
        %vm3648 = vcmp.eq.f32.partialorder %v2256, %v3601
        %vm3649 = vcmp.eq.f32.partialorder %v2256, %v3605
        %vm3650 = vcmp.eq.f32.partialorder %v2256, %v3609
        %vm3651 = vcmp.eq.f32.partialorder %v2256, %v3613
        %vm3652 = vcmp.eq.f32.partialorder %v2256, %v3617
        %vm3653 = vcmp.eq.f32.partialorder %v2256, %v3621
        %vm3654 = vcmp.eq.f32.partialorder %v2256, %v3625
        %vm3655 = vcmp.eq.f32.partialorder %v2256, %v3629
        %vm3656 = vcmp.eq.f32.partialorder %v2256, %v3633
        %vm3657 = vcmp.eq.f32.partialorder %v2256, %v3637
        %vm3658 = vcmp.eq.f32.partialorder %v2256, %v3641
        %3659 = vset.pattern.permute.xlu0 1
        %3660 = vperm.xlu0 %3659, %v2418
        %v3661 = vpop.permute.xlu0 %3660
        %3663 = vset.pattern.permute.xlu0 1
        %3664 = vperm.xlu0 %3663, %v2419
        %v3665 = vpop.permute.xlu0 %3664
        %3667 = vset.pattern.permute.xlu0 1
        %3668 = vperm.xlu0 %3667, %v2420
        %v3669 = vpop.permute.xlu0 %3668
        %3671 = vset.pattern.permute.xlu0 1
        %3672 = vperm.xlu0 %3671, %v2421
        %v3673 = vpop.permute.xlu0 %3672
        %3675 = vset.pattern.permute.xlu0 1
        %3676 = vperm.xlu0 %3675, %v2422
        %v3677 = vpop.permute.xlu0 %3676
        %3679 = vset.pattern.permute.xlu0 1
        %3680 = vperm.xlu0 %3679, %v2423
        %v3681 = vpop.permute.xlu0 %3680
        %3683 = vset.pattern.permute.xlu0 1
        %3684 = vperm.xlu0 %3683, %v2424
        %v3685 = vpop.permute.xlu0 %3684
        %3687 = vset.pattern.permute.xlu0 1
        %3688 = vperm.xlu0 %3687, %v2425
        %v3689 = vpop.permute.xlu0 %3688
        %3691 = vset.pattern.permute.xlu0 1
        %3692 = vperm.xlu0 %3691, %v2426
        %v3693 = vpop.permute.xlu0 %3692
        %3695 = vset.pattern.permute.xlu0 1
        %3696 = vperm.xlu0 %3695, %v2427
        %v3697 = vpop.permute.xlu0 %3696
        %3699 = vset.pattern.permute.xlu0 1
        %3700 = vperm.xlu0 %3699, %v2428
        %v3701 = vpop.permute.xlu0 %3700
        %3703 = vset.pattern.permute.xlu0 1
        %3704 = vperm.xlu0 %3703, %v2429
        %v3705 = vpop.permute.xlu0 %3704
        %3707 = vset.pattern.permute.xlu0 1
        %3708 = vperm.xlu0 %3707, %v2430
        %v3709 = vpop.permute.xlu0 %3708
        %3711 = vset.pattern.permute.xlu0 1
        %3712 = vperm.xlu0 %3711, %v2431
        %v3713 = vpop.permute.xlu0 %3712
        %3715 = vset.pattern.permute.xlu0 1
        %3716 = vperm.xlu0 %3715, %v2432
        %v3717 = vpop.permute.xlu0 %3716
        %3719 = vset.pattern.permute.xlu0 1
        %3720 = vperm.xlu0 %3719, %v2433
        %v3721 = vpop.permute.xlu0 %3720
        %v3723 = vsel %vm3643, %v3661, 0.0
        %v3724 = vsel %vm3644, %v3665, 0.0
        %v3725 = vsel %vm3645, %v3669, 0.0
        %v3726 = vsel %vm3646, %v3673, 0.0
        %v3727 = vsel %vm3647, %v3677, 0.0
        %v3728 = vsel %vm3648, %v3681, 0.0
        %v3729 = vsel %vm3649, %v3685, 0.0
        %v3730 = vsel %vm3650, %v3689, 0.0
        %v3731 = vsel %vm3651, %v3693, 0.0
        %v3732 = vsel %vm3652, %v3697, 0.0
        %v3733 = vsel %vm3653, %v3701, 0.0
        %v3734 = vsel %vm3654, %v3705, 0.0
        %v3735 = vsel %vm3655, %v3709, 0.0
        %v3736 = vsel %vm3656, %v3713, 0.0
        %v3737 = vsel %vm3657, %v3717, 0.0
        %v3738 = vsel %vm3658, %v3721, 0.0
        %v3739 = vadd.f32 %v3563, %v3723
        %v3740 = vadd.f32 %v3564, %v3724
        %v3741 = vadd.f32 %v3565, %v3725
        %v3742 = vadd.f32 %v3566, %v3726
        %v3743 = vadd.f32 %v3567, %v3727
        %v3744 = vadd.f32 %v3568, %v3728
        %v3745 = vadd.f32 %v3569, %v3729
        %v3746 = vadd.f32 %v3570, %v3730
        %v3747 = vadd.f32 %v3571, %v3731
        %v3748 = vadd.f32 %v3572, %v3732
        %v3749 = vadd.f32 %v3573, %v3733
        %v3750 = vadd.f32 %v3574, %v3734
        %v3751 = vadd.f32 %v3575, %v3735
        %v3752 = vadd.f32 %v3576, %v3736
        %v3753 = vadd.f32 %v3577, %v3737
        %v3754 = vadd.f32 %v3578, %v3738
        %3755 = vset.pattern.permute.xlu0 1
        %3756 = vperm.xlu0 %3755, %v2274
        %v3757 = vpop.permute.xlu0 %3756
        %3759 = vset.pattern.permute.xlu0 1
        %3760 = vperm.xlu0 %3759, %v2275
        %v3761 = vpop.permute.xlu0 %3760
        %3763 = vset.pattern.permute.xlu0 1
        %3764 = vperm.xlu0 %3763, %v2276
        %v3765 = vpop.permute.xlu0 %3764
        %3767 = vset.pattern.permute.xlu0 1
        %3768 = vperm.xlu0 %3767, %v2277
        %v3769 = vpop.permute.xlu0 %3768
        %3771 = vset.pattern.permute.xlu0 1
        %3772 = vperm.xlu0 %3771, %v2278
        %v3773 = vpop.permute.xlu0 %3772
        %3775 = vset.pattern.permute.xlu0 1
        %3776 = vperm.xlu0 %3775, %v2279
        %v3777 = vpop.permute.xlu0 %3776
        %3779 = vset.pattern.permute.xlu0 1
        %3780 = vperm.xlu0 %3779, %v2280
        %v3781 = vpop.permute.xlu0 %3780
        %3783 = vset.pattern.permute.xlu0 1
        %3784 = vperm.xlu0 %3783, %v2281
        %v3785 = vpop.permute.xlu0 %3784
        %3787 = vset.pattern.permute.xlu0 1
        %3788 = vperm.xlu0 %3787, %v2282
        %v3789 = vpop.permute.xlu0 %3788
        %3791 = vset.pattern.permute.xlu0 1
        %3792 = vperm.xlu0 %3791, %v2283
        %v3793 = vpop.permute.xlu0 %3792
        %3795 = vset.pattern.permute.xlu0 1
        %3796 = vperm.xlu0 %3795, %v2284
        %v3797 = vpop.permute.xlu0 %3796
        %3799 = vset.pattern.permute.xlu0 1
        %3800 = vperm.xlu0 %3799, %v2285
        %v3801 = vpop.permute.xlu0 %3800
        %3803 = vset.pattern.permute.xlu0 1
        %3804 = vperm.xlu0 %3803, %v2286
        %v3805 = vpop.permute.xlu0 %3804
        %3807 = vset.pattern.permute.xlu0 1
        %3808 = vperm.xlu0 %3807, %v2287
        %v3809 = vpop.permute.xlu0 %3808
        %3811 = vset.pattern.permute.xlu0 1
        %3812 = vperm.xlu0 %3811, %v2288
        %v3813 = vpop.permute.xlu0 %3812
        %3815 = vset.pattern.permute.xlu0 1
        %3816 = vperm.xlu0 %3815, %v2289
        %v3817 = vpop.permute.xlu0 %3816
        %vm3819 = vcmp.eq.f32.partialorder %v2851, %v3757
        %vm3820 = vcmp.eq.f32.partialorder %v2851, %v3761
        %vm3821 = vcmp.eq.f32.partialorder %v2851, %v3765
        %vm3822 = vcmp.eq.f32.partialorder %v2851, %v3769
        %vm3823 = vcmp.eq.f32.partialorder %v2851, %v3773
        %vm3824 = vcmp.eq.f32.partialorder %v2851, %v3777
        %vm3825 = vcmp.eq.f32.partialorder %v2851, %v3781
        %vm3826 = vcmp.eq.f32.partialorder %v2851, %v3785
        %vm3827 = vcmp.eq.f32.partialorder %v2851, %v3789
        %vm3828 = vcmp.eq.f32.partialorder %v2851, %v3793
        %vm3829 = vcmp.eq.f32.partialorder %v2851, %v3797
        %vm3830 = vcmp.eq.f32.partialorder %v2851, %v3801
        %vm3831 = vcmp.eq.f32.partialorder %v2851, %v3805
        %vm3832 = vcmp.eq.f32.partialorder %v2851, %v3809
        %vm3833 = vcmp.eq.f32.partialorder %v2851, %v3813
        %vm3834 = vcmp.eq.f32.partialorder %v2851, %v3817
        %3835 = vset.pattern.permute.xlu0 1
        %3836 = vperm.xlu0 %3835, %v2949
        %v3837 = vpop.permute.xlu0 %3836
        %3839 = vset.pattern.permute.xlu0 1
        %3840 = vperm.xlu0 %3839, %v2950
        %v3841 = vpop.permute.xlu0 %3840
        %3843 = vset.pattern.permute.xlu0 1
        %3844 = vperm.xlu0 %3843, %v2951
        %v3845 = vpop.permute.xlu0 %3844
        %3847 = vset.pattern.permute.xlu0 1
        %3848 = vperm.xlu0 %3847, %v2952
        %v3849 = vpop.permute.xlu0 %3848
        %3851 = vset.pattern.permute.xlu0 1
        %3852 = vperm.xlu0 %3851, %v2953
        %v3853 = vpop.permute.xlu0 %3852
        %3855 = vset.pattern.permute.xlu0 1
        %3856 = vperm.xlu0 %3855, %v2954
        %v3857 = vpop.permute.xlu0 %3856
        %3859 = vset.pattern.permute.xlu0 1
        %3860 = vperm.xlu0 %3859, %v2955
        %v3861 = vpop.permute.xlu0 %3860
        %3863 = vset.pattern.permute.xlu0 1
        %3864 = vperm.xlu0 %3863, %v2956
        %v3865 = vpop.permute.xlu0 %3864
        %3867 = vset.pattern.permute.xlu0 1
        %3868 = vperm.xlu0 %3867, %v2957
        %v3869 = vpop.permute.xlu0 %3868
        %3871 = vset.pattern.permute.xlu0 1
        %3872 = vperm.xlu0 %3871, %v2958
        %v3873 = vpop.permute.xlu0 %3872
        %3875 = vset.pattern.permute.xlu0 1
        %3876 = vperm.xlu0 %3875, %v2959
        %v3877 = vpop.permute.xlu0 %3876
        %3879 = vset.pattern.permute.xlu0 1
        %3880 = vperm.xlu0 %3879, %v2960
        %v3881 = vpop.permute.xlu0 %3880
        %3883 = vset.pattern.permute.xlu0 1
        %3884 = vperm.xlu0 %3883, %v2961
        %v3885 = vpop.permute.xlu0 %3884
        %3887 = vset.pattern.permute.xlu0 1
        %3888 = vperm.xlu0 %3887, %v2962
        %v3889 = vpop.permute.xlu0 %3888
        %3891 = vset.pattern.permute.xlu0 1
        %3892 = vperm.xlu0 %3891, %v2963
        %v3893 = vpop.permute.xlu0 %3892
        %3895 = vset.pattern.permute.xlu0 1
        %3896 = vperm.xlu0 %3895, %v2964
        %v3897 = vpop.permute.xlu0 %3896
        %v3899 = vsel %vm3819, %v3837, 0.0
        %v3900 = vsel %vm3820, %v3841, 0.0
        %v3901 = vsel %vm3821, %v3845, 0.0
        %v3902 = vsel %vm3822, %v3849, 0.0
        %v3903 = vsel %vm3823, %v3853, 0.0
        %v3904 = vsel %vm3824, %v3857, 0.0
        %v3905 = vsel %vm3825, %v3861, 0.0
        %v3906 = vsel %vm3826, %v3865, 0.0
        %v3907 = vsel %vm3827, %v3869, 0.0
        %v3908 = vsel %vm3828, %v3873, 0.0
        %v3909 = vsel %vm3829, %v3877, 0.0
        %v3910 = vsel %vm3830, %v3881, 0.0
        %v3911 = vsel %vm3831, %v3885, 0.0
        %v3912 = vsel %vm3832, %v3889, 0.0
        %v3913 = vsel %vm3833, %v3893, 0.0
        %v3914 = vsel %vm3834, %v3897, 0.0
        %3915 = vset.pattern.permute.xlu0 1
        %3916 = vperm.xlu0 %3915, %v3061
        %v3917 = vpop.permute.xlu0 %3916
        %3919 = vset.pattern.permute.xlu0 1
        %3920 = vperm.xlu0 %3919, %v3062
        %v3921 = vpop.permute.xlu0 %3920
        %3923 = vset.pattern.permute.xlu0 1
        %3924 = vperm.xlu0 %3923, %v3063
        %v3925 = vpop.permute.xlu0 %3924
        %3927 = vset.pattern.permute.xlu0 1
        %3928 = vperm.xlu0 %3927, %v3064
        %v3929 = vpop.permute.xlu0 %3928
        %3931 = vset.pattern.permute.xlu0 1
        %3932 = vperm.xlu0 %3931, %v3065
        %v3933 = vpop.permute.xlu0 %3932
        %3935 = vset.pattern.permute.xlu0 1
        %3936 = vperm.xlu0 %3935, %v3066
        %v3937 = vpop.permute.xlu0 %3936
        %3939 = vset.pattern.permute.xlu0 1
        %3940 = vperm.xlu0 %3939, %v3067
        %v3941 = vpop.permute.xlu0 %3940
        %3943 = vset.pattern.permute.xlu0 1
        %3944 = vperm.xlu0 %3943, %v3068
        %v3945 = vpop.permute.xlu0 %3944
        %3947 = vset.pattern.permute.xlu0 1
        %3948 = vperm.xlu0 %3947, %v3069
        %v3949 = vpop.permute.xlu0 %3948
        %3951 = vset.pattern.permute.xlu0 1
        %3952 = vperm.xlu0 %3951, %v3070
        %v3953 = vpop.permute.xlu0 %3952
        %3955 = vset.pattern.permute.xlu0 1
        %3956 = vperm.xlu0 %3955, %v3071
        %v3957 = vpop.permute.xlu0 %3956
        %3959 = vset.pattern.permute.xlu0 1
        %3960 = vperm.xlu0 %3959, %v3072
        %v3961 = vpop.permute.xlu0 %3960
        %3963 = vset.pattern.permute.xlu0 1
        %3964 = vperm.xlu0 %3963, %v3073
        %v3965 = vpop.permute.xlu0 %3964
        %3967 = vset.pattern.permute.xlu0 1
        %3968 = vperm.xlu0 %3967, %v3074
        %v3969 = vpop.permute.xlu0 %3968
        %3971 = vset.pattern.permute.xlu0 1
        %3972 = vperm.xlu0 %3971, %v3075
        %v3973 = vpop.permute.xlu0 %3972
        %3975 = vset.pattern.permute.xlu0 1
        %3976 = vperm.xlu0 %3975, %v3076
        %v3977 = vpop.permute.xlu0 %3976
        %vm3979 = vcmp.eq.f32.partialorder %v2851, %v3917
        %vm3980 = vcmp.eq.f32.partialorder %v2851, %v3921
        %vm3981 = vcmp.eq.f32.partialorder %v2851, %v3925
        %vm3982 = vcmp.eq.f32.partialorder %v2851, %v3929
        %vm3983 = vcmp.eq.f32.partialorder %v2851, %v3933
        %vm3984 = vcmp.eq.f32.partialorder %v2851, %v3937
        %vm3985 = vcmp.eq.f32.partialorder %v2851, %v3941
        %vm3986 = vcmp.eq.f32.partialorder %v2851, %v3945
        %vm3987 = vcmp.eq.f32.partialorder %v2851, %v3949
        %vm3988 = vcmp.eq.f32.partialorder %v2851, %v3953
        %vm3989 = vcmp.eq.f32.partialorder %v2851, %v3957
        %vm3990 = vcmp.eq.f32.partialorder %v2851, %v3961
        %vm3991 = vcmp.eq.f32.partialorder %v2851, %v3965
        %vm3992 = vcmp.eq.f32.partialorder %v2851, %v3969
        %vm3993 = vcmp.eq.f32.partialorder %v2851, %v3973
        %vm3994 = vcmp.eq.f32.partialorder %v2851, %v3977
        %3995 = vset.pattern.permute.xlu0 1
        %3996 = vperm.xlu0 %3995, %v2306
        %v3997 = vpop.permute.xlu0 %3996
        %3999 = vset.pattern.permute.xlu0 1
        %4000 = vperm.xlu0 %3999, %v2307
        %v4001 = vpop.permute.xlu0 %4000
        %4003 = vset.pattern.permute.xlu0 1
        %4004 = vperm.xlu0 %4003, %v2308
        %v4005 = vpop.permute.xlu0 %4004
        %4007 = vset.pattern.permute.xlu0 1
        %4008 = vperm.xlu0 %4007, %v2309
        %v4009 = vpop.permute.xlu0 %4008
        %4011 = vset.pattern.permute.xlu0 1
        %4012 = vperm.xlu0 %4011, %v2310
        %v4013 = vpop.permute.xlu0 %4012
        %4015 = vset.pattern.permute.xlu0 1
        %4016 = vperm.xlu0 %4015, %v2311
        %v4017 = vpop.permute.xlu0 %4016
        %4019 = vset.pattern.permute.xlu0 1
        %4020 = vperm.xlu0 %4019, %v2312
        %v4021 = vpop.permute.xlu0 %4020
        %4023 = vset.pattern.permute.xlu0 1
        %4024 = vperm.xlu0 %4023, %v2313
        %v4025 = vpop.permute.xlu0 %4024
        %4027 = vset.pattern.permute.xlu0 1
        %4028 = vperm.xlu0 %4027, %v2314
        %v4029 = vpop.permute.xlu0 %4028
        %4031 = vset.pattern.permute.xlu0 1
        %4032 = vperm.xlu0 %4031, %v2315
        %v4033 = vpop.permute.xlu0 %4032
        %4035 = vset.pattern.permute.xlu0 1
        %4036 = vperm.xlu0 %4035, %v2316
        %v4037 = vpop.permute.xlu0 %4036
        %4039 = vset.pattern.permute.xlu0 1
        %4040 = vperm.xlu0 %4039, %v2317
        %v4041 = vpop.permute.xlu0 %4040
        %4043 = vset.pattern.permute.xlu0 1
        %4044 = vperm.xlu0 %4043, %v2318
        %v4045 = vpop.permute.xlu0 %4044
        %4047 = vset.pattern.permute.xlu0 1
        %4048 = vperm.xlu0 %4047, %v2319
        %v4049 = vpop.permute.xlu0 %4048
        %4051 = vset.pattern.permute.xlu0 1
        %4052 = vperm.xlu0 %4051, %v2320
        %v4053 = vpop.permute.xlu0 %4052
        %4055 = vset.pattern.permute.xlu0 1
        %4056 = vperm.xlu0 %4055, %v2321
        %v4057 = vpop.permute.xlu0 %4056
        %v4059 = vsel %vm3979, %v3997, 0.0
        %v4060 = vsel %vm3980, %v4001, 0.0
        %v4061 = vsel %vm3981, %v4005, 0.0
        %v4062 = vsel %vm3982, %v4009, 0.0
        %v4063 = vsel %vm3983, %v4013, 0.0
        %v4064 = vsel %vm3984, %v4017, 0.0
        %v4065 = vsel %vm3985, %v4021, 0.0
        %v4066 = vsel %vm3986, %v4025, 0.0
        %v4067 = vsel %vm3987, %v4029, 0.0
        %v4068 = vsel %vm3988, %v4033, 0.0
        %v4069 = vsel %vm3989, %v4037, 0.0
        %v4070 = vsel %vm3990, %v4041, 0.0
        %v4071 = vsel %vm3991, %v4045, 0.0
        %v4072 = vsel %vm3992, %v4049, 0.0
        %v4073 = vsel %vm3993, %v4053, 0.0
        %v4074 = vsel %vm3994, %v4057, 0.0
        %v4075 = vadd.f32 %v3899, %v4059
        %v4076 = vadd.f32 %v3900, %v4060
        %v4077 = vadd.f32 %v3901, %v4061
        %v4078 = vadd.f32 %v3902, %v4062
        %v4079 = vadd.f32 %v3903, %v4063
        %v4080 = vadd.f32 %v3904, %v4064
        %v4081 = vadd.f32 %v3905, %v4065
        %v4082 = vadd.f32 %v3906, %v4066
        %v4083 = vadd.f32 %v3907, %v4067
        %v4084 = vadd.f32 %v3908, %v4068
        %v4085 = vadd.f32 %v3909, %v4069
        %v4086 = vadd.f32 %v3910, %v4070
        %v4087 = vadd.f32 %v3911, %v4071
        %v4088 = vadd.f32 %v3912, %v4072
        %v4089 = vadd.f32 %v3913, %v4073
        %v4090 = vadd.f32 %v3914, %v4074
        %v4092 = vsel %vm3285, %v3739, 0
        %v4095 = vsel %vm3285, %v3740, 0
        %v4098 = vsel %vm3285, %v3741, 0
        %v4101 = vsel %vm3285, %v3742, 0
        %v4104 = vsel %vm3285, %v3743, 0
        %v4107 = vsel %vm3285, %v3744, 0
        %v4110 = vsel %vm3285, %v3745, 0
        %v4113 = vsel %vm3285, %v3746, 0
        %v4116 = vsel %vm3285, %v3747, 0
        %v4119 = vsel %vm3285, %v3748, 0
        %v4122 = vsel %vm3285, %v3749, 0
        %v4125 = vsel %vm3285, %v3750, 0
        %v4128 = vsel %vm3285, %v3751, 0
        %v4131 = vsel %vm3285, %v3752, 0
        %v4134 = vsel %vm3285, %v3753, 0
        %v4137 = vsel %vm3285, %v3754, 0
        %4139 = vmatpush.msra.mxu0 0.0
        %4140 = vmatpush.msra.mxu0 0.0
        %4141 = vmatpush.msra.mxu0 0.0
        %4142 = vmatpush.msra.mxu0 0.0
        %4143 = vmatpush.msra.mxu0 0.0
        %4144 = vmatpush.msra.mxu0 0.0
        %4145 = vmatpush.msra.mxu0 0.0
        %4146 = vmatpush.msra.mxu0 0.0
        %4147 = vmatpush.msra.mxu0 0.0
        %4148 = vmatpush.msra.mxu0 0.0
        %4149 = vmatpush.msra.mxu0 0.0
        %4150 = vmatpush.msra.mxu0 0.0
        %4151 = vmatpush.msra.mxu0 0.0
        %4152 = vmatpush.msra.mxu0 %v3336
        %4153 = vmatpush.msra.mxu0 %v2252
        %4154 = vmatpush.msra.mxu0 %v2251
        %4155 = vmatmul.f32.gmra.mxu0 %v4092
        %v4156 = vpop.f32.mrf.mxu0
        %v4157 = vadd.f32 0.0, %v4156
        %4158 = vmatmul.f32.gmra.mxu0 %v4095
        %v4159 = vpop.f32.mrf.mxu0
        %v4160 = vadd.f32 0.0, %v4159
        %4161 = vmatmul.f32.gmra.mxu0 %v4098
        %v4162 = vpop.f32.mrf.mxu0
        %v4163 = vadd.f32 0.0, %v4162
        %4164 = vmatmul.f32.gmra.mxu0 %v4101
        %v4165 = vpop.f32.mrf.mxu0
        %v4166 = vadd.f32 0.0, %v4165
        %4167 = vmatmul.f32.gmra.mxu0 %v4104
        %v4168 = vpop.f32.mrf.mxu0
        %v4169 = vadd.f32 0.0, %v4168
        %4170 = vmatmul.f32.gmra.mxu0 %v4107
        %v4171 = vpop.f32.mrf.mxu0
        %v4172 = vadd.f32 0.0, %v4171
        %4173 = vmatmul.f32.gmra.mxu0 %v4110
        %v4174 = vpop.f32.mrf.mxu0
        %v4175 = vadd.f32 0.0, %v4174
        %4176 = vmatmul.f32.gmra.mxu0 %v4113
        %v4177 = vpop.f32.mrf.mxu0
        %v4178 = vadd.f32 0.0, %v4177
        %4179 = vmatmul.f32.gmra.mxu0 %v4116
        %v4180 = vpop.f32.mrf.mxu0
        %v4181 = vadd.f32 0.0, %v4180
        %4182 = vmatmul.f32.gmra.mxu0 %v4119
        %v4183 = vpop.f32.mrf.mxu0
        %v4184 = vadd.f32 0.0, %v4183
        %4185 = vmatmul.f32.gmra.mxu0 %v4122
        %v4186 = vpop.f32.mrf.mxu0
        %v4187 = vadd.f32 0.0, %v4186
        %4188 = vmatmul.f32.gmra.mxu0 %v4125
        %v4189 = vpop.f32.mrf.mxu0
        %v4190 = vadd.f32 0.0, %v4189
        %4191 = vmatmul.f32.gmra.mxu0 %v4128
        %v4192 = vpop.f32.mrf.mxu0
        %v4193 = vadd.f32 0.0, %v4192
        %4194 = vmatmul.f32.gmra.mxu0 %v4131
        %v4195 = vpop.f32.mrf.mxu0
        %v4196 = vadd.f32 0.0, %v4195
        %4197 = vmatmul.f32.gmra.mxu0 %v4134
        %v4198 = vpop.f32.mrf.mxu0
        %v4199 = vadd.f32 0.0, %v4198
        %4200 = vmatmul.f32.gmra.mxu0 %v4137
        %v4201 = vpop.f32.mrf.mxu0
        %v4202 = vadd.f32 0.0, %v4201
        %4203 = vdwg.mxu0
        %v4204 = vmul.f32 %v4157, %v4075
        %v4205 = vmul.f32 %v4160, %v4076
        %v4206 = vmul.f32 %v4163, %v4077
        %v4207 = vmul.f32 %v4166, %v4078
        %v4208 = vmul.f32 %v4169, %v4079
        %v4209 = vmul.f32 %v4172, %v4080
        %v4210 = vmul.f32 %v4175, %v4081
        %v4211 = vmul.f32 %v4178, %v4082
        %v4212 = vmul.f32 %v4181, %v4083
        %v4213 = vmul.f32 %v4184, %v4084
        %v4214 = vmul.f32 %v4187, %v4085
        %v4215 = vmul.f32 %v4190, %v4086
        %v4216 = vmul.f32 %v4193, %v4087
        %v4217 = vmul.f32 %v4196, %v4088
        %v4218 = vmul.f32 %v4199, %v4089
        %v4219 = vmul.f32 %v4202, %v4090
        %4220 = vset.pattern.permute.xlu0 2
        %4221 = vperm.xlu0 %4220, %v2258
        %v4222 = vpop.permute.xlu0 %4221
        %4224 = vset.pattern.permute.xlu0 2
        %4225 = vperm.xlu0 %4224, %v2259
        %v4226 = vpop.permute.xlu0 %4225
        %4228 = vset.pattern.permute.xlu0 2
        %4229 = vperm.xlu0 %4228, %v2260
        %v4230 = vpop.permute.xlu0 %4229
        %4232 = vset.pattern.permute.xlu0 2
        %4233 = vperm.xlu0 %4232, %v2261
        %v4234 = vpop.permute.xlu0 %4233
        %4236 = vset.pattern.permute.xlu0 2
        %4237 = vperm.xlu0 %4236, %v2262
        %v4238 = vpop.permute.xlu0 %4237
        %4240 = vset.pattern.permute.xlu0 2
        %4241 = vperm.xlu0 %4240, %v2263
        %v4242 = vpop.permute.xlu0 %4241
        %4244 = vset.pattern.permute.xlu0 2
        %4245 = vperm.xlu0 %4244, %v2264
        %v4246 = vpop.permute.xlu0 %4245
        %4248 = vset.pattern.permute.xlu0 2
        %4249 = vperm.xlu0 %4248, %v2265
        %v4250 = vpop.permute.xlu0 %4249
        %4252 = vset.pattern.permute.xlu0 2
        %4253 = vperm.xlu0 %4252, %v2266
        %v4254 = vpop.permute.xlu0 %4253
        %4256 = vset.pattern.permute.xlu0 2
        %4257 = vperm.xlu0 %4256, %v2267
        %v4258 = vpop.permute.xlu0 %4257
        %4260 = vset.pattern.permute.xlu0 2
        %4261 = vperm.xlu0 %4260, %v2268
        %v4262 = vpop.permute.xlu0 %4261
        %4264 = vset.pattern.permute.xlu0 2
        %4265 = vperm.xlu0 %4264, %v2269
        %v4266 = vpop.permute.xlu0 %4265
        %4268 = vset.pattern.permute.xlu0 2
        %4269 = vperm.xlu0 %4268, %v2270
        %v4270 = vpop.permute.xlu0 %4269
        %4272 = vset.pattern.permute.xlu0 2
        %4273 = vperm.xlu0 %4272, %v2271
        %v4274 = vpop.permute.xlu0 %4273
        %4276 = vset.pattern.permute.xlu0 2
        %4277 = vperm.xlu0 %4276, %v2272
        %v4278 = vpop.permute.xlu0 %4277
        %4280 = vset.pattern.permute.xlu0 2
        %4281 = vperm.xlu0 %4280, %v2273
        %v4282 = vpop.permute.xlu0 %4281
        %vm4284 = vcmp.eq.f32.partialorder %v2256, %v4222
        %vm4285 = vcmp.eq.f32.partialorder %v2256, %v4226
        %vm4286 = vcmp.eq.f32.partialorder %v2256, %v4230
        %vm4287 = vcmp.eq.f32.partialorder %v2256, %v4234
        %vm4288 = vcmp.eq.f32.partialorder %v2256, %v4238
        %vm4289 = vcmp.eq.f32.partialorder %v2256, %v4242
        %vm4290 = vcmp.eq.f32.partialorder %v2256, %v4246
        %vm4291 = vcmp.eq.f32.partialorder %v2256, %v4250
        %vm4292 = vcmp.eq.f32.partialorder %v2256, %v4254
        %vm4293 = vcmp.eq.f32.partialorder %v2256, %v4258
        %vm4294 = vcmp.eq.f32.partialorder %v2256, %v4262
        %vm4295 = vcmp.eq.f32.partialorder %v2256, %v4266
        %vm4296 = vcmp.eq.f32.partialorder %v2256, %v4270
        %vm4297 = vcmp.eq.f32.partialorder %v2256, %v4274
        %vm4298 = vcmp.eq.f32.partialorder %v2256, %v4278
        %vm4299 = vcmp.eq.f32.partialorder %v2256, %v4282
        %4300 = vset.pattern.permute.xlu0 2
        %4301 = vperm.xlu0 %4300, %v2402
        %v4302 = vpop.permute.xlu0 %4301
        %4304 = vset.pattern.permute.xlu0 2
        %4305 = vperm.xlu0 %4304, %v2403
        %v4306 = vpop.permute.xlu0 %4305
        %4308 = vset.pattern.permute.xlu0 2
        %4309 = vperm.xlu0 %4308, %v2404
        %v4310 = vpop.permute.xlu0 %4309
        %4312 = vset.pattern.permute.xlu0 2
        %4313 = vperm.xlu0 %4312, %v2405
        %v4314 = vpop.permute.xlu0 %4313
        %4316 = vset.pattern.permute.xlu0 2
        %4317 = vperm.xlu0 %4316, %v2406
        %v4318 = vpop.permute.xlu0 %4317
        %4320 = vset.pattern.permute.xlu0 2
        %4321 = vperm.xlu0 %4320, %v2407
        %v4322 = vpop.permute.xlu0 %4321
        %4324 = vset.pattern.permute.xlu0 2
        %4325 = vperm.xlu0 %4324, %v2408
        %v4326 = vpop.permute.xlu0 %4325
        %4328 = vset.pattern.permute.xlu0 2
        %4329 = vperm.xlu0 %4328, %v2409
        %v4330 = vpop.permute.xlu0 %4329
        %4332 = vset.pattern.permute.xlu0 2
        %4333 = vperm.xlu0 %4332, %v2410
        %v4334 = vpop.permute.xlu0 %4333
        %4336 = vset.pattern.permute.xlu0 2
        %4337 = vperm.xlu0 %4336, %v2411
        %v4338 = vpop.permute.xlu0 %4337
        %4340 = vset.pattern.permute.xlu0 2
        %4341 = vperm.xlu0 %4340, %v2412
        %v4342 = vpop.permute.xlu0 %4341
        %4344 = vset.pattern.permute.xlu0 2
        %4345 = vperm.xlu0 %4344, %v2413
        %v4346 = vpop.permute.xlu0 %4345
        %4348 = vset.pattern.permute.xlu0 2
        %4349 = vperm.xlu0 %4348, %v2414
        %v4350 = vpop.permute.xlu0 %4349
        %4352 = vset.pattern.permute.xlu0 2
        %4353 = vperm.xlu0 %4352, %v2415
        %v4354 = vpop.permute.xlu0 %4353
        %4356 = vset.pattern.permute.xlu0 2
        %4357 = vperm.xlu0 %4356, %v2416
        %v4358 = vpop.permute.xlu0 %4357
        %4360 = vset.pattern.permute.xlu0 2
        %4361 = vperm.xlu0 %4360, %v2417
        %v4362 = vpop.permute.xlu0 %4361
        %v4364 = vsel %vm4284, %v4302, 0.0
        %v4365 = vsel %vm4285, %v4306, 0.0
        %v4366 = vsel %vm4286, %v4310, 0.0
        %v4367 = vsel %vm4287, %v4314, 0.0
        %v4368 = vsel %vm4288, %v4318, 0.0
        %v4369 = vsel %vm4289, %v4322, 0.0
        %v4370 = vsel %vm4290, %v4326, 0.0
        %v4371 = vsel %vm4291, %v4330, 0.0
        %v4372 = vsel %vm4292, %v4334, 0.0
        %v4373 = vsel %vm4293, %v4338, 0.0
        %v4374 = vsel %vm4294, %v4342, 0.0
        %v4375 = vsel %vm4295, %v4346, 0.0
        %v4376 = vsel %vm4296, %v4350, 0.0
        %v4377 = vsel %vm4297, %v4354, 0.0
        %v4378 = vsel %vm4298, %v4358, 0.0
        %v4379 = vsel %vm4299, %v4362, 0.0
        %4380 = vset.pattern.permute.xlu0 2
        %4381 = vperm.xlu0 %4380, %v2626
        %v4382 = vpop.permute.xlu0 %4381
        %4384 = vset.pattern.permute.xlu0 2
        %4385 = vperm.xlu0 %4384, %v2627
        %v4386 = vpop.permute.xlu0 %4385
        %4388 = vset.pattern.permute.xlu0 2
        %4389 = vperm.xlu0 %4388, %v2628
        %v4390 = vpop.permute.xlu0 %4389
        %4392 = vset.pattern.permute.xlu0 2
        %4393 = vperm.xlu0 %4392, %v2629
        %v4394 = vpop.permute.xlu0 %4393
        %4396 = vset.pattern.permute.xlu0 2
        %4397 = vperm.xlu0 %4396, %v2630
        %v4398 = vpop.permute.xlu0 %4397
        %4400 = vset.pattern.permute.xlu0 2
        %4401 = vperm.xlu0 %4400, %v2631
        %v4402 = vpop.permute.xlu0 %4401
        %4404 = vset.pattern.permute.xlu0 2
        %4405 = vperm.xlu0 %4404, %v2632
        %v4406 = vpop.permute.xlu0 %4405
        %4408 = vset.pattern.permute.xlu0 2
        %4409 = vperm.xlu0 %4408, %v2633
        %v4410 = vpop.permute.xlu0 %4409
        %4412 = vset.pattern.permute.xlu0 2
        %4413 = vperm.xlu0 %4412, %v2634
        %v4414 = vpop.permute.xlu0 %4413
        %4416 = vset.pattern.permute.xlu0 2
        %4417 = vperm.xlu0 %4416, %v2635
        %v4418 = vpop.permute.xlu0 %4417
        %4420 = vset.pattern.permute.xlu0 2
        %4421 = vperm.xlu0 %4420, %v2636
        %v4422 = vpop.permute.xlu0 %4421
        %4424 = vset.pattern.permute.xlu0 2
        %4425 = vperm.xlu0 %4424, %v2637
        %v4426 = vpop.permute.xlu0 %4425
        %4428 = vset.pattern.permute.xlu0 2
        %4429 = vperm.xlu0 %4428, %v2638
        %v4430 = vpop.permute.xlu0 %4429
        %4432 = vset.pattern.permute.xlu0 2
        %4433 = vperm.xlu0 %4432, %v2639
        %v4434 = vpop.permute.xlu0 %4433
        %4436 = vset.pattern.permute.xlu0 2
        %4437 = vperm.xlu0 %4436, %v2640
        %v4438 = vpop.permute.xlu0 %4437
        %4440 = vset.pattern.permute.xlu0 2
        %4441 = vperm.xlu0 %4440, %v2641
        %v4442 = vpop.permute.xlu0 %4441
        %vm4444 = vcmp.eq.f32.partialorder %v2256, %v4382
        %vm4445 = vcmp.eq.f32.partialorder %v2256, %v4386
        %vm4446 = vcmp.eq.f32.partialorder %v2256, %v4390
        %vm4447 = vcmp.eq.f32.partialorder %v2256, %v4394
        %vm4448 = vcmp.eq.f32.partialorder %v2256, %v4398
        %vm4449 = vcmp.eq.f32.partialorder %v2256, %v4402
        %vm4450 = vcmp.eq.f32.partialorder %v2256, %v4406
        %vm4451 = vcmp.eq.f32.partialorder %v2256, %v4410
        %vm4452 = vcmp.eq.f32.partialorder %v2256, %v4414
        %vm4453 = vcmp.eq.f32.partialorder %v2256, %v4418
        %vm4454 = vcmp.eq.f32.partialorder %v2256, %v4422
        %vm4455 = vcmp.eq.f32.partialorder %v2256, %v4426
        %vm4456 = vcmp.eq.f32.partialorder %v2256, %v4430
        %vm4457 = vcmp.eq.f32.partialorder %v2256, %v4434
        %vm4458 = vcmp.eq.f32.partialorder %v2256, %v4438
        %vm4459 = vcmp.eq.f32.partialorder %v2256, %v4442
        %4460 = vset.pattern.permute.xlu0 2
        %4461 = vperm.xlu0 %4460, %v2418
        %v4462 = vpop.permute.xlu0 %4461
        %4464 = vset.pattern.permute.xlu0 2
        %4465 = vperm.xlu0 %4464, %v2419
        %v4466 = vpop.permute.xlu0 %4465
        %4468 = vset.pattern.permute.xlu0 2
        %4469 = vperm.xlu0 %4468, %v2420
        %v4470 = vpop.permute.xlu0 %4469
        %4472 = vset.pattern.permute.xlu0 2
        %4473 = vperm.xlu0 %4472, %v2421
        %v4474 = vpop.permute.xlu0 %4473
        %4476 = vset.pattern.permute.xlu0 2
        %4477 = vperm.xlu0 %4476, %v2422
        %v4478 = vpop.permute.xlu0 %4477
        %4480 = vset.pattern.permute.xlu0 2
        %4481 = vperm.xlu0 %4480, %v2423
        %v4482 = vpop.permute.xlu0 %4481
        %4484 = vset.pattern.permute.xlu0 2
        %4485 = vperm.xlu0 %4484, %v2424
        %v4486 = vpop.permute.xlu0 %4485
        %4488 = vset.pattern.permute.xlu0 2
        %4489 = vperm.xlu0 %4488, %v2425
        %v4490 = vpop.permute.xlu0 %4489
        %4492 = vset.pattern.permute.xlu0 2
        %4493 = vperm.xlu0 %4492, %v2426
        %v4494 = vpop.permute.xlu0 %4493
        %4496 = vset.pattern.permute.xlu0 2
        %4497 = vperm.xlu0 %4496, %v2427
        %v4498 = vpop.permute.xlu0 %4497
        %4500 = vset.pattern.permute.xlu0 2
        %4501 = vperm.xlu0 %4500, %v2428
        %v4502 = vpop.permute.xlu0 %4501
        %4504 = vset.pattern.permute.xlu0 2
        %4505 = vperm.xlu0 %4504, %v2429
        %v4506 = vpop.permute.xlu0 %4505
        %4508 = vset.pattern.permute.xlu0 2
        %4509 = vperm.xlu0 %4508, %v2430
        %v4510 = vpop.permute.xlu0 %4509
        %4512 = vset.pattern.permute.xlu0 2
        %4513 = vperm.xlu0 %4512, %v2431
        %v4514 = vpop.permute.xlu0 %4513
        %4516 = vset.pattern.permute.xlu0 2
        %4517 = vperm.xlu0 %4516, %v2432
        %v4518 = vpop.permute.xlu0 %4517
        %4520 = vset.pattern.permute.xlu0 2
        %4521 = vperm.xlu0 %4520, %v2433
        %v4522 = vpop.permute.xlu0 %4521
        %v4524 = vsel %vm4444, %v4462, 0.0
        %v4525 = vsel %vm4445, %v4466, 0.0
        %v4526 = vsel %vm4446, %v4470, 0.0
        %v4527 = vsel %vm4447, %v4474, 0.0
        %v4528 = vsel %vm4448, %v4478, 0.0
        %v4529 = vsel %vm4449, %v4482, 0.0
        %v4530 = vsel %vm4450, %v4486, 0.0
        %v4531 = vsel %vm4451, %v4490, 0.0
        %v4532 = vsel %vm4452, %v4494, 0.0
        %v4533 = vsel %vm4453, %v4498, 0.0
        %v4534 = vsel %vm4454, %v4502, 0.0
        %v4535 = vsel %vm4455, %v4506, 0.0
        %v4536 = vsel %vm4456, %v4510, 0.0
        %v4537 = vsel %vm4457, %v4514, 0.0
        %v4538 = vsel %vm4458, %v4518, 0.0
        %v4539 = vsel %vm4459, %v4522, 0.0
        %v4540 = vadd.f32 %v4364, %v4524
        %v4541 = vadd.f32 %v4365, %v4525
        %v4542 = vadd.f32 %v4366, %v4526
        %v4543 = vadd.f32 %v4367, %v4527
        %v4544 = vadd.f32 %v4368, %v4528
        %v4545 = vadd.f32 %v4369, %v4529
        %v4546 = vadd.f32 %v4370, %v4530
        %v4547 = vadd.f32 %v4371, %v4531
        %v4548 = vadd.f32 %v4372, %v4532
        %v4549 = vadd.f32 %v4373, %v4533
        %v4550 = vadd.f32 %v4374, %v4534
        %v4551 = vadd.f32 %v4375, %v4535
        %v4552 = vadd.f32 %v4376, %v4536
        %v4553 = vadd.f32 %v4377, %v4537
        %v4554 = vadd.f32 %v4378, %v4538
        %v4555 = vadd.f32 %v4379, %v4539
        %4556 = vset.pattern.permute.xlu0 2
        %4557 = vperm.xlu0 %4556, %v2274
        %v4558 = vpop.permute.xlu0 %4557
        %4560 = vset.pattern.permute.xlu0 2
        %4561 = vperm.xlu0 %4560, %v2275
        %v4562 = vpop.permute.xlu0 %4561
        %4564 = vset.pattern.permute.xlu0 2
        %4565 = vperm.xlu0 %4564, %v2276
        %v4566 = vpop.permute.xlu0 %4565
        %4568 = vset.pattern.permute.xlu0 2
        %4569 = vperm.xlu0 %4568, %v2277
        %v4570 = vpop.permute.xlu0 %4569
        %4572 = vset.pattern.permute.xlu0 2
        %4573 = vperm.xlu0 %4572, %v2278
        %v4574 = vpop.permute.xlu0 %4573
        %4576 = vset.pattern.permute.xlu0 2
        %4577 = vperm.xlu0 %4576, %v2279
        %v4578 = vpop.permute.xlu0 %4577
        %4580 = vset.pattern.permute.xlu0 2
        %4581 = vperm.xlu0 %4580, %v2280
        %v4582 = vpop.permute.xlu0 %4581
        %4584 = vset.pattern.permute.xlu0 2
        %4585 = vperm.xlu0 %4584, %v2281
        %v4586 = vpop.permute.xlu0 %4585
        %4588 = vset.pattern.permute.xlu0 2
        %4589 = vperm.xlu0 %4588, %v2282
        %v4590 = vpop.permute.xlu0 %4589
        %4592 = vset.pattern.permute.xlu0 2
        %4593 = vperm.xlu0 %4592, %v2283
        %v4594 = vpop.permute.xlu0 %4593
        %4596 = vset.pattern.permute.xlu0 2
        %4597 = vperm.xlu0 %4596, %v2284
        %v4598 = vpop.permute.xlu0 %4597
        %4600 = vset.pattern.permute.xlu0 2
        %4601 = vperm.xlu0 %4600, %v2285
        %v4602 = vpop.permute.xlu0 %4601
        %4604 = vset.pattern.permute.xlu0 2
        %4605 = vperm.xlu0 %4604, %v2286
        %v4606 = vpop.permute.xlu0 %4605
        %4608 = vset.pattern.permute.xlu0 2
        %4609 = vperm.xlu0 %4608, %v2287
        %v4610 = vpop.permute.xlu0 %4609
        %4612 = vset.pattern.permute.xlu0 2
        %4613 = vperm.xlu0 %4612, %v2288
        %v4614 = vpop.permute.xlu0 %4613
        %4616 = vset.pattern.permute.xlu0 2
        %4617 = vperm.xlu0 %4616, %v2289
        %v4618 = vpop.permute.xlu0 %4617
        %vm4620 = vcmp.eq.f32.partialorder %v2851, %v4558
        %vm4621 = vcmp.eq.f32.partialorder %v2851, %v4562
        %vm4622 = vcmp.eq.f32.partialorder %v2851, %v4566
        %vm4623 = vcmp.eq.f32.partialorder %v2851, %v4570
        %vm4624 = vcmp.eq.f32.partialorder %v2851, %v4574
        %vm4625 = vcmp.eq.f32.partialorder %v2851, %v4578
        %vm4626 = vcmp.eq.f32.partialorder %v2851, %v4582
        %vm4627 = vcmp.eq.f32.partialorder %v2851, %v4586
        %vm4628 = vcmp.eq.f32.partialorder %v2851, %v4590
        %vm4629 = vcmp.eq.f32.partialorder %v2851, %v4594
        %vm4630 = vcmp.eq.f32.partialorder %v2851, %v4598
        %vm4631 = vcmp.eq.f32.partialorder %v2851, %v4602
        %vm4632 = vcmp.eq.f32.partialorder %v2851, %v4606
        %vm4633 = vcmp.eq.f32.partialorder %v2851, %v4610
        %vm4634 = vcmp.eq.f32.partialorder %v2851, %v4614
        %vm4635 = vcmp.eq.f32.partialorder %v2851, %v4618
        %4636 = vset.pattern.permute.xlu0 2
        %4637 = vperm.xlu0 %4636, %v2949
        %v4638 = vpop.permute.xlu0 %4637
        %4640 = vset.pattern.permute.xlu0 2
        %4641 = vperm.xlu0 %4640, %v2950
        %v4642 = vpop.permute.xlu0 %4641
        %4644 = vset.pattern.permute.xlu0 2
        %4645 = vperm.xlu0 %4644, %v2951
        %v4646 = vpop.permute.xlu0 %4645
        %4648 = vset.pattern.permute.xlu0 2
        %4649 = vperm.xlu0 %4648, %v2952
        %v4650 = vpop.permute.xlu0 %4649
        %4652 = vset.pattern.permute.xlu0 2
        %4653 = vperm.xlu0 %4652, %v2953
        %v4654 = vpop.permute.xlu0 %4653
        %4656 = vset.pattern.permute.xlu0 2
        %4657 = vperm.xlu0 %4656, %v2954
        %v4658 = vpop.permute.xlu0 %4657
        %4660 = vset.pattern.permute.xlu0 2
        %4661 = vperm.xlu0 %4660, %v2955
        %v4662 = vpop.permute.xlu0 %4661
        %4664 = vset.pattern.permute.xlu0 2
        %4665 = vperm.xlu0 %4664, %v2956
        %v4666 = vpop.permute.xlu0 %4665
        %4668 = vset.pattern.permute.xlu0 2
        %4669 = vperm.xlu0 %4668, %v2957
        %v4670 = vpop.permute.xlu0 %4669
        %4672 = vset.pattern.permute.xlu0 2
        %4673 = vperm.xlu0 %4672, %v2958
        %v4674 = vpop.permute.xlu0 %4673
        %4676 = vset.pattern.permute.xlu0 2
        %4677 = vperm.xlu0 %4676, %v2959
        %v4678 = vpop.permute.xlu0 %4677
        %4680 = vset.pattern.permute.xlu0 2
        %4681 = vperm.xlu0 %4680, %v2960
        %v4682 = vpop.permute.xlu0 %4681
        %4684 = vset.pattern.permute.xlu0 2
        %4685 = vperm.xlu0 %4684, %v2961
        %v4686 = vpop.permute.xlu0 %4685
        %4688 = vset.pattern.permute.xlu0 2
        %4689 = vperm.xlu0 %4688, %v2962
        %v4690 = vpop.permute.xlu0 %4689
        %4692 = vset.pattern.permute.xlu0 2
        %4693 = vperm.xlu0 %4692, %v2963
        %v4694 = vpop.permute.xlu0 %4693
        %4696 = vset.pattern.permute.xlu0 2
        %4697 = vperm.xlu0 %4696, %v2964
        %v4698 = vpop.permute.xlu0 %4697
        %v4700 = vsel %vm4620, %v4638, 0.0
        %v4701 = vsel %vm4621, %v4642, 0.0
        %v4702 = vsel %vm4622, %v4646, 0.0
        %v4703 = vsel %vm4623, %v4650, 0.0
        %v4704 = vsel %vm4624, %v4654, 0.0
        %v4705 = vsel %vm4625, %v4658, 0.0
        %v4706 = vsel %vm4626, %v4662, 0.0
        %v4707 = vsel %vm4627, %v4666, 0.0
        %v4708 = vsel %vm4628, %v4670, 0.0
        %v4709 = vsel %vm4629, %v4674, 0.0
        %v4710 = vsel %vm4630, %v4678, 0.0
        %v4711 = vsel %vm4631, %v4682, 0.0
        %v4712 = vsel %vm4632, %v4686, 0.0
        %v4713 = vsel %vm4633, %v4690, 0.0
        %v4714 = vsel %vm4634, %v4694, 0.0
        %v4715 = vsel %vm4635, %v4698, 0.0
        %4716 = vset.pattern.permute.xlu0 2
        %4717 = vperm.xlu0 %4716, %v3061
        %v4718 = vpop.permute.xlu0 %4717
        %4720 = vset.pattern.permute.xlu0 2
        %4721 = vperm.xlu0 %4720, %v3062
        %v4722 = vpop.permute.xlu0 %4721
        %4724 = vset.pattern.permute.xlu0 2
        %4725 = vperm.xlu0 %4724, %v3063
        %v4726 = vpop.permute.xlu0 %4725
        %4728 = vset.pattern.permute.xlu0 2
        %4729 = vperm.xlu0 %4728, %v3064
        %v4730 = vpop.permute.xlu0 %4729
        %4732 = vset.pattern.permute.xlu0 2
        %4733 = vperm.xlu0 %4732, %v3065
        %v4734 = vpop.permute.xlu0 %4733
        %4736 = vset.pattern.permute.xlu0 2
        %4737 = vperm.xlu0 %4736, %v3066
        %v4738 = vpop.permute.xlu0 %4737
        %4740 = vset.pattern.permute.xlu0 2
        %4741 = vperm.xlu0 %4740, %v3067
        %v4742 = vpop.permute.xlu0 %4741
        %4744 = vset.pattern.permute.xlu0 2
        %4745 = vperm.xlu0 %4744, %v3068
        %v4746 = vpop.permute.xlu0 %4745
        %4748 = vset.pattern.permute.xlu0 2
        %4749 = vperm.xlu0 %4748, %v3069
        %v4750 = vpop.permute.xlu0 %4749
        %4752 = vset.pattern.permute.xlu0 2
        %4753 = vperm.xlu0 %4752, %v3070
        %v4754 = vpop.permute.xlu0 %4753
        %4756 = vset.pattern.permute.xlu0 2
        %4757 = vperm.xlu0 %4756, %v3071
        %v4758 = vpop.permute.xlu0 %4757
        %4760 = vset.pattern.permute.xlu0 2
        %4761 = vperm.xlu0 %4760, %v3072
        %v4762 = vpop.permute.xlu0 %4761
        %4764 = vset.pattern.permute.xlu0 2
        %4765 = vperm.xlu0 %4764, %v3073
        %v4766 = vpop.permute.xlu0 %4765
        %4768 = vset.pattern.permute.xlu0 2
        %4769 = vperm.xlu0 %4768, %v3074
        %v4770 = vpop.permute.xlu0 %4769
        %4772 = vset.pattern.permute.xlu0 2
        %4773 = vperm.xlu0 %4772, %v3075
        %v4774 = vpop.permute.xlu0 %4773
        %4776 = vset.pattern.permute.xlu0 2
        %4777 = vperm.xlu0 %4776, %v3076
        %v4778 = vpop.permute.xlu0 %4777
        %vm4780 = vcmp.eq.f32.partialorder %v2851, %v4718
        %vm4781 = vcmp.eq.f32.partialorder %v2851, %v4722
        %vm4782 = vcmp.eq.f32.partialorder %v2851, %v4726
        %vm4783 = vcmp.eq.f32.partialorder %v2851, %v4730
        %vm4784 = vcmp.eq.f32.partialorder %v2851, %v4734
        %vm4785 = vcmp.eq.f32.partialorder %v2851, %v4738
        %vm4786 = vcmp.eq.f32.partialorder %v2851, %v4742
        %vm4787 = vcmp.eq.f32.partialorder %v2851, %v4746
        %vm4788 = vcmp.eq.f32.partialorder %v2851, %v4750
        %vm4789 = vcmp.eq.f32.partialorder %v2851, %v4754
        %vm4790 = vcmp.eq.f32.partialorder %v2851, %v4758
        %vm4791 = vcmp.eq.f32.partialorder %v2851, %v4762
        %vm4792 = vcmp.eq.f32.partialorder %v2851, %v4766
        %vm4793 = vcmp.eq.f32.partialorder %v2851, %v4770
        %vm4794 = vcmp.eq.f32.partialorder %v2851, %v4774
        %vm4795 = vcmp.eq.f32.partialorder %v2851, %v4778
        %4796 = vset.pattern.permute.xlu0 2
        %4797 = vperm.xlu0 %4796, %v2306
        %v4798 = vpop.permute.xlu0 %4797
        %4800 = vset.pattern.permute.xlu0 2
        %4801 = vperm.xlu0 %4800, %v2307
        %v4802 = vpop.permute.xlu0 %4801
        %4804 = vset.pattern.permute.xlu0 2
        %4805 = vperm.xlu0 %4804, %v2308
        %v4806 = vpop.permute.xlu0 %4805
        %4808 = vset.pattern.permute.xlu0 2
        %4809 = vperm.xlu0 %4808, %v2309
        %v4810 = vpop.permute.xlu0 %4809
        %4812 = vset.pattern.permute.xlu0 2
        %4813 = vperm.xlu0 %4812, %v2310
        %v4814 = vpop.permute.xlu0 %4813
        %4816 = vset.pattern.permute.xlu0 2
        %4817 = vperm.xlu0 %4816, %v2311
        %v4818 = vpop.permute.xlu0 %4817
        %4820 = vset.pattern.permute.xlu0 2
        %4821 = vperm.xlu0 %4820, %v2312
        %v4822 = vpop.permute.xlu0 %4821
        %4824 = vset.pattern.permute.xlu0 2
        %4825 = vperm.xlu0 %4824, %v2313
        %v4826 = vpop.permute.xlu0 %4825
        %4828 = vset.pattern.permute.xlu0 2
        %4829 = vperm.xlu0 %4828, %v2314
        %v4830 = vpop.permute.xlu0 %4829
        %4832 = vset.pattern.permute.xlu0 2
        %4833 = vperm.xlu0 %4832, %v2315
        %v4834 = vpop.permute.xlu0 %4833
        %4836 = vset.pattern.permute.xlu0 2
        %4837 = vperm.xlu0 %4836, %v2316
        %v4838 = vpop.permute.xlu0 %4837
        %4840 = vset.pattern.permute.xlu0 2
        %4841 = vperm.xlu0 %4840, %v2317
        %v4842 = vpop.permute.xlu0 %4841
        %4844 = vset.pattern.permute.xlu0 2
        %4845 = vperm.xlu0 %4844, %v2318
        %v4846 = vpop.permute.xlu0 %4845
        %4848 = vset.pattern.permute.xlu0 2
        %4849 = vperm.xlu0 %4848, %v2319
        %v4850 = vpop.permute.xlu0 %4849
        %4852 = vset.pattern.permute.xlu0 2
        %4853 = vperm.xlu0 %4852, %v2320
        %v4854 = vpop.permute.xlu0 %4853
        %4856 = vset.pattern.permute.xlu0 2
        %4857 = vperm.xlu0 %4856, %v2321
        %v4858 = vpop.permute.xlu0 %4857
        %v4860 = vsel %vm4780, %v4798, 0.0
        %v4861 = vsel %vm4781, %v4802, 0.0
        %v4862 = vsel %vm4782, %v4806, 0.0
        %v4863 = vsel %vm4783, %v4810, 0.0
        %v4864 = vsel %vm4784, %v4814, 0.0
        %v4865 = vsel %vm4785, %v4818, 0.0
        %v4866 = vsel %vm4786, %v4822, 0.0
        %v4867 = vsel %vm4787, %v4826, 0.0
        %v4868 = vsel %vm4788, %v4830, 0.0
        %v4869 = vsel %vm4789, %v4834, 0.0
        %v4870 = vsel %vm4790, %v4838, 0.0
        %v4871 = vsel %vm4791, %v4842, 0.0
        %v4872 = vsel %vm4792, %v4846, 0.0
        %v4873 = vsel %vm4793, %v4850, 0.0
        %v4874 = vsel %vm4794, %v4854, 0.0
        %v4875 = vsel %vm4795, %v4858, 0.0
        %v4876 = vadd.f32 %v4700, %v4860
        %v4877 = vadd.f32 %v4701, %v4861
        %v4878 = vadd.f32 %v4702, %v4862
        %v4879 = vadd.f32 %v4703, %v4863
        %v4880 = vadd.f32 %v4704, %v4864
        %v4881 = vadd.f32 %v4705, %v4865
        %v4882 = vadd.f32 %v4706, %v4866
        %v4883 = vadd.f32 %v4707, %v4867
        %v4884 = vadd.f32 %v4708, %v4868
        %v4885 = vadd.f32 %v4709, %v4869
        %v4886 = vadd.f32 %v4710, %v4870
        %v4887 = vadd.f32 %v4711, %v4871
        %v4888 = vadd.f32 %v4712, %v4872
        %v4889 = vadd.f32 %v4713, %v4873
        %v4890 = vadd.f32 %v4714, %v4874
        %v4891 = vadd.f32 %v4715, %v4875
        %v4893 = vsel %vm3285, %v4540, 0
        %v4896 = vsel %vm3285, %v4541, 0
        %v4899 = vsel %vm3285, %v4542, 0
        %v4902 = vsel %vm3285, %v4543, 0
        %v4905 = vsel %vm3285, %v4544, 0
        %v4908 = vsel %vm3285, %v4545, 0
        %v4911 = vsel %vm3285, %v4546, 0
        %v4914 = vsel %vm3285, %v4547, 0
        %v4917 = vsel %vm3285, %v4548, 0
        %v4920 = vsel %vm3285, %v4549, 0
        %v4923 = vsel %vm3285, %v4550, 0
        %v4926 = vsel %vm3285, %v4551, 0
        %v4929 = vsel %vm3285, %v4552, 0
        %v4932 = vsel %vm3285, %v4553, 0
        %v4935 = vsel %vm3285, %v4554, 0
        %v4938 = vsel %vm3285, %v4555, 0
        %4940 = vmatpush.msra.mxu0 0.0
        %4941 = vmatpush.msra.mxu0 0.0
        %4942 = vmatpush.msra.mxu0 0.0
        %4943 = vmatpush.msra.mxu0 0.0
        %4944 = vmatpush.msra.mxu0 0.0
        %4945 = vmatpush.msra.mxu0 0.0
        %4946 = vmatpush.msra.mxu0 0.0
        %4947 = vmatpush.msra.mxu0 0.0
        %4948 = vmatpush.msra.mxu0 0.0
        %4949 = vmatpush.msra.mxu0 0.0
        %4950 = vmatpush.msra.mxu0 0.0
        %4951 = vmatpush.msra.mxu0 0.0
        %4952 = vmatpush.msra.mxu0 0.0
        %4953 = vmatpush.msra.mxu0 %v3336
        %4954 = vmatpush.msra.mxu0 %v2252
        %4955 = vmatpush.msra.mxu0 %v2251
        %4956 = vmatmul.f32.gmra.mxu0 %v4893
        %v4957 = vpop.f32.mrf.mxu0
        %v4958 = vadd.f32 0.0, %v4957
        %4959 = vmatmul.f32.gmra.mxu0 %v4896
        %v4960 = vpop.f32.mrf.mxu0
        %v4961 = vadd.f32 0.0, %v4960
        %4962 = vmatmul.f32.gmra.mxu0 %v4899
        %v4963 = vpop.f32.mrf.mxu0
        %v4964 = vadd.f32 0.0, %v4963
        %4965 = vmatmul.f32.gmra.mxu0 %v4902
        %v4966 = vpop.f32.mrf.mxu0
        %v4967 = vadd.f32 0.0, %v4966
        %4968 = vmatmul.f32.gmra.mxu0 %v4905
        %v4969 = vpop.f32.mrf.mxu0
        %v4970 = vadd.f32 0.0, %v4969
        %4971 = vmatmul.f32.gmra.mxu0 %v4908
        %v4972 = vpop.f32.mrf.mxu0
        %v4973 = vadd.f32 0.0, %v4972
        %4974 = vmatmul.f32.gmra.mxu0 %v4911
        %v4975 = vpop.f32.mrf.mxu0
        %v4976 = vadd.f32 0.0, %v4975
        %4977 = vmatmul.f32.gmra.mxu0 %v4914
        %v4978 = vpop.f32.mrf.mxu0
        %v4979 = vadd.f32 0.0, %v4978
        %4980 = vmatmul.f32.gmra.mxu0 %v4917
        %v4981 = vpop.f32.mrf.mxu0
        %v4982 = vadd.f32 0.0, %v4981
        %4983 = vmatmul.f32.gmra.mxu0 %v4920
        %v4984 = vpop.f32.mrf.mxu0
        %v4985 = vadd.f32 0.0, %v4984
        %4986 = vmatmul.f32.gmra.mxu0 %v4923
        %v4987 = vpop.f32.mrf.mxu0
        %v4988 = vadd.f32 0.0, %v4987
        %4989 = vmatmul.f32.gmra.mxu0 %v4926
        %v4990 = vpop.f32.mrf.mxu0
        %v4991 = vadd.f32 0.0, %v4990
        %4992 = vmatmul.f32.gmra.mxu0 %v4929
        %v4993 = vpop.f32.mrf.mxu0
        %v4994 = vadd.f32 0.0, %v4993
        %4995 = vmatmul.f32.gmra.mxu0 %v4932
        %v4996 = vpop.f32.mrf.mxu0
        %v4997 = vadd.f32 0.0, %v4996
        %4998 = vmatmul.f32.gmra.mxu0 %v4935
        %v4999 = vpop.f32.mrf.mxu0
        %v5000 = vadd.f32 0.0, %v4999
        %5001 = vmatmul.f32.gmra.mxu0 %v4938
        %v5002 = vpop.f32.mrf.mxu0
        %v5003 = vadd.f32 0.0, %v5002
        %5004 = vdwg.mxu0
        %v5005 = vmul.f32 %v4958, %v4876
        %v5006 = vmul.f32 %v4961, %v4877
        %v5007 = vmul.f32 %v4964, %v4878
        %v5008 = vmul.f32 %v4967, %v4879
        %v5009 = vmul.f32 %v4970, %v4880
        %v5010 = vmul.f32 %v4973, %v4881
        %v5011 = vmul.f32 %v4976, %v4882
        %v5012 = vmul.f32 %v4979, %v4883
        %v5013 = vmul.f32 %v4982, %v4884
        %v5014 = vmul.f32 %v4985, %v4885
        %v5015 = vmul.f32 %v4988, %v4886
        %v5016 = vmul.f32 %v4991, %v4887
        %v5017 = vmul.f32 %v4994, %v4888
        %v5018 = vmul.f32 %v4997, %v4889
        %v5019 = vmul.f32 %v5000, %v4890
        %v5020 = vmul.f32 %v5003, %v4891
        %5021 = vset.pattern.permute.xlu0 3
        %5022 = vperm.xlu0 %5021, %v2258
        %v5023 = vpop.permute.xlu0 %5022
        %5025 = vset.pattern.permute.xlu0 3
        %5026 = vperm.xlu0 %5025, %v2259
        %v5027 = vpop.permute.xlu0 %5026
        %5029 = vset.pattern.permute.xlu0 3
        %5030 = vperm.xlu0 %5029, %v2260
        %v5031 = vpop.permute.xlu0 %5030
        %5033 = vset.pattern.permute.xlu0 3
        %5034 = vperm.xlu0 %5033, %v2261
        %v5035 = vpop.permute.xlu0 %5034
        %5037 = vset.pattern.permute.xlu0 3
        %5038 = vperm.xlu0 %5037, %v2262
        %v5039 = vpop.permute.xlu0 %5038
        %5041 = vset.pattern.permute.xlu0 3
        %5042 = vperm.xlu0 %5041, %v2263
        %v5043 = vpop.permute.xlu0 %5042
        %5045 = vset.pattern.permute.xlu0 3
        %5046 = vperm.xlu0 %5045, %v2264
        %v5047 = vpop.permute.xlu0 %5046
        %5049 = vset.pattern.permute.xlu0 3
        %5050 = vperm.xlu0 %5049, %v2265
        %v5051 = vpop.permute.xlu0 %5050
        %5053 = vset.pattern.permute.xlu0 3
        %5054 = vperm.xlu0 %5053, %v2266
        %v5055 = vpop.permute.xlu0 %5054
        %5057 = vset.pattern.permute.xlu0 3
        %5058 = vperm.xlu0 %5057, %v2267
        %v5059 = vpop.permute.xlu0 %5058
        %5061 = vset.pattern.permute.xlu0 3
        %5062 = vperm.xlu0 %5061, %v2268
        %v5063 = vpop.permute.xlu0 %5062
        %5065 = vset.pattern.permute.xlu0 3
        %5066 = vperm.xlu0 %5065, %v2269
        %v5067 = vpop.permute.xlu0 %5066
        %5069 = vset.pattern.permute.xlu0 3
        %5070 = vperm.xlu0 %5069, %v2270
        %v5071 = vpop.permute.xlu0 %5070
        %5073 = vset.pattern.permute.xlu0 3
        %5074 = vperm.xlu0 %5073, %v2271
        %v5075 = vpop.permute.xlu0 %5074
        %5077 = vset.pattern.permute.xlu0 3
        %5078 = vperm.xlu0 %5077, %v2272
        %v5079 = vpop.permute.xlu0 %5078
        %5081 = vset.pattern.permute.xlu0 3
        %5082 = vperm.xlu0 %5081, %v2273
        %v5083 = vpop.permute.xlu0 %5082
        %vm5085 = vcmp.eq.f32.partialorder %v2256, %v5023
        %vm5086 = vcmp.eq.f32.partialorder %v2256, %v5027
        %vm5087 = vcmp.eq.f32.partialorder %v2256, %v5031
        %vm5088 = vcmp.eq.f32.partialorder %v2256, %v5035
        %vm5089 = vcmp.eq.f32.partialorder %v2256, %v5039
        %vm5090 = vcmp.eq.f32.partialorder %v2256, %v5043
        %vm5091 = vcmp.eq.f32.partialorder %v2256, %v5047
        %vm5092 = vcmp.eq.f32.partialorder %v2256, %v5051
        %vm5093 = vcmp.eq.f32.partialorder %v2256, %v5055
        %vm5094 = vcmp.eq.f32.partialorder %v2256, %v5059
        %vm5095 = vcmp.eq.f32.partialorder %v2256, %v5063
        %vm5096 = vcmp.eq.f32.partialorder %v2256, %v5067
        %vm5097 = vcmp.eq.f32.partialorder %v2256, %v5071
        %vm5098 = vcmp.eq.f32.partialorder %v2256, %v5075
        %vm5099 = vcmp.eq.f32.partialorder %v2256, %v5079
        %vm5100 = vcmp.eq.f32.partialorder %v2256, %v5083
        %5101 = vset.pattern.permute.xlu0 3
        %5102 = vperm.xlu0 %5101, %v2402
        %v5103 = vpop.permute.xlu0 %5102
        %5105 = vset.pattern.permute.xlu0 3
        %5106 = vperm.xlu0 %5105, %v2403
        %v5107 = vpop.permute.xlu0 %5106
        %5109 = vset.pattern.permute.xlu0 3
        %5110 = vperm.xlu0 %5109, %v2404
        %v5111 = vpop.permute.xlu0 %5110
        %5113 = vset.pattern.permute.xlu0 3
        %5114 = vperm.xlu0 %5113, %v2405
        %v5115 = vpop.permute.xlu0 %5114
        %5117 = vset.pattern.permute.xlu0 3
        %5118 = vperm.xlu0 %5117, %v2406
        %v5119 = vpop.permute.xlu0 %5118
        %5121 = vset.pattern.permute.xlu0 3
        %5122 = vperm.xlu0 %5121, %v2407
        %v5123 = vpop.permute.xlu0 %5122
        %5125 = vset.pattern.permute.xlu0 3
        %5126 = vperm.xlu0 %5125, %v2408
        %v5127 = vpop.permute.xlu0 %5126
        %5129 = vset.pattern.permute.xlu0 3
        %5130 = vperm.xlu0 %5129, %v2409
        %v5131 = vpop.permute.xlu0 %5130
        %5133 = vset.pattern.permute.xlu0 3
        %5134 = vperm.xlu0 %5133, %v2410
        %v5135 = vpop.permute.xlu0 %5134
        %5137 = vset.pattern.permute.xlu0 3
        %5138 = vperm.xlu0 %5137, %v2411
        %v5139 = vpop.permute.xlu0 %5138
        %5141 = vset.pattern.permute.xlu0 3
        %5142 = vperm.xlu0 %5141, %v2412
        %v5143 = vpop.permute.xlu0 %5142
        %5145 = vset.pattern.permute.xlu0 3
        %5146 = vperm.xlu0 %5145, %v2413
        %v5147 = vpop.permute.xlu0 %5146
        %5149 = vset.pattern.permute.xlu0 3
        %5150 = vperm.xlu0 %5149, %v2414
        %v5151 = vpop.permute.xlu0 %5150
        %5153 = vset.pattern.permute.xlu0 3
        %5154 = vperm.xlu0 %5153, %v2415
        %v5155 = vpop.permute.xlu0 %5154
        %5157 = vset.pattern.permute.xlu0 3
        %5158 = vperm.xlu0 %5157, %v2416
        %v5159 = vpop.permute.xlu0 %5158
        %5161 = vset.pattern.permute.xlu0 3
        %5162 = vperm.xlu0 %5161, %v2417
        %v5163 = vpop.permute.xlu0 %5162
        %v5165 = vsel %vm5085, %v5103, 0.0
        %v5166 = vsel %vm5086, %v5107, 0.0
        %v5167 = vsel %vm5087, %v5111, 0.0
        %v5168 = vsel %vm5088, %v5115, 0.0
        %v5169 = vsel %vm5089, %v5119, 0.0
        %v5170 = vsel %vm5090, %v5123, 0.0
        %v5171 = vsel %vm5091, %v5127, 0.0
        %v5172 = vsel %vm5092, %v5131, 0.0
        %v5173 = vsel %vm5093, %v5135, 0.0
        %v5174 = vsel %vm5094, %v5139, 0.0
        %v5175 = vsel %vm5095, %v5143, 0.0
        %v5176 = vsel %vm5096, %v5147, 0.0
        %v5177 = vsel %vm5097, %v5151, 0.0
        %v5178 = vsel %vm5098, %v5155, 0.0
        %v5179 = vsel %vm5099, %v5159, 0.0
        %v5180 = vsel %vm5100, %v5163, 0.0
        %5181 = vset.pattern.permute.xlu0 3
        %5182 = vperm.xlu0 %5181, %v2626
        %v5183 = vpop.permute.xlu0 %5182
        %5185 = vset.pattern.permute.xlu0 3
        %5186 = vperm.xlu0 %5185, %v2627
        %v5187 = vpop.permute.xlu0 %5186
        %5189 = vset.pattern.permute.xlu0 3
        %5190 = vperm.xlu0 %5189, %v2628
        %v5191 = vpop.permute.xlu0 %5190
        %5193 = vset.pattern.permute.xlu0 3
        %5194 = vperm.xlu0 %5193, %v2629
        %v5195 = vpop.permute.xlu0 %5194
        %5197 = vset.pattern.permute.xlu0 3
        %5198 = vperm.xlu0 %5197, %v2630
        %v5199 = vpop.permute.xlu0 %5198
        %5201 = vset.pattern.permute.xlu0 3
        %5202 = vperm.xlu0 %5201, %v2631
        %v5203 = vpop.permute.xlu0 %5202
        %5205 = vset.pattern.permute.xlu0 3
        %5206 = vperm.xlu0 %5205, %v2632
        %v5207 = vpop.permute.xlu0 %5206
        %5209 = vset.pattern.permute.xlu0 3
        %5210 = vperm.xlu0 %5209, %v2633
        %v5211 = vpop.permute.xlu0 %5210
        %5213 = vset.pattern.permute.xlu0 3
        %5214 = vperm.xlu0 %5213, %v2634
        %v5215 = vpop.permute.xlu0 %5214
        %5217 = vset.pattern.permute.xlu0 3
        %5218 = vperm.xlu0 %5217, %v2635
        %v5219 = vpop.permute.xlu0 %5218
        %5221 = vset.pattern.permute.xlu0 3
        %5222 = vperm.xlu0 %5221, %v2636
        %v5223 = vpop.permute.xlu0 %5222
        %5225 = vset.pattern.permute.xlu0 3
        %5226 = vperm.xlu0 %5225, %v2637
        %v5227 = vpop.permute.xlu0 %5226
        %5229 = vset.pattern.permute.xlu0 3
        %5230 = vperm.xlu0 %5229, %v2638
        %v5231 = vpop.permute.xlu0 %5230
        %5233 = vset.pattern.permute.xlu0 3
        %5234 = vperm.xlu0 %5233, %v2639
        %v5235 = vpop.permute.xlu0 %5234
        %5237 = vset.pattern.permute.xlu0 3
        %5238 = vperm.xlu0 %5237, %v2640
        %v5239 = vpop.permute.xlu0 %5238
        %5241 = vset.pattern.permute.xlu0 3
        %5242 = vperm.xlu0 %5241, %v2641
        %v5243 = vpop.permute.xlu0 %5242
        %vm5245 = vcmp.eq.f32.partialorder %v2256, %v5183
        %vm5246 = vcmp.eq.f32.partialorder %v2256, %v5187
        %vm5247 = vcmp.eq.f32.partialorder %v2256, %v5191
        %vm5248 = vcmp.eq.f32.partialorder %v2256, %v5195
        %vm5249 = vcmp.eq.f32.partialorder %v2256, %v5199
        %vm5250 = vcmp.eq.f32.partialorder %v2256, %v5203
        %vm5251 = vcmp.eq.f32.partialorder %v2256, %v5207
        %vm5252 = vcmp.eq.f32.partialorder %v2256, %v5211
        %vm5253 = vcmp.eq.f32.partialorder %v2256, %v5215
        %vm5254 = vcmp.eq.f32.partialorder %v2256, %v5219
        %vm5255 = vcmp.eq.f32.partialorder %v2256, %v5223
        %vm5256 = vcmp.eq.f32.partialorder %v2256, %v5227
        %vm5257 = vcmp.eq.f32.partialorder %v2256, %v5231
        %vm5258 = vcmp.eq.f32.partialorder %v2256, %v5235
        %vm5259 = vcmp.eq.f32.partialorder %v2256, %v5239
        %vm5260 = vcmp.eq.f32.partialorder %v2256, %v5243
        %5261 = vset.pattern.permute.xlu0 3
        %5262 = vperm.xlu0 %5261, %v2418
        %v5263 = vpop.permute.xlu0 %5262
        %5265 = vset.pattern.permute.xlu0 3
        %5266 = vperm.xlu0 %5265, %v2419
        %v5267 = vpop.permute.xlu0 %5266
        %5269 = vset.pattern.permute.xlu0 3
        %5270 = vperm.xlu0 %5269, %v2420
        %v5271 = vpop.permute.xlu0 %5270
        %5273 = vset.pattern.permute.xlu0 3
        %5274 = vperm.xlu0 %5273, %v2421
        %v5275 = vpop.permute.xlu0 %5274
        %5277 = vset.pattern.permute.xlu0 3
        %5278 = vperm.xlu0 %5277, %v2422
        %v5279 = vpop.permute.xlu0 %5278
        %5281 = vset.pattern.permute.xlu0 3
        %5282 = vperm.xlu0 %5281, %v2423
        %v5283 = vpop.permute.xlu0 %5282
        %5285 = vset.pattern.permute.xlu0 3
        %5286 = vperm.xlu0 %5285, %v2424
        %v5287 = vpop.permute.xlu0 %5286
        %5289 = vset.pattern.permute.xlu0 3
        %5290 = vperm.xlu0 %5289, %v2425
        %v5291 = vpop.permute.xlu0 %5290
        %5293 = vset.pattern.permute.xlu0 3
        %5294 = vperm.xlu0 %5293, %v2426
        %v5295 = vpop.permute.xlu0 %5294
        %5297 = vset.pattern.permute.xlu0 3
        %5298 = vperm.xlu0 %5297, %v2427
        %v5299 = vpop.permute.xlu0 %5298
        %5301 = vset.pattern.permute.xlu0 3
        %5302 = vperm.xlu0 %5301, %v2428
        %v5303 = vpop.permute.xlu0 %5302
        %5305 = vset.pattern.permute.xlu0 3
        %5306 = vperm.xlu0 %5305, %v2429
        %v5307 = vpop.permute.xlu0 %5306
        %5309 = vset.pattern.permute.xlu0 3
        %5310 = vperm.xlu0 %5309, %v2430
        %v5311 = vpop.permute.xlu0 %5310
        %5313 = vset.pattern.permute.xlu0 3
        %5314 = vperm.xlu0 %5313, %v2431
        %v5315 = vpop.permute.xlu0 %5314
        %5317 = vset.pattern.permute.xlu0 3
        %5318 = vperm.xlu0 %5317, %v2432
        %v5319 = vpop.permute.xlu0 %5318
        %5321 = vset.pattern.permute.xlu0 3
        %5322 = vperm.xlu0 %5321, %v2433
        %v5323 = vpop.permute.xlu0 %5322
        %v5325 = vsel %vm5245, %v5263, 0.0
        %v5326 = vsel %vm5246, %v5267, 0.0
        %v5327 = vsel %vm5247, %v5271, 0.0
        %v5328 = vsel %vm5248, %v5275, 0.0
        %v5329 = vsel %vm5249, %v5279, 0.0
        %v5330 = vsel %vm5250, %v5283, 0.0
        %v5331 = vsel %vm5251, %v5287, 0.0
        %v5332 = vsel %vm5252, %v5291, 0.0
        %v5333 = vsel %vm5253, %v5295, 0.0
        %v5334 = vsel %vm5254, %v5299, 0.0
        %v5335 = vsel %vm5255, %v5303, 0.0
        %v5336 = vsel %vm5256, %v5307, 0.0
        %v5337 = vsel %vm5257, %v5311, 0.0
        %v5338 = vsel %vm5258, %v5315, 0.0
        %v5339 = vsel %vm5259, %v5319, 0.0
        %v5340 = vsel %vm5260, %v5323, 0.0
        %v5341 = vadd.f32 %v5165, %v5325
        %v5342 = vadd.f32 %v5166, %v5326
        %v5343 = vadd.f32 %v5167, %v5327
        %v5344 = vadd.f32 %v5168, %v5328
        %v5345 = vadd.f32 %v5169, %v5329
        %v5346 = vadd.f32 %v5170, %v5330
        %v5347 = vadd.f32 %v5171, %v5331
        %v5348 = vadd.f32 %v5172, %v5332
        %v5349 = vadd.f32 %v5173, %v5333
        %v5350 = vadd.f32 %v5174, %v5334
        %v5351 = vadd.f32 %v5175, %v5335
        %v5352 = vadd.f32 %v5176, %v5336
        %v5353 = vadd.f32 %v5177, %v5337
        %v5354 = vadd.f32 %v5178, %v5338
        %v5355 = vadd.f32 %v5179, %v5339
        %v5356 = vadd.f32 %v5180, %v5340
        %5357 = vset.pattern.permute.xlu0 3
        %5358 = vperm.xlu0 %5357, %v2274
        %v5359 = vpop.permute.xlu0 %5358
        %5361 = vset.pattern.permute.xlu0 3
        %5362 = vperm.xlu0 %5361, %v2275
        %v5363 = vpop.permute.xlu0 %5362
        %5365 = vset.pattern.permute.xlu0 3
        %5366 = vperm.xlu0 %5365, %v2276
        %v5367 = vpop.permute.xlu0 %5366
        %5369 = vset.pattern.permute.xlu0 3
        %5370 = vperm.xlu0 %5369, %v2277
        %v5371 = vpop.permute.xlu0 %5370
        %5373 = vset.pattern.permute.xlu0 3
        %5374 = vperm.xlu0 %5373, %v2278
        %v5375 = vpop.permute.xlu0 %5374
        %5377 = vset.pattern.permute.xlu0 3
        %5378 = vperm.xlu0 %5377, %v2279
        %v5379 = vpop.permute.xlu0 %5378
        %5381 = vset.pattern.permute.xlu0 3
        %5382 = vperm.xlu0 %5381, %v2280
        %v5383 = vpop.permute.xlu0 %5382
        %5385 = vset.pattern.permute.xlu0 3
        %5386 = vperm.xlu0 %5385, %v2281
        %v5387 = vpop.permute.xlu0 %5386
        %5389 = vset.pattern.permute.xlu0 3
        %5390 = vperm.xlu0 %5389, %v2282
        %v5391 = vpop.permute.xlu0 %5390
        %5393 = vset.pattern.permute.xlu0 3
        %5394 = vperm.xlu0 %5393, %v2283
        %v5395 = vpop.permute.xlu0 %5394
        %5397 = vset.pattern.permute.xlu0 3
        %5398 = vperm.xlu0 %5397, %v2284
        %v5399 = vpop.permute.xlu0 %5398
        %5401 = vset.pattern.permute.xlu0 3
        %5402 = vperm.xlu0 %5401, %v2285
        %v5403 = vpop.permute.xlu0 %5402
        %5405 = vset.pattern.permute.xlu0 3
        %5406 = vperm.xlu0 %5405, %v2286
        %v5407 = vpop.permute.xlu0 %5406
        %5409 = vset.pattern.permute.xlu0 3
        %5410 = vperm.xlu0 %5409, %v2287
        %v5411 = vpop.permute.xlu0 %5410
        %5413 = vset.pattern.permute.xlu0 3
        %5414 = vperm.xlu0 %5413, %v2288
        %v5415 = vpop.permute.xlu0 %5414
        %5417 = vset.pattern.permute.xlu0 3
        %5418 = vperm.xlu0 %5417, %v2289
        %v5419 = vpop.permute.xlu0 %5418
        %vm5421 = vcmp.eq.f32.partialorder %v2851, %v5359
        %vm5422 = vcmp.eq.f32.partialorder %v2851, %v5363
        %vm5423 = vcmp.eq.f32.partialorder %v2851, %v5367
        %vm5424 = vcmp.eq.f32.partialorder %v2851, %v5371
        %vm5425 = vcmp.eq.f32.partialorder %v2851, %v5375
        %vm5426 = vcmp.eq.f32.partialorder %v2851, %v5379
        %vm5427 = vcmp.eq.f32.partialorder %v2851, %v5383
        %vm5428 = vcmp.eq.f32.partialorder %v2851, %v5387
        %vm5429 = vcmp.eq.f32.partialorder %v2851, %v5391
        %vm5430 = vcmp.eq.f32.partialorder %v2851, %v5395
        %vm5431 = vcmp.eq.f32.partialorder %v2851, %v5399
        %vm5432 = vcmp.eq.f32.partialorder %v2851, %v5403
        %vm5433 = vcmp.eq.f32.partialorder %v2851, %v5407
        %vm5434 = vcmp.eq.f32.partialorder %v2851, %v5411
        %vm5435 = vcmp.eq.f32.partialorder %v2851, %v5415
        %vm5436 = vcmp.eq.f32.partialorder %v2851, %v5419
        %5437 = vset.pattern.permute.xlu0 3
        %5438 = vperm.xlu0 %5437, %v2949
        %v5439 = vpop.permute.xlu0 %5438
        %5441 = vset.pattern.permute.xlu0 3
        %5442 = vperm.xlu0 %5441, %v2950
        %v5443 = vpop.permute.xlu0 %5442
        %5445 = vset.pattern.permute.xlu0 3
        %5446 = vperm.xlu0 %5445, %v2951
        %v5447 = vpop.permute.xlu0 %5446
        %5449 = vset.pattern.permute.xlu0 3
        %5450 = vperm.xlu0 %5449, %v2952
        %v5451 = vpop.permute.xlu0 %5450
        %5453 = vset.pattern.permute.xlu0 3
        %5454 = vperm.xlu0 %5453, %v2953
        %v5455 = vpop.permute.xlu0 %5454
        %5457 = vset.pattern.permute.xlu0 3
        %5458 = vperm.xlu0 %5457, %v2954
        %v5459 = vpop.permute.xlu0 %5458
        %5461 = vset.pattern.permute.xlu0 3
        %5462 = vperm.xlu0 %5461, %v2955
        %v5463 = vpop.permute.xlu0 %5462
        %5465 = vset.pattern.permute.xlu0 3
        %5466 = vperm.xlu0 %5465, %v2956
        %v5467 = vpop.permute.xlu0 %5466
        %5469 = vset.pattern.permute.xlu0 3
        %5470 = vperm.xlu0 %5469, %v2957
        %v5471 = vpop.permute.xlu0 %5470
        %5473 = vset.pattern.permute.xlu0 3
        %5474 = vperm.xlu0 %5473, %v2958
        %v5475 = vpop.permute.xlu0 %5474
        %5477 = vset.pattern.permute.xlu0 3
        %5478 = vperm.xlu0 %5477, %v2959
        %v5479 = vpop.permute.xlu0 %5478
        %5481 = vset.pattern.permute.xlu0 3
        %5482 = vperm.xlu0 %5481, %v2960
        %v5483 = vpop.permute.xlu0 %5482
        %5485 = vset.pattern.permute.xlu0 3
        %5486 = vperm.xlu0 %5485, %v2961
        %v5487 = vpop.permute.xlu0 %5486
        %5489 = vset.pattern.permute.xlu0 3
        %5490 = vperm.xlu0 %5489, %v2962
        %v5491 = vpop.permute.xlu0 %5490
        %5493 = vset.pattern.permute.xlu0 3
        %5494 = vperm.xlu0 %5493, %v2963
        %v5495 = vpop.permute.xlu0 %5494
        %5497 = vset.pattern.permute.xlu0 3
        %5498 = vperm.xlu0 %5497, %v2964
        %v5499 = vpop.permute.xlu0 %5498
        %v5501 = vsel %vm5421, %v5439, 0.0
        %v5502 = vsel %vm5422, %v5443, 0.0
        %v5503 = vsel %vm5423, %v5447, 0.0
        %v5504 = vsel %vm5424, %v5451, 0.0
        %v5505 = vsel %vm5425, %v5455, 0.0
        %v5506 = vsel %vm5426, %v5459, 0.0
        %v5507 = vsel %vm5427, %v5463, 0.0
        %v5508 = vsel %vm5428, %v5467, 0.0
        %v5509 = vsel %vm5429, %v5471, 0.0
        %v5510 = vsel %vm5430, %v5475, 0.0
        %v5511 = vsel %vm5431, %v5479, 0.0
        %v5512 = vsel %vm5432, %v5483, 0.0
        %v5513 = vsel %vm5433, %v5487, 0.0
        %v5514 = vsel %vm5434, %v5491, 0.0
        %v5515 = vsel %vm5435, %v5495, 0.0
        %v5516 = vsel %vm5436, %v5499, 0.0
        %5517 = vset.pattern.permute.xlu0 3
        %5518 = vperm.xlu0 %5517, %v3061
        %v5519 = vpop.permute.xlu0 %5518
        %5521 = vset.pattern.permute.xlu0 3
        %5522 = vperm.xlu0 %5521, %v3062
        %v5523 = vpop.permute.xlu0 %5522
        %5525 = vset.pattern.permute.xlu0 3
        %5526 = vperm.xlu0 %5525, %v3063
        %v5527 = vpop.permute.xlu0 %5526
        %5529 = vset.pattern.permute.xlu0 3
        %5530 = vperm.xlu0 %5529, %v3064
        %v5531 = vpop.permute.xlu0 %5530
        %5533 = vset.pattern.permute.xlu0 3
        %5534 = vperm.xlu0 %5533, %v3065
        %v5535 = vpop.permute.xlu0 %5534
        %5537 = vset.pattern.permute.xlu0 3
        %5538 = vperm.xlu0 %5537, %v3066
        %v5539 = vpop.permute.xlu0 %5538
        %5541 = vset.pattern.permute.xlu0 3
        %5542 = vperm.xlu0 %5541, %v3067
        %v5543 = vpop.permute.xlu0 %5542
        %5545 = vset.pattern.permute.xlu0 3
        %5546 = vperm.xlu0 %5545, %v3068
        %v5547 = vpop.permute.xlu0 %5546
        %5549 = vset.pattern.permute.xlu0 3
        %5550 = vperm.xlu0 %5549, %v3069
        %v5551 = vpop.permute.xlu0 %5550
        %5553 = vset.pattern.permute.xlu0 3
        %5554 = vperm.xlu0 %5553, %v3070
        %v5555 = vpop.permute.xlu0 %5554
        %5557 = vset.pattern.permute.xlu0 3
        %5558 = vperm.xlu0 %5557, %v3071
        %v5559 = vpop.permute.xlu0 %5558
        %5561 = vset.pattern.permute.xlu0 3
        %5562 = vperm.xlu0 %5561, %v3072
        %v5563 = vpop.permute.xlu0 %5562
        %5565 = vset.pattern.permute.xlu0 3
        %5566 = vperm.xlu0 %5565, %v3073
        %v5567 = vpop.permute.xlu0 %5566
        %5569 = vset.pattern.permute.xlu0 3
        %5570 = vperm.xlu0 %5569, %v3074
        %v5571 = vpop.permute.xlu0 %5570
        %5573 = vset.pattern.permute.xlu0 3
        %5574 = vperm.xlu0 %5573, %v3075
        %v5575 = vpop.permute.xlu0 %5574
        %5577 = vset.pattern.permute.xlu0 3
        %5578 = vperm.xlu0 %5577, %v3076
        %v5579 = vpop.permute.xlu0 %5578
        %vm5581 = vcmp.eq.f32.partialorder %v2851, %v5519
        %vm5582 = vcmp.eq.f32.partialorder %v2851, %v5523
        %vm5583 = vcmp.eq.f32.partialorder %v2851, %v5527
        %vm5584 = vcmp.eq.f32.partialorder %v2851, %v5531
        %vm5585 = vcmp.eq.f32.partialorder %v2851, %v5535
        %vm5586 = vcmp.eq.f32.partialorder %v2851, %v5539
        %vm5587 = vcmp.eq.f32.partialorder %v2851, %v5543
        %vm5588 = vcmp.eq.f32.partialorder %v2851, %v5547
        %vm5589 = vcmp.eq.f32.partialorder %v2851, %v5551
        %vm5590 = vcmp.eq.f32.partialorder %v2851, %v5555
        %vm5591 = vcmp.eq.f32.partialorder %v2851, %v5559
        %vm5592 = vcmp.eq.f32.partialorder %v2851, %v5563
        %vm5593 = vcmp.eq.f32.partialorder %v2851, %v5567
        %vm5594 = vcmp.eq.f32.partialorder %v2851, %v5571
        %vm5595 = vcmp.eq.f32.partialorder %v2851, %v5575
        %vm5596 = vcmp.eq.f32.partialorder %v2851, %v5579
        %5597 = vset.pattern.permute.xlu0 3
        %5598 = vperm.xlu0 %5597, %v2306
        %v5599 = vpop.permute.xlu0 %5598
        %5601 = vset.pattern.permute.xlu0 3
        %5602 = vperm.xlu0 %5601, %v2307
        %v5603 = vpop.permute.xlu0 %5602
        %5605 = vset.pattern.permute.xlu0 3
        %5606 = vperm.xlu0 %5605, %v2308
        %v5607 = vpop.permute.xlu0 %5606
        %5609 = vset.pattern.permute.xlu0 3
        %5610 = vperm.xlu0 %5609, %v2309
        %v5611 = vpop.permute.xlu0 %5610
        %5613 = vset.pattern.permute.xlu0 3
        %5614 = vperm.xlu0 %5613, %v2310
        %v5615 = vpop.permute.xlu0 %5614
        %5617 = vset.pattern.permute.xlu0 3
        %5618 = vperm.xlu0 %5617, %v2311
        %v5619 = vpop.permute.xlu0 %5618
        %5621 = vset.pattern.permute.xlu0 3
        %5622 = vperm.xlu0 %5621, %v2312
        %v5623 = vpop.permute.xlu0 %5622
        %5625 = vset.pattern.permute.xlu0 3
        %5626 = vperm.xlu0 %5625, %v2313
        %v5627 = vpop.permute.xlu0 %5626
        %5629 = vset.pattern.permute.xlu0 3
        %5630 = vperm.xlu0 %5629, %v2314
        %v5631 = vpop.permute.xlu0 %5630
        %5633 = vset.pattern.permute.xlu0 3
        %5634 = vperm.xlu0 %5633, %v2315
        %v5635 = vpop.permute.xlu0 %5634
        %5637 = vset.pattern.permute.xlu0 3
        %5638 = vperm.xlu0 %5637, %v2316
        %v5639 = vpop.permute.xlu0 %5638
        %5641 = vset.pattern.permute.xlu0 3
        %5642 = vperm.xlu0 %5641, %v2317
        %v5643 = vpop.permute.xlu0 %5642
        %5645 = vset.pattern.permute.xlu0 3
        %5646 = vperm.xlu0 %5645, %v2318
        %v5647 = vpop.permute.xlu0 %5646
        %5649 = vset.pattern.permute.xlu0 3
        %5650 = vperm.xlu0 %5649, %v2319
        %v5651 = vpop.permute.xlu0 %5650
        %5653 = vset.pattern.permute.xlu0 3
        %5654 = vperm.xlu0 %5653, %v2320
        %v5655 = vpop.permute.xlu0 %5654
        %5657 = vset.pattern.permute.xlu0 3
        %5658 = vperm.xlu0 %5657, %v2321
        %v5659 = vpop.permute.xlu0 %5658
        %v5661 = vsel %vm5581, %v5599, 0.0
        %v5662 = vsel %vm5582, %v5603, 0.0
        %v5663 = vsel %vm5583, %v5607, 0.0
        %v5664 = vsel %vm5584, %v5611, 0.0
        %v5665 = vsel %vm5585, %v5615, 0.0
        %v5666 = vsel %vm5586, %v5619, 0.0
        %v5667 = vsel %vm5587, %v5623, 0.0
        %v5668 = vsel %vm5588, %v5627, 0.0
        %v5669 = vsel %vm5589, %v5631, 0.0
        %v5670 = vsel %vm5590, %v5635, 0.0
        %v5671 = vsel %vm5591, %v5639, 0.0
        %v5672 = vsel %vm5592, %v5643, 0.0
        %v5673 = vsel %vm5593, %v5647, 0.0
        %v5674 = vsel %vm5594, %v5651, 0.0
        %v5675 = vsel %vm5595, %v5655, 0.0
        %v5676 = vsel %vm5596, %v5659, 0.0
        %v5677 = vadd.f32 %v5501, %v5661
        %v5678 = vadd.f32 %v5502, %v5662
        %v5679 = vadd.f32 %v5503, %v5663
        %v5680 = vadd.f32 %v5504, %v5664
        %v5681 = vadd.f32 %v5505, %v5665
        %v5682 = vadd.f32 %v5506, %v5666
        %v5683 = vadd.f32 %v5507, %v5667
        %v5684 = vadd.f32 %v5508, %v5668
        %v5685 = vadd.f32 %v5509, %v5669
        %v5686 = vadd.f32 %v5510, %v5670
        %v5687 = vadd.f32 %v5511, %v5671
        %v5688 = vadd.f32 %v5512, %v5672
        %v5689 = vadd.f32 %v5513, %v5673
        %v5690 = vadd.f32 %v5514, %v5674
        %v5691 = vadd.f32 %v5515, %v5675
        %v5692 = vadd.f32 %v5516, %v5676
        %v5694 = vsel %vm3285, %v5341, 0
        %v5697 = vsel %vm3285, %v5342, 0
        %v5700 = vsel %vm3285, %v5343, 0
        %v5703 = vsel %vm3285, %v5344, 0
        %v5706 = vsel %vm3285, %v5345, 0
        %v5709 = vsel %vm3285, %v5346, 0
        %v5712 = vsel %vm3285, %v5347, 0
        %v5715 = vsel %vm3285, %v5348, 0
        %v5718 = vsel %vm3285, %v5349, 0
        %v5721 = vsel %vm3285, %v5350, 0
        %v5724 = vsel %vm3285, %v5351, 0
        %v5727 = vsel %vm3285, %v5352, 0
        %v5730 = vsel %vm3285, %v5353, 0
        %v5733 = vsel %vm3285, %v5354, 0
        %v5736 = vsel %vm3285, %v5355, 0
        %v5739 = vsel %vm3285, %v5356, 0
        %5741 = vmatpush.msra.mxu0 0.0
        %5742 = vmatpush.msra.mxu0 0.0
        %5743 = vmatpush.msra.mxu0 0.0
        %5744 = vmatpush.msra.mxu0 0.0
        %5745 = vmatpush.msra.mxu0 0.0
        %5746 = vmatpush.msra.mxu0 0.0
        %5747 = vmatpush.msra.mxu0 0.0
        %5748 = vmatpush.msra.mxu0 0.0
        %5749 = vmatpush.msra.mxu0 0.0
        %5750 = vmatpush.msra.mxu0 0.0
        %5751 = vmatpush.msra.mxu0 0.0
        %5752 = vmatpush.msra.mxu0 0.0
        %5753 = vmatpush.msra.mxu0 0.0
        %5754 = vmatpush.msra.mxu0 %v3336
        %5755 = vmatpush.msra.mxu0 %v2252
        %5756 = vmatpush.msra.mxu0 %v2251
        %5757 = vmatmul.f32.gmra.mxu0 %v5694
        %v5758 = vpop.f32.mrf.mxu0
        %v5759 = vadd.f32 0.0, %v5758
        %5760 = vmatmul.f32.gmra.mxu0 %v5697
        %v5761 = vpop.f32.mrf.mxu0
        %v5762 = vadd.f32 0.0, %v5761
        %5763 = vmatmul.f32.gmra.mxu0 %v5700
        %v5764 = vpop.f32.mrf.mxu0
        %v5765 = vadd.f32 0.0, %v5764
        %5766 = vmatmul.f32.gmra.mxu0 %v5703
        %v5767 = vpop.f32.mrf.mxu0
        %v5768 = vadd.f32 0.0, %v5767
        %5769 = vmatmul.f32.gmra.mxu0 %v5706
        %v5770 = vpop.f32.mrf.mxu0
        %v5771 = vadd.f32 0.0, %v5770
        %5772 = vmatmul.f32.gmra.mxu0 %v5709
        %v5773 = vpop.f32.mrf.mxu0
        %v5774 = vadd.f32 0.0, %v5773
        %5775 = vmatmul.f32.gmra.mxu0 %v5712
        %v5776 = vpop.f32.mrf.mxu0
        %v5777 = vadd.f32 0.0, %v5776
        %5778 = vmatmul.f32.gmra.mxu0 %v5715
        %v5779 = vpop.f32.mrf.mxu0
        %v5780 = vadd.f32 0.0, %v5779
        %5781 = vmatmul.f32.gmra.mxu0 %v5718
        %v5782 = vpop.f32.mrf.mxu0
        %v5783 = vadd.f32 0.0, %v5782
        %5784 = vmatmul.f32.gmra.mxu0 %v5721
        %v5785 = vpop.f32.mrf.mxu0
        %v5786 = vadd.f32 0.0, %v5785
        %5787 = vmatmul.f32.gmra.mxu0 %v5724
        %v5788 = vpop.f32.mrf.mxu0
        %v5789 = vadd.f32 0.0, %v5788
        %5790 = vmatmul.f32.gmra.mxu0 %v5727
        %v5791 = vpop.f32.mrf.mxu0
        %v5792 = vadd.f32 0.0, %v5791
        %5793 = vmatmul.f32.gmra.mxu0 %v5730
        %v5794 = vpop.f32.mrf.mxu0
        %v5795 = vadd.f32 0.0, %v5794
        %5796 = vmatmul.f32.gmra.mxu0 %v5733
        %v5797 = vpop.f32.mrf.mxu0
        %v5798 = vadd.f32 0.0, %v5797
        %5799 = vmatmul.f32.gmra.mxu0 %v5736
        %v5800 = vpop.f32.mrf.mxu0
        %v5801 = vadd.f32 0.0, %v5800
        %5802 = vmatmul.f32.gmra.mxu0 %v5739
        %v5803 = vpop.f32.mrf.mxu0
        %v5804 = vadd.f32 0.0, %v5803
        %5805 = vdwg.mxu0
        %v5806 = vmul.f32 %v5759, %v5677
        %v5807 = vmul.f32 %v5762, %v5678
        %v5808 = vmul.f32 %v5765, %v5679
        %v5809 = vmul.f32 %v5768, %v5680
        %v5810 = vmul.f32 %v5771, %v5681
        %v5811 = vmul.f32 %v5774, %v5682
        %v5812 = vmul.f32 %v5777, %v5683
        %v5813 = vmul.f32 %v5780, %v5684
        %v5814 = vmul.f32 %v5783, %v5685
        %v5815 = vmul.f32 %v5786, %v5686
        %v5816 = vmul.f32 %v5789, %v5687
        %v5817 = vmul.f32 %v5792, %v5688
        %v5818 = vmul.f32 %v5795, %v5689
        %v5819 = vmul.f32 %v5798, %v5690
        %v5820 = vmul.f32 %v5801, %v5691
        %v5821 = vmul.f32 %v5804, %v5692
        %5822 = vset.pattern.permute.xlu0 4
        %5823 = vperm.xlu0 %5822, %v2258
        %v5824 = vpop.permute.xlu0 %5823
        %5826 = vset.pattern.permute.xlu0 4
        %5827 = vperm.xlu0 %5826, %v2259
        %v5828 = vpop.permute.xlu0 %5827
        %5830 = vset.pattern.permute.xlu0 4
        %5831 = vperm.xlu0 %5830, %v2260
        %v5832 = vpop.permute.xlu0 %5831
        %5834 = vset.pattern.permute.xlu0 4
        %5835 = vperm.xlu0 %5834, %v2261
        %v5836 = vpop.permute.xlu0 %5835
        %5838 = vset.pattern.permute.xlu0 4
        %5839 = vperm.xlu0 %5838, %v2262
        %v5840 = vpop.permute.xlu0 %5839
        %5842 = vset.pattern.permute.xlu0 4
        %5843 = vperm.xlu0 %5842, %v2263
        %v5844 = vpop.permute.xlu0 %5843
        %5846 = vset.pattern.permute.xlu0 4
        %5847 = vperm.xlu0 %5846, %v2264
        %v5848 = vpop.permute.xlu0 %5847
        %5850 = vset.pattern.permute.xlu0 4
        %5851 = vperm.xlu0 %5850, %v2265
        %v5852 = vpop.permute.xlu0 %5851
        %5854 = vset.pattern.permute.xlu0 4
        %5855 = vperm.xlu0 %5854, %v2266
        %v5856 = vpop.permute.xlu0 %5855
        %5858 = vset.pattern.permute.xlu0 4
        %5859 = vperm.xlu0 %5858, %v2267
        %v5860 = vpop.permute.xlu0 %5859
        %5862 = vset.pattern.permute.xlu0 4
        %5863 = vperm.xlu0 %5862, %v2268
        %v5864 = vpop.permute.xlu0 %5863
        %5866 = vset.pattern.permute.xlu0 4
        %5867 = vperm.xlu0 %5866, %v2269
        %v5868 = vpop.permute.xlu0 %5867
        %5870 = vset.pattern.permute.xlu0 4
        %5871 = vperm.xlu0 %5870, %v2270
        %v5872 = vpop.permute.xlu0 %5871
        %5874 = vset.pattern.permute.xlu0 4
        %5875 = vperm.xlu0 %5874, %v2271
        %v5876 = vpop.permute.xlu0 %5875
        %5878 = vset.pattern.permute.xlu0 4
        %5879 = vperm.xlu0 %5878, %v2272
        %v5880 = vpop.permute.xlu0 %5879
        %5882 = vset.pattern.permute.xlu0 4
        %5883 = vperm.xlu0 %5882, %v2273
        %v5884 = vpop.permute.xlu0 %5883
        %vm5886 = vcmp.eq.f32.partialorder %v2256, %v5824
        %vm5887 = vcmp.eq.f32.partialorder %v2256, %v5828
        %vm5888 = vcmp.eq.f32.partialorder %v2256, %v5832
        %vm5889 = vcmp.eq.f32.partialorder %v2256, %v5836
        %vm5890 = vcmp.eq.f32.partialorder %v2256, %v5840
        %vm5891 = vcmp.eq.f32.partialorder %v2256, %v5844
        %vm5892 = vcmp.eq.f32.partialorder %v2256, %v5848
        %vm5893 = vcmp.eq.f32.partialorder %v2256, %v5852
        %vm5894 = vcmp.eq.f32.partialorder %v2256, %v5856
        %vm5895 = vcmp.eq.f32.partialorder %v2256, %v5860
        %vm5896 = vcmp.eq.f32.partialorder %v2256, %v5864
        %vm5897 = vcmp.eq.f32.partialorder %v2256, %v5868
        %vm5898 = vcmp.eq.f32.partialorder %v2256, %v5872
        %vm5899 = vcmp.eq.f32.partialorder %v2256, %v5876
        %vm5900 = vcmp.eq.f32.partialorder %v2256, %v5880
        %vm5901 = vcmp.eq.f32.partialorder %v2256, %v5884
        %5902 = vset.pattern.permute.xlu0 4
        %5903 = vperm.xlu0 %5902, %v2402
        %v5904 = vpop.permute.xlu0 %5903
        %5906 = vset.pattern.permute.xlu0 4
        %5907 = vperm.xlu0 %5906, %v2403
        %v5908 = vpop.permute.xlu0 %5907
        %5910 = vset.pattern.permute.xlu0 4
        %5911 = vperm.xlu0 %5910, %v2404
        %v5912 = vpop.permute.xlu0 %5911
        %5914 = vset.pattern.permute.xlu0 4
        %5915 = vperm.xlu0 %5914, %v2405
        %v5916 = vpop.permute.xlu0 %5915
        %5918 = vset.pattern.permute.xlu0 4
        %5919 = vperm.xlu0 %5918, %v2406
        %v5920 = vpop.permute.xlu0 %5919
        %5922 = vset.pattern.permute.xlu0 4
        %5923 = vperm.xlu0 %5922, %v2407
        %v5924 = vpop.permute.xlu0 %5923
        %5926 = vset.pattern.permute.xlu0 4
        %5927 = vperm.xlu0 %5926, %v2408
        %v5928 = vpop.permute.xlu0 %5927
        %5930 = vset.pattern.permute.xlu0 4
        %5931 = vperm.xlu0 %5930, %v2409
        %v5932 = vpop.permute.xlu0 %5931
        %5934 = vset.pattern.permute.xlu0 4
        %5935 = vperm.xlu0 %5934, %v2410
        %v5936 = vpop.permute.xlu0 %5935
        %5938 = vset.pattern.permute.xlu0 4
        %5939 = vperm.xlu0 %5938, %v2411
        %v5940 = vpop.permute.xlu0 %5939
        %5942 = vset.pattern.permute.xlu0 4
        %5943 = vperm.xlu0 %5942, %v2412
        %v5944 = vpop.permute.xlu0 %5943
        %5946 = vset.pattern.permute.xlu0 4
        %5947 = vperm.xlu0 %5946, %v2413
        %v5948 = vpop.permute.xlu0 %5947
        %5950 = vset.pattern.permute.xlu0 4
        %5951 = vperm.xlu0 %5950, %v2414
        %v5952 = vpop.permute.xlu0 %5951
        %5954 = vset.pattern.permute.xlu0 4
        %5955 = vperm.xlu0 %5954, %v2415
        %v5956 = vpop.permute.xlu0 %5955
        %5958 = vset.pattern.permute.xlu0 4
        %5959 = vperm.xlu0 %5958, %v2416
        %v5960 = vpop.permute.xlu0 %5959
        %5962 = vset.pattern.permute.xlu0 4
        %5963 = vperm.xlu0 %5962, %v2417
        %v5964 = vpop.permute.xlu0 %5963
        %v5966 = vsel %vm5886, %v5904, 0.0
        %v5967 = vsel %vm5887, %v5908, 0.0
        %v5968 = vsel %vm5888, %v5912, 0.0
        %v5969 = vsel %vm5889, %v5916, 0.0
        %v5970 = vsel %vm5890, %v5920, 0.0
        %v5971 = vsel %vm5891, %v5924, 0.0
        %v5972 = vsel %vm5892, %v5928, 0.0
        %v5973 = vsel %vm5893, %v5932, 0.0
        %v5974 = vsel %vm5894, %v5936, 0.0
        %v5975 = vsel %vm5895, %v5940, 0.0
        %v5976 = vsel %vm5896, %v5944, 0.0
        %v5977 = vsel %vm5897, %v5948, 0.0
        %v5978 = vsel %vm5898, %v5952, 0.0
        %v5979 = vsel %vm5899, %v5956, 0.0
        %v5980 = vsel %vm5900, %v5960, 0.0
        %v5981 = vsel %vm5901, %v5964, 0.0
        %5982 = vset.pattern.permute.xlu0 4
        %5983 = vperm.xlu0 %5982, %v2626
        %v5984 = vpop.permute.xlu0 %5983
        %5986 = vset.pattern.permute.xlu0 4
        %5987 = vperm.xlu0 %5986, %v2627
        %v5988 = vpop.permute.xlu0 %5987
        %5990 = vset.pattern.permute.xlu0 4
        %5991 = vperm.xlu0 %5990, %v2628
        %v5992 = vpop.permute.xlu0 %5991
        %5994 = vset.pattern.permute.xlu0 4
        %5995 = vperm.xlu0 %5994, %v2629
        %v5996 = vpop.permute.xlu0 %5995
        %5998 = vset.pattern.permute.xlu0 4
        %5999 = vperm.xlu0 %5998, %v2630
        %v6000 = vpop.permute.xlu0 %5999
        %6002 = vset.pattern.permute.xlu0 4
        %6003 = vperm.xlu0 %6002, %v2631
        %v6004 = vpop.permute.xlu0 %6003
        %6006 = vset.pattern.permute.xlu0 4
        %6007 = vperm.xlu0 %6006, %v2632
        %v6008 = vpop.permute.xlu0 %6007
        %6010 = vset.pattern.permute.xlu0 4
        %6011 = vperm.xlu0 %6010, %v2633
        %v6012 = vpop.permute.xlu0 %6011
        %6014 = vset.pattern.permute.xlu0 4
        %6015 = vperm.xlu0 %6014, %v2634
        %v6016 = vpop.permute.xlu0 %6015
        %6018 = vset.pattern.permute.xlu0 4
        %6019 = vperm.xlu0 %6018, %v2635
        %v6020 = vpop.permute.xlu0 %6019
        %6022 = vset.pattern.permute.xlu0 4
        %6023 = vperm.xlu0 %6022, %v2636
        %v6024 = vpop.permute.xlu0 %6023
        %6026 = vset.pattern.permute.xlu0 4
        %6027 = vperm.xlu0 %6026, %v2637
        %v6028 = vpop.permute.xlu0 %6027
        %6030 = vset.pattern.permute.xlu0 4
        %6031 = vperm.xlu0 %6030, %v2638
        %v6032 = vpop.permute.xlu0 %6031
        %6034 = vset.pattern.permute.xlu0 4
        %6035 = vperm.xlu0 %6034, %v2639
        %v6036 = vpop.permute.xlu0 %6035
        %6038 = vset.pattern.permute.xlu0 4
        %6039 = vperm.xlu0 %6038, %v2640
        %v6040 = vpop.permute.xlu0 %6039
        %6042 = vset.pattern.permute.xlu0 4
        %6043 = vperm.xlu0 %6042, %v2641
        %v6044 = vpop.permute.xlu0 %6043
        %vm6046 = vcmp.eq.f32.partialorder %v2256, %v5984
        %vm6047 = vcmp.eq.f32.partialorder %v2256, %v5988
        %vm6048 = vcmp.eq.f32.partialorder %v2256, %v5992
        %vm6049 = vcmp.eq.f32.partialorder %v2256, %v5996
        %vm6050 = vcmp.eq.f32.partialorder %v2256, %v6000
        %vm6051 = vcmp.eq.f32.partialorder %v2256, %v6004
        %vm6052 = vcmp.eq.f32.partialorder %v2256, %v6008
        %vm6053 = vcmp.eq.f32.partialorder %v2256, %v6012
        %vm6054 = vcmp.eq.f32.partialorder %v2256, %v6016
        %vm6055 = vcmp.eq.f32.partialorder %v2256, %v6020
        %vm6056 = vcmp.eq.f32.partialorder %v2256, %v6024
        %vm6057 = vcmp.eq.f32.partialorder %v2256, %v6028
        %vm6058 = vcmp.eq.f32.partialorder %v2256, %v6032
        %vm6059 = vcmp.eq.f32.partialorder %v2256, %v6036
        %vm6060 = vcmp.eq.f32.partialorder %v2256, %v6040
        %vm6061 = vcmp.eq.f32.partialorder %v2256, %v6044
        %6062 = vset.pattern.permute.xlu0 4
        %6063 = vperm.xlu0 %6062, %v2418
        %v6064 = vpop.permute.xlu0 %6063
        %6066 = vset.pattern.permute.xlu0 4
        %6067 = vperm.xlu0 %6066, %v2419
        %v6068 = vpop.permute.xlu0 %6067
        %6070 = vset.pattern.permute.xlu0 4
        %6071 = vperm.xlu0 %6070, %v2420
        %v6072 = vpop.permute.xlu0 %6071
        %6074 = vset.pattern.permute.xlu0 4
        %6075 = vperm.xlu0 %6074, %v2421
        %v6076 = vpop.permute.xlu0 %6075
        %6078 = vset.pattern.permute.xlu0 4
        %6079 = vperm.xlu0 %6078, %v2422
        %v6080 = vpop.permute.xlu0 %6079
        %6082 = vset.pattern.permute.xlu0 4
        %6083 = vperm.xlu0 %6082, %v2423
        %v6084 = vpop.permute.xlu0 %6083
        %6086 = vset.pattern.permute.xlu0 4
        %6087 = vperm.xlu0 %6086, %v2424
        %v6088 = vpop.permute.xlu0 %6087
        %6090 = vset.pattern.permute.xlu0 4
        %6091 = vperm.xlu0 %6090, %v2425
        %v6092 = vpop.permute.xlu0 %6091
        %6094 = vset.pattern.permute.xlu0 4
        %6095 = vperm.xlu0 %6094, %v2426
        %v6096 = vpop.permute.xlu0 %6095
        %6098 = vset.pattern.permute.xlu0 4
        %6099 = vperm.xlu0 %6098, %v2427
        %v6100 = vpop.permute.xlu0 %6099
        %6102 = vset.pattern.permute.xlu0 4
        %6103 = vperm.xlu0 %6102, %v2428
        %v6104 = vpop.permute.xlu0 %6103
        %6106 = vset.pattern.permute.xlu0 4
        %6107 = vperm.xlu0 %6106, %v2429
        %v6108 = vpop.permute.xlu0 %6107
        %6110 = vset.pattern.permute.xlu0 4
        %6111 = vperm.xlu0 %6110, %v2430
        %v6112 = vpop.permute.xlu0 %6111
        %6114 = vset.pattern.permute.xlu0 4
        %6115 = vperm.xlu0 %6114, %v2431
        %v6116 = vpop.permute.xlu0 %6115
        %6118 = vset.pattern.permute.xlu0 4
        %6119 = vperm.xlu0 %6118, %v2432
        %v6120 = vpop.permute.xlu0 %6119
        %6122 = vset.pattern.permute.xlu0 4
        %6123 = vperm.xlu0 %6122, %v2433
        %v6124 = vpop.permute.xlu0 %6123
        %v6126 = vsel %vm6046, %v6064, 0.0
        %v6127 = vsel %vm6047, %v6068, 0.0
        %v6128 = vsel %vm6048, %v6072, 0.0
        %v6129 = vsel %vm6049, %v6076, 0.0
        %v6130 = vsel %vm6050, %v6080, 0.0
        %v6131 = vsel %vm6051, %v6084, 0.0
        %v6132 = vsel %vm6052, %v6088, 0.0
        %v6133 = vsel %vm6053, %v6092, 0.0
        %v6134 = vsel %vm6054, %v6096, 0.0
        %v6135 = vsel %vm6055, %v6100, 0.0
        %v6136 = vsel %vm6056, %v6104, 0.0
        %v6137 = vsel %vm6057, %v6108, 0.0
        %v6138 = vsel %vm6058, %v6112, 0.0
        %v6139 = vsel %vm6059, %v6116, 0.0
        %v6140 = vsel %vm6060, %v6120, 0.0
        %v6141 = vsel %vm6061, %v6124, 0.0
        %v6142 = vadd.f32 %v5966, %v6126
        %v6143 = vadd.f32 %v5967, %v6127
        %v6144 = vadd.f32 %v5968, %v6128
        %v6145 = vadd.f32 %v5969, %v6129
        %v6146 = vadd.f32 %v5970, %v6130
        %v6147 = vadd.f32 %v5971, %v6131
        %v6148 = vadd.f32 %v5972, %v6132
        %v6149 = vadd.f32 %v5973, %v6133
        %v6150 = vadd.f32 %v5974, %v6134
        %v6151 = vadd.f32 %v5975, %v6135
        %v6152 = vadd.f32 %v5976, %v6136
        %v6153 = vadd.f32 %v5977, %v6137
        %v6154 = vadd.f32 %v5978, %v6138
        %v6155 = vadd.f32 %v5979, %v6139
        %v6156 = vadd.f32 %v5980, %v6140
        %v6157 = vadd.f32 %v5981, %v6141
        %6158 = vset.pattern.permute.xlu0 4
        %6159 = vperm.xlu0 %6158, %v2274
        %v6160 = vpop.permute.xlu0 %6159
        %6162 = vset.pattern.permute.xlu0 4
        %6163 = vperm.xlu0 %6162, %v2275
        %v6164 = vpop.permute.xlu0 %6163
        %6166 = vset.pattern.permute.xlu0 4
        %6167 = vperm.xlu0 %6166, %v2276
        %v6168 = vpop.permute.xlu0 %6167
        %6170 = vset.pattern.permute.xlu0 4
        %6171 = vperm.xlu0 %6170, %v2277
        %v6172 = vpop.permute.xlu0 %6171
        %6174 = vset.pattern.permute.xlu0 4
        %6175 = vperm.xlu0 %6174, %v2278
        %v6176 = vpop.permute.xlu0 %6175
        %6178 = vset.pattern.permute.xlu0 4
        %6179 = vperm.xlu0 %6178, %v2279
        %v6180 = vpop.permute.xlu0 %6179
        %6182 = vset.pattern.permute.xlu0 4
        %6183 = vperm.xlu0 %6182, %v2280
        %v6184 = vpop.permute.xlu0 %6183
        %6186 = vset.pattern.permute.xlu0 4
        %6187 = vperm.xlu0 %6186, %v2281
        %v6188 = vpop.permute.xlu0 %6187
        %6190 = vset.pattern.permute.xlu0 4
        %6191 = vperm.xlu0 %6190, %v2282
        %v6192 = vpop.permute.xlu0 %6191
        %6194 = vset.pattern.permute.xlu0 4
        %6195 = vperm.xlu0 %6194, %v2283
        %v6196 = vpop.permute.xlu0 %6195
        %6198 = vset.pattern.permute.xlu0 4
        %6199 = vperm.xlu0 %6198, %v2284
        %v6200 = vpop.permute.xlu0 %6199
        %6202 = vset.pattern.permute.xlu0 4
        %6203 = vperm.xlu0 %6202, %v2285
        %v6204 = vpop.permute.xlu0 %6203
        %6206 = vset.pattern.permute.xlu0 4
        %6207 = vperm.xlu0 %6206, %v2286
        %v6208 = vpop.permute.xlu0 %6207
        %6210 = vset.pattern.permute.xlu0 4
        %6211 = vperm.xlu0 %6210, %v2287
        %v6212 = vpop.permute.xlu0 %6211
        %6214 = vset.pattern.permute.xlu0 4
        %6215 = vperm.xlu0 %6214, %v2288
        %v6216 = vpop.permute.xlu0 %6215
        %6218 = vset.pattern.permute.xlu0 4
        %6219 = vperm.xlu0 %6218, %v2289
        %v6220 = vpop.permute.xlu0 %6219
        %vm6222 = vcmp.eq.f32.partialorder %v2851, %v6160
        %vm6223 = vcmp.eq.f32.partialorder %v2851, %v6164
        %vm6224 = vcmp.eq.f32.partialorder %v2851, %v6168
        %vm6225 = vcmp.eq.f32.partialorder %v2851, %v6172
        %vm6226 = vcmp.eq.f32.partialorder %v2851, %v6176
        %vm6227 = vcmp.eq.f32.partialorder %v2851, %v6180
        %vm6228 = vcmp.eq.f32.partialorder %v2851, %v6184
        %vm6229 = vcmp.eq.f32.partialorder %v2851, %v6188
        %vm6230 = vcmp.eq.f32.partialorder %v2851, %v6192
        %vm6231 = vcmp.eq.f32.partialorder %v2851, %v6196
        %vm6232 = vcmp.eq.f32.partialorder %v2851, %v6200
        %vm6233 = vcmp.eq.f32.partialorder %v2851, %v6204
        %vm6234 = vcmp.eq.f32.partialorder %v2851, %v6208
        %vm6235 = vcmp.eq.f32.partialorder %v2851, %v6212
        %vm6236 = vcmp.eq.f32.partialorder %v2851, %v6216
        %vm6237 = vcmp.eq.f32.partialorder %v2851, %v6220
        %6238 = vset.pattern.permute.xlu0 4
        %6239 = vperm.xlu0 %6238, %v2949
        %v6240 = vpop.permute.xlu0 %6239
        %6242 = vset.pattern.permute.xlu0 4
        %6243 = vperm.xlu0 %6242, %v2950
        %v6244 = vpop.permute.xlu0 %6243
        %6246 = vset.pattern.permute.xlu0 4
        %6247 = vperm.xlu0 %6246, %v2951
        %v6248 = vpop.permute.xlu0 %6247
        %6250 = vset.pattern.permute.xlu0 4
        %6251 = vperm.xlu0 %6250, %v2952
        %v6252 = vpop.permute.xlu0 %6251
        %6254 = vset.pattern.permute.xlu0 4
        %6255 = vperm.xlu0 %6254, %v2953
        %v6256 = vpop.permute.xlu0 %6255
        %6258 = vset.pattern.permute.xlu0 4
        %6259 = vperm.xlu0 %6258, %v2954
        %v6260 = vpop.permute.xlu0 %6259
        %6262 = vset.pattern.permute.xlu0 4
        %6263 = vperm.xlu0 %6262, %v2955
        %v6264 = vpop.permute.xlu0 %6263
        %6266 = vset.pattern.permute.xlu0 4
        %6267 = vperm.xlu0 %6266, %v2956
        %v6268 = vpop.permute.xlu0 %6267
        %6270 = vset.pattern.permute.xlu0 4
        %6271 = vperm.xlu0 %6270, %v2957
        %v6272 = vpop.permute.xlu0 %6271
        %6274 = vset.pattern.permute.xlu0 4
        %6275 = vperm.xlu0 %6274, %v2958
        %v6276 = vpop.permute.xlu0 %6275
        %6278 = vset.pattern.permute.xlu0 4
        %6279 = vperm.xlu0 %6278, %v2959
        %v6280 = vpop.permute.xlu0 %6279
        %6282 = vset.pattern.permute.xlu0 4
        %6283 = vperm.xlu0 %6282, %v2960
        %v6284 = vpop.permute.xlu0 %6283
        %6286 = vset.pattern.permute.xlu0 4
        %6287 = vperm.xlu0 %6286, %v2961
        %v6288 = vpop.permute.xlu0 %6287
        %6290 = vset.pattern.permute.xlu0 4
        %6291 = vperm.xlu0 %6290, %v2962
        %v6292 = vpop.permute.xlu0 %6291
        %6294 = vset.pattern.permute.xlu0 4
        %6295 = vperm.xlu0 %6294, %v2963
        %v6296 = vpop.permute.xlu0 %6295
        %6298 = vset.pattern.permute.xlu0 4
        %6299 = vperm.xlu0 %6298, %v2964
        %v6300 = vpop.permute.xlu0 %6299
        %v6302 = vsel %vm6222, %v6240, 0.0
        %v6303 = vsel %vm6223, %v6244, 0.0
        %v6304 = vsel %vm6224, %v6248, 0.0
        %v6305 = vsel %vm6225, %v6252, 0.0
        %v6306 = vsel %vm6226, %v6256, 0.0
        %v6307 = vsel %vm6227, %v6260, 0.0
        %v6308 = vsel %vm6228, %v6264, 0.0
        %v6309 = vsel %vm6229, %v6268, 0.0
        %v6310 = vsel %vm6230, %v6272, 0.0
        %v6311 = vsel %vm6231, %v6276, 0.0
        %v6312 = vsel %vm6232, %v6280, 0.0
        %v6313 = vsel %vm6233, %v6284, 0.0
        %v6314 = vsel %vm6234, %v6288, 0.0
        %v6315 = vsel %vm6235, %v6292, 0.0
        %v6316 = vsel %vm6236, %v6296, 0.0
        %v6317 = vsel %vm6237, %v6300, 0.0
        %6318 = vset.pattern.permute.xlu0 4
        %6319 = vperm.xlu0 %6318, %v3061
        %v6320 = vpop.permute.xlu0 %6319
        %6322 = vset.pattern.permute.xlu0 4
        %6323 = vperm.xlu0 %6322, %v3062
        %v6324 = vpop.permute.xlu0 %6323
        %6326 = vset.pattern.permute.xlu0 4
        %6327 = vperm.xlu0 %6326, %v3063
        %v6328 = vpop.permute.xlu0 %6327
        %6330 = vset.pattern.permute.xlu0 4
        %6331 = vperm.xlu0 %6330, %v3064
        %v6332 = vpop.permute.xlu0 %6331
        %6334 = vset.pattern.permute.xlu0 4
        %6335 = vperm.xlu0 %6334, %v3065
        %v6336 = vpop.permute.xlu0 %6335
        %6338 = vset.pattern.permute.xlu0 4
        %6339 = vperm.xlu0 %6338, %v3066
        %v6340 = vpop.permute.xlu0 %6339
        %6342 = vset.pattern.permute.xlu0 4
        %6343 = vperm.xlu0 %6342, %v3067
        %v6344 = vpop.permute.xlu0 %6343
        %6346 = vset.pattern.permute.xlu0 4
        %6347 = vperm.xlu0 %6346, %v3068
        %v6348 = vpop.permute.xlu0 %6347
        %6350 = vset.pattern.permute.xlu0 4
        %6351 = vperm.xlu0 %6350, %v3069
        %v6352 = vpop.permute.xlu0 %6351
        %6354 = vset.pattern.permute.xlu0 4
        %6355 = vperm.xlu0 %6354, %v3070
        %v6356 = vpop.permute.xlu0 %6355
        %6358 = vset.pattern.permute.xlu0 4
        %6359 = vperm.xlu0 %6358, %v3071
        %v6360 = vpop.permute.xlu0 %6359
        %6362 = vset.pattern.permute.xlu0 4
        %6363 = vperm.xlu0 %6362, %v3072
        %v6364 = vpop.permute.xlu0 %6363
        %6366 = vset.pattern.permute.xlu0 4
        %6367 = vperm.xlu0 %6366, %v3073
        %v6368 = vpop.permute.xlu0 %6367
        %6370 = vset.pattern.permute.xlu0 4
        %6371 = vperm.xlu0 %6370, %v3074
        %v6372 = vpop.permute.xlu0 %6371
        %6374 = vset.pattern.permute.xlu0 4
        %6375 = vperm.xlu0 %6374, %v3075
        %v6376 = vpop.permute.xlu0 %6375
        %6378 = vset.pattern.permute.xlu0 4
        %6379 = vperm.xlu0 %6378, %v3076
        %v6380 = vpop.permute.xlu0 %6379
        %vm6382 = vcmp.eq.f32.partialorder %v2851, %v6320
        %vm6383 = vcmp.eq.f32.partialorder %v2851, %v6324
        %vm6384 = vcmp.eq.f32.partialorder %v2851, %v6328
        %vm6385 = vcmp.eq.f32.partialorder %v2851, %v6332
        %vm6386 = vcmp.eq.f32.partialorder %v2851, %v6336
        %vm6387 = vcmp.eq.f32.partialorder %v2851, %v6340
        %vm6388 = vcmp.eq.f32.partialorder %v2851, %v6344
        %vm6389 = vcmp.eq.f32.partialorder %v2851, %v6348
        %vm6390 = vcmp.eq.f32.partialorder %v2851, %v6352
        %vm6391 = vcmp.eq.f32.partialorder %v2851, %v6356
        %vm6392 = vcmp.eq.f32.partialorder %v2851, %v6360
        %vm6393 = vcmp.eq.f32.partialorder %v2851, %v6364
        %vm6394 = vcmp.eq.f32.partialorder %v2851, %v6368
        %vm6395 = vcmp.eq.f32.partialorder %v2851, %v6372
        %vm6396 = vcmp.eq.f32.partialorder %v2851, %v6376
        %vm6397 = vcmp.eq.f32.partialorder %v2851, %v6380
        %6398 = vset.pattern.permute.xlu0 4
        %6399 = vperm.xlu0 %6398, %v2306
        %v6400 = vpop.permute.xlu0 %6399
        %6402 = vset.pattern.permute.xlu0 4
        %6403 = vperm.xlu0 %6402, %v2307
        %v6404 = vpop.permute.xlu0 %6403
        %6406 = vset.pattern.permute.xlu0 4
        %6407 = vperm.xlu0 %6406, %v2308
        %v6408 = vpop.permute.xlu0 %6407
        %6410 = vset.pattern.permute.xlu0 4
        %6411 = vperm.xlu0 %6410, %v2309
        %v6412 = vpop.permute.xlu0 %6411
        %6414 = vset.pattern.permute.xlu0 4
        %6415 = vperm.xlu0 %6414, %v2310
        %v6416 = vpop.permute.xlu0 %6415
        %6418 = vset.pattern.permute.xlu0 4
        %6419 = vperm.xlu0 %6418, %v2311
        %v6420 = vpop.permute.xlu0 %6419
        %6422 = vset.pattern.permute.xlu0 4
        %6423 = vperm.xlu0 %6422, %v2312
        %v6424 = vpop.permute.xlu0 %6423
        %6426 = vset.pattern.permute.xlu0 4
        %6427 = vperm.xlu0 %6426, %v2313
        %v6428 = vpop.permute.xlu0 %6427
        %6430 = vset.pattern.permute.xlu0 4
        %6431 = vperm.xlu0 %6430, %v2314
        %v6432 = vpop.permute.xlu0 %6431
        %6434 = vset.pattern.permute.xlu0 4
        %6435 = vperm.xlu0 %6434, %v2315
        %v6436 = vpop.permute.xlu0 %6435
        %6438 = vset.pattern.permute.xlu0 4
        %6439 = vperm.xlu0 %6438, %v2316
        %v6440 = vpop.permute.xlu0 %6439
        %6442 = vset.pattern.permute.xlu0 4
        %6443 = vperm.xlu0 %6442, %v2317
        %v6444 = vpop.permute.xlu0 %6443
        %6446 = vset.pattern.permute.xlu0 4
        %6447 = vperm.xlu0 %6446, %v2318
        %v6448 = vpop.permute.xlu0 %6447
        %6450 = vset.pattern.permute.xlu0 4
        %6451 = vperm.xlu0 %6450, %v2319
        %v6452 = vpop.permute.xlu0 %6451
        %6454 = vset.pattern.permute.xlu0 4
        %6455 = vperm.xlu0 %6454, %v2320
        %v6456 = vpop.permute.xlu0 %6455
        %6458 = vset.pattern.permute.xlu0 4
        %6459 = vperm.xlu0 %6458, %v2321
        %v6460 = vpop.permute.xlu0 %6459
        %v6462 = vsel %vm6382, %v6400, 0.0
        %v6463 = vsel %vm6383, %v6404, 0.0
        %v6464 = vsel %vm6384, %v6408, 0.0
        %v6465 = vsel %vm6385, %v6412, 0.0
        %v6466 = vsel %vm6386, %v6416, 0.0
        %v6467 = vsel %vm6387, %v6420, 0.0
        %v6468 = vsel %vm6388, %v6424, 0.0
        %v6469 = vsel %vm6389, %v6428, 0.0
        %v6470 = vsel %vm6390, %v6432, 0.0
        %v6471 = vsel %vm6391, %v6436, 0.0
        %v6472 = vsel %vm6392, %v6440, 0.0
        %v6473 = vsel %vm6393, %v6444, 0.0
        %v6474 = vsel %vm6394, %v6448, 0.0
        %v6475 = vsel %vm6395, %v6452, 0.0
        %v6476 = vsel %vm6396, %v6456, 0.0
        %v6477 = vsel %vm6397, %v6460, 0.0
        %v6478 = vadd.f32 %v6302, %v6462
        %v6479 = vadd.f32 %v6303, %v6463
        %v6480 = vadd.f32 %v6304, %v6464
        %v6481 = vadd.f32 %v6305, %v6465
        %v6482 = vadd.f32 %v6306, %v6466
        %v6483 = vadd.f32 %v6307, %v6467
        %v6484 = vadd.f32 %v6308, %v6468
        %v6485 = vadd.f32 %v6309, %v6469
        %v6486 = vadd.f32 %v6310, %v6470
        %v6487 = vadd.f32 %v6311, %v6471
        %v6488 = vadd.f32 %v6312, %v6472
        %v6489 = vadd.f32 %v6313, %v6473
        %v6490 = vadd.f32 %v6314, %v6474
        %v6491 = vadd.f32 %v6315, %v6475
        %v6492 = vadd.f32 %v6316, %v6476
        %v6493 = vadd.f32 %v6317, %v6477
        %v6495 = vsel %vm3285, %v6142, 0
        %v6498 = vsel %vm3285, %v6143, 0
        %v6501 = vsel %vm3285, %v6144, 0
        %v6504 = vsel %vm3285, %v6145, 0
        %v6507 = vsel %vm3285, %v6146, 0
        %v6510 = vsel %vm3285, %v6147, 0
        %v6513 = vsel %vm3285, %v6148, 0
        %v6516 = vsel %vm3285, %v6149, 0
        %v6519 = vsel %vm3285, %v6150, 0
        %v6522 = vsel %vm3285, %v6151, 0
        %v6525 = vsel %vm3285, %v6152, 0
        %v6528 = vsel %vm3285, %v6153, 0
        %v6531 = vsel %vm3285, %v6154, 0
        %v6534 = vsel %vm3285, %v6155, 0
        %v6537 = vsel %vm3285, %v6156, 0
        %v6540 = vsel %vm3285, %v6157, 0
        %6542 = vmatpush.msra.mxu0 0.0
        %6543 = vmatpush.msra.mxu0 0.0
        %6544 = vmatpush.msra.mxu0 0.0
        %6545 = vmatpush.msra.mxu0 0.0
        %6546 = vmatpush.msra.mxu0 0.0
        %6547 = vmatpush.msra.mxu0 0.0
        %6548 = vmatpush.msra.mxu0 0.0
        %6549 = vmatpush.msra.mxu0 0.0
        %6550 = vmatpush.msra.mxu0 0.0
        %6551 = vmatpush.msra.mxu0 0.0
        %6552 = vmatpush.msra.mxu0 0.0
        %6553 = vmatpush.msra.mxu0 0.0
        %6554 = vmatpush.msra.mxu0 0.0
        %6555 = vmatpush.msra.mxu0 %v3336
        %6556 = vmatpush.msra.mxu0 %v2252
        %6557 = vmatpush.msra.mxu0 %v2251
        %6558 = vmatmul.f32.gmra.mxu0 %v6495
        %v6559 = vpop.f32.mrf.mxu0
        %v6560 = vadd.f32 0.0, %v6559
        %6561 = vmatmul.f32.gmra.mxu0 %v6498
        %v6562 = vpop.f32.mrf.mxu0
        %v6563 = vadd.f32 0.0, %v6562
        %6564 = vmatmul.f32.gmra.mxu0 %v6501
        %v6565 = vpop.f32.mrf.mxu0
        %v6566 = vadd.f32 0.0, %v6565
        %6567 = vmatmul.f32.gmra.mxu0 %v6504
        %v6568 = vpop.f32.mrf.mxu0
        %v6569 = vadd.f32 0.0, %v6568
        %6570 = vmatmul.f32.gmra.mxu0 %v6507
        %v6571 = vpop.f32.mrf.mxu0
        %v6572 = vadd.f32 0.0, %v6571
        %6573 = vmatmul.f32.gmra.mxu0 %v6510
        %v6574 = vpop.f32.mrf.mxu0
        %v6575 = vadd.f32 0.0, %v6574
        %6576 = vmatmul.f32.gmra.mxu0 %v6513
        %v6577 = vpop.f32.mrf.mxu0
        %v6578 = vadd.f32 0.0, %v6577
        %6579 = vmatmul.f32.gmra.mxu0 %v6516
        %v6580 = vpop.f32.mrf.mxu0
        %v6581 = vadd.f32 0.0, %v6580
        %6582 = vmatmul.f32.gmra.mxu0 %v6519
        %v6583 = vpop.f32.mrf.mxu0
        %v6584 = vadd.f32 0.0, %v6583
        %6585 = vmatmul.f32.gmra.mxu0 %v6522
        %v6586 = vpop.f32.mrf.mxu0
        %v6587 = vadd.f32 0.0, %v6586
        %6588 = vmatmul.f32.gmra.mxu0 %v6525
        %v6589 = vpop.f32.mrf.mxu0
        %v6590 = vadd.f32 0.0, %v6589
        %6591 = vmatmul.f32.gmra.mxu0 %v6528
        %v6592 = vpop.f32.mrf.mxu0
        %v6593 = vadd.f32 0.0, %v6592
        %6594 = vmatmul.f32.gmra.mxu0 %v6531
        %v6595 = vpop.f32.mrf.mxu0
        %v6596 = vadd.f32 0.0, %v6595
        %6597 = vmatmul.f32.gmra.mxu0 %v6534
        %v6598 = vpop.f32.mrf.mxu0
        %v6599 = vadd.f32 0.0, %v6598
        %6600 = vmatmul.f32.gmra.mxu0 %v6537
        %v6601 = vpop.f32.mrf.mxu0
        %v6602 = vadd.f32 0.0, %v6601
        %6603 = vmatmul.f32.gmra.mxu0 %v6540
        %v6604 = vpop.f32.mrf.mxu0
        %v6605 = vadd.f32 0.0, %v6604
        %6606 = vdwg.mxu0
        %v6607 = vmul.f32 %v6560, %v6478
        %v6608 = vmul.f32 %v6563, %v6479
        %v6609 = vmul.f32 %v6566, %v6480
        %v6610 = vmul.f32 %v6569, %v6481
        %v6611 = vmul.f32 %v6572, %v6482
        %v6612 = vmul.f32 %v6575, %v6483
        %v6613 = vmul.f32 %v6578, %v6484
        %v6614 = vmul.f32 %v6581, %v6485
        %v6615 = vmul.f32 %v6584, %v6486
        %v6616 = vmul.f32 %v6587, %v6487
        %v6617 = vmul.f32 %v6590, %v6488
        %v6618 = vmul.f32 %v6593, %v6489
        %v6619 = vmul.f32 %v6596, %v6490
        %v6620 = vmul.f32 %v6599, %v6491
        %v6621 = vmul.f32 %v6602, %v6492
        %v6622 = vmul.f32 %v6605, %v6493
        %6623 = vset.pattern.permute.xlu0 5
        %6624 = vperm.xlu0 %6623, %v2258
        %v6625 = vpop.permute.xlu0 %6624
        %6627 = vset.pattern.permute.xlu0 5
        %6628 = vperm.xlu0 %6627, %v2259
        %v6629 = vpop.permute.xlu0 %6628
        %6631 = vset.pattern.permute.xlu0 5
        %6632 = vperm.xlu0 %6631, %v2260
        %v6633 = vpop.permute.xlu0 %6632
        %6635 = vset.pattern.permute.xlu0 5
        %6636 = vperm.xlu0 %6635, %v2261
        %v6637 = vpop.permute.xlu0 %6636
        %6639 = vset.pattern.permute.xlu0 5
        %6640 = vperm.xlu0 %6639, %v2262
        %v6641 = vpop.permute.xlu0 %6640
        %6643 = vset.pattern.permute.xlu0 5
        %6644 = vperm.xlu0 %6643, %v2263
        %v6645 = vpop.permute.xlu0 %6644
        %6647 = vset.pattern.permute.xlu0 5
        %6648 = vperm.xlu0 %6647, %v2264
        %v6649 = vpop.permute.xlu0 %6648
        %6651 = vset.pattern.permute.xlu0 5
        %6652 = vperm.xlu0 %6651, %v2265
        %v6653 = vpop.permute.xlu0 %6652
        %6655 = vset.pattern.permute.xlu0 5
        %6656 = vperm.xlu0 %6655, %v2266
        %v6657 = vpop.permute.xlu0 %6656
        %6659 = vset.pattern.permute.xlu0 5
        %6660 = vperm.xlu0 %6659, %v2267
        %v6661 = vpop.permute.xlu0 %6660
        %6663 = vset.pattern.permute.xlu0 5
        %6664 = vperm.xlu0 %6663, %v2268
        %v6665 = vpop.permute.xlu0 %6664
        %6667 = vset.pattern.permute.xlu0 5
        %6668 = vperm.xlu0 %6667, %v2269
        %v6669 = vpop.permute.xlu0 %6668
        %6671 = vset.pattern.permute.xlu0 5
        %6672 = vperm.xlu0 %6671, %v2270
        %v6673 = vpop.permute.xlu0 %6672
        %6675 = vset.pattern.permute.xlu0 5
        %6676 = vperm.xlu0 %6675, %v2271
        %v6677 = vpop.permute.xlu0 %6676
        %6679 = vset.pattern.permute.xlu0 5
        %6680 = vperm.xlu0 %6679, %v2272
        %v6681 = vpop.permute.xlu0 %6680
        %6683 = vset.pattern.permute.xlu0 5
        %6684 = vperm.xlu0 %6683, %v2273
        %v6685 = vpop.permute.xlu0 %6684
        %vm6687 = vcmp.eq.f32.partialorder %v2256, %v6625
        %vm6688 = vcmp.eq.f32.partialorder %v2256, %v6629
        %vm6689 = vcmp.eq.f32.partialorder %v2256, %v6633
        %vm6690 = vcmp.eq.f32.partialorder %v2256, %v6637
        %vm6691 = vcmp.eq.f32.partialorder %v2256, %v6641
        %vm6692 = vcmp.eq.f32.partialorder %v2256, %v6645
        %vm6693 = vcmp.eq.f32.partialorder %v2256, %v6649
        %vm6694 = vcmp.eq.f32.partialorder %v2256, %v6653
        %vm6695 = vcmp.eq.f32.partialorder %v2256, %v6657
        %vm6696 = vcmp.eq.f32.partialorder %v2256, %v6661
        %vm6697 = vcmp.eq.f32.partialorder %v2256, %v6665
        %vm6698 = vcmp.eq.f32.partialorder %v2256, %v6669
        %vm6699 = vcmp.eq.f32.partialorder %v2256, %v6673
        %vm6700 = vcmp.eq.f32.partialorder %v2256, %v6677
        %vm6701 = vcmp.eq.f32.partialorder %v2256, %v6681
        %vm6702 = vcmp.eq.f32.partialorder %v2256, %v6685
        %6703 = vset.pattern.permute.xlu0 5
        %6704 = vperm.xlu0 %6703, %v2402
        %v6705 = vpop.permute.xlu0 %6704
        %6707 = vset.pattern.permute.xlu0 5
        %6708 = vperm.xlu0 %6707, %v2403
        %v6709 = vpop.permute.xlu0 %6708
        %6711 = vset.pattern.permute.xlu0 5
        %6712 = vperm.xlu0 %6711, %v2404
        %v6713 = vpop.permute.xlu0 %6712
        %6715 = vset.pattern.permute.xlu0 5
        %6716 = vperm.xlu0 %6715, %v2405
        %v6717 = vpop.permute.xlu0 %6716
        %6719 = vset.pattern.permute.xlu0 5
        %6720 = vperm.xlu0 %6719, %v2406
        %v6721 = vpop.permute.xlu0 %6720
        %6723 = vset.pattern.permute.xlu0 5
        %6724 = vperm.xlu0 %6723, %v2407
        %v6725 = vpop.permute.xlu0 %6724
        %6727 = vset.pattern.permute.xlu0 5
        %6728 = vperm.xlu0 %6727, %v2408
        %v6729 = vpop.permute.xlu0 %6728
        %6731 = vset.pattern.permute.xlu0 5
        %6732 = vperm.xlu0 %6731, %v2409
        %v6733 = vpop.permute.xlu0 %6732
        %6735 = vset.pattern.permute.xlu0 5
        %6736 = vperm.xlu0 %6735, %v2410
        %v6737 = vpop.permute.xlu0 %6736
        %6739 = vset.pattern.permute.xlu0 5
        %6740 = vperm.xlu0 %6739, %v2411
        %v6741 = vpop.permute.xlu0 %6740
        %6743 = vset.pattern.permute.xlu0 5
        %6744 = vperm.xlu0 %6743, %v2412
        %v6745 = vpop.permute.xlu0 %6744
        %6747 = vset.pattern.permute.xlu0 5
        %6748 = vperm.xlu0 %6747, %v2413
        %v6749 = vpop.permute.xlu0 %6748
        %6751 = vset.pattern.permute.xlu0 5
        %6752 = vperm.xlu0 %6751, %v2414
        %v6753 = vpop.permute.xlu0 %6752
        %6755 = vset.pattern.permute.xlu0 5
        %6756 = vperm.xlu0 %6755, %v2415
        %v6757 = vpop.permute.xlu0 %6756
        %6759 = vset.pattern.permute.xlu0 5
        %6760 = vperm.xlu0 %6759, %v2416
        %v6761 = vpop.permute.xlu0 %6760
        %6763 = vset.pattern.permute.xlu0 5
        %6764 = vperm.xlu0 %6763, %v2417
        %v6765 = vpop.permute.xlu0 %6764
        %v6767 = vsel %vm6687, %v6705, 0.0
        %v6768 = vsel %vm6688, %v6709, 0.0
        %v6769 = vsel %vm6689, %v6713, 0.0
        %v6770 = vsel %vm6690, %v6717, 0.0
        %v6771 = vsel %vm6691, %v6721, 0.0
        %v6772 = vsel %vm6692, %v6725, 0.0
        %v6773 = vsel %vm6693, %v6729, 0.0
        %v6774 = vsel %vm6694, %v6733, 0.0
        %v6775 = vsel %vm6695, %v6737, 0.0
        %v6776 = vsel %vm6696, %v6741, 0.0
        %v6777 = vsel %vm6697, %v6745, 0.0
        %v6778 = vsel %vm6698, %v6749, 0.0
        %v6779 = vsel %vm6699, %v6753, 0.0
        %v6780 = vsel %vm6700, %v6757, 0.0
        %v6781 = vsel %vm6701, %v6761, 0.0
        %v6782 = vsel %vm6702, %v6765, 0.0
        %6783 = vset.pattern.permute.xlu0 5
        %6784 = vperm.xlu0 %6783, %v2626
        %v6785 = vpop.permute.xlu0 %6784
        %6787 = vset.pattern.permute.xlu0 5
        %6788 = vperm.xlu0 %6787, %v2627
        %v6789 = vpop.permute.xlu0 %6788
        %6791 = vset.pattern.permute.xlu0 5
        %6792 = vperm.xlu0 %6791, %v2628
        %v6793 = vpop.permute.xlu0 %6792
        %6795 = vset.pattern.permute.xlu0 5
        %6796 = vperm.xlu0 %6795, %v2629
        %v6797 = vpop.permute.xlu0 %6796
        %6799 = vset.pattern.permute.xlu0 5
        %6800 = vperm.xlu0 %6799, %v2630
        %v6801 = vpop.permute.xlu0 %6800
        %6803 = vset.pattern.permute.xlu0 5
        %6804 = vperm.xlu0 %6803, %v2631
        %v6805 = vpop.permute.xlu0 %6804
        %6807 = vset.pattern.permute.xlu0 5
        %6808 = vperm.xlu0 %6807, %v2632
        %v6809 = vpop.permute.xlu0 %6808
        %6811 = vset.pattern.permute.xlu0 5
        %6812 = vperm.xlu0 %6811, %v2633
        %v6813 = vpop.permute.xlu0 %6812
        %6815 = vset.pattern.permute.xlu0 5
        %6816 = vperm.xlu0 %6815, %v2634
        %v6817 = vpop.permute.xlu0 %6816
        %6819 = vset.pattern.permute.xlu0 5
        %6820 = vperm.xlu0 %6819, %v2635
        %v6821 = vpop.permute.xlu0 %6820
        %6823 = vset.pattern.permute.xlu0 5
        %6824 = vperm.xlu0 %6823, %v2636
        %v6825 = vpop.permute.xlu0 %6824
        %6827 = vset.pattern.permute.xlu0 5
        %6828 = vperm.xlu0 %6827, %v2637
        %v6829 = vpop.permute.xlu0 %6828
        %6831 = vset.pattern.permute.xlu0 5
        %6832 = vperm.xlu0 %6831, %v2638
        %v6833 = vpop.permute.xlu0 %6832
        %6835 = vset.pattern.permute.xlu0 5
        %6836 = vperm.xlu0 %6835, %v2639
        %v6837 = vpop.permute.xlu0 %6836
        %6839 = vset.pattern.permute.xlu0 5
        %6840 = vperm.xlu0 %6839, %v2640
        %v6841 = vpop.permute.xlu0 %6840
        %6843 = vset.pattern.permute.xlu0 5
        %6844 = vperm.xlu0 %6843, %v2641
        %v6845 = vpop.permute.xlu0 %6844
        %vm6847 = vcmp.eq.f32.partialorder %v2256, %v6785
        %vm6848 = vcmp.eq.f32.partialorder %v2256, %v6789
        %vm6849 = vcmp.eq.f32.partialorder %v2256, %v6793
        %vm6850 = vcmp.eq.f32.partialorder %v2256, %v6797
        %vm6851 = vcmp.eq.f32.partialorder %v2256, %v6801
        %vm6852 = vcmp.eq.f32.partialorder %v2256, %v6805
        %vm6853 = vcmp.eq.f32.partialorder %v2256, %v6809
        %vm6854 = vcmp.eq.f32.partialorder %v2256, %v6813
        %vm6855 = vcmp.eq.f32.partialorder %v2256, %v6817
        %vm6856 = vcmp.eq.f32.partialorder %v2256, %v6821
        %vm6857 = vcmp.eq.f32.partialorder %v2256, %v6825
        %vm6858 = vcmp.eq.f32.partialorder %v2256, %v6829
        %vm6859 = vcmp.eq.f32.partialorder %v2256, %v6833
        %vm6860 = vcmp.eq.f32.partialorder %v2256, %v6837
        %vm6861 = vcmp.eq.f32.partialorder %v2256, %v6841
        %vm6862 = vcmp.eq.f32.partialorder %v2256, %v6845
        %6863 = vset.pattern.permute.xlu0 5
        %6864 = vperm.xlu0 %6863, %v2418
        %v6865 = vpop.permute.xlu0 %6864
        %6867 = vset.pattern.permute.xlu0 5
        %6868 = vperm.xlu0 %6867, %v2419
        %v6869 = vpop.permute.xlu0 %6868
        %6871 = vset.pattern.permute.xlu0 5
        %6872 = vperm.xlu0 %6871, %v2420
        %v6873 = vpop.permute.xlu0 %6872
        %6875 = vset.pattern.permute.xlu0 5
        %6876 = vperm.xlu0 %6875, %v2421
        %v6877 = vpop.permute.xlu0 %6876
        %6879 = vset.pattern.permute.xlu0 5
        %6880 = vperm.xlu0 %6879, %v2422
        %v6881 = vpop.permute.xlu0 %6880
        %6883 = vset.pattern.permute.xlu0 5
        %6884 = vperm.xlu0 %6883, %v2423
        %v6885 = vpop.permute.xlu0 %6884
        %6887 = vset.pattern.permute.xlu0 5
        %6888 = vperm.xlu0 %6887, %v2424
        %v6889 = vpop.permute.xlu0 %6888
        %6891 = vset.pattern.permute.xlu0 5
        %6892 = vperm.xlu0 %6891, %v2425
        %v6893 = vpop.permute.xlu0 %6892
        %6895 = vset.pattern.permute.xlu0 5
        %6896 = vperm.xlu0 %6895, %v2426
        %v6897 = vpop.permute.xlu0 %6896
        %6899 = vset.pattern.permute.xlu0 5
        %6900 = vperm.xlu0 %6899, %v2427
        %v6901 = vpop.permute.xlu0 %6900
        %6903 = vset.pattern.permute.xlu0 5
        %6904 = vperm.xlu0 %6903, %v2428
        %v6905 = vpop.permute.xlu0 %6904
        %6907 = vset.pattern.permute.xlu0 5
        %6908 = vperm.xlu0 %6907, %v2429
        %v6909 = vpop.permute.xlu0 %6908
        %6911 = vset.pattern.permute.xlu0 5
        %6912 = vperm.xlu0 %6911, %v2430
        %v6913 = vpop.permute.xlu0 %6912
        %6915 = vset.pattern.permute.xlu0 5
        %6916 = vperm.xlu0 %6915, %v2431
        %v6917 = vpop.permute.xlu0 %6916
        %6919 = vset.pattern.permute.xlu0 5
        %6920 = vperm.xlu0 %6919, %v2432
        %v6921 = vpop.permute.xlu0 %6920
        %6923 = vset.pattern.permute.xlu0 5
        %6924 = vperm.xlu0 %6923, %v2433
        %v6925 = vpop.permute.xlu0 %6924
        %v6927 = vsel %vm6847, %v6865, 0.0
        %v6928 = vsel %vm6848, %v6869, 0.0
        %v6929 = vsel %vm6849, %v6873, 0.0
        %v6930 = vsel %vm6850, %v6877, 0.0
        %v6931 = vsel %vm6851, %v6881, 0.0
        %v6932 = vsel %vm6852, %v6885, 0.0
        %v6933 = vsel %vm6853, %v6889, 0.0
        %v6934 = vsel %vm6854, %v6893, 0.0
        %v6935 = vsel %vm6855, %v6897, 0.0
        %v6936 = vsel %vm6856, %v6901, 0.0
        %v6937 = vsel %vm6857, %v6905, 0.0
        %v6938 = vsel %vm6858, %v6909, 0.0
        %v6939 = vsel %vm6859, %v6913, 0.0
        %v6940 = vsel %vm6860, %v6917, 0.0
        %v6941 = vsel %vm6861, %v6921, 0.0
        %v6942 = vsel %vm6862, %v6925, 0.0
        %v6943 = vadd.f32 %v6767, %v6927
        %v6944 = vadd.f32 %v6768, %v6928
        %v6945 = vadd.f32 %v6769, %v6929
        %v6946 = vadd.f32 %v6770, %v6930
        %v6947 = vadd.f32 %v6771, %v6931
        %v6948 = vadd.f32 %v6772, %v6932
        %v6949 = vadd.f32 %v6773, %v6933
        %v6950 = vadd.f32 %v6774, %v6934
        %v6951 = vadd.f32 %v6775, %v6935
        %v6952 = vadd.f32 %v6776, %v6936
        %v6953 = vadd.f32 %v6777, %v6937
        %v6954 = vadd.f32 %v6778, %v6938
        %v6955 = vadd.f32 %v6779, %v6939
        %v6956 = vadd.f32 %v6780, %v6940
        %v6957 = vadd.f32 %v6781, %v6941
        %v6958 = vadd.f32 %v6782, %v6942
        %6959 = vset.pattern.permute.xlu0 5
        %6960 = vperm.xlu0 %6959, %v2274
        %v6961 = vpop.permute.xlu0 %6960
        %6963 = vset.pattern.permute.xlu0 5
        %6964 = vperm.xlu0 %6963, %v2275
        %v6965 = vpop.permute.xlu0 %6964
        %6967 = vset.pattern.permute.xlu0 5
        %6968 = vperm.xlu0 %6967, %v2276
        %v6969 = vpop.permute.xlu0 %6968
        %6971 = vset.pattern.permute.xlu0 5
        %6972 = vperm.xlu0 %6971, %v2277
        %v6973 = vpop.permute.xlu0 %6972
        %6975 = vset.pattern.permute.xlu0 5
        %6976 = vperm.xlu0 %6975, %v2278
        %v6977 = vpop.permute.xlu0 %6976
        %6979 = vset.pattern.permute.xlu0 5
        %6980 = vperm.xlu0 %6979, %v2279
        %v6981 = vpop.permute.xlu0 %6980
        %6983 = vset.pattern.permute.xlu0 5
        %6984 = vperm.xlu0 %6983, %v2280
        %v6985 = vpop.permute.xlu0 %6984
        %6987 = vset.pattern.permute.xlu0 5
        %6988 = vperm.xlu0 %6987, %v2281
        %v6989 = vpop.permute.xlu0 %6988
        %6991 = vset.pattern.permute.xlu0 5
        %6992 = vperm.xlu0 %6991, %v2282
        %v6993 = vpop.permute.xlu0 %6992
        %6995 = vset.pattern.permute.xlu0 5
        %6996 = vperm.xlu0 %6995, %v2283
        %v6997 = vpop.permute.xlu0 %6996
        %6999 = vset.pattern.permute.xlu0 5
        %7000 = vperm.xlu0 %6999, %v2284
        %v7001 = vpop.permute.xlu0 %7000
        %7003 = vset.pattern.permute.xlu0 5
        %7004 = vperm.xlu0 %7003, %v2285
        %v7005 = vpop.permute.xlu0 %7004
        %7007 = vset.pattern.permute.xlu0 5
        %7008 = vperm.xlu0 %7007, %v2286
        %v7009 = vpop.permute.xlu0 %7008
        %7011 = vset.pattern.permute.xlu0 5
        %7012 = vperm.xlu0 %7011, %v2287
        %v7013 = vpop.permute.xlu0 %7012
        %7015 = vset.pattern.permute.xlu0 5
        %7016 = vperm.xlu0 %7015, %v2288
        %v7017 = vpop.permute.xlu0 %7016
        %7019 = vset.pattern.permute.xlu0 5
        %7020 = vperm.xlu0 %7019, %v2289
        %v7021 = vpop.permute.xlu0 %7020
        %vm7023 = vcmp.eq.f32.partialorder %v2851, %v6961
        %vm7024 = vcmp.eq.f32.partialorder %v2851, %v6965
        %vm7025 = vcmp.eq.f32.partialorder %v2851, %v6969
        %vm7026 = vcmp.eq.f32.partialorder %v2851, %v6973
        %vm7027 = vcmp.eq.f32.partialorder %v2851, %v6977
        %vm7028 = vcmp.eq.f32.partialorder %v2851, %v6981
        %vm7029 = vcmp.eq.f32.partialorder %v2851, %v6985
        %vm7030 = vcmp.eq.f32.partialorder %v2851, %v6989
        %vm7031 = vcmp.eq.f32.partialorder %v2851, %v6993
        %vm7032 = vcmp.eq.f32.partialorder %v2851, %v6997
        %vm7033 = vcmp.eq.f32.partialorder %v2851, %v7001
        %vm7034 = vcmp.eq.f32.partialorder %v2851, %v7005
        %vm7035 = vcmp.eq.f32.partialorder %v2851, %v7009
        %vm7036 = vcmp.eq.f32.partialorder %v2851, %v7013
        %vm7037 = vcmp.eq.f32.partialorder %v2851, %v7017
        %vm7038 = vcmp.eq.f32.partialorder %v2851, %v7021
        %7039 = vset.pattern.permute.xlu0 5
        %7040 = vperm.xlu0 %7039, %v2949
        %v7041 = vpop.permute.xlu0 %7040
        %7043 = vset.pattern.permute.xlu0 5
        %7044 = vperm.xlu0 %7043, %v2950
        %v7045 = vpop.permute.xlu0 %7044
        %7047 = vset.pattern.permute.xlu0 5
        %7048 = vperm.xlu0 %7047, %v2951
        %v7049 = vpop.permute.xlu0 %7048
        %7051 = vset.pattern.permute.xlu0 5
        %7052 = vperm.xlu0 %7051, %v2952
        %v7053 = vpop.permute.xlu0 %7052
        %7055 = vset.pattern.permute.xlu0 5
        %7056 = vperm.xlu0 %7055, %v2953
        %v7057 = vpop.permute.xlu0 %7056
        %7059 = vset.pattern.permute.xlu0 5
        %7060 = vperm.xlu0 %7059, %v2954
        %v7061 = vpop.permute.xlu0 %7060
        %7063 = vset.pattern.permute.xlu0 5
        %7064 = vperm.xlu0 %7063, %v2955
        %v7065 = vpop.permute.xlu0 %7064
        %7067 = vset.pattern.permute.xlu0 5
        %7068 = vperm.xlu0 %7067, %v2956
        %v7069 = vpop.permute.xlu0 %7068
        %7071 = vset.pattern.permute.xlu0 5
        %7072 = vperm.xlu0 %7071, %v2957
        %v7073 = vpop.permute.xlu0 %7072
        %7075 = vset.pattern.permute.xlu0 5
        %7076 = vperm.xlu0 %7075, %v2958
        %v7077 = vpop.permute.xlu0 %7076
        %7079 = vset.pattern.permute.xlu0 5
        %7080 = vperm.xlu0 %7079, %v2959
        %v7081 = vpop.permute.xlu0 %7080
        %7083 = vset.pattern.permute.xlu0 5
        %7084 = vperm.xlu0 %7083, %v2960
        %v7085 = vpop.permute.xlu0 %7084
        %7087 = vset.pattern.permute.xlu0 5
        %7088 = vperm.xlu0 %7087, %v2961
        %v7089 = vpop.permute.xlu0 %7088
        %7091 = vset.pattern.permute.xlu0 5
        %7092 = vperm.xlu0 %7091, %v2962
        %v7093 = vpop.permute.xlu0 %7092
        %7095 = vset.pattern.permute.xlu0 5
        %7096 = vperm.xlu0 %7095, %v2963
        %v7097 = vpop.permute.xlu0 %7096
        %7099 = vset.pattern.permute.xlu0 5
        %7100 = vperm.xlu0 %7099, %v2964
        %v7101 = vpop.permute.xlu0 %7100
        %v7103 = vsel %vm7023, %v7041, 0.0
        %v7104 = vsel %vm7024, %v7045, 0.0
        %v7105 = vsel %vm7025, %v7049, 0.0
        %v7106 = vsel %vm7026, %v7053, 0.0
        %v7107 = vsel %vm7027, %v7057, 0.0
        %v7108 = vsel %vm7028, %v7061, 0.0
        %v7109 = vsel %vm7029, %v7065, 0.0
        %v7110 = vsel %vm7030, %v7069, 0.0
        %v7111 = vsel %vm7031, %v7073, 0.0
        %v7112 = vsel %vm7032, %v7077, 0.0
        %v7113 = vsel %vm7033, %v7081, 0.0
        %v7114 = vsel %vm7034, %v7085, 0.0
        %v7115 = vsel %vm7035, %v7089, 0.0
        %v7116 = vsel %vm7036, %v7093, 0.0
        %v7117 = vsel %vm7037, %v7097, 0.0
        %v7118 = vsel %vm7038, %v7101, 0.0
        %7119 = vset.pattern.permute.xlu0 5
        %7120 = vperm.xlu0 %7119, %v3061
        %v7121 = vpop.permute.xlu0 %7120
        %7123 = vset.pattern.permute.xlu0 5
        %7124 = vperm.xlu0 %7123, %v3062
        %v7125 = vpop.permute.xlu0 %7124
        %7127 = vset.pattern.permute.xlu0 5
        %7128 = vperm.xlu0 %7127, %v3063
        %v7129 = vpop.permute.xlu0 %7128
        %7131 = vset.pattern.permute.xlu0 5
        %7132 = vperm.xlu0 %7131, %v3064
        %v7133 = vpop.permute.xlu0 %7132
        %7135 = vset.pattern.permute.xlu0 5
        %7136 = vperm.xlu0 %7135, %v3065
        %v7137 = vpop.permute.xlu0 %7136
        %7139 = vset.pattern.permute.xlu0 5
        %7140 = vperm.xlu0 %7139, %v3066
        %v7141 = vpop.permute.xlu0 %7140
        %7143 = vset.pattern.permute.xlu0 5
        %7144 = vperm.xlu0 %7143, %v3067
        %v7145 = vpop.permute.xlu0 %7144
        %7147 = vset.pattern.permute.xlu0 5
        %7148 = vperm.xlu0 %7147, %v3068
        %v7149 = vpop.permute.xlu0 %7148
        %7151 = vset.pattern.permute.xlu0 5
        %7152 = vperm.xlu0 %7151, %v3069
        %v7153 = vpop.permute.xlu0 %7152
        %7155 = vset.pattern.permute.xlu0 5
        %7156 = vperm.xlu0 %7155, %v3070
        %v7157 = vpop.permute.xlu0 %7156
        %7159 = vset.pattern.permute.xlu0 5
        %7160 = vperm.xlu0 %7159, %v3071
        %v7161 = vpop.permute.xlu0 %7160
        %7163 = vset.pattern.permute.xlu0 5
        %7164 = vperm.xlu0 %7163, %v3072
        %v7165 = vpop.permute.xlu0 %7164
        %7167 = vset.pattern.permute.xlu0 5
        %7168 = vperm.xlu0 %7167, %v3073
        %v7169 = vpop.permute.xlu0 %7168
        %7171 = vset.pattern.permute.xlu0 5
        %7172 = vperm.xlu0 %7171, %v3074
        %v7173 = vpop.permute.xlu0 %7172
        %7175 = vset.pattern.permute.xlu0 5
        %7176 = vperm.xlu0 %7175, %v3075
        %v7177 = vpop.permute.xlu0 %7176
        %7179 = vset.pattern.permute.xlu0 5
        %7180 = vperm.xlu0 %7179, %v3076
        %v7181 = vpop.permute.xlu0 %7180
        %vm7183 = vcmp.eq.f32.partialorder %v2851, %v7121
        %vm7184 = vcmp.eq.f32.partialorder %v2851, %v7125
        %vm7185 = vcmp.eq.f32.partialorder %v2851, %v7129
        %vm7186 = vcmp.eq.f32.partialorder %v2851, %v7133
        %vm7187 = vcmp.eq.f32.partialorder %v2851, %v7137
        %vm7188 = vcmp.eq.f32.partialorder %v2851, %v7141
        %vm7189 = vcmp.eq.f32.partialorder %v2851, %v7145
        %vm7190 = vcmp.eq.f32.partialorder %v2851, %v7149
        %vm7191 = vcmp.eq.f32.partialorder %v2851, %v7153
        %vm7192 = vcmp.eq.f32.partialorder %v2851, %v7157
        %vm7193 = vcmp.eq.f32.partialorder %v2851, %v7161
        %vm7194 = vcmp.eq.f32.partialorder %v2851, %v7165
        %vm7195 = vcmp.eq.f32.partialorder %v2851, %v7169
        %vm7196 = vcmp.eq.f32.partialorder %v2851, %v7173
        %vm7197 = vcmp.eq.f32.partialorder %v2851, %v7177
        %vm7198 = vcmp.eq.f32.partialorder %v2851, %v7181
        %7199 = vset.pattern.permute.xlu0 5
        %7200 = vperm.xlu0 %7199, %v2306
        %v7201 = vpop.permute.xlu0 %7200
        %7203 = vset.pattern.permute.xlu0 5
        %7204 = vperm.xlu0 %7203, %v2307
        %v7205 = vpop.permute.xlu0 %7204
        %7207 = vset.pattern.permute.xlu0 5
        %7208 = vperm.xlu0 %7207, %v2308
        %v7209 = vpop.permute.xlu0 %7208
        %7211 = vset.pattern.permute.xlu0 5
        %7212 = vperm.xlu0 %7211, %v2309
        %v7213 = vpop.permute.xlu0 %7212
        %7215 = vset.pattern.permute.xlu0 5
        %7216 = vperm.xlu0 %7215, %v2310
        %v7217 = vpop.permute.xlu0 %7216
        %7219 = vset.pattern.permute.xlu0 5
        %7220 = vperm.xlu0 %7219, %v2311
        %v7221 = vpop.permute.xlu0 %7220
        %7223 = vset.pattern.permute.xlu0 5
        %7224 = vperm.xlu0 %7223, %v2312
        %v7225 = vpop.permute.xlu0 %7224
        %7227 = vset.pattern.permute.xlu0 5
        %7228 = vperm.xlu0 %7227, %v2313
        %v7229 = vpop.permute.xlu0 %7228
        %7231 = vset.pattern.permute.xlu0 5
        %7232 = vperm.xlu0 %7231, %v2314
        %v7233 = vpop.permute.xlu0 %7232
        %7235 = vset.pattern.permute.xlu0 5
        %7236 = vperm.xlu0 %7235, %v2315
        %v7237 = vpop.permute.xlu0 %7236
        %7239 = vset.pattern.permute.xlu0 5
        %7240 = vperm.xlu0 %7239, %v2316
        %v7241 = vpop.permute.xlu0 %7240
        %7243 = vset.pattern.permute.xlu0 5
        %7244 = vperm.xlu0 %7243, %v2317
        %v7245 = vpop.permute.xlu0 %7244
        %7247 = vset.pattern.permute.xlu0 5
        %7248 = vperm.xlu0 %7247, %v2318
        %v7249 = vpop.permute.xlu0 %7248
        %7251 = vset.pattern.permute.xlu0 5
        %7252 = vperm.xlu0 %7251, %v2319
        %v7253 = vpop.permute.xlu0 %7252
        %7255 = vset.pattern.permute.xlu0 5
        %7256 = vperm.xlu0 %7255, %v2320
        %v7257 = vpop.permute.xlu0 %7256
        %7259 = vset.pattern.permute.xlu0 5
        %7260 = vperm.xlu0 %7259, %v2321
        %v7261 = vpop.permute.xlu0 %7260
        %v7263 = vsel %vm7183, %v7201, 0.0
        %v7264 = vsel %vm7184, %v7205, 0.0
        %v7265 = vsel %vm7185, %v7209, 0.0
        %v7266 = vsel %vm7186, %v7213, 0.0
        %v7267 = vsel %vm7187, %v7217, 0.0
        %v7268 = vsel %vm7188, %v7221, 0.0
        %v7269 = vsel %vm7189, %v7225, 0.0
        %v7270 = vsel %vm7190, %v7229, 0.0
        %v7271 = vsel %vm7191, %v7233, 0.0
        %v7272 = vsel %vm7192, %v7237, 0.0
        %v7273 = vsel %vm7193, %v7241, 0.0
        %v7274 = vsel %vm7194, %v7245, 0.0
        %v7275 = vsel %vm7195, %v7249, 0.0
        %v7276 = vsel %vm7196, %v7253, 0.0
        %v7277 = vsel %vm7197, %v7257, 0.0
        %v7278 = vsel %vm7198, %v7261, 0.0
        %v7279 = vadd.f32 %v7103, %v7263
        %v7280 = vadd.f32 %v7104, %v7264
        %v7281 = vadd.f32 %v7105, %v7265
        %v7282 = vadd.f32 %v7106, %v7266
        %v7283 = vadd.f32 %v7107, %v7267
        %v7284 = vadd.f32 %v7108, %v7268
        %v7285 = vadd.f32 %v7109, %v7269
        %v7286 = vadd.f32 %v7110, %v7270
        %v7287 = vadd.f32 %v7111, %v7271
        %v7288 = vadd.f32 %v7112, %v7272
        %v7289 = vadd.f32 %v7113, %v7273
        %v7290 = vadd.f32 %v7114, %v7274
        %v7291 = vadd.f32 %v7115, %v7275
        %v7292 = vadd.f32 %v7116, %v7276
        %v7293 = vadd.f32 %v7117, %v7277
        %v7294 = vadd.f32 %v7118, %v7278
        %v7296 = vsel %vm3285, %v6943, 0
        %v7299 = vsel %vm3285, %v6944, 0
        %v7302 = vsel %vm3285, %v6945, 0
        %v7305 = vsel %vm3285, %v6946, 0
        %v7308 = vsel %vm3285, %v6947, 0
        %v7311 = vsel %vm3285, %v6948, 0
        %v7314 = vsel %vm3285, %v6949, 0
        %v7317 = vsel %vm3285, %v6950, 0
        %v7320 = vsel %vm3285, %v6951, 0
        %v7323 = vsel %vm3285, %v6952, 0
        %v7326 = vsel %vm3285, %v6953, 0
        %v7329 = vsel %vm3285, %v6954, 0
        %v7332 = vsel %vm3285, %v6955, 0
        %v7335 = vsel %vm3285, %v6956, 0
        %v7338 = vsel %vm3285, %v6957, 0
        %v7341 = vsel %vm3285, %v6958, 0
        %7343 = vmatpush.msra.mxu0 0.0
        %7344 = vmatpush.msra.mxu0 0.0
        %7345 = vmatpush.msra.mxu0 0.0
        %7346 = vmatpush.msra.mxu0 0.0
        %7347 = vmatpush.msra.mxu0 0.0
        %7348 = vmatpush.msra.mxu0 0.0
        %7349 = vmatpush.msra.mxu0 0.0
        %7350 = vmatpush.msra.mxu0 0.0
        %7351 = vmatpush.msra.mxu0 0.0
        %7352 = vmatpush.msra.mxu0 0.0
        %7353 = vmatpush.msra.mxu0 0.0
        %7354 = vmatpush.msra.mxu0 0.0
        %7355 = vmatpush.msra.mxu0 0.0
        %7356 = vmatpush.msra.mxu0 %v3336
        %7357 = vmatpush.msra.mxu0 %v2252
        %7358 = vmatpush.msra.mxu0 %v2251
        %7359 = vmatmul.f32.gmra.mxu0 %v7296
        %v7360 = vpop.f32.mrf.mxu0
        %v7361 = vadd.f32 0.0, %v7360
        %7362 = vmatmul.f32.gmra.mxu0 %v7299
        %v7363 = vpop.f32.mrf.mxu0
        %v7364 = vadd.f32 0.0, %v7363
        %7365 = vmatmul.f32.gmra.mxu0 %v7302
        %v7366 = vpop.f32.mrf.mxu0
        %v7367 = vadd.f32 0.0, %v7366
        %7368 = vmatmul.f32.gmra.mxu0 %v7305
        %v7369 = vpop.f32.mrf.mxu0
        %v7370 = vadd.f32 0.0, %v7369
        %7371 = vmatmul.f32.gmra.mxu0 %v7308
        %v7372 = vpop.f32.mrf.mxu0
        %v7373 = vadd.f32 0.0, %v7372
        %7374 = vmatmul.f32.gmra.mxu0 %v7311
        %v7375 = vpop.f32.mrf.mxu0
        %v7376 = vadd.f32 0.0, %v7375
        %7377 = vmatmul.f32.gmra.mxu0 %v7314
        %v7378 = vpop.f32.mrf.mxu0
        %v7379 = vadd.f32 0.0, %v7378
        %7380 = vmatmul.f32.gmra.mxu0 %v7317
        %v7381 = vpop.f32.mrf.mxu0
        %v7382 = vadd.f32 0.0, %v7381
        %7383 = vmatmul.f32.gmra.mxu0 %v7320
        %v7384 = vpop.f32.mrf.mxu0
        %v7385 = vadd.f32 0.0, %v7384
        %7386 = vmatmul.f32.gmra.mxu0 %v7323
        %v7387 = vpop.f32.mrf.mxu0
        %v7388 = vadd.f32 0.0, %v7387
        %7389 = vmatmul.f32.gmra.mxu0 %v7326
        %v7390 = vpop.f32.mrf.mxu0
        %v7391 = vadd.f32 0.0, %v7390
        %7392 = vmatmul.f32.gmra.mxu0 %v7329
        %v7393 = vpop.f32.mrf.mxu0
        %v7394 = vadd.f32 0.0, %v7393
        %7395 = vmatmul.f32.gmra.mxu0 %v7332
        %v7396 = vpop.f32.mrf.mxu0
        %v7397 = vadd.f32 0.0, %v7396
        %7398 = vmatmul.f32.gmra.mxu0 %v7335
        %v7399 = vpop.f32.mrf.mxu0
        %v7400 = vadd.f32 0.0, %v7399
        %7401 = vmatmul.f32.gmra.mxu0 %v7338
        %v7402 = vpop.f32.mrf.mxu0
        %v7403 = vadd.f32 0.0, %v7402
        %7404 = vmatmul.f32.gmra.mxu0 %v7341
        %v7405 = vpop.f32.mrf.mxu0
        %v7406 = vadd.f32 0.0, %v7405
        %7407 = vdwg.mxu0
        %v7408 = vmul.f32 %v7361, %v7279
        %v7409 = vmul.f32 %v7364, %v7280
        %v7410 = vmul.f32 %v7367, %v7281
        %v7411 = vmul.f32 %v7370, %v7282
        %v7412 = vmul.f32 %v7373, %v7283
        %v7413 = vmul.f32 %v7376, %v7284
        %v7414 = vmul.f32 %v7379, %v7285
        %v7415 = vmul.f32 %v7382, %v7286
        %v7416 = vmul.f32 %v7385, %v7287
        %v7417 = vmul.f32 %v7388, %v7288
        %v7418 = vmul.f32 %v7391, %v7289
        %v7419 = vmul.f32 %v7394, %v7290
        %v7420 = vmul.f32 %v7397, %v7291
        %v7421 = vmul.f32 %v7400, %v7292
        %v7422 = vmul.f32 %v7403, %v7293
        %v7423 = vmul.f32 %v7406, %v7294
        %7424 = vset.pattern.permute.xlu0 6
        %7425 = vperm.xlu0 %7424, %v2258
        %v7426 = vpop.permute.xlu0 %7425
        %7428 = vset.pattern.permute.xlu0 6
        %7429 = vperm.xlu0 %7428, %v2259
        %v7430 = vpop.permute.xlu0 %7429
        %7432 = vset.pattern.permute.xlu0 6
        %7433 = vperm.xlu0 %7432, %v2260
        %v7434 = vpop.permute.xlu0 %7433
        %7436 = vset.pattern.permute.xlu0 6
        %7437 = vperm.xlu0 %7436, %v2261
        %v7438 = vpop.permute.xlu0 %7437
        %7440 = vset.pattern.permute.xlu0 6
        %7441 = vperm.xlu0 %7440, %v2262
        %v7442 = vpop.permute.xlu0 %7441
        %7444 = vset.pattern.permute.xlu0 6
        %7445 = vperm.xlu0 %7444, %v2263
        %v7446 = vpop.permute.xlu0 %7445
        %7448 = vset.pattern.permute.xlu0 6
        %7449 = vperm.xlu0 %7448, %v2264
        %v7450 = vpop.permute.xlu0 %7449
        %7452 = vset.pattern.permute.xlu0 6
        %7453 = vperm.xlu0 %7452, %v2265
        %v7454 = vpop.permute.xlu0 %7453
        %7456 = vset.pattern.permute.xlu0 6
        %7457 = vperm.xlu0 %7456, %v2266
        %v7458 = vpop.permute.xlu0 %7457
        %7460 = vset.pattern.permute.xlu0 6
        %7461 = vperm.xlu0 %7460, %v2267
        %v7462 = vpop.permute.xlu0 %7461
        %7464 = vset.pattern.permute.xlu0 6
        %7465 = vperm.xlu0 %7464, %v2268
        %v7466 = vpop.permute.xlu0 %7465
        %7468 = vset.pattern.permute.xlu0 6
        %7469 = vperm.xlu0 %7468, %v2269
        %v7470 = vpop.permute.xlu0 %7469
        %7472 = vset.pattern.permute.xlu0 6
        %7473 = vperm.xlu0 %7472, %v2270
        %v7474 = vpop.permute.xlu0 %7473
        %7476 = vset.pattern.permute.xlu0 6
        %7477 = vperm.xlu0 %7476, %v2271
        %v7478 = vpop.permute.xlu0 %7477
        %7480 = vset.pattern.permute.xlu0 6
        %7481 = vperm.xlu0 %7480, %v2272
        %v7482 = vpop.permute.xlu0 %7481
        %7484 = vset.pattern.permute.xlu0 6
        %7485 = vperm.xlu0 %7484, %v2273
        %v7486 = vpop.permute.xlu0 %7485
        %vm7488 = vcmp.eq.f32.partialorder %v2256, %v7426
        %vm7489 = vcmp.eq.f32.partialorder %v2256, %v7430
        %vm7490 = vcmp.eq.f32.partialorder %v2256, %v7434
        %vm7491 = vcmp.eq.f32.partialorder %v2256, %v7438
        %vm7492 = vcmp.eq.f32.partialorder %v2256, %v7442
        %vm7493 = vcmp.eq.f32.partialorder %v2256, %v7446
        %vm7494 = vcmp.eq.f32.partialorder %v2256, %v7450
        %vm7495 = vcmp.eq.f32.partialorder %v2256, %v7454
        %vm7496 = vcmp.eq.f32.partialorder %v2256, %v7458
        %vm7497 = vcmp.eq.f32.partialorder %v2256, %v7462
        %vm7498 = vcmp.eq.f32.partialorder %v2256, %v7466
        %vm7499 = vcmp.eq.f32.partialorder %v2256, %v7470
        %vm7500 = vcmp.eq.f32.partialorder %v2256, %v7474
        %vm7501 = vcmp.eq.f32.partialorder %v2256, %v7478
        %vm7502 = vcmp.eq.f32.partialorder %v2256, %v7482
        %vm7503 = vcmp.eq.f32.partialorder %v2256, %v7486
        %7504 = vset.pattern.permute.xlu0 6
        %7505 = vperm.xlu0 %7504, %v2402
        %v7506 = vpop.permute.xlu0 %7505
        %7508 = vset.pattern.permute.xlu0 6
        %7509 = vperm.xlu0 %7508, %v2403
        %v7510 = vpop.permute.xlu0 %7509
        %7512 = vset.pattern.permute.xlu0 6
        %7513 = vperm.xlu0 %7512, %v2404
        %v7514 = vpop.permute.xlu0 %7513
        %7516 = vset.pattern.permute.xlu0 6
        %7517 = vperm.xlu0 %7516, %v2405
        %v7518 = vpop.permute.xlu0 %7517
        %7520 = vset.pattern.permute.xlu0 6
        %7521 = vperm.xlu0 %7520, %v2406
        %v7522 = vpop.permute.xlu0 %7521
        %7524 = vset.pattern.permute.xlu0 6
        %7525 = vperm.xlu0 %7524, %v2407
        %v7526 = vpop.permute.xlu0 %7525
        %7528 = vset.pattern.permute.xlu0 6
        %7529 = vperm.xlu0 %7528, %v2408
        %v7530 = vpop.permute.xlu0 %7529
        %7532 = vset.pattern.permute.xlu0 6
        %7533 = vperm.xlu0 %7532, %v2409
        %v7534 = vpop.permute.xlu0 %7533
        %7536 = vset.pattern.permute.xlu0 6
        %7537 = vperm.xlu0 %7536, %v2410
        %v7538 = vpop.permute.xlu0 %7537
        %7540 = vset.pattern.permute.xlu0 6
        %7541 = vperm.xlu0 %7540, %v2411
        %v7542 = vpop.permute.xlu0 %7541
        %7544 = vset.pattern.permute.xlu0 6
        %7545 = vperm.xlu0 %7544, %v2412
        %v7546 = vpop.permute.xlu0 %7545
        %7548 = vset.pattern.permute.xlu0 6
        %7549 = vperm.xlu0 %7548, %v2413
        %v7550 = vpop.permute.xlu0 %7549
        %7552 = vset.pattern.permute.xlu0 6
        %7553 = vperm.xlu0 %7552, %v2414
        %v7554 = vpop.permute.xlu0 %7553
        %7556 = vset.pattern.permute.xlu0 6
        %7557 = vperm.xlu0 %7556, %v2415
        %v7558 = vpop.permute.xlu0 %7557
        %7560 = vset.pattern.permute.xlu0 6
        %7561 = vperm.xlu0 %7560, %v2416
        %v7562 = vpop.permute.xlu0 %7561
        %7564 = vset.pattern.permute.xlu0 6
        %7565 = vperm.xlu0 %7564, %v2417
        %v7566 = vpop.permute.xlu0 %7565
        %v7568 = vsel %vm7488, %v7506, 0.0
        %v7569 = vsel %vm7489, %v7510, 0.0
        %v7570 = vsel %vm7490, %v7514, 0.0
        %v7571 = vsel %vm7491, %v7518, 0.0
        %v7572 = vsel %vm7492, %v7522, 0.0
        %v7573 = vsel %vm7493, %v7526, 0.0
        %v7574 = vsel %vm7494, %v7530, 0.0
        %v7575 = vsel %vm7495, %v7534, 0.0
        %v7576 = vsel %vm7496, %v7538, 0.0
        %v7577 = vsel %vm7497, %v7542, 0.0
        %v7578 = vsel %vm7498, %v7546, 0.0
        %v7579 = vsel %vm7499, %v7550, 0.0
        %v7580 = vsel %vm7500, %v7554, 0.0
        %v7581 = vsel %vm7501, %v7558, 0.0
        %v7582 = vsel %vm7502, %v7562, 0.0
        %v7583 = vsel %vm7503, %v7566, 0.0
        %7584 = vset.pattern.permute.xlu0 6
        %7585 = vperm.xlu0 %7584, %v2626
        %v7586 = vpop.permute.xlu0 %7585
        %7588 = vset.pattern.permute.xlu0 6
        %7589 = vperm.xlu0 %7588, %v2627
        %v7590 = vpop.permute.xlu0 %7589
        %7592 = vset.pattern.permute.xlu0 6
        %7593 = vperm.xlu0 %7592, %v2628
        %v7594 = vpop.permute.xlu0 %7593
        %7596 = vset.pattern.permute.xlu0 6
        %7597 = vperm.xlu0 %7596, %v2629
        %v7598 = vpop.permute.xlu0 %7597
        %7600 = vset.pattern.permute.xlu0 6
        %7601 = vperm.xlu0 %7600, %v2630
        %v7602 = vpop.permute.xlu0 %7601
        %7604 = vset.pattern.permute.xlu0 6
        %7605 = vperm.xlu0 %7604, %v2631
        %v7606 = vpop.permute.xlu0 %7605
        %7608 = vset.pattern.permute.xlu0 6
        %7609 = vperm.xlu0 %7608, %v2632
        %v7610 = vpop.permute.xlu0 %7609
        %7612 = vset.pattern.permute.xlu0 6
        %7613 = vperm.xlu0 %7612, %v2633
        %v7614 = vpop.permute.xlu0 %7613
        %7616 = vset.pattern.permute.xlu0 6
        %7617 = vperm.xlu0 %7616, %v2634
        %v7618 = vpop.permute.xlu0 %7617
        %7620 = vset.pattern.permute.xlu0 6
        %7621 = vperm.xlu0 %7620, %v2635
        %v7622 = vpop.permute.xlu0 %7621
        %7624 = vset.pattern.permute.xlu0 6
        %7625 = vperm.xlu0 %7624, %v2636
        %v7626 = vpop.permute.xlu0 %7625
        %7628 = vset.pattern.permute.xlu0 6
        %7629 = vperm.xlu0 %7628, %v2637
        %v7630 = vpop.permute.xlu0 %7629
        %7632 = vset.pattern.permute.xlu0 6
        %7633 = vperm.xlu0 %7632, %v2638
        %v7634 = vpop.permute.xlu0 %7633
        %7636 = vset.pattern.permute.xlu0 6
        %7637 = vperm.xlu0 %7636, %v2639
        %v7638 = vpop.permute.xlu0 %7637
        %7640 = vset.pattern.permute.xlu0 6
        %7641 = vperm.xlu0 %7640, %v2640
        %v7642 = vpop.permute.xlu0 %7641
        %7644 = vset.pattern.permute.xlu0 6
        %7645 = vperm.xlu0 %7644, %v2641
        %v7646 = vpop.permute.xlu0 %7645
        %vm7648 = vcmp.eq.f32.partialorder %v2256, %v7586
        %vm7649 = vcmp.eq.f32.partialorder %v2256, %v7590
        %vm7650 = vcmp.eq.f32.partialorder %v2256, %v7594
        %vm7651 = vcmp.eq.f32.partialorder %v2256, %v7598
        %vm7652 = vcmp.eq.f32.partialorder %v2256, %v7602
        %vm7653 = vcmp.eq.f32.partialorder %v2256, %v7606
        %vm7654 = vcmp.eq.f32.partialorder %v2256, %v7610
        %vm7655 = vcmp.eq.f32.partialorder %v2256, %v7614
        %vm7656 = vcmp.eq.f32.partialorder %v2256, %v7618
        %vm7657 = vcmp.eq.f32.partialorder %v2256, %v7622
        %vm7658 = vcmp.eq.f32.partialorder %v2256, %v7626
        %vm7659 = vcmp.eq.f32.partialorder %v2256, %v7630
        %vm7660 = vcmp.eq.f32.partialorder %v2256, %v7634
        %vm7661 = vcmp.eq.f32.partialorder %v2256, %v7638
        %vm7662 = vcmp.eq.f32.partialorder %v2256, %v7642
        %vm7663 = vcmp.eq.f32.partialorder %v2256, %v7646
        %7664 = vset.pattern.permute.xlu0 6
        %7665 = vperm.xlu0 %7664, %v2418
        %v7666 = vpop.permute.xlu0 %7665
        %7668 = vset.pattern.permute.xlu0 6
        %7669 = vperm.xlu0 %7668, %v2419
        %v7670 = vpop.permute.xlu0 %7669
        %7672 = vset.pattern.permute.xlu0 6
        %7673 = vperm.xlu0 %7672, %v2420
        %v7674 = vpop.permute.xlu0 %7673
        %7676 = vset.pattern.permute.xlu0 6
        %7677 = vperm.xlu0 %7676, %v2421
        %v7678 = vpop.permute.xlu0 %7677
        %7680 = vset.pattern.permute.xlu0 6
        %7681 = vperm.xlu0 %7680, %v2422
        %v7682 = vpop.permute.xlu0 %7681
        %7684 = vset.pattern.permute.xlu0 6
        %7685 = vperm.xlu0 %7684, %v2423
        %v7686 = vpop.permute.xlu0 %7685
        %7688 = vset.pattern.permute.xlu0 6
        %7689 = vperm.xlu0 %7688, %v2424
        %v7690 = vpop.permute.xlu0 %7689
        %7692 = vset.pattern.permute.xlu0 6
        %7693 = vperm.xlu0 %7692, %v2425
        %v7694 = vpop.permute.xlu0 %7693
        %7696 = vset.pattern.permute.xlu0 6
        %7697 = vperm.xlu0 %7696, %v2426
        %v7698 = vpop.permute.xlu0 %7697
        %7700 = vset.pattern.permute.xlu0 6
        %7701 = vperm.xlu0 %7700, %v2427
        %v7702 = vpop.permute.xlu0 %7701
        %7704 = vset.pattern.permute.xlu0 6
        %7705 = vperm.xlu0 %7704, %v2428
        %v7706 = vpop.permute.xlu0 %7705
        %7708 = vset.pattern.permute.xlu0 6
        %7709 = vperm.xlu0 %7708, %v2429
        %v7710 = vpop.permute.xlu0 %7709
        %7712 = vset.pattern.permute.xlu0 6
        %7713 = vperm.xlu0 %7712, %v2430
        %v7714 = vpop.permute.xlu0 %7713
        %7716 = vset.pattern.permute.xlu0 6
        %7717 = vperm.xlu0 %7716, %v2431
        %v7718 = vpop.permute.xlu0 %7717
        %7720 = vset.pattern.permute.xlu0 6
        %7721 = vperm.xlu0 %7720, %v2432
        %v7722 = vpop.permute.xlu0 %7721
        %7724 = vset.pattern.permute.xlu0 6
        %7725 = vperm.xlu0 %7724, %v2433
        %v7726 = vpop.permute.xlu0 %7725
        %v7728 = vsel %vm7648, %v7666, 0.0
        %v7729 = vsel %vm7649, %v7670, 0.0
        %v7730 = vsel %vm7650, %v7674, 0.0
        %v7731 = vsel %vm7651, %v7678, 0.0
        %v7732 = vsel %vm7652, %v7682, 0.0
        %v7733 = vsel %vm7653, %v7686, 0.0
        %v7734 = vsel %vm7654, %v7690, 0.0
        %v7735 = vsel %vm7655, %v7694, 0.0
        %v7736 = vsel %vm7656, %v7698, 0.0
        %v7737 = vsel %vm7657, %v7702, 0.0
        %v7738 = vsel %vm7658, %v7706, 0.0
        %v7739 = vsel %vm7659, %v7710, 0.0
        %v7740 = vsel %vm7660, %v7714, 0.0
        %v7741 = vsel %vm7661, %v7718, 0.0
        %v7742 = vsel %vm7662, %v7722, 0.0
        %v7743 = vsel %vm7663, %v7726, 0.0
        %v7744 = vadd.f32 %v7568, %v7728
        %v7745 = vadd.f32 %v7569, %v7729
        %v7746 = vadd.f32 %v7570, %v7730
        %v7747 = vadd.f32 %v7571, %v7731
        %v7748 = vadd.f32 %v7572, %v7732
        %v7749 = vadd.f32 %v7573, %v7733
        %v7750 = vadd.f32 %v7574, %v7734
        %v7751 = vadd.f32 %v7575, %v7735
        %v7752 = vadd.f32 %v7576, %v7736
        %v7753 = vadd.f32 %v7577, %v7737
        %v7754 = vadd.f32 %v7578, %v7738
        %v7755 = vadd.f32 %v7579, %v7739
        %v7756 = vadd.f32 %v7580, %v7740
        %v7757 = vadd.f32 %v7581, %v7741
        %v7758 = vadd.f32 %v7582, %v7742
        %v7759 = vadd.f32 %v7583, %v7743
        %7760 = vset.pattern.permute.xlu0 6
        %7761 = vperm.xlu0 %7760, %v2274
        %v7762 = vpop.permute.xlu0 %7761
        %7764 = vset.pattern.permute.xlu0 6
        %7765 = vperm.xlu0 %7764, %v2275
        %v7766 = vpop.permute.xlu0 %7765
        %7768 = vset.pattern.permute.xlu0 6
        %7769 = vperm.xlu0 %7768, %v2276
        %v7770 = vpop.permute.xlu0 %7769
        %7772 = vset.pattern.permute.xlu0 6
        %7773 = vperm.xlu0 %7772, %v2277
        %v7774 = vpop.permute.xlu0 %7773
        %7776 = vset.pattern.permute.xlu0 6
        %7777 = vperm.xlu0 %7776, %v2278
        %v7778 = vpop.permute.xlu0 %7777
        %7780 = vset.pattern.permute.xlu0 6
        %7781 = vperm.xlu0 %7780, %v2279
        %v7782 = vpop.permute.xlu0 %7781
        %7784 = vset.pattern.permute.xlu0 6
        %7785 = vperm.xlu0 %7784, %v2280
        %v7786 = vpop.permute.xlu0 %7785
        %7788 = vset.pattern.permute.xlu0 6
        %7789 = vperm.xlu0 %7788, %v2281
        %v7790 = vpop.permute.xlu0 %7789
        %7792 = vset.pattern.permute.xlu0 6
        %7793 = vperm.xlu0 %7792, %v2282
        %v7794 = vpop.permute.xlu0 %7793
        %7796 = vset.pattern.permute.xlu0 6
        %7797 = vperm.xlu0 %7796, %v2283
        %v7798 = vpop.permute.xlu0 %7797
        %7800 = vset.pattern.permute.xlu0 6
        %7801 = vperm.xlu0 %7800, %v2284
        %v7802 = vpop.permute.xlu0 %7801
        %7804 = vset.pattern.permute.xlu0 6
        %7805 = vperm.xlu0 %7804, %v2285
        %v7806 = vpop.permute.xlu0 %7805
        %7808 = vset.pattern.permute.xlu0 6
        %7809 = vperm.xlu0 %7808, %v2286
        %v7810 = vpop.permute.xlu0 %7809
        %7812 = vset.pattern.permute.xlu0 6
        %7813 = vperm.xlu0 %7812, %v2287
        %v7814 = vpop.permute.xlu0 %7813
        %7816 = vset.pattern.permute.xlu0 6
        %7817 = vperm.xlu0 %7816, %v2288
        %v7818 = vpop.permute.xlu0 %7817
        %7820 = vset.pattern.permute.xlu0 6
        %7821 = vperm.xlu0 %7820, %v2289
        %v7822 = vpop.permute.xlu0 %7821
        %vm7824 = vcmp.eq.f32.partialorder %v2851, %v7762
        %vm7825 = vcmp.eq.f32.partialorder %v2851, %v7766
        %vm7826 = vcmp.eq.f32.partialorder %v2851, %v7770
        %vm7827 = vcmp.eq.f32.partialorder %v2851, %v7774
        %vm7828 = vcmp.eq.f32.partialorder %v2851, %v7778
        %vm7829 = vcmp.eq.f32.partialorder %v2851, %v7782
        %vm7830 = vcmp.eq.f32.partialorder %v2851, %v7786
        %vm7831 = vcmp.eq.f32.partialorder %v2851, %v7790
        %vm7832 = vcmp.eq.f32.partialorder %v2851, %v7794
        %vm7833 = vcmp.eq.f32.partialorder %v2851, %v7798
        %vm7834 = vcmp.eq.f32.partialorder %v2851, %v7802
        %vm7835 = vcmp.eq.f32.partialorder %v2851, %v7806
        %vm7836 = vcmp.eq.f32.partialorder %v2851, %v7810
        %vm7837 = vcmp.eq.f32.partialorder %v2851, %v7814
        %vm7838 = vcmp.eq.f32.partialorder %v2851, %v7818
        %vm7839 = vcmp.eq.f32.partialorder %v2851, %v7822
        %7840 = vset.pattern.permute.xlu0 6
        %7841 = vperm.xlu0 %7840, %v2949
        %v7842 = vpop.permute.xlu0 %7841
        %7844 = vset.pattern.permute.xlu0 6
        %7845 = vperm.xlu0 %7844, %v2950
        %v7846 = vpop.permute.xlu0 %7845
        %7848 = vset.pattern.permute.xlu0 6
        %7849 = vperm.xlu0 %7848, %v2951
        %v7850 = vpop.permute.xlu0 %7849
        %7852 = vset.pattern.permute.xlu0 6
        %7853 = vperm.xlu0 %7852, %v2952
        %v7854 = vpop.permute.xlu0 %7853
        %7856 = vset.pattern.permute.xlu0 6
        %7857 = vperm.xlu0 %7856, %v2953
        %v7858 = vpop.permute.xlu0 %7857
        %7860 = vset.pattern.permute.xlu0 6
        %7861 = vperm.xlu0 %7860, %v2954
        %v7862 = vpop.permute.xlu0 %7861
        %7864 = vset.pattern.permute.xlu0 6
        %7865 = vperm.xlu0 %7864, %v2955
        %v7866 = vpop.permute.xlu0 %7865
        %7868 = vset.pattern.permute.xlu0 6
        %7869 = vperm.xlu0 %7868, %v2956
        %v7870 = vpop.permute.xlu0 %7869
        %7872 = vset.pattern.permute.xlu0 6
        %7873 = vperm.xlu0 %7872, %v2957
        %v7874 = vpop.permute.xlu0 %7873
        %7876 = vset.pattern.permute.xlu0 6
        %7877 = vperm.xlu0 %7876, %v2958
        %v7878 = vpop.permute.xlu0 %7877
        %7880 = vset.pattern.permute.xlu0 6
        %7881 = vperm.xlu0 %7880, %v2959
        %v7882 = vpop.permute.xlu0 %7881
        %7884 = vset.pattern.permute.xlu0 6
        %7885 = vperm.xlu0 %7884, %v2960
        %v7886 = vpop.permute.xlu0 %7885
        %7888 = vset.pattern.permute.xlu0 6
        %7889 = vperm.xlu0 %7888, %v2961
        %v7890 = vpop.permute.xlu0 %7889
        %7892 = vset.pattern.permute.xlu0 6
        %7893 = vperm.xlu0 %7892, %v2962
        %v7894 = vpop.permute.xlu0 %7893
        %7896 = vset.pattern.permute.xlu0 6
        %7897 = vperm.xlu0 %7896, %v2963
        %v7898 = vpop.permute.xlu0 %7897
        %7900 = vset.pattern.permute.xlu0 6
        %7901 = vperm.xlu0 %7900, %v2964
        %v7902 = vpop.permute.xlu0 %7901
        %v7904 = vsel %vm7824, %v7842, 0.0
        %v7905 = vsel %vm7825, %v7846, 0.0
        %v7906 = vsel %vm7826, %v7850, 0.0
        %v7907 = vsel %vm7827, %v7854, 0.0
        %v7908 = vsel %vm7828, %v7858, 0.0
        %v7909 = vsel %vm7829, %v7862, 0.0
        %v7910 = vsel %vm7830, %v7866, 0.0
        %v7911 = vsel %vm7831, %v7870, 0.0
        %v7912 = vsel %vm7832, %v7874, 0.0
        %v7913 = vsel %vm7833, %v7878, 0.0
        %v7914 = vsel %vm7834, %v7882, 0.0
        %v7915 = vsel %vm7835, %v7886, 0.0
        %v7916 = vsel %vm7836, %v7890, 0.0
        %v7917 = vsel %vm7837, %v7894, 0.0
        %v7918 = vsel %vm7838, %v7898, 0.0
        %v7919 = vsel %vm7839, %v7902, 0.0
        %7920 = vset.pattern.permute.xlu0 6
        %7921 = vperm.xlu0 %7920, %v3061
        %v7922 = vpop.permute.xlu0 %7921
        %7924 = vset.pattern.permute.xlu0 6
        %7925 = vperm.xlu0 %7924, %v3062
        %v7926 = vpop.permute.xlu0 %7925
        %7928 = vset.pattern.permute.xlu0 6
        %7929 = vperm.xlu0 %7928, %v3063
        %v7930 = vpop.permute.xlu0 %7929
        %7932 = vset.pattern.permute.xlu0 6
        %7933 = vperm.xlu0 %7932, %v3064
        %v7934 = vpop.permute.xlu0 %7933
        %7936 = vset.pattern.permute.xlu0 6
        %7937 = vperm.xlu0 %7936, %v3065
        %v7938 = vpop.permute.xlu0 %7937
        %7940 = vset.pattern.permute.xlu0 6
        %7941 = vperm.xlu0 %7940, %v3066
        %v7942 = vpop.permute.xlu0 %7941
        %7944 = vset.pattern.permute.xlu0 6
        %7945 = vperm.xlu0 %7944, %v3067
        %v7946 = vpop.permute.xlu0 %7945
        %7948 = vset.pattern.permute.xlu0 6
        %7949 = vperm.xlu0 %7948, %v3068
        %v7950 = vpop.permute.xlu0 %7949
        %7952 = vset.pattern.permute.xlu0 6
        %7953 = vperm.xlu0 %7952, %v3069
        %v7954 = vpop.permute.xlu0 %7953
        %7956 = vset.pattern.permute.xlu0 6
        %7957 = vperm.xlu0 %7956, %v3070
        %v7958 = vpop.permute.xlu0 %7957
        %7960 = vset.pattern.permute.xlu0 6
        %7961 = vperm.xlu0 %7960, %v3071
        %v7962 = vpop.permute.xlu0 %7961
        %7964 = vset.pattern.permute.xlu0 6
        %7965 = vperm.xlu0 %7964, %v3072
        %v7966 = vpop.permute.xlu0 %7965
        %7968 = vset.pattern.permute.xlu0 6
        %7969 = vperm.xlu0 %7968, %v3073
        %v7970 = vpop.permute.xlu0 %7969
        %7972 = vset.pattern.permute.xlu0 6
        %7973 = vperm.xlu0 %7972, %v3074
        %v7974 = vpop.permute.xlu0 %7973
        %7976 = vset.pattern.permute.xlu0 6
        %7977 = vperm.xlu0 %7976, %v3075
        %v7978 = vpop.permute.xlu0 %7977
        %7980 = vset.pattern.permute.xlu0 6
        %7981 = vperm.xlu0 %7980, %v3076
        %v7982 = vpop.permute.xlu0 %7981
        %vm7984 = vcmp.eq.f32.partialorder %v2851, %v7922
        %vm7985 = vcmp.eq.f32.partialorder %v2851, %v7926
        %vm7986 = vcmp.eq.f32.partialorder %v2851, %v7930
        %vm7987 = vcmp.eq.f32.partialorder %v2851, %v7934
        %vm7988 = vcmp.eq.f32.partialorder %v2851, %v7938
        %vm7989 = vcmp.eq.f32.partialorder %v2851, %v7942
        %vm7990 = vcmp.eq.f32.partialorder %v2851, %v7946
        %vm7991 = vcmp.eq.f32.partialorder %v2851, %v7950
        %vm7992 = vcmp.eq.f32.partialorder %v2851, %v7954
        %vm7993 = vcmp.eq.f32.partialorder %v2851, %v7958
        %vm7994 = vcmp.eq.f32.partialorder %v2851, %v7962
        %vm7995 = vcmp.eq.f32.partialorder %v2851, %v7966
        %vm7996 = vcmp.eq.f32.partialorder %v2851, %v7970
        %vm7997 = vcmp.eq.f32.partialorder %v2851, %v7974
        %vm7998 = vcmp.eq.f32.partialorder %v2851, %v7978
        %vm7999 = vcmp.eq.f32.partialorder %v2851, %v7982
        %8000 = vset.pattern.permute.xlu0 6
        %8001 = vperm.xlu0 %8000, %v2306
        %v8002 = vpop.permute.xlu0 %8001
        %8004 = vset.pattern.permute.xlu0 6
        %8005 = vperm.xlu0 %8004, %v2307
        %v8006 = vpop.permute.xlu0 %8005
        %8008 = vset.pattern.permute.xlu0 6
        %8009 = vperm.xlu0 %8008, %v2308
        %v8010 = vpop.permute.xlu0 %8009
        %8012 = vset.pattern.permute.xlu0 6
        %8013 = vperm.xlu0 %8012, %v2309
        %v8014 = vpop.permute.xlu0 %8013
        %8016 = vset.pattern.permute.xlu0 6
        %8017 = vperm.xlu0 %8016, %v2310
        %v8018 = vpop.permute.xlu0 %8017
        %8020 = vset.pattern.permute.xlu0 6
        %8021 = vperm.xlu0 %8020, %v2311
        %v8022 = vpop.permute.xlu0 %8021
        %8024 = vset.pattern.permute.xlu0 6
        %8025 = vperm.xlu0 %8024, %v2312
        %v8026 = vpop.permute.xlu0 %8025
        %8028 = vset.pattern.permute.xlu0 6
        %8029 = vperm.xlu0 %8028, %v2313
        %v8030 = vpop.permute.xlu0 %8029
        %8032 = vset.pattern.permute.xlu0 6
        %8033 = vperm.xlu0 %8032, %v2314
        %v8034 = vpop.permute.xlu0 %8033
        %8036 = vset.pattern.permute.xlu0 6
        %8037 = vperm.xlu0 %8036, %v2315
        %v8038 = vpop.permute.xlu0 %8037
        %8040 = vset.pattern.permute.xlu0 6
        %8041 = vperm.xlu0 %8040, %v2316
        %v8042 = vpop.permute.xlu0 %8041
        %8044 = vset.pattern.permute.xlu0 6
        %8045 = vperm.xlu0 %8044, %v2317
        %v8046 = vpop.permute.xlu0 %8045
        %8048 = vset.pattern.permute.xlu0 6
        %8049 = vperm.xlu0 %8048, %v2318
        %v8050 = vpop.permute.xlu0 %8049
        %8052 = vset.pattern.permute.xlu0 6
        %8053 = vperm.xlu0 %8052, %v2319
        %v8054 = vpop.permute.xlu0 %8053
        %8056 = vset.pattern.permute.xlu0 6
        %8057 = vperm.xlu0 %8056, %v2320
        %v8058 = vpop.permute.xlu0 %8057
        %8060 = vset.pattern.permute.xlu0 6
        %8061 = vperm.xlu0 %8060, %v2321
        %v8062 = vpop.permute.xlu0 %8061
        %v8064 = vsel %vm7984, %v8002, 0.0
        %v8065 = vsel %vm7985, %v8006, 0.0
        %v8066 = vsel %vm7986, %v8010, 0.0
        %v8067 = vsel %vm7987, %v8014, 0.0
        %v8068 = vsel %vm7988, %v8018, 0.0
        %v8069 = vsel %vm7989, %v8022, 0.0
        %v8070 = vsel %vm7990, %v8026, 0.0
        %v8071 = vsel %vm7991, %v8030, 0.0
        %v8072 = vsel %vm7992, %v8034, 0.0
        %v8073 = vsel %vm7993, %v8038, 0.0
        %v8074 = vsel %vm7994, %v8042, 0.0
        %v8075 = vsel %vm7995, %v8046, 0.0
        %v8076 = vsel %vm7996, %v8050, 0.0
        %v8077 = vsel %vm7997, %v8054, 0.0
        %v8078 = vsel %vm7998, %v8058, 0.0
        %v8079 = vsel %vm7999, %v8062, 0.0
        %v8080 = vadd.f32 %v7904, %v8064
        %v8081 = vadd.f32 %v7905, %v8065
        %v8082 = vadd.f32 %v7906, %v8066
        %v8083 = vadd.f32 %v7907, %v8067
        %v8084 = vadd.f32 %v7908, %v8068
        %v8085 = vadd.f32 %v7909, %v8069
        %v8086 = vadd.f32 %v7910, %v8070
        %v8087 = vadd.f32 %v7911, %v8071
        %v8088 = vadd.f32 %v7912, %v8072
        %v8089 = vadd.f32 %v7913, %v8073
        %v8090 = vadd.f32 %v7914, %v8074
        %v8091 = vadd.f32 %v7915, %v8075
        %v8092 = vadd.f32 %v7916, %v8076
        %v8093 = vadd.f32 %v7917, %v8077
        %v8094 = vadd.f32 %v7918, %v8078
        %v8095 = vadd.f32 %v7919, %v8079
        %v8097 = vsel %vm3285, %v7744, 0
        %v8100 = vsel %vm3285, %v7745, 0
        %v8103 = vsel %vm3285, %v7746, 0
        %v8106 = vsel %vm3285, %v7747, 0
        %v8109 = vsel %vm3285, %v7748, 0
        %v8112 = vsel %vm3285, %v7749, 0
        %v8115 = vsel %vm3285, %v7750, 0
        %v8118 = vsel %vm3285, %v7751, 0
        %v8121 = vsel %vm3285, %v7752, 0
        %v8124 = vsel %vm3285, %v7753, 0
        %v8127 = vsel %vm3285, %v7754, 0
        %v8130 = vsel %vm3285, %v7755, 0
        %v8133 = vsel %vm3285, %v7756, 0
        %v8136 = vsel %vm3285, %v7757, 0
        %v8139 = vsel %vm3285, %v7758, 0
        %v8142 = vsel %vm3285, %v7759, 0
        %8144 = vmatpush.msra.mxu0 0.0
        %8145 = vmatpush.msra.mxu0 0.0
        %8146 = vmatpush.msra.mxu0 0.0
        %8147 = vmatpush.msra.mxu0 0.0
        %8148 = vmatpush.msra.mxu0 0.0
        %8149 = vmatpush.msra.mxu0 0.0
        %8150 = vmatpush.msra.mxu0 0.0
        %8151 = vmatpush.msra.mxu0 0.0
        %8152 = vmatpush.msra.mxu0 0.0
        %8153 = vmatpush.msra.mxu0 0.0
        %8154 = vmatpush.msra.mxu0 0.0
        %8155 = vmatpush.msra.mxu0 0.0
        %8156 = vmatpush.msra.mxu0 0.0
        %8157 = vmatpush.msra.mxu0 %v3336
        %8158 = vmatpush.msra.mxu0 %v2252
        %8159 = vmatpush.msra.mxu0 %v2251
        %8160 = vmatmul.f32.gmra.mxu0 %v8097
        %v8161 = vpop.f32.mrf.mxu0
        %v8162 = vadd.f32 0.0, %v8161
        %8163 = vmatmul.f32.gmra.mxu0 %v8100
        %v8164 = vpop.f32.mrf.mxu0
        %v8165 = vadd.f32 0.0, %v8164
        %8166 = vmatmul.f32.gmra.mxu0 %v8103
        %v8167 = vpop.f32.mrf.mxu0
        %v8168 = vadd.f32 0.0, %v8167
        %8169 = vmatmul.f32.gmra.mxu0 %v8106
        %v8170 = vpop.f32.mrf.mxu0
        %v8171 = vadd.f32 0.0, %v8170
        %8172 = vmatmul.f32.gmra.mxu0 %v8109
        %v8173 = vpop.f32.mrf.mxu0
        %v8174 = vadd.f32 0.0, %v8173
        %8175 = vmatmul.f32.gmra.mxu0 %v8112
        %v8176 = vpop.f32.mrf.mxu0
        %v8177 = vadd.f32 0.0, %v8176
        %8178 = vmatmul.f32.gmra.mxu0 %v8115
        %v8179 = vpop.f32.mrf.mxu0
        %v8180 = vadd.f32 0.0, %v8179
        %8181 = vmatmul.f32.gmra.mxu0 %v8118
        %v8182 = vpop.f32.mrf.mxu0
        %v8183 = vadd.f32 0.0, %v8182
        %8184 = vmatmul.f32.gmra.mxu0 %v8121
        %v8185 = vpop.f32.mrf.mxu0
        %v8186 = vadd.f32 0.0, %v8185
        %8187 = vmatmul.f32.gmra.mxu0 %v8124
        %v8188 = vpop.f32.mrf.mxu0
        %v8189 = vadd.f32 0.0, %v8188
        %8190 = vmatmul.f32.gmra.mxu0 %v8127
        %v8191 = vpop.f32.mrf.mxu0
        %v8192 = vadd.f32 0.0, %v8191
        %8193 = vmatmul.f32.gmra.mxu0 %v8130
        %v8194 = vpop.f32.mrf.mxu0
        %v8195 = vadd.f32 0.0, %v8194
        %8196 = vmatmul.f32.gmra.mxu0 %v8133
        %v8197 = vpop.f32.mrf.mxu0
        %v8198 = vadd.f32 0.0, %v8197
        %8199 = vmatmul.f32.gmra.mxu0 %v8136
        %v8200 = vpop.f32.mrf.mxu0
        %v8201 = vadd.f32 0.0, %v8200
        %8202 = vmatmul.f32.gmra.mxu0 %v8139
        %v8203 = vpop.f32.mrf.mxu0
        %v8204 = vadd.f32 0.0, %v8203
        %8205 = vmatmul.f32.gmra.mxu0 %v8142
        %v8206 = vpop.f32.mrf.mxu0
        %v8207 = vadd.f32 0.0, %v8206
        %8208 = vdwg.mxu0
        %v8209 = vmul.f32 %v8162, %v8080
        %v8210 = vmul.f32 %v8165, %v8081
        %v8211 = vmul.f32 %v8168, %v8082
        %v8212 = vmul.f32 %v8171, %v8083
        %v8213 = vmul.f32 %v8174, %v8084
        %v8214 = vmul.f32 %v8177, %v8085
        %v8215 = vmul.f32 %v8180, %v8086
        %v8216 = vmul.f32 %v8183, %v8087
        %v8217 = vmul.f32 %v8186, %v8088
        %v8218 = vmul.f32 %v8189, %v8089
        %v8219 = vmul.f32 %v8192, %v8090
        %v8220 = vmul.f32 %v8195, %v8091
        %v8221 = vmul.f32 %v8198, %v8092
        %v8222 = vmul.f32 %v8201, %v8093
        %v8223 = vmul.f32 %v8204, %v8094
        %v8224 = vmul.f32 %v8207, %v8095
        %8225 = vset.pattern.permute.xlu0 7
        %8226 = vperm.xlu0 %8225, %v2258
        %v8227 = vpop.permute.xlu0 %8226
        %8229 = vset.pattern.permute.xlu0 7
        %8230 = vperm.xlu0 %8229, %v2259
        %v8231 = vpop.permute.xlu0 %8230
        %8233 = vset.pattern.permute.xlu0 7
        %8234 = vperm.xlu0 %8233, %v2260
        %v8235 = vpop.permute.xlu0 %8234
        %8237 = vset.pattern.permute.xlu0 7
        %8238 = vperm.xlu0 %8237, %v2261
        %v8239 = vpop.permute.xlu0 %8238
        %8241 = vset.pattern.permute.xlu0 7
        %8242 = vperm.xlu0 %8241, %v2262
        %v8243 = vpop.permute.xlu0 %8242
        %8245 = vset.pattern.permute.xlu0 7
        %8246 = vperm.xlu0 %8245, %v2263
        %v8247 = vpop.permute.xlu0 %8246
        %8249 = vset.pattern.permute.xlu0 7
        %8250 = vperm.xlu0 %8249, %v2264
        %v8251 = vpop.permute.xlu0 %8250
        %8253 = vset.pattern.permute.xlu0 7
        %8254 = vperm.xlu0 %8253, %v2265
        %v8255 = vpop.permute.xlu0 %8254
        %8257 = vset.pattern.permute.xlu0 7
        %8258 = vperm.xlu0 %8257, %v2266
        %v8259 = vpop.permute.xlu0 %8258
        %8261 = vset.pattern.permute.xlu0 7
        %8262 = vperm.xlu0 %8261, %v2267
        %v8263 = vpop.permute.xlu0 %8262
        %8265 = vset.pattern.permute.xlu0 7
        %8266 = vperm.xlu0 %8265, %v2268
        %v8267 = vpop.permute.xlu0 %8266
        %8269 = vset.pattern.permute.xlu0 7
        %8270 = vperm.xlu0 %8269, %v2269
        %v8271 = vpop.permute.xlu0 %8270
        %8273 = vset.pattern.permute.xlu0 7
        %8274 = vperm.xlu0 %8273, %v2270
        %v8275 = vpop.permute.xlu0 %8274
        %8277 = vset.pattern.permute.xlu0 7
        %8278 = vperm.xlu0 %8277, %v2271
        %v8279 = vpop.permute.xlu0 %8278
        %8281 = vset.pattern.permute.xlu0 7
        %8282 = vperm.xlu0 %8281, %v2272
        %v8283 = vpop.permute.xlu0 %8282
        %8285 = vset.pattern.permute.xlu0 7
        %8286 = vperm.xlu0 %8285, %v2273
        %v8287 = vpop.permute.xlu0 %8286
        %vm8289 = vcmp.eq.f32.partialorder %v2256, %v8227
        %vm8290 = vcmp.eq.f32.partialorder %v2256, %v8231
        %vm8291 = vcmp.eq.f32.partialorder %v2256, %v8235
        %vm8292 = vcmp.eq.f32.partialorder %v2256, %v8239
        %vm8293 = vcmp.eq.f32.partialorder %v2256, %v8243
        %vm8294 = vcmp.eq.f32.partialorder %v2256, %v8247
        %vm8295 = vcmp.eq.f32.partialorder %v2256, %v8251
        %vm8296 = vcmp.eq.f32.partialorder %v2256, %v8255
        %vm8297 = vcmp.eq.f32.partialorder %v2256, %v8259
        %vm8298 = vcmp.eq.f32.partialorder %v2256, %v8263
        %vm8299 = vcmp.eq.f32.partialorder %v2256, %v8267
        %vm8300 = vcmp.eq.f32.partialorder %v2256, %v8271
        %vm8301 = vcmp.eq.f32.partialorder %v2256, %v8275
        %vm8302 = vcmp.eq.f32.partialorder %v2256, %v8279
        %vm8303 = vcmp.eq.f32.partialorder %v2256, %v8283
        %vm8304 = vcmp.eq.f32.partialorder %v2256, %v8287
        %8305 = vset.pattern.permute.xlu0 7
        %8306 = vperm.xlu0 %8305, %v2402
        %v8307 = vpop.permute.xlu0 %8306
        %8309 = vset.pattern.permute.xlu0 7
        %8310 = vperm.xlu0 %8309, %v2403
        %v8311 = vpop.permute.xlu0 %8310
        %8313 = vset.pattern.permute.xlu0 7
        %8314 = vperm.xlu0 %8313, %v2404
        %v8315 = vpop.permute.xlu0 %8314
        %8317 = vset.pattern.permute.xlu0 7
        %8318 = vperm.xlu0 %8317, %v2405
        %v8319 = vpop.permute.xlu0 %8318
        %8321 = vset.pattern.permute.xlu0 7
        %8322 = vperm.xlu0 %8321, %v2406
        %v8323 = vpop.permute.xlu0 %8322
        %8325 = vset.pattern.permute.xlu0 7
        %8326 = vperm.xlu0 %8325, %v2407
        %v8327 = vpop.permute.xlu0 %8326
        %8329 = vset.pattern.permute.xlu0 7
        %8330 = vperm.xlu0 %8329, %v2408
        %v8331 = vpop.permute.xlu0 %8330
        %8333 = vset.pattern.permute.xlu0 7
        %8334 = vperm.xlu0 %8333, %v2409
        %v8335 = vpop.permute.xlu0 %8334
        %8337 = vset.pattern.permute.xlu0 7
        %8338 = vperm.xlu0 %8337, %v2410
        %v8339 = vpop.permute.xlu0 %8338
        %8341 = vset.pattern.permute.xlu0 7
        %8342 = vperm.xlu0 %8341, %v2411
        %v8343 = vpop.permute.xlu0 %8342
        %8345 = vset.pattern.permute.xlu0 7
        %8346 = vperm.xlu0 %8345, %v2412
        %v8347 = vpop.permute.xlu0 %8346
        %8349 = vset.pattern.permute.xlu0 7
        %8350 = vperm.xlu0 %8349, %v2413
        %v8351 = vpop.permute.xlu0 %8350
        %8353 = vset.pattern.permute.xlu0 7
        %8354 = vperm.xlu0 %8353, %v2414
        %v8355 = vpop.permute.xlu0 %8354
        %8357 = vset.pattern.permute.xlu0 7
        %8358 = vperm.xlu0 %8357, %v2415
        %v8359 = vpop.permute.xlu0 %8358
        %8361 = vset.pattern.permute.xlu0 7
        %8362 = vperm.xlu0 %8361, %v2416
        %v8363 = vpop.permute.xlu0 %8362
        %8365 = vset.pattern.permute.xlu0 7
        %8366 = vperm.xlu0 %8365, %v2417
        %v8367 = vpop.permute.xlu0 %8366
        %v8369 = vsel %vm8289, %v8307, 0.0
        %v8370 = vsel %vm8290, %v8311, 0.0
        %v8371 = vsel %vm8291, %v8315, 0.0
        %v8372 = vsel %vm8292, %v8319, 0.0
        %v8373 = vsel %vm8293, %v8323, 0.0
        %v8374 = vsel %vm8294, %v8327, 0.0
        %v8375 = vsel %vm8295, %v8331, 0.0
        %v8376 = vsel %vm8296, %v8335, 0.0
        %v8377 = vsel %vm8297, %v8339, 0.0
        %v8378 = vsel %vm8298, %v8343, 0.0
        %v8379 = vsel %vm8299, %v8347, 0.0
        %v8380 = vsel %vm8300, %v8351, 0.0
        %v8381 = vsel %vm8301, %v8355, 0.0
        %v8382 = vsel %vm8302, %v8359, 0.0
        %v8383 = vsel %vm8303, %v8363, 0.0
        %v8384 = vsel %vm8304, %v8367, 0.0
        %8385 = vset.pattern.permute.xlu0 7
        %8386 = vperm.xlu0 %8385, %v2626
        %v8387 = vpop.permute.xlu0 %8386
        %8389 = vset.pattern.permute.xlu0 7
        %8390 = vperm.xlu0 %8389, %v2627
        %v8391 = vpop.permute.xlu0 %8390
        %8393 = vset.pattern.permute.xlu0 7
        %8394 = vperm.xlu0 %8393, %v2628
        %v8395 = vpop.permute.xlu0 %8394
        %8397 = vset.pattern.permute.xlu0 7
        %8398 = vperm.xlu0 %8397, %v2629
        %v8399 = vpop.permute.xlu0 %8398
        %8401 = vset.pattern.permute.xlu0 7
        %8402 = vperm.xlu0 %8401, %v2630
        %v8403 = vpop.permute.xlu0 %8402
        %8405 = vset.pattern.permute.xlu0 7
        %8406 = vperm.xlu0 %8405, %v2631
        %v8407 = vpop.permute.xlu0 %8406
        %8409 = vset.pattern.permute.xlu0 7
        %8410 = vperm.xlu0 %8409, %v2632
        %v8411 = vpop.permute.xlu0 %8410
        %8413 = vset.pattern.permute.xlu0 7
        %8414 = vperm.xlu0 %8413, %v2633
        %v8415 = vpop.permute.xlu0 %8414
        %8417 = vset.pattern.permute.xlu0 7
        %8418 = vperm.xlu0 %8417, %v2634
        %v8419 = vpop.permute.xlu0 %8418
        %8421 = vset.pattern.permute.xlu0 7
        %8422 = vperm.xlu0 %8421, %v2635
        %v8423 = vpop.permute.xlu0 %8422
        %8425 = vset.pattern.permute.xlu0 7
        %8426 = vperm.xlu0 %8425, %v2636
        %v8427 = vpop.permute.xlu0 %8426
        %8429 = vset.pattern.permute.xlu0 7
        %8430 = vperm.xlu0 %8429, %v2637
        %v8431 = vpop.permute.xlu0 %8430
        %8433 = vset.pattern.permute.xlu0 7
        %8434 = vperm.xlu0 %8433, %v2638
        %v8435 = vpop.permute.xlu0 %8434
        %8437 = vset.pattern.permute.xlu0 7
        %8438 = vperm.xlu0 %8437, %v2639
        %v8439 = vpop.permute.xlu0 %8438
        %8441 = vset.pattern.permute.xlu0 7
        %8442 = vperm.xlu0 %8441, %v2640
        %v8443 = vpop.permute.xlu0 %8442
        %8445 = vset.pattern.permute.xlu0 7
        %8446 = vperm.xlu0 %8445, %v2641
        %v8447 = vpop.permute.xlu0 %8446
        %vm8449 = vcmp.eq.f32.partialorder %v2256, %v8387
        %vm8450 = vcmp.eq.f32.partialorder %v2256, %v8391
        %vm8451 = vcmp.eq.f32.partialorder %v2256, %v8395
        %vm8452 = vcmp.eq.f32.partialorder %v2256, %v8399
        %vm8453 = vcmp.eq.f32.partialorder %v2256, %v8403
        %vm8454 = vcmp.eq.f32.partialorder %v2256, %v8407
        %vm8455 = vcmp.eq.f32.partialorder %v2256, %v8411
        %vm8456 = vcmp.eq.f32.partialorder %v2256, %v8415
        %vm8457 = vcmp.eq.f32.partialorder %v2256, %v8419
        %vm8458 = vcmp.eq.f32.partialorder %v2256, %v8423
        %vm8459 = vcmp.eq.f32.partialorder %v2256, %v8427
        %vm8460 = vcmp.eq.f32.partialorder %v2256, %v8431
        %vm8461 = vcmp.eq.f32.partialorder %v2256, %v8435
        %vm8462 = vcmp.eq.f32.partialorder %v2256, %v8439
        %vm8463 = vcmp.eq.f32.partialorder %v2256, %v8443
        %vm8464 = vcmp.eq.f32.partialorder %v2256, %v8447
        %8465 = vset.pattern.permute.xlu0 7
        %8466 = vperm.xlu0 %8465, %v2418
        %v8467 = vpop.permute.xlu0 %8466
        %8469 = vset.pattern.permute.xlu0 7
        %8470 = vperm.xlu0 %8469, %v2419
        %v8471 = vpop.permute.xlu0 %8470
        %8473 = vset.pattern.permute.xlu0 7
        %8474 = vperm.xlu0 %8473, %v2420
        %v8475 = vpop.permute.xlu0 %8474
        %8477 = vset.pattern.permute.xlu0 7
        %8478 = vperm.xlu0 %8477, %v2421
        %v8479 = vpop.permute.xlu0 %8478
        %8481 = vset.pattern.permute.xlu0 7
        %8482 = vperm.xlu0 %8481, %v2422
        %v8483 = vpop.permute.xlu0 %8482
        %8485 = vset.pattern.permute.xlu0 7
        %8486 = vperm.xlu0 %8485, %v2423
        %v8487 = vpop.permute.xlu0 %8486
        %8489 = vset.pattern.permute.xlu0 7
        %8490 = vperm.xlu0 %8489, %v2424
        %v8491 = vpop.permute.xlu0 %8490
        %8493 = vset.pattern.permute.xlu0 7
        %8494 = vperm.xlu0 %8493, %v2425
        %v8495 = vpop.permute.xlu0 %8494
        %8497 = vset.pattern.permute.xlu0 7
        %8498 = vperm.xlu0 %8497, %v2426
        %v8499 = vpop.permute.xlu0 %8498
        %8501 = vset.pattern.permute.xlu0 7
        %8502 = vperm.xlu0 %8501, %v2427
        %v8503 = vpop.permute.xlu0 %8502
        %8505 = vset.pattern.permute.xlu0 7
        %8506 = vperm.xlu0 %8505, %v2428
        %v8507 = vpop.permute.xlu0 %8506
        %8509 = vset.pattern.permute.xlu0 7
        %8510 = vperm.xlu0 %8509, %v2429
        %v8511 = vpop.permute.xlu0 %8510
        %8513 = vset.pattern.permute.xlu0 7
        %8514 = vperm.xlu0 %8513, %v2430
        %v8515 = vpop.permute.xlu0 %8514
        %8517 = vset.pattern.permute.xlu0 7
        %8518 = vperm.xlu0 %8517, %v2431
        %v8519 = vpop.permute.xlu0 %8518
        %8521 = vset.pattern.permute.xlu0 7
        %8522 = vperm.xlu0 %8521, %v2432
        %v8523 = vpop.permute.xlu0 %8522
        %8525 = vset.pattern.permute.xlu0 7
        %8526 = vperm.xlu0 %8525, %v2433
        %v8527 = vpop.permute.xlu0 %8526
        %v8529 = vsel %vm8449, %v8467, 0.0
        %v8530 = vsel %vm8450, %v8471, 0.0
        %v8531 = vsel %vm8451, %v8475, 0.0
        %v8532 = vsel %vm8452, %v8479, 0.0
        %v8533 = vsel %vm8453, %v8483, 0.0
        %v8534 = vsel %vm8454, %v8487, 0.0
        %v8535 = vsel %vm8455, %v8491, 0.0
        %v8536 = vsel %vm8456, %v8495, 0.0
        %v8537 = vsel %vm8457, %v8499, 0.0
        %v8538 = vsel %vm8458, %v8503, 0.0
        %v8539 = vsel %vm8459, %v8507, 0.0
        %v8540 = vsel %vm8460, %v8511, 0.0
        %v8541 = vsel %vm8461, %v8515, 0.0
        %v8542 = vsel %vm8462, %v8519, 0.0
        %v8543 = vsel %vm8463, %v8523, 0.0
        %v8544 = vsel %vm8464, %v8527, 0.0
        %v8545 = vadd.f32 %v8369, %v8529
        %v8546 = vadd.f32 %v8370, %v8530
        %v8547 = vadd.f32 %v8371, %v8531
        %v8548 = vadd.f32 %v8372, %v8532
        %v8549 = vadd.f32 %v8373, %v8533
        %v8550 = vadd.f32 %v8374, %v8534
        %v8551 = vadd.f32 %v8375, %v8535
        %v8552 = vadd.f32 %v8376, %v8536
        %v8553 = vadd.f32 %v8377, %v8537
        %v8554 = vadd.f32 %v8378, %v8538
        %v8555 = vadd.f32 %v8379, %v8539
        %v8556 = vadd.f32 %v8380, %v8540
        %v8557 = vadd.f32 %v8381, %v8541
        %v8558 = vadd.f32 %v8382, %v8542
        %v8559 = vadd.f32 %v8383, %v8543
        %v8560 = vadd.f32 %v8384, %v8544
        %8561 = vset.pattern.permute.xlu0 7
        %8562 = vperm.xlu0 %8561, %v2274
        %v8563 = vpop.permute.xlu0 %8562
        %8565 = vset.pattern.permute.xlu0 7
        %8566 = vperm.xlu0 %8565, %v2275
        %v8567 = vpop.permute.xlu0 %8566
        %8569 = vset.pattern.permute.xlu0 7
        %8570 = vperm.xlu0 %8569, %v2276
        %v8571 = vpop.permute.xlu0 %8570
        %8573 = vset.pattern.permute.xlu0 7
        %8574 = vperm.xlu0 %8573, %v2277
        %v8575 = vpop.permute.xlu0 %8574
        %8577 = vset.pattern.permute.xlu0 7
        %8578 = vperm.xlu0 %8577, %v2278
        %v8579 = vpop.permute.xlu0 %8578
        %8581 = vset.pattern.permute.xlu0 7
        %8582 = vperm.xlu0 %8581, %v2279
        %v8583 = vpop.permute.xlu0 %8582
        %8585 = vset.pattern.permute.xlu0 7
        %8586 = vperm.xlu0 %8585, %v2280
        %v8587 = vpop.permute.xlu0 %8586
        %8589 = vset.pattern.permute.xlu0 7
        %8590 = vperm.xlu0 %8589, %v2281
        %v8591 = vpop.permute.xlu0 %8590
        %8593 = vset.pattern.permute.xlu0 7
        %8594 = vperm.xlu0 %8593, %v2282
        %v8595 = vpop.permute.xlu0 %8594
        %8597 = vset.pattern.permute.xlu0 7
        %8598 = vperm.xlu0 %8597, %v2283
        %v8599 = vpop.permute.xlu0 %8598
        %8601 = vset.pattern.permute.xlu0 7
        %8602 = vperm.xlu0 %8601, %v2284
        %v8603 = vpop.permute.xlu0 %8602
        %8605 = vset.pattern.permute.xlu0 7
        %8606 = vperm.xlu0 %8605, %v2285
        %v8607 = vpop.permute.xlu0 %8606
        %8609 = vset.pattern.permute.xlu0 7
        %8610 = vperm.xlu0 %8609, %v2286
        %v8611 = vpop.permute.xlu0 %8610
        %8613 = vset.pattern.permute.xlu0 7
        %8614 = vperm.xlu0 %8613, %v2287
        %v8615 = vpop.permute.xlu0 %8614
        %8617 = vset.pattern.permute.xlu0 7
        %8618 = vperm.xlu0 %8617, %v2288
        %v8619 = vpop.permute.xlu0 %8618
        %8621 = vset.pattern.permute.xlu0 7
        %8622 = vperm.xlu0 %8621, %v2289
        %v8623 = vpop.permute.xlu0 %8622
        %vm8625 = vcmp.eq.f32.partialorder %v2851, %v8563
        %vm8626 = vcmp.eq.f32.partialorder %v2851, %v8567
        %vm8627 = vcmp.eq.f32.partialorder %v2851, %v8571
        %vm8628 = vcmp.eq.f32.partialorder %v2851, %v8575
        %vm8629 = vcmp.eq.f32.partialorder %v2851, %v8579
        %vm8630 = vcmp.eq.f32.partialorder %v2851, %v8583
        %vm8631 = vcmp.eq.f32.partialorder %v2851, %v8587
        %vm8632 = vcmp.eq.f32.partialorder %v2851, %v8591
        %vm8633 = vcmp.eq.f32.partialorder %v2851, %v8595
        %vm8634 = vcmp.eq.f32.partialorder %v2851, %v8599
        %vm8635 = vcmp.eq.f32.partialorder %v2851, %v8603
        %vm8636 = vcmp.eq.f32.partialorder %v2851, %v8607
        %vm8637 = vcmp.eq.f32.partialorder %v2851, %v8611
        %vm8638 = vcmp.eq.f32.partialorder %v2851, %v8615
        %vm8639 = vcmp.eq.f32.partialorder %v2851, %v8619
        %vm8640 = vcmp.eq.f32.partialorder %v2851, %v8623
        %8641 = vset.pattern.permute.xlu0 7
        %8642 = vperm.xlu0 %8641, %v2949
        %v8643 = vpop.permute.xlu0 %8642
        %8645 = vset.pattern.permute.xlu0 7
        %8646 = vperm.xlu0 %8645, %v2950
        %v8647 = vpop.permute.xlu0 %8646
        %8649 = vset.pattern.permute.xlu0 7
        %8650 = vperm.xlu0 %8649, %v2951
        %v8651 = vpop.permute.xlu0 %8650
        %8653 = vset.pattern.permute.xlu0 7
        %8654 = vperm.xlu0 %8653, %v2952
        %v8655 = vpop.permute.xlu0 %8654
        %8657 = vset.pattern.permute.xlu0 7
        %8658 = vperm.xlu0 %8657, %v2953
        %v8659 = vpop.permute.xlu0 %8658
        %8661 = vset.pattern.permute.xlu0 7
        %8662 = vperm.xlu0 %8661, %v2954
        %v8663 = vpop.permute.xlu0 %8662
        %8665 = vset.pattern.permute.xlu0 7
        %8666 = vperm.xlu0 %8665, %v2955
        %v8667 = vpop.permute.xlu0 %8666
        %8669 = vset.pattern.permute.xlu0 7
        %8670 = vperm.xlu0 %8669, %v2956
        %v8671 = vpop.permute.xlu0 %8670
        %8673 = vset.pattern.permute.xlu0 7
        %8674 = vperm.xlu0 %8673, %v2957
        %v8675 = vpop.permute.xlu0 %8674
        %8677 = vset.pattern.permute.xlu0 7
        %8678 = vperm.xlu0 %8677, %v2958
        %v8679 = vpop.permute.xlu0 %8678
        %8681 = vset.pattern.permute.xlu0 7
        %8682 = vperm.xlu0 %8681, %v2959
        %v8683 = vpop.permute.xlu0 %8682
        %8685 = vset.pattern.permute.xlu0 7
        %8686 = vperm.xlu0 %8685, %v2960
        %v8687 = vpop.permute.xlu0 %8686
        %8689 = vset.pattern.permute.xlu0 7
        %8690 = vperm.xlu0 %8689, %v2961
        %v8691 = vpop.permute.xlu0 %8690
        %8693 = vset.pattern.permute.xlu0 7
        %8694 = vperm.xlu0 %8693, %v2962
        %v8695 = vpop.permute.xlu0 %8694
        %8697 = vset.pattern.permute.xlu0 7
        %8698 = vperm.xlu0 %8697, %v2963
        %v8699 = vpop.permute.xlu0 %8698
        %8701 = vset.pattern.permute.xlu0 7
        %8702 = vperm.xlu0 %8701, %v2964
        %v8703 = vpop.permute.xlu0 %8702
        %v8705 = vsel %vm8625, %v8643, 0.0
        %v8706 = vsel %vm8626, %v8647, 0.0
        %v8707 = vsel %vm8627, %v8651, 0.0
        %v8708 = vsel %vm8628, %v8655, 0.0
        %v8709 = vsel %vm8629, %v8659, 0.0
        %v8710 = vsel %vm8630, %v8663, 0.0
        %v8711 = vsel %vm8631, %v8667, 0.0
        %v8712 = vsel %vm8632, %v8671, 0.0
        %v8713 = vsel %vm8633, %v8675, 0.0
        %v8714 = vsel %vm8634, %v8679, 0.0
        %v8715 = vsel %vm8635, %v8683, 0.0
        %v8716 = vsel %vm8636, %v8687, 0.0
        %v8717 = vsel %vm8637, %v8691, 0.0
        %v8718 = vsel %vm8638, %v8695, 0.0
        %v8719 = vsel %vm8639, %v8699, 0.0
        %v8720 = vsel %vm8640, %v8703, 0.0
        %8721 = vset.pattern.permute.xlu0 7
        %8722 = vperm.xlu0 %8721, %v3061
        %v8723 = vpop.permute.xlu0 %8722
        %8725 = vset.pattern.permute.xlu0 7
        %8726 = vperm.xlu0 %8725, %v3062
        %v8727 = vpop.permute.xlu0 %8726
        %8729 = vset.pattern.permute.xlu0 7
        %8730 = vperm.xlu0 %8729, %v3063
        %v8731 = vpop.permute.xlu0 %8730
        %8733 = vset.pattern.permute.xlu0 7
        %8734 = vperm.xlu0 %8733, %v3064
        %v8735 = vpop.permute.xlu0 %8734
        %8737 = vset.pattern.permute.xlu0 7
        %8738 = vperm.xlu0 %8737, %v3065
        %v8739 = vpop.permute.xlu0 %8738
        %8741 = vset.pattern.permute.xlu0 7
        %8742 = vperm.xlu0 %8741, %v3066
        %v8743 = vpop.permute.xlu0 %8742
        %8745 = vset.pattern.permute.xlu0 7
        %8746 = vperm.xlu0 %8745, %v3067
        %v8747 = vpop.permute.xlu0 %8746
        %8749 = vset.pattern.permute.xlu0 7
        %8750 = vperm.xlu0 %8749, %v3068
        %v8751 = vpop.permute.xlu0 %8750
        %8753 = vset.pattern.permute.xlu0 7
        %8754 = vperm.xlu0 %8753, %v3069
        %v8755 = vpop.permute.xlu0 %8754
        %8757 = vset.pattern.permute.xlu0 7
        %8758 = vperm.xlu0 %8757, %v3070
        %v8759 = vpop.permute.xlu0 %8758
        %8761 = vset.pattern.permute.xlu0 7
        %8762 = vperm.xlu0 %8761, %v3071
        %v8763 = vpop.permute.xlu0 %8762
        %8765 = vset.pattern.permute.xlu0 7
        %8766 = vperm.xlu0 %8765, %v3072
        %v8767 = vpop.permute.xlu0 %8766
        %8769 = vset.pattern.permute.xlu0 7
        %8770 = vperm.xlu0 %8769, %v3073
        %v8771 = vpop.permute.xlu0 %8770
        %8773 = vset.pattern.permute.xlu0 7
        %8774 = vperm.xlu0 %8773, %v3074
        %v8775 = vpop.permute.xlu0 %8774
        %8777 = vset.pattern.permute.xlu0 7
        %8778 = vperm.xlu0 %8777, %v3075
        %v8779 = vpop.permute.xlu0 %8778
        %8781 = vset.pattern.permute.xlu0 7
        %8782 = vperm.xlu0 %8781, %v3076
        %v8783 = vpop.permute.xlu0 %8782
        %vm8785 = vcmp.eq.f32.partialorder %v2851, %v8723
        %vm8786 = vcmp.eq.f32.partialorder %v2851, %v8727
        %vm8787 = vcmp.eq.f32.partialorder %v2851, %v8731
        %vm8788 = vcmp.eq.f32.partialorder %v2851, %v8735
        %vm8789 = vcmp.eq.f32.partialorder %v2851, %v8739
        %vm8790 = vcmp.eq.f32.partialorder %v2851, %v8743
        %vm8791 = vcmp.eq.f32.partialorder %v2851, %v8747
        %vm8792 = vcmp.eq.f32.partialorder %v2851, %v8751
        %vm8793 = vcmp.eq.f32.partialorder %v2851, %v8755
        %vm8794 = vcmp.eq.f32.partialorder %v2851, %v8759
        %vm8795 = vcmp.eq.f32.partialorder %v2851, %v8763
        %vm8796 = vcmp.eq.f32.partialorder %v2851, %v8767
        %vm8797 = vcmp.eq.f32.partialorder %v2851, %v8771
        %vm8798 = vcmp.eq.f32.partialorder %v2851, %v8775
        %vm8799 = vcmp.eq.f32.partialorder %v2851, %v8779
        %vm8800 = vcmp.eq.f32.partialorder %v2851, %v8783
        %8801 = vset.pattern.permute.xlu0 7
        %8802 = vperm.xlu0 %8801, %v2306
        %v8803 = vpop.permute.xlu0 %8802
        %8805 = vset.pattern.permute.xlu0 7
        %8806 = vperm.xlu0 %8805, %v2307
        %v8807 = vpop.permute.xlu0 %8806
        %8809 = vset.pattern.permute.xlu0 7
        %8810 = vperm.xlu0 %8809, %v2308
        %v8811 = vpop.permute.xlu0 %8810
        %8813 = vset.pattern.permute.xlu0 7
        %8814 = vperm.xlu0 %8813, %v2309
        %v8815 = vpop.permute.xlu0 %8814
        %8817 = vset.pattern.permute.xlu0 7
        %8818 = vperm.xlu0 %8817, %v2310
        %v8819 = vpop.permute.xlu0 %8818
        %8821 = vset.pattern.permute.xlu0 7
        %8822 = vperm.xlu0 %8821, %v2311
        %v8823 = vpop.permute.xlu0 %8822
        %8825 = vset.pattern.permute.xlu0 7
        %8826 = vperm.xlu0 %8825, %v2312
        %v8827 = vpop.permute.xlu0 %8826
        %8829 = vset.pattern.permute.xlu0 7
        %8830 = vperm.xlu0 %8829, %v2313
        %v8831 = vpop.permute.xlu0 %8830
        %8833 = vset.pattern.permute.xlu0 7
        %8834 = vperm.xlu0 %8833, %v2314
        %v8835 = vpop.permute.xlu0 %8834
        %8837 = vset.pattern.permute.xlu0 7
        %8838 = vperm.xlu0 %8837, %v2315
        %v8839 = vpop.permute.xlu0 %8838
        %8841 = vset.pattern.permute.xlu0 7
        %8842 = vperm.xlu0 %8841, %v2316
        %v8843 = vpop.permute.xlu0 %8842
        %8845 = vset.pattern.permute.xlu0 7
        %8846 = vperm.xlu0 %8845, %v2317
        %v8847 = vpop.permute.xlu0 %8846
        %8849 = vset.pattern.permute.xlu0 7
        %8850 = vperm.xlu0 %8849, %v2318
        %v8851 = vpop.permute.xlu0 %8850
        %8853 = vset.pattern.permute.xlu0 7
        %8854 = vperm.xlu0 %8853, %v2319
        %v8855 = vpop.permute.xlu0 %8854
        %8857 = vset.pattern.permute.xlu0 7
        %8858 = vperm.xlu0 %8857, %v2320
        %v8859 = vpop.permute.xlu0 %8858
        %8861 = vset.pattern.permute.xlu0 7
        %8862 = vperm.xlu0 %8861, %v2321
        %v8863 = vpop.permute.xlu0 %8862
        %v8865 = vsel %vm8785, %v8803, 0.0
        %v8866 = vsel %vm8786, %v8807, 0.0
        %v8867 = vsel %vm8787, %v8811, 0.0
        %v8868 = vsel %vm8788, %v8815, 0.0
        %v8869 = vsel %vm8789, %v8819, 0.0
        %v8870 = vsel %vm8790, %v8823, 0.0
        %v8871 = vsel %vm8791, %v8827, 0.0
        %v8872 = vsel %vm8792, %v8831, 0.0
        %v8873 = vsel %vm8793, %v8835, 0.0
        %v8874 = vsel %vm8794, %v8839, 0.0
        %v8875 = vsel %vm8795, %v8843, 0.0
        %v8876 = vsel %vm8796, %v8847, 0.0
        %v8877 = vsel %vm8797, %v8851, 0.0
        %v8878 = vsel %vm8798, %v8855, 0.0
        %v8879 = vsel %vm8799, %v8859, 0.0
        %v8880 = vsel %vm8800, %v8863, 0.0
        %v8881 = vadd.f32 %v8705, %v8865
        %v8882 = vadd.f32 %v8706, %v8866
        %v8883 = vadd.f32 %v8707, %v8867
        %v8884 = vadd.f32 %v8708, %v8868
        %v8885 = vadd.f32 %v8709, %v8869
        %v8886 = vadd.f32 %v8710, %v8870
        %v8887 = vadd.f32 %v8711, %v8871
        %v8888 = vadd.f32 %v8712, %v8872
        %v8889 = vadd.f32 %v8713, %v8873
        %v8890 = vadd.f32 %v8714, %v8874
        %v8891 = vadd.f32 %v8715, %v8875
        %v8892 = vadd.f32 %v8716, %v8876
        %v8893 = vadd.f32 %v8717, %v8877
        %v8894 = vadd.f32 %v8718, %v8878
        %v8895 = vadd.f32 %v8719, %v8879
        %v8896 = vadd.f32 %v8720, %v8880
        %v8898 = vsel %vm3285, %v8545, 0
        %v8901 = vsel %vm3285, %v8546, 0
        %v8904 = vsel %vm3285, %v8547, 0
        %v8907 = vsel %vm3285, %v8548, 0
        %v8910 = vsel %vm3285, %v8549, 0
        %v8913 = vsel %vm3285, %v8550, 0
        %v8916 = vsel %vm3285, %v8551, 0
        %v8919 = vsel %vm3285, %v8552, 0
        %v8922 = vsel %vm3285, %v8553, 0
        %v8925 = vsel %vm3285, %v8554, 0
        %v8928 = vsel %vm3285, %v8555, 0
        %v8931 = vsel %vm3285, %v8556, 0
        %v8934 = vsel %vm3285, %v8557, 0
        %v8937 = vsel %vm3285, %v8558, 0
        %v8940 = vsel %vm3285, %v8559, 0
        %v8943 = vsel %vm3285, %v8560, 0
        %8945 = vmatpush.msra.mxu0 0.0
        %8946 = vmatpush.msra.mxu0 0.0
        %8947 = vmatpush.msra.mxu0 0.0
        %8948 = vmatpush.msra.mxu0 0.0
        %8949 = vmatpush.msra.mxu0 0.0
        %8950 = vmatpush.msra.mxu0 0.0
        %8951 = vmatpush.msra.mxu0 0.0
        %8952 = vmatpush.msra.mxu0 0.0
        %8953 = vmatpush.msra.mxu0 0.0
        %8954 = vmatpush.msra.mxu0 0.0
        %8955 = vmatpush.msra.mxu0 0.0
        %8956 = vmatpush.msra.mxu0 0.0
        %8957 = vmatpush.msra.mxu0 0.0
        %8958 = vmatpush.msra.mxu0 %v3336
        %8959 = vmatpush.msra.mxu0 %v2252
        %8960 = vmatpush.msra.mxu0 %v2251
        %8961 = vmatmul.f32.gmra.mxu0 %v8898
        %v8962 = vpop.f32.mrf.mxu0
        %v8963 = vadd.f32 0.0, %v8962
        %8964 = vmatmul.f32.gmra.mxu0 %v8901
        %v8965 = vpop.f32.mrf.mxu0
        %v8966 = vadd.f32 0.0, %v8965
        %8967 = vmatmul.f32.gmra.mxu0 %v8904
        %v8968 = vpop.f32.mrf.mxu0
        %v8969 = vadd.f32 0.0, %v8968
        %8970 = vmatmul.f32.gmra.mxu0 %v8907
        %v8971 = vpop.f32.mrf.mxu0
        %v8972 = vadd.f32 0.0, %v8971
        %8973 = vmatmul.f32.gmra.mxu0 %v8910
        %v8974 = vpop.f32.mrf.mxu0
        %v8975 = vadd.f32 0.0, %v8974
        %8976 = vmatmul.f32.gmra.mxu0 %v8913
        %v8977 = vpop.f32.mrf.mxu0
        %v8978 = vadd.f32 0.0, %v8977
        %8979 = vmatmul.f32.gmra.mxu0 %v8916
        %v8980 = vpop.f32.mrf.mxu0
        %v8981 = vadd.f32 0.0, %v8980
        %8982 = vmatmul.f32.gmra.mxu0 %v8919
        %v8983 = vpop.f32.mrf.mxu0
        %v8984 = vadd.f32 0.0, %v8983
        %8985 = vmatmul.f32.gmra.mxu0 %v8922
        %v8986 = vpop.f32.mrf.mxu0
        %v8987 = vadd.f32 0.0, %v8986
        %8988 = vmatmul.f32.gmra.mxu0 %v8925
        %v8989 = vpop.f32.mrf.mxu0
        %v8990 = vadd.f32 0.0, %v8989
        %8991 = vmatmul.f32.gmra.mxu0 %v8928
        %v8992 = vpop.f32.mrf.mxu0
        %v8993 = vadd.f32 0.0, %v8992
        %8994 = vmatmul.f32.gmra.mxu0 %v8931
        %v8995 = vpop.f32.mrf.mxu0
        %v8996 = vadd.f32 0.0, %v8995
        %8997 = vmatmul.f32.gmra.mxu0 %v8934
        %v8998 = vpop.f32.mrf.mxu0
        %v8999 = vadd.f32 0.0, %v8998
        %9000 = vmatmul.f32.gmra.mxu0 %v8937
        %v9001 = vpop.f32.mrf.mxu0
        %v9002 = vadd.f32 0.0, %v9001
        %9003 = vmatmul.f32.gmra.mxu0 %v8940
        %v9004 = vpop.f32.mrf.mxu0
        %v9005 = vadd.f32 0.0, %v9004
        %9006 = vmatmul.f32.gmra.mxu0 %v8943
        %v9007 = vpop.f32.mrf.mxu0
        %v9008 = vadd.f32 0.0, %v9007
        %9009 = vdwg.mxu0
        %v9010 = vmul.f32 %v8963, %v8881
        %v9011 = vmul.f32 %v8966, %v8882
        %v9012 = vmul.f32 %v8969, %v8883
        %v9013 = vmul.f32 %v8972, %v8884
        %v9014 = vmul.f32 %v8975, %v8885
        %v9015 = vmul.f32 %v8978, %v8886
        %v9016 = vmul.f32 %v8981, %v8887
        %v9017 = vmul.f32 %v8984, %v8888
        %v9018 = vmul.f32 %v8987, %v8889
        %v9019 = vmul.f32 %v8990, %v8890
        %v9020 = vmul.f32 %v8993, %v8891
        %v9021 = vmul.f32 %v8996, %v8892
        %v9022 = vmul.f32 %v8999, %v8893
        %v9023 = vmul.f32 %v9002, %v8894
        %v9024 = vmul.f32 %v9005, %v8895
        %v9025 = vmul.f32 %v9008, %v8896
        %9026 = vset.pattern.permute.xlu0 8
        %9027 = vperm.xlu0 %9026, %v2258
        %v9028 = vpop.permute.xlu0 %9027
        %9030 = vset.pattern.permute.xlu0 8
        %9031 = vperm.xlu0 %9030, %v2259
        %v9032 = vpop.permute.xlu0 %9031
        %9034 = vset.pattern.permute.xlu0 8
        %9035 = vperm.xlu0 %9034, %v2260
        %v9036 = vpop.permute.xlu0 %9035
        %9038 = vset.pattern.permute.xlu0 8
        %9039 = vperm.xlu0 %9038, %v2261
        %v9040 = vpop.permute.xlu0 %9039
        %9042 = vset.pattern.permute.xlu0 8
        %9043 = vperm.xlu0 %9042, %v2262
        %v9044 = vpop.permute.xlu0 %9043
        %9046 = vset.pattern.permute.xlu0 8
        %9047 = vperm.xlu0 %9046, %v2263
        %v9048 = vpop.permute.xlu0 %9047
        %9050 = vset.pattern.permute.xlu0 8
        %9051 = vperm.xlu0 %9050, %v2264
        %v9052 = vpop.permute.xlu0 %9051
        %9054 = vset.pattern.permute.xlu0 8
        %9055 = vperm.xlu0 %9054, %v2265
        %v9056 = vpop.permute.xlu0 %9055
        %9058 = vset.pattern.permute.xlu0 8
        %9059 = vperm.xlu0 %9058, %v2266
        %v9060 = vpop.permute.xlu0 %9059
        %9062 = vset.pattern.permute.xlu0 8
        %9063 = vperm.xlu0 %9062, %v2267
        %v9064 = vpop.permute.xlu0 %9063
        %9066 = vset.pattern.permute.xlu0 8
        %9067 = vperm.xlu0 %9066, %v2268
        %v9068 = vpop.permute.xlu0 %9067
        %9070 = vset.pattern.permute.xlu0 8
        %9071 = vperm.xlu0 %9070, %v2269
        %v9072 = vpop.permute.xlu0 %9071
        %9074 = vset.pattern.permute.xlu0 8
        %9075 = vperm.xlu0 %9074, %v2270
        %v9076 = vpop.permute.xlu0 %9075
        %9078 = vset.pattern.permute.xlu0 8
        %9079 = vperm.xlu0 %9078, %v2271
        %v9080 = vpop.permute.xlu0 %9079
        %9082 = vset.pattern.permute.xlu0 8
        %9083 = vperm.xlu0 %9082, %v2272
        %v9084 = vpop.permute.xlu0 %9083
        %9086 = vset.pattern.permute.xlu0 8
        %9087 = vperm.xlu0 %9086, %v2273
        %v9088 = vpop.permute.xlu0 %9087
        %vm9090 = vcmp.eq.f32.partialorder %v2256, %v9028
        %vm9091 = vcmp.eq.f32.partialorder %v2256, %v9032
        %vm9092 = vcmp.eq.f32.partialorder %v2256, %v9036
        %vm9093 = vcmp.eq.f32.partialorder %v2256, %v9040
        %vm9094 = vcmp.eq.f32.partialorder %v2256, %v9044
        %vm9095 = vcmp.eq.f32.partialorder %v2256, %v9048
        %vm9096 = vcmp.eq.f32.partialorder %v2256, %v9052
        %vm9097 = vcmp.eq.f32.partialorder %v2256, %v9056
        %vm9098 = vcmp.eq.f32.partialorder %v2256, %v9060
        %vm9099 = vcmp.eq.f32.partialorder %v2256, %v9064
        %vm9100 = vcmp.eq.f32.partialorder %v2256, %v9068
        %vm9101 = vcmp.eq.f32.partialorder %v2256, %v9072
        %vm9102 = vcmp.eq.f32.partialorder %v2256, %v9076
        %vm9103 = vcmp.eq.f32.partialorder %v2256, %v9080
        %vm9104 = vcmp.eq.f32.partialorder %v2256, %v9084
        %vm9105 = vcmp.eq.f32.partialorder %v2256, %v9088
        %9106 = vset.pattern.permute.xlu0 8
        %9107 = vperm.xlu0 %9106, %v2402
        %v9108 = vpop.permute.xlu0 %9107
        %9110 = vset.pattern.permute.xlu0 8
        %9111 = vperm.xlu0 %9110, %v2403
        %v9112 = vpop.permute.xlu0 %9111
        %9114 = vset.pattern.permute.xlu0 8
        %9115 = vperm.xlu0 %9114, %v2404
        %v9116 = vpop.permute.xlu0 %9115
        %9118 = vset.pattern.permute.xlu0 8
        %9119 = vperm.xlu0 %9118, %v2405
        %v9120 = vpop.permute.xlu0 %9119
        %9122 = vset.pattern.permute.xlu0 8
        %9123 = vperm.xlu0 %9122, %v2406
        %v9124 = vpop.permute.xlu0 %9123
        %9126 = vset.pattern.permute.xlu0 8
        %9127 = vperm.xlu0 %9126, %v2407
        %v9128 = vpop.permute.xlu0 %9127
        %9130 = vset.pattern.permute.xlu0 8
        %9131 = vperm.xlu0 %9130, %v2408
        %v9132 = vpop.permute.xlu0 %9131
        %9134 = vset.pattern.permute.xlu0 8
        %9135 = vperm.xlu0 %9134, %v2409
        %v9136 = vpop.permute.xlu0 %9135
        %9138 = vset.pattern.permute.xlu0 8
        %9139 = vperm.xlu0 %9138, %v2410
        %v9140 = vpop.permute.xlu0 %9139
        %9142 = vset.pattern.permute.xlu0 8
        %9143 = vperm.xlu0 %9142, %v2411
        %v9144 = vpop.permute.xlu0 %9143
        %9146 = vset.pattern.permute.xlu0 8
        %9147 = vperm.xlu0 %9146, %v2412
        %v9148 = vpop.permute.xlu0 %9147
        %9150 = vset.pattern.permute.xlu0 8
        %9151 = vperm.xlu0 %9150, %v2413
        %v9152 = vpop.permute.xlu0 %9151
        %9154 = vset.pattern.permute.xlu0 8
        %9155 = vperm.xlu0 %9154, %v2414
        %v9156 = vpop.permute.xlu0 %9155
        %9158 = vset.pattern.permute.xlu0 8
        %9159 = vperm.xlu0 %9158, %v2415
        %v9160 = vpop.permute.xlu0 %9159
        %9162 = vset.pattern.permute.xlu0 8
        %9163 = vperm.xlu0 %9162, %v2416
        %v9164 = vpop.permute.xlu0 %9163
        %9166 = vset.pattern.permute.xlu0 8
        %9167 = vperm.xlu0 %9166, %v2417
        %v9168 = vpop.permute.xlu0 %9167
        %v9170 = vsel %vm9090, %v9108, 0.0
        %v9171 = vsel %vm9091, %v9112, 0.0
        %v9172 = vsel %vm9092, %v9116, 0.0
        %v9173 = vsel %vm9093, %v9120, 0.0
        %v9174 = vsel %vm9094, %v9124, 0.0
        %v9175 = vsel %vm9095, %v9128, 0.0
        %v9176 = vsel %vm9096, %v9132, 0.0
        %v9177 = vsel %vm9097, %v9136, 0.0
        %v9178 = vsel %vm9098, %v9140, 0.0
        %v9179 = vsel %vm9099, %v9144, 0.0
        %v9180 = vsel %vm9100, %v9148, 0.0
        %v9181 = vsel %vm9101, %v9152, 0.0
        %v9182 = vsel %vm9102, %v9156, 0.0
        %v9183 = vsel %vm9103, %v9160, 0.0
        %v9184 = vsel %vm9104, %v9164, 0.0
        %v9185 = vsel %vm9105, %v9168, 0.0
        %9186 = vset.pattern.permute.xlu0 8
        %9187 = vperm.xlu0 %9186, %v2626
        %v9188 = vpop.permute.xlu0 %9187
        %9190 = vset.pattern.permute.xlu0 8
        %9191 = vperm.xlu0 %9190, %v2627
        %v9192 = vpop.permute.xlu0 %9191
        %9194 = vset.pattern.permute.xlu0 8
        %9195 = vperm.xlu0 %9194, %v2628
        %v9196 = vpop.permute.xlu0 %9195
        %9198 = vset.pattern.permute.xlu0 8
        %9199 = vperm.xlu0 %9198, %v2629
        %v9200 = vpop.permute.xlu0 %9199
        %9202 = vset.pattern.permute.xlu0 8
        %9203 = vperm.xlu0 %9202, %v2630
        %v9204 = vpop.permute.xlu0 %9203
        %9206 = vset.pattern.permute.xlu0 8
        %9207 = vperm.xlu0 %9206, %v2631
        %v9208 = vpop.permute.xlu0 %9207
        %9210 = vset.pattern.permute.xlu0 8
        %9211 = vperm.xlu0 %9210, %v2632
        %v9212 = vpop.permute.xlu0 %9211
        %9214 = vset.pattern.permute.xlu0 8
        %9215 = vperm.xlu0 %9214, %v2633
        %v9216 = vpop.permute.xlu0 %9215
        %9218 = vset.pattern.permute.xlu0 8
        %9219 = vperm.xlu0 %9218, %v2634
        %v9220 = vpop.permute.xlu0 %9219
        %9222 = vset.pattern.permute.xlu0 8
        %9223 = vperm.xlu0 %9222, %v2635
        %v9224 = vpop.permute.xlu0 %9223
        %9226 = vset.pattern.permute.xlu0 8
        %9227 = vperm.xlu0 %9226, %v2636
        %v9228 = vpop.permute.xlu0 %9227
        %9230 = vset.pattern.permute.xlu0 8
        %9231 = vperm.xlu0 %9230, %v2637
        %v9232 = vpop.permute.xlu0 %9231
        %9234 = vset.pattern.permute.xlu0 8
        %9235 = vperm.xlu0 %9234, %v2638
        %v9236 = vpop.permute.xlu0 %9235
        %9238 = vset.pattern.permute.xlu0 8
        %9239 = vperm.xlu0 %9238, %v2639
        %v9240 = vpop.permute.xlu0 %9239
        %9242 = vset.pattern.permute.xlu0 8
        %9243 = vperm.xlu0 %9242, %v2640
        %v9244 = vpop.permute.xlu0 %9243
        %9246 = vset.pattern.permute.xlu0 8
        %9247 = vperm.xlu0 %9246, %v2641
        %v9248 = vpop.permute.xlu0 %9247
        %vm9250 = vcmp.eq.f32.partialorder %v2256, %v9188
        %vm9251 = vcmp.eq.f32.partialorder %v2256, %v9192
        %vm9252 = vcmp.eq.f32.partialorder %v2256, %v9196
        %vm9253 = vcmp.eq.f32.partialorder %v2256, %v9200
        %vm9254 = vcmp.eq.f32.partialorder %v2256, %v9204
        %vm9255 = vcmp.eq.f32.partialorder %v2256, %v9208
        %vm9256 = vcmp.eq.f32.partialorder %v2256, %v9212
        %vm9257 = vcmp.eq.f32.partialorder %v2256, %v9216
        %vm9258 = vcmp.eq.f32.partialorder %v2256, %v9220
        %vm9259 = vcmp.eq.f32.partialorder %v2256, %v9224
        %vm9260 = vcmp.eq.f32.partialorder %v2256, %v9228
        %vm9261 = vcmp.eq.f32.partialorder %v2256, %v9232
        %vm9262 = vcmp.eq.f32.partialorder %v2256, %v9236
        %vm9263 = vcmp.eq.f32.partialorder %v2256, %v9240
        %vm9264 = vcmp.eq.f32.partialorder %v2256, %v9244
        %vm9265 = vcmp.eq.f32.partialorder %v2256, %v9248
        %9266 = vset.pattern.permute.xlu0 8
        %9267 = vperm.xlu0 %9266, %v2418
        %v9268 = vpop.permute.xlu0 %9267
        %9270 = vset.pattern.permute.xlu0 8
        %9271 = vperm.xlu0 %9270, %v2419
        %v9272 = vpop.permute.xlu0 %9271
        %9274 = vset.pattern.permute.xlu0 8
        %9275 = vperm.xlu0 %9274, %v2420
        %v9276 = vpop.permute.xlu0 %9275
        %9278 = vset.pattern.permute.xlu0 8
        %9279 = vperm.xlu0 %9278, %v2421
        %v9280 = vpop.permute.xlu0 %9279
        %9282 = vset.pattern.permute.xlu0 8
        %9283 = vperm.xlu0 %9282, %v2422
        %v9284 = vpop.permute.xlu0 %9283
        %9286 = vset.pattern.permute.xlu0 8
        %9287 = vperm.xlu0 %9286, %v2423
        %v9288 = vpop.permute.xlu0 %9287
        %9290 = vset.pattern.permute.xlu0 8
        %9291 = vperm.xlu0 %9290, %v2424
        %v9292 = vpop.permute.xlu0 %9291
        %9294 = vset.pattern.permute.xlu0 8
        %9295 = vperm.xlu0 %9294, %v2425
        %v9296 = vpop.permute.xlu0 %9295
        %9298 = vset.pattern.permute.xlu0 8
        %9299 = vperm.xlu0 %9298, %v2426
        %v9300 = vpop.permute.xlu0 %9299
        %9302 = vset.pattern.permute.xlu0 8
        %9303 = vperm.xlu0 %9302, %v2427
        %v9304 = vpop.permute.xlu0 %9303
        %9306 = vset.pattern.permute.xlu0 8
        %9307 = vperm.xlu0 %9306, %v2428
        %v9308 = vpop.permute.xlu0 %9307
        %9310 = vset.pattern.permute.xlu0 8
        %9311 = vperm.xlu0 %9310, %v2429
        %v9312 = vpop.permute.xlu0 %9311
        %9314 = vset.pattern.permute.xlu0 8
        %9315 = vperm.xlu0 %9314, %v2430
        %v9316 = vpop.permute.xlu0 %9315
        %9318 = vset.pattern.permute.xlu0 8
        %9319 = vperm.xlu0 %9318, %v2431
        %v9320 = vpop.permute.xlu0 %9319
        %9322 = vset.pattern.permute.xlu0 8
        %9323 = vperm.xlu0 %9322, %v2432
        %v9324 = vpop.permute.xlu0 %9323
        %9326 = vset.pattern.permute.xlu0 8
        %9327 = vperm.xlu0 %9326, %v2433
        %v9328 = vpop.permute.xlu0 %9327
        %v9330 = vsel %vm9250, %v9268, 0.0
        %v9331 = vsel %vm9251, %v9272, 0.0
        %v9332 = vsel %vm9252, %v9276, 0.0
        %v9333 = vsel %vm9253, %v9280, 0.0
        %v9334 = vsel %vm9254, %v9284, 0.0
        %v9335 = vsel %vm9255, %v9288, 0.0
        %v9336 = vsel %vm9256, %v9292, 0.0
        %v9337 = vsel %vm9257, %v9296, 0.0
        %v9338 = vsel %vm9258, %v9300, 0.0
        %v9339 = vsel %vm9259, %v9304, 0.0
        %v9340 = vsel %vm9260, %v9308, 0.0
        %v9341 = vsel %vm9261, %v9312, 0.0
        %v9342 = vsel %vm9262, %v9316, 0.0
        %v9343 = vsel %vm9263, %v9320, 0.0
        %v9344 = vsel %vm9264, %v9324, 0.0
        %v9345 = vsel %vm9265, %v9328, 0.0
        %v9346 = vadd.f32 %v9170, %v9330
        %v9347 = vadd.f32 %v9171, %v9331
        %v9348 = vadd.f32 %v9172, %v9332
        %v9349 = vadd.f32 %v9173, %v9333
        %v9350 = vadd.f32 %v9174, %v9334
        %v9351 = vadd.f32 %v9175, %v9335
        %v9352 = vadd.f32 %v9176, %v9336
        %v9353 = vadd.f32 %v9177, %v9337
        %v9354 = vadd.f32 %v9178, %v9338
        %v9355 = vadd.f32 %v9179, %v9339
        %v9356 = vadd.f32 %v9180, %v9340
        %v9357 = vadd.f32 %v9181, %v9341
        %v9358 = vadd.f32 %v9182, %v9342
        %v9359 = vadd.f32 %v9183, %v9343
        %v9360 = vadd.f32 %v9184, %v9344
        %v9361 = vadd.f32 %v9185, %v9345
        %9362 = vset.pattern.permute.xlu0 8
        %9363 = vperm.xlu0 %9362, %v2274
        %v9364 = vpop.permute.xlu0 %9363
        %9366 = vset.pattern.permute.xlu0 8
        %9367 = vperm.xlu0 %9366, %v2275
        %v9368 = vpop.permute.xlu0 %9367
        %9370 = vset.pattern.permute.xlu0 8
        %9371 = vperm.xlu0 %9370, %v2276
        %v9372 = vpop.permute.xlu0 %9371
        %9374 = vset.pattern.permute.xlu0 8
        %9375 = vperm.xlu0 %9374, %v2277
        %v9376 = vpop.permute.xlu0 %9375
        %9378 = vset.pattern.permute.xlu0 8
        %9379 = vperm.xlu0 %9378, %v2278
        %v9380 = vpop.permute.xlu0 %9379
        %9382 = vset.pattern.permute.xlu0 8
        %9383 = vperm.xlu0 %9382, %v2279
        %v9384 = vpop.permute.xlu0 %9383
        %9386 = vset.pattern.permute.xlu0 8
        %9387 = vperm.xlu0 %9386, %v2280
        %v9388 = vpop.permute.xlu0 %9387
        %9390 = vset.pattern.permute.xlu0 8
        %9391 = vperm.xlu0 %9390, %v2281
        %v9392 = vpop.permute.xlu0 %9391
        %9394 = vset.pattern.permute.xlu0 8
        %9395 = vperm.xlu0 %9394, %v2282
        %v9396 = vpop.permute.xlu0 %9395
        %9398 = vset.pattern.permute.xlu0 8
        %9399 = vperm.xlu0 %9398, %v2283
        %v9400 = vpop.permute.xlu0 %9399
        %9402 = vset.pattern.permute.xlu0 8
        %9403 = vperm.xlu0 %9402, %v2284
        %v9404 = vpop.permute.xlu0 %9403
        %9406 = vset.pattern.permute.xlu0 8
        %9407 = vperm.xlu0 %9406, %v2285
        %v9408 = vpop.permute.xlu0 %9407
        %9410 = vset.pattern.permute.xlu0 8
        %9411 = vperm.xlu0 %9410, %v2286
        %v9412 = vpop.permute.xlu0 %9411
        %9414 = vset.pattern.permute.xlu0 8
        %9415 = vperm.xlu0 %9414, %v2287
        %v9416 = vpop.permute.xlu0 %9415
        %9418 = vset.pattern.permute.xlu0 8
        %9419 = vperm.xlu0 %9418, %v2288
        %v9420 = vpop.permute.xlu0 %9419
        %9422 = vset.pattern.permute.xlu0 8
        %9423 = vperm.xlu0 %9422, %v2289
        %v9424 = vpop.permute.xlu0 %9423
        %vm9426 = vcmp.eq.f32.partialorder %v2851, %v9364
        %vm9427 = vcmp.eq.f32.partialorder %v2851, %v9368
        %vm9428 = vcmp.eq.f32.partialorder %v2851, %v9372
        %vm9429 = vcmp.eq.f32.partialorder %v2851, %v9376
        %vm9430 = vcmp.eq.f32.partialorder %v2851, %v9380
        %vm9431 = vcmp.eq.f32.partialorder %v2851, %v9384
        %vm9432 = vcmp.eq.f32.partialorder %v2851, %v9388
        %vm9433 = vcmp.eq.f32.partialorder %v2851, %v9392
        %vm9434 = vcmp.eq.f32.partialorder %v2851, %v9396
        %vm9435 = vcmp.eq.f32.partialorder %v2851, %v9400
        %vm9436 = vcmp.eq.f32.partialorder %v2851, %v9404
        %vm9437 = vcmp.eq.f32.partialorder %v2851, %v9408
        %vm9438 = vcmp.eq.f32.partialorder %v2851, %v9412
        %vm9439 = vcmp.eq.f32.partialorder %v2851, %v9416
        %vm9440 = vcmp.eq.f32.partialorder %v2851, %v9420
        %vm9441 = vcmp.eq.f32.partialorder %v2851, %v9424
        %9442 = vset.pattern.permute.xlu0 8
        %9443 = vperm.xlu0 %9442, %v2949
        %v9444 = vpop.permute.xlu0 %9443
        %9446 = vset.pattern.permute.xlu0 8
        %9447 = vperm.xlu0 %9446, %v2950
        %v9448 = vpop.permute.xlu0 %9447
        %9450 = vset.pattern.permute.xlu0 8
        %9451 = vperm.xlu0 %9450, %v2951
        %v9452 = vpop.permute.xlu0 %9451
        %9454 = vset.pattern.permute.xlu0 8
        %9455 = vperm.xlu0 %9454, %v2952
        %v9456 = vpop.permute.xlu0 %9455
        %9458 = vset.pattern.permute.xlu0 8
        %9459 = vperm.xlu0 %9458, %v2953
        %v9460 = vpop.permute.xlu0 %9459
        %9462 = vset.pattern.permute.xlu0 8
        %9463 = vperm.xlu0 %9462, %v2954
        %v9464 = vpop.permute.xlu0 %9463
        %9466 = vset.pattern.permute.xlu0 8
        %9467 = vperm.xlu0 %9466, %v2955
        %v9468 = vpop.permute.xlu0 %9467
        %9470 = vset.pattern.permute.xlu0 8
        %9471 = vperm.xlu0 %9470, %v2956
        %v9472 = vpop.permute.xlu0 %9471
        %9474 = vset.pattern.permute.xlu0 8
        %9475 = vperm.xlu0 %9474, %v2957
        %v9476 = vpop.permute.xlu0 %9475
        %9478 = vset.pattern.permute.xlu0 8
        %9479 = vperm.xlu0 %9478, %v2958
        %v9480 = vpop.permute.xlu0 %9479
        %9482 = vset.pattern.permute.xlu0 8
        %9483 = vperm.xlu0 %9482, %v2959
        %v9484 = vpop.permute.xlu0 %9483
        %9486 = vset.pattern.permute.xlu0 8
        %9487 = vperm.xlu0 %9486, %v2960
        %v9488 = vpop.permute.xlu0 %9487
        %9490 = vset.pattern.permute.xlu0 8
        %9491 = vperm.xlu0 %9490, %v2961
        %v9492 = vpop.permute.xlu0 %9491
        %9494 = vset.pattern.permute.xlu0 8
        %9495 = vperm.xlu0 %9494, %v2962
        %v9496 = vpop.permute.xlu0 %9495
        %9498 = vset.pattern.permute.xlu0 8
        %9499 = vperm.xlu0 %9498, %v2963
        %v9500 = vpop.permute.xlu0 %9499
        %9502 = vset.pattern.permute.xlu0 8
        %9503 = vperm.xlu0 %9502, %v2964
        %v9504 = vpop.permute.xlu0 %9503
        %v9506 = vsel %vm9426, %v9444, 0.0
        %v9507 = vsel %vm9427, %v9448, 0.0
        %v9508 = vsel %vm9428, %v9452, 0.0
        %v9509 = vsel %vm9429, %v9456, 0.0
        %v9510 = vsel %vm9430, %v9460, 0.0
        %v9511 = vsel %vm9431, %v9464, 0.0
        %v9512 = vsel %vm9432, %v9468, 0.0
        %v9513 = vsel %vm9433, %v9472, 0.0
        %v9514 = vsel %vm9434, %v9476, 0.0
        %v9515 = vsel %vm9435, %v9480, 0.0
        %v9516 = vsel %vm9436, %v9484, 0.0
        %v9517 = vsel %vm9437, %v9488, 0.0
        %v9518 = vsel %vm9438, %v9492, 0.0
        %v9519 = vsel %vm9439, %v9496, 0.0
        %v9520 = vsel %vm9440, %v9500, 0.0
        %v9521 = vsel %vm9441, %v9504, 0.0
        %9522 = vset.pattern.permute.xlu0 8
        %9523 = vperm.xlu0 %9522, %v3061
        %v9524 = vpop.permute.xlu0 %9523
        %9526 = vset.pattern.permute.xlu0 8
        %9527 = vperm.xlu0 %9526, %v3062
        %v9528 = vpop.permute.xlu0 %9527
        %9530 = vset.pattern.permute.xlu0 8
        %9531 = vperm.xlu0 %9530, %v3063
        %v9532 = vpop.permute.xlu0 %9531
        %9534 = vset.pattern.permute.xlu0 8
        %9535 = vperm.xlu0 %9534, %v3064
        %v9536 = vpop.permute.xlu0 %9535
        %9538 = vset.pattern.permute.xlu0 8
        %9539 = vperm.xlu0 %9538, %v3065
        %v9540 = vpop.permute.xlu0 %9539
        %9542 = vset.pattern.permute.xlu0 8
        %9543 = vperm.xlu0 %9542, %v3066
        %v9544 = vpop.permute.xlu0 %9543
        %9546 = vset.pattern.permute.xlu0 8
        %9547 = vperm.xlu0 %9546, %v3067
        %v9548 = vpop.permute.xlu0 %9547
        %9550 = vset.pattern.permute.xlu0 8
        %9551 = vperm.xlu0 %9550, %v3068
        %v9552 = vpop.permute.xlu0 %9551
        %9554 = vset.pattern.permute.xlu0 8
        %9555 = vperm.xlu0 %9554, %v3069
        %v9556 = vpop.permute.xlu0 %9555
        %9558 = vset.pattern.permute.xlu0 8
        %9559 = vperm.xlu0 %9558, %v3070
        %v9560 = vpop.permute.xlu0 %9559
        %9562 = vset.pattern.permute.xlu0 8
        %9563 = vperm.xlu0 %9562, %v3071
        %v9564 = vpop.permute.xlu0 %9563
        %9566 = vset.pattern.permute.xlu0 8
        %9567 = vperm.xlu0 %9566, %v3072
        %v9568 = vpop.permute.xlu0 %9567
        %9570 = vset.pattern.permute.xlu0 8
        %9571 = vperm.xlu0 %9570, %v3073
        %v9572 = vpop.permute.xlu0 %9571
        %9574 = vset.pattern.permute.xlu0 8
        %9575 = vperm.xlu0 %9574, %v3074
        %v9576 = vpop.permute.xlu0 %9575
        %9578 = vset.pattern.permute.xlu0 8
        %9579 = vperm.xlu0 %9578, %v3075
        %v9580 = vpop.permute.xlu0 %9579
        %9582 = vset.pattern.permute.xlu0 8
        %9583 = vperm.xlu0 %9582, %v3076
        %v9584 = vpop.permute.xlu0 %9583
        %vm9586 = vcmp.eq.f32.partialorder %v2851, %v9524
        %vm9587 = vcmp.eq.f32.partialorder %v2851, %v9528
        %vm9588 = vcmp.eq.f32.partialorder %v2851, %v9532
        %vm9589 = vcmp.eq.f32.partialorder %v2851, %v9536
        %vm9590 = vcmp.eq.f32.partialorder %v2851, %v9540
        %vm9591 = vcmp.eq.f32.partialorder %v2851, %v9544
        %vm9592 = vcmp.eq.f32.partialorder %v2851, %v9548
        %vm9593 = vcmp.eq.f32.partialorder %v2851, %v9552
        %vm9594 = vcmp.eq.f32.partialorder %v2851, %v9556
        %vm9595 = vcmp.eq.f32.partialorder %v2851, %v9560
        %vm9596 = vcmp.eq.f32.partialorder %v2851, %v9564
        %vm9597 = vcmp.eq.f32.partialorder %v2851, %v9568
        %vm9598 = vcmp.eq.f32.partialorder %v2851, %v9572
        %vm9599 = vcmp.eq.f32.partialorder %v2851, %v9576
        %vm9600 = vcmp.eq.f32.partialorder %v2851, %v9580
        %vm9601 = vcmp.eq.f32.partialorder %v2851, %v9584
        %9602 = vset.pattern.permute.xlu0 8
        %9603 = vperm.xlu0 %9602, %v2306
        %v9604 = vpop.permute.xlu0 %9603
        %9606 = vset.pattern.permute.xlu0 8
        %9607 = vperm.xlu0 %9606, %v2307
        %v9608 = vpop.permute.xlu0 %9607
        %9610 = vset.pattern.permute.xlu0 8
        %9611 = vperm.xlu0 %9610, %v2308
        %v9612 = vpop.permute.xlu0 %9611
        %9614 = vset.pattern.permute.xlu0 8
        %9615 = vperm.xlu0 %9614, %v2309
        %v9616 = vpop.permute.xlu0 %9615
        %9618 = vset.pattern.permute.xlu0 8
        %9619 = vperm.xlu0 %9618, %v2310
        %v9620 = vpop.permute.xlu0 %9619
        %9622 = vset.pattern.permute.xlu0 8
        %9623 = vperm.xlu0 %9622, %v2311
        %v9624 = vpop.permute.xlu0 %9623
        %9626 = vset.pattern.permute.xlu0 8
        %9627 = vperm.xlu0 %9626, %v2312
        %v9628 = vpop.permute.xlu0 %9627
        %9630 = vset.pattern.permute.xlu0 8
        %9631 = vperm.xlu0 %9630, %v2313
        %v9632 = vpop.permute.xlu0 %9631
        %9634 = vset.pattern.permute.xlu0 8
        %9635 = vperm.xlu0 %9634, %v2314
        %v9636 = vpop.permute.xlu0 %9635
        %9638 = vset.pattern.permute.xlu0 8
        %9639 = vperm.xlu0 %9638, %v2315
        %v9640 = vpop.permute.xlu0 %9639
        %9642 = vset.pattern.permute.xlu0 8
        %9643 = vperm.xlu0 %9642, %v2316
        %v9644 = vpop.permute.xlu0 %9643
        %9646 = vset.pattern.permute.xlu0 8
        %9647 = vperm.xlu0 %9646, %v2317
        %v9648 = vpop.permute.xlu0 %9647
        %9650 = vset.pattern.permute.xlu0 8
        %9651 = vperm.xlu0 %9650, %v2318
        %v9652 = vpop.permute.xlu0 %9651
        %9654 = vset.pattern.permute.xlu0 8
        %9655 = vperm.xlu0 %9654, %v2319
        %v9656 = vpop.permute.xlu0 %9655
        %9658 = vset.pattern.permute.xlu0 8
        %9659 = vperm.xlu0 %9658, %v2320
        %v9660 = vpop.permute.xlu0 %9659
        %9662 = vset.pattern.permute.xlu0 8
        %9663 = vperm.xlu0 %9662, %v2321
        %v9664 = vpop.permute.xlu0 %9663
        %v9666 = vsel %vm9586, %v9604, 0.0
        %v9667 = vsel %vm9587, %v9608, 0.0
        %v9668 = vsel %vm9588, %v9612, 0.0
        %v9669 = vsel %vm9589, %v9616, 0.0
        %v9670 = vsel %vm9590, %v9620, 0.0
        %v9671 = vsel %vm9591, %v9624, 0.0
        %v9672 = vsel %vm9592, %v9628, 0.0
        %v9673 = vsel %vm9593, %v9632, 0.0
        %v9674 = vsel %vm9594, %v9636, 0.0
        %v9675 = vsel %vm9595, %v9640, 0.0
        %v9676 = vsel %vm9596, %v9644, 0.0
        %v9677 = vsel %vm9597, %v9648, 0.0
        %v9678 = vsel %vm9598, %v9652, 0.0
        %v9679 = vsel %vm9599, %v9656, 0.0
        %v9680 = vsel %vm9600, %v9660, 0.0
        %v9681 = vsel %vm9601, %v9664, 0.0
        %v9682 = vadd.f32 %v9506, %v9666
        %v9683 = vadd.f32 %v9507, %v9667
        %v9684 = vadd.f32 %v9508, %v9668
        %v9685 = vadd.f32 %v9509, %v9669
        %v9686 = vadd.f32 %v9510, %v9670
        %v9687 = vadd.f32 %v9511, %v9671
        %v9688 = vadd.f32 %v9512, %v9672
        %v9689 = vadd.f32 %v9513, %v9673
        %v9690 = vadd.f32 %v9514, %v9674
        %v9691 = vadd.f32 %v9515, %v9675
        %v9692 = vadd.f32 %v9516, %v9676
        %v9693 = vadd.f32 %v9517, %v9677
        %v9694 = vadd.f32 %v9518, %v9678
        %v9695 = vadd.f32 %v9519, %v9679
        %v9696 = vadd.f32 %v9520, %v9680
        %v9697 = vadd.f32 %v9521, %v9681
        %v9699 = vsel %vm3285, %v9346, 0
        %v9702 = vsel %vm3285, %v9347, 0
        %v9705 = vsel %vm3285, %v9348, 0
        %v9708 = vsel %vm3285, %v9349, 0
        %v9711 = vsel %vm3285, %v9350, 0
        %v9714 = vsel %vm3285, %v9351, 0
        %v9717 = vsel %vm3285, %v9352, 0
        %v9720 = vsel %vm3285, %v9353, 0
        %v9723 = vsel %vm3285, %v9354, 0
        %v9726 = vsel %vm3285, %v9355, 0
        %v9729 = vsel %vm3285, %v9356, 0
        %v9732 = vsel %vm3285, %v9357, 0
        %v9735 = vsel %vm3285, %v9358, 0
        %v9738 = vsel %vm3285, %v9359, 0
        %v9741 = vsel %vm3285, %v9360, 0
        %v9744 = vsel %vm3285, %v9361, 0
        %9746 = vmatpush.msra.mxu0 0.0
        %9747 = vmatpush.msra.mxu0 0.0
        %9748 = vmatpush.msra.mxu0 0.0
        %9749 = vmatpush.msra.mxu0 0.0
        %9750 = vmatpush.msra.mxu0 0.0
        %9751 = vmatpush.msra.mxu0 0.0
        %9752 = vmatpush.msra.mxu0 0.0
        %9753 = vmatpush.msra.mxu0 0.0
        %9754 = vmatpush.msra.mxu0 0.0
        %9755 = vmatpush.msra.mxu0 0.0
        %9756 = vmatpush.msra.mxu0 0.0
        %9757 = vmatpush.msra.mxu0 0.0
        %9758 = vmatpush.msra.mxu0 0.0
        %9759 = vmatpush.msra.mxu0 %v3336
        %9760 = vmatpush.msra.mxu0 %v2252
        %9761 = vmatpush.msra.mxu0 %v2251
        %9762 = vmatmul.f32.gmra.mxu0 %v9699
        %v9763 = vpop.f32.mrf.mxu0
        %v9764 = vadd.f32 0.0, %v9763
        %9765 = vmatmul.f32.gmra.mxu0 %v9702
        %v9766 = vpop.f32.mrf.mxu0
        %v9767 = vadd.f32 0.0, %v9766
        %9768 = vmatmul.f32.gmra.mxu0 %v9705
        %v9769 = vpop.f32.mrf.mxu0
        %v9770 = vadd.f32 0.0, %v9769
        %9771 = vmatmul.f32.gmra.mxu0 %v9708
        %v9772 = vpop.f32.mrf.mxu0
        %v9773 = vadd.f32 0.0, %v9772
        %9774 = vmatmul.f32.gmra.mxu0 %v9711
        %v9775 = vpop.f32.mrf.mxu0
        %v9776 = vadd.f32 0.0, %v9775
        %9777 = vmatmul.f32.gmra.mxu0 %v9714
        %v9778 = vpop.f32.mrf.mxu0
        %v9779 = vadd.f32 0.0, %v9778
        %9780 = vmatmul.f32.gmra.mxu0 %v9717
        %v9781 = vpop.f32.mrf.mxu0
        %v9782 = vadd.f32 0.0, %v9781
        %9783 = vmatmul.f32.gmra.mxu0 %v9720
        %v9784 = vpop.f32.mrf.mxu0
        %v9785 = vadd.f32 0.0, %v9784
        %9786 = vmatmul.f32.gmra.mxu0 %v9723
        %v9787 = vpop.f32.mrf.mxu0
        %v9788 = vadd.f32 0.0, %v9787
        %9789 = vmatmul.f32.gmra.mxu0 %v9726
        %v9790 = vpop.f32.mrf.mxu0
        %v9791 = vadd.f32 0.0, %v9790
        %9792 = vmatmul.f32.gmra.mxu0 %v9729
        %v9793 = vpop.f32.mrf.mxu0
        %v9794 = vadd.f32 0.0, %v9793
        %9795 = vmatmul.f32.gmra.mxu0 %v9732
        %v9796 = vpop.f32.mrf.mxu0
        %v9797 = vadd.f32 0.0, %v9796
        %9798 = vmatmul.f32.gmra.mxu0 %v9735
        %v9799 = vpop.f32.mrf.mxu0
        %v9800 = vadd.f32 0.0, %v9799
        %9801 = vmatmul.f32.gmra.mxu0 %v9738
        %v9802 = vpop.f32.mrf.mxu0
        %v9803 = vadd.f32 0.0, %v9802
        %9804 = vmatmul.f32.gmra.mxu0 %v9741
        %v9805 = vpop.f32.mrf.mxu0
        %v9806 = vadd.f32 0.0, %v9805
        %9807 = vmatmul.f32.gmra.mxu0 %v9744
        %v9808 = vpop.f32.mrf.mxu0
        %v9809 = vadd.f32 0.0, %v9808
        %9810 = vdwg.mxu0
        %v9811 = vmul.f32 %v9764, %v9682
        %v9812 = vmul.f32 %v9767, %v9683
        %v9813 = vmul.f32 %v9770, %v9684
        %v9814 = vmul.f32 %v9773, %v9685
        %v9815 = vmul.f32 %v9776, %v9686
        %v9816 = vmul.f32 %v9779, %v9687
        %v9817 = vmul.f32 %v9782, %v9688
        %v9818 = vmul.f32 %v9785, %v9689
        %v9819 = vmul.f32 %v9788, %v9690
        %v9820 = vmul.f32 %v9791, %v9691
        %v9821 = vmul.f32 %v9794, %v9692
        %v9822 = vmul.f32 %v9797, %v9693
        %v9823 = vmul.f32 %v9800, %v9694
        %v9824 = vmul.f32 %v9803, %v9695
        %v9825 = vmul.f32 %v9806, %v9696
        %v9826 = vmul.f32 %v9809, %v9697
        %9843 = vrot.lane.b32.xlu0 %v4204, 72
        %v9844 = vpop.permute.xlu0 %9843
        %9845 = vrot.lane.b32.xlu0 %v4205, 72
        %v9846 = vpop.permute.xlu0 %9845
        %9847 = vrot.lane.b32.xlu0 %v4206, 72
        %v9848 = vpop.permute.xlu0 %9847
        %9849 = vrot.lane.b32.xlu0 %v4207, 72
        %v9850 = vpop.permute.xlu0 %9849
        %9851 = vrot.lane.b32.xlu0 %v4208, 72
        %v9852 = vpop.permute.xlu0 %9851
        %9853 = vrot.lane.b32.xlu0 %v4209, 72
        %v9854 = vpop.permute.xlu0 %9853
        %9855 = vrot.lane.b32.xlu0 %v4210, 72
        %v9856 = vpop.permute.xlu0 %9855
        %9857 = vrot.lane.b32.xlu0 %v4211, 72
        %v9858 = vpop.permute.xlu0 %9857
        %9859 = vrot.lane.b32.xlu0 %v4212, 72
        %v9860 = vpop.permute.xlu0 %9859
        %9861 = vrot.lane.b32.xlu0 %v4213, 72
        %v9862 = vpop.permute.xlu0 %9861
        %9863 = vrot.lane.b32.xlu0 %v4214, 72
        %v9864 = vpop.permute.xlu0 %9863
        %9865 = vrot.lane.b32.xlu0 %v4215, 72
        %v9866 = vpop.permute.xlu0 %9865
        %9867 = vrot.lane.b32.xlu0 %v4216, 72
        %v9868 = vpop.permute.xlu0 %9867
        %9869 = vrot.lane.b32.xlu0 %v4217, 72
        %v9870 = vpop.permute.xlu0 %9869
        %9871 = vrot.lane.b32.xlu0 %v4218, 72
        %v9872 = vpop.permute.xlu0 %9871
        %9873 = vrot.lane.b32.xlu0 %v4219, 72
        %v9874 = vpop.permute.xlu0 %9873
        %9907 = vrot.lane.b32.xlu0 %v5005, 16
        %v9908 = vpop.permute.xlu0 %9907
        %9909 = vrot.lane.b32.xlu0 %v5006, 16
        %v9910 = vpop.permute.xlu0 %9909
        %9911 = vrot.lane.b32.xlu0 %v5007, 16
        %v9912 = vpop.permute.xlu0 %9911
        %9913 = vrot.lane.b32.xlu0 %v5008, 16
        %v9914 = vpop.permute.xlu0 %9913
        %9915 = vrot.lane.b32.xlu0 %v5009, 16
        %v9916 = vpop.permute.xlu0 %9915
        %9917 = vrot.lane.b32.xlu0 %v5010, 16
        %v9918 = vpop.permute.xlu0 %9917
        %9919 = vrot.lane.b32.xlu0 %v5011, 16
        %v9920 = vpop.permute.xlu0 %9919
        %9921 = vrot.lane.b32.xlu0 %v5012, 16
        %v9922 = vpop.permute.xlu0 %9921
        %9923 = vrot.lane.b32.xlu0 %v5013, 16
        %v9924 = vpop.permute.xlu0 %9923
        %9925 = vrot.lane.b32.xlu0 %v5014, 16
        %v9926 = vpop.permute.xlu0 %9925
        %9927 = vrot.lane.b32.xlu0 %v5015, 16
        %v9928 = vpop.permute.xlu0 %9927
        %9929 = vrot.lane.b32.xlu0 %v5016, 16
        %v9930 = vpop.permute.xlu0 %9929
        %9931 = vrot.lane.b32.xlu0 %v5017, 16
        %v9932 = vpop.permute.xlu0 %9931
        %9933 = vrot.lane.b32.xlu0 %v5018, 16
        %v9934 = vpop.permute.xlu0 %9933
        %9935 = vrot.lane.b32.xlu0 %v5019, 16
        %v9936 = vpop.permute.xlu0 %9935
        %9937 = vrot.lane.b32.xlu0 %v5020, 16
        %v9938 = vpop.permute.xlu0 %9937
        %9971 = vrot.lane.b32.xlu0 %v5806, 88
        %v9972 = vpop.permute.xlu0 %9971
        %9973 = vrot.lane.b32.xlu0 %v5807, 88
        %v9974 = vpop.permute.xlu0 %9973
        %9975 = vrot.lane.b32.xlu0 %v5808, 88
        %v9976 = vpop.permute.xlu0 %9975
        %9977 = vrot.lane.b32.xlu0 %v5809, 88
        %v9978 = vpop.permute.xlu0 %9977
        %9979 = vrot.lane.b32.xlu0 %v5810, 88
        %v9980 = vpop.permute.xlu0 %9979
        %9981 = vrot.lane.b32.xlu0 %v5811, 88
        %v9982 = vpop.permute.xlu0 %9981
        %9983 = vrot.lane.b32.xlu0 %v5812, 88
        %v9984 = vpop.permute.xlu0 %9983
        %9985 = vrot.lane.b32.xlu0 %v5813, 88
        %v9986 = vpop.permute.xlu0 %9985
        %9987 = vrot.lane.b32.xlu0 %v5814, 88
        %v9988 = vpop.permute.xlu0 %9987
        %9989 = vrot.lane.b32.xlu0 %v5815, 88
        %v9990 = vpop.permute.xlu0 %9989
        %9991 = vrot.lane.b32.xlu0 %v5816, 88
        %v9992 = vpop.permute.xlu0 %9991
        %9993 = vrot.lane.b32.xlu0 %v5817, 88
        %v9994 = vpop.permute.xlu0 %9993
        %9995 = vrot.lane.b32.xlu0 %v5818, 88
        %v9996 = vpop.permute.xlu0 %9995
        %9997 = vrot.lane.b32.xlu0 %v5819, 88
        %v9998 = vpop.permute.xlu0 %9997
        %9999 = vrot.lane.b32.xlu0 %v5820, 88
        %v10000 = vpop.permute.xlu0 %9999
        %10001 = vrot.lane.b32.xlu0 %v5821, 88
        %v10002 = vpop.permute.xlu0 %10001
        %10035 = vrot.lane.b32.xlu0 %v6607, 32
        %v10036 = vpop.permute.xlu0 %10035
        %10037 = vrot.lane.b32.xlu0 %v6608, 32
        %v10038 = vpop.permute.xlu0 %10037
        %10039 = vrot.lane.b32.xlu0 %v6609, 32
        %v10040 = vpop.permute.xlu0 %10039
        %10041 = vrot.lane.b32.xlu0 %v6610, 32
        %v10042 = vpop.permute.xlu0 %10041
        %10043 = vrot.lane.b32.xlu0 %v6611, 32
        %v10044 = vpop.permute.xlu0 %10043
        %10045 = vrot.lane.b32.xlu0 %v6612, 32
        %v10046 = vpop.permute.xlu0 %10045
        %10047 = vrot.lane.b32.xlu0 %v6613, 32
        %v10048 = vpop.permute.xlu0 %10047
        %10049 = vrot.lane.b32.xlu0 %v6614, 32
        %v10050 = vpop.permute.xlu0 %10049
        %10051 = vrot.lane.b32.xlu0 %v6615, 32
        %v10052 = vpop.permute.xlu0 %10051
        %10053 = vrot.lane.b32.xlu0 %v6616, 32
        %v10054 = vpop.permute.xlu0 %10053
        %10055 = vrot.lane.b32.xlu0 %v6617, 32
        %v10056 = vpop.permute.xlu0 %10055
        %10057 = vrot.lane.b32.xlu0 %v6618, 32
        %v10058 = vpop.permute.xlu0 %10057
        %10059 = vrot.lane.b32.xlu0 %v6619, 32
        %v10060 = vpop.permute.xlu0 %10059
        %10061 = vrot.lane.b32.xlu0 %v6620, 32
        %v10062 = vpop.permute.xlu0 %10061
        %10063 = vrot.lane.b32.xlu0 %v6621, 32
        %v10064 = vpop.permute.xlu0 %10063
        %10065 = vrot.lane.b32.xlu0 %v6622, 32
        %v10066 = vpop.permute.xlu0 %10065
        %10099 = vrot.lane.b32.xlu0 %v7408, 104
        %v10100 = vpop.permute.xlu0 %10099
        %10101 = vrot.lane.b32.xlu0 %v7409, 104
        %v10102 = vpop.permute.xlu0 %10101
        %10103 = vrot.lane.b32.xlu0 %v7410, 104
        %v10104 = vpop.permute.xlu0 %10103
        %10105 = vrot.lane.b32.xlu0 %v7411, 104
        %v10106 = vpop.permute.xlu0 %10105
        %10107 = vrot.lane.b32.xlu0 %v7412, 104
        %v10108 = vpop.permute.xlu0 %10107
        %10109 = vrot.lane.b32.xlu0 %v7413, 104
        %v10110 = vpop.permute.xlu0 %10109
        %10111 = vrot.lane.b32.xlu0 %v7414, 104
        %v10112 = vpop.permute.xlu0 %10111
        %10113 = vrot.lane.b32.xlu0 %v7415, 104
        %v10114 = vpop.permute.xlu0 %10113
        %10115 = vrot.lane.b32.xlu0 %v7416, 104
        %v10116 = vpop.permute.xlu0 %10115
        %10117 = vrot.lane.b32.xlu0 %v7417, 104
        %v10118 = vpop.permute.xlu0 %10117
        %10119 = vrot.lane.b32.xlu0 %v7418, 104
        %v10120 = vpop.permute.xlu0 %10119
        %10121 = vrot.lane.b32.xlu0 %v7419, 104
        %v10122 = vpop.permute.xlu0 %10121
        %10123 = vrot.lane.b32.xlu0 %v7420, 104
        %v10124 = vpop.permute.xlu0 %10123
        %10125 = vrot.lane.b32.xlu0 %v7421, 104
        %v10126 = vpop.permute.xlu0 %10125
        %10127 = vrot.lane.b32.xlu0 %v7422, 104
        %v10128 = vpop.permute.xlu0 %10127
        %10129 = vrot.lane.b32.xlu0 %v7423, 104
        %v10130 = vpop.permute.xlu0 %10129
        %10163 = vrot.lane.b32.xlu0 %v8209, 48
        %v10164 = vpop.permute.xlu0 %10163
        %10165 = vrot.lane.b32.xlu0 %v8210, 48
        %v10166 = vpop.permute.xlu0 %10165
        %10167 = vrot.lane.b32.xlu0 %v8211, 48
        %v10168 = vpop.permute.xlu0 %10167
        %10169 = vrot.lane.b32.xlu0 %v8212, 48
        %v10170 = vpop.permute.xlu0 %10169
        %10171 = vrot.lane.b32.xlu0 %v8213, 48
        %v10172 = vpop.permute.xlu0 %10171
        %10173 = vrot.lane.b32.xlu0 %v8214, 48
        %v10174 = vpop.permute.xlu0 %10173
        %10175 = vrot.lane.b32.xlu0 %v8215, 48
        %v10176 = vpop.permute.xlu0 %10175
        %10177 = vrot.lane.b32.xlu0 %v8216, 48
        %v10178 = vpop.permute.xlu0 %10177
        %10179 = vrot.lane.b32.xlu0 %v8217, 48
        %v10180 = vpop.permute.xlu0 %10179
        %10181 = vrot.lane.b32.xlu0 %v8218, 48
        %v10182 = vpop.permute.xlu0 %10181
        %10183 = vrot.lane.b32.xlu0 %v8219, 48
        %v10184 = vpop.permute.xlu0 %10183
        %10185 = vrot.lane.b32.xlu0 %v8220, 48
        %v10186 = vpop.permute.xlu0 %10185
        %10187 = vrot.lane.b32.xlu0 %v8221, 48
        %v10188 = vpop.permute.xlu0 %10187
        %10189 = vrot.lane.b32.xlu0 %v8222, 48
        %v10190 = vpop.permute.xlu0 %10189
        %10191 = vrot.lane.b32.xlu0 %v8223, 48
        %v10192 = vpop.permute.xlu0 %10191
        %10193 = vrot.lane.b32.xlu0 %v8224, 48
        %v10194 = vpop.permute.xlu0 %10193
        %10227 = vrot.lane.b32.xlu0 %v9010, 120
        %v10228 = vpop.permute.xlu0 %10227
        %10229 = vrot.lane.b32.xlu0 %v9011, 120
        %v10230 = vpop.permute.xlu0 %10229
        %10231 = vrot.lane.b32.xlu0 %v9012, 120
        %v10232 = vpop.permute.xlu0 %10231
        %10233 = vrot.lane.b32.xlu0 %v9013, 120
        %v10234 = vpop.permute.xlu0 %10233
        %10235 = vrot.lane.b32.xlu0 %v9014, 120
        %v10236 = vpop.permute.xlu0 %10235
        %10237 = vrot.lane.b32.xlu0 %v9015, 120
        %v10238 = vpop.permute.xlu0 %10237
        %10239 = vrot.lane.b32.xlu0 %v9016, 120
        %v10240 = vpop.permute.xlu0 %10239
        %10241 = vrot.lane.b32.xlu0 %v9017, 120
        %v10242 = vpop.permute.xlu0 %10241
        %10243 = vrot.lane.b32.xlu0 %v9018, 120
        %v10244 = vpop.permute.xlu0 %10243
        %10245 = vrot.lane.b32.xlu0 %v9019, 120
        %v10246 = vpop.permute.xlu0 %10245
        %10247 = vrot.lane.b32.xlu0 %v9020, 120
        %v10248 = vpop.permute.xlu0 %10247
        %10249 = vrot.lane.b32.xlu0 %v9021, 120
        %v10250 = vpop.permute.xlu0 %10249
        %10251 = vrot.lane.b32.xlu0 %v9022, 120
        %v10252 = vpop.permute.xlu0 %10251
        %10253 = vrot.lane.b32.xlu0 %v9023, 120
        %v10254 = vpop.permute.xlu0 %10253
        %10255 = vrot.lane.b32.xlu0 %v9024, 120
        %v10256 = vpop.permute.xlu0 %10255
        %10257 = vrot.lane.b32.xlu0 %v9025, 120
        %v10258 = vpop.permute.xlu0 %10257
        %10291 = vrot.lane.b32.xlu0 %v9811, 64
        %v10292 = vpop.permute.xlu0 %10291
        %10293 = vrot.lane.b32.xlu0 %v9812, 64
        %v10294 = vpop.permute.xlu0 %10293
        %10295 = vrot.lane.b32.xlu0 %v9813, 64
        %v10296 = vpop.permute.xlu0 %10295
        %10297 = vrot.lane.b32.xlu0 %v9814, 64
        %v10298 = vpop.permute.xlu0 %10297
        %10299 = vrot.lane.b32.xlu0 %v9815, 64
        %v10300 = vpop.permute.xlu0 %10299
        %10301 = vrot.lane.b32.xlu0 %v9816, 64
        %v10302 = vpop.permute.xlu0 %10301
        %10303 = vrot.lane.b32.xlu0 %v9817, 64
        %v10304 = vpop.permute.xlu0 %10303
        %10305 = vrot.lane.b32.xlu0 %v9818, 64
        %v10306 = vpop.permute.xlu0 %10305
        %10307 = vrot.lane.b32.xlu0 %v9819, 64
        %v10308 = vpop.permute.xlu0 %10307
        %10309 = vrot.lane.b32.xlu0 %v9820, 64
        %v10310 = vpop.permute.xlu0 %10309
        %10311 = vrot.lane.b32.xlu0 %v9821, 64
        %v10312 = vpop.permute.xlu0 %10311
        %10313 = vrot.lane.b32.xlu0 %v9822, 64
        %v10314 = vpop.permute.xlu0 %10313
        %10315 = vrot.lane.b32.xlu0 %v9823, 64
        %v10316 = vpop.permute.xlu0 %10315
        %10317 = vrot.lane.b32.xlu0 %v9824, 64
        %v10318 = vpop.permute.xlu0 %10317
        %10319 = vrot.lane.b32.xlu0 %v9825, 64
        %v10320 = vpop.permute.xlu0 %10319
        %10321 = vrot.lane.b32.xlu0 %v9826, 64
        %v10322 = vpop.permute.xlu0 %10321
        %vm10339 = vcmask 588800
        %v10340 = vsel %vm10339, %v3403, %v9844
        %v10341 = vsel %vm10339, %v3404, %v9846
        %v10342 = vsel %vm10339, %v3405, %v9848
        %v10343 = vsel %vm10339, %v3406, %v9850
        %v10344 = vsel %vm10339, %v3407, %v9852
        %v10345 = vsel %vm10339, %v3408, %v9854
        %v10346 = vsel %vm10339, %v3409, %v9856
        %v10347 = vsel %vm10339, %v3410, %v9858
        %v10348 = vsel %vm10339, %v3411, %v9860
        %v10349 = vsel %vm10339, %v3412, %v9862
        %v10350 = vsel %vm10339, %v3413, %v9864
        %v10351 = vsel %vm10339, %v3414, %v9866
        %v10352 = vsel %vm10339, %v3415, %v9868
        %v10353 = vsel %vm10339, %v3416, %v9870
        %v10354 = vsel %vm10339, %v3417, %v9872
        %v10355 = vsel %vm10339, %v3418, %v9874
        %v10356 = vsel %vm1009, %v9844, %v9908
        %v10357 = vsel %vm1009, %v9846, %v9910
        %v10358 = vsel %vm1009, %v9848, %v9912
        %v10359 = vsel %vm1009, %v9850, %v9914
        %v10360 = vsel %vm1009, %v9852, %v9916
        %v10361 = vsel %vm1009, %v9854, %v9918
        %v10362 = vsel %vm1009, %v9856, %v9920
        %v10363 = vsel %vm1009, %v9858, %v9922
        %v10364 = vsel %vm1009, %v9860, %v9924
        %v10365 = vsel %vm1009, %v9862, %v9926
        %v10366 = vsel %vm1009, %v9864, %v9928
        %v10367 = vsel %vm1009, %v9866, %v9930
        %v10368 = vsel %vm1009, %v9868, %v9932
        %v10369 = vsel %vm1009, %v9870, %v9934
        %v10370 = vsel %vm1009, %v9872, %v9936
        %v10371 = vsel %vm1009, %v9874, %v9938
        %vm10372 = vcmask 719872
        %v10373 = vsel %vm10372, %v10356, %v9972
        %v10374 = vsel %vm10372, %v10357, %v9974
        %v10375 = vsel %vm10372, %v10358, %v9976
        %v10376 = vsel %vm10372, %v10359, %v9978
        %v10377 = vsel %vm10372, %v10360, %v9980
        %v10378 = vsel %vm10372, %v10361, %v9982
        %v10379 = vsel %vm10372, %v10362, %v9984
        %v10380 = vsel %vm10372, %v10363, %v9986
        %v10381 = vsel %vm10372, %v10364, %v9988
        %v10382 = vsel %vm10372, %v10365, %v9990
        %v10383 = vsel %vm10372, %v10366, %v9992
        %v10384 = vsel %vm10372, %v10367, %v9994
        %v10385 = vsel %vm10372, %v10368, %v9996
        %v10386 = vsel %vm10372, %v10369, %v9998
        %v10387 = vsel %vm10372, %v10370, %v10000
        %v10388 = vsel %vm10372, %v10371, %v10002
        %v10389 = vsel %vm1077, %v9972, %v10036
        %v10390 = vsel %vm1077, %v9974, %v10038
        %v10391 = vsel %vm1077, %v9976, %v10040
        %v10392 = vsel %vm1077, %v9978, %v10042
        %v10393 = vsel %vm1077, %v9980, %v10044
        %v10394 = vsel %vm1077, %v9982, %v10046
        %v10395 = vsel %vm1077, %v9984, %v10048
        %v10396 = vsel %vm1077, %v9986, %v10050
        %v10397 = vsel %vm1077, %v9988, %v10052
        %v10398 = vsel %vm1077, %v9990, %v10054
        %v10399 = vsel %vm1077, %v9992, %v10056
        %v10400 = vsel %vm1077, %v9994, %v10058
        %v10401 = vsel %vm1077, %v9996, %v10060
        %v10402 = vsel %vm1077, %v9998, %v10062
        %v10403 = vsel %vm1077, %v10000, %v10064
        %v10404 = vsel %vm1077, %v10002, %v10066
        %vm10405 = vcmask 850944
        %v10406 = vsel %vm10405, %v10389, %v10100
        %v10407 = vsel %vm10405, %v10390, %v10102
        %v10408 = vsel %vm10405, %v10391, %v10104
        %v10409 = vsel %vm10405, %v10392, %v10106
        %v10410 = vsel %vm10405, %v10393, %v10108
        %v10411 = vsel %vm10405, %v10394, %v10110
        %v10412 = vsel %vm10405, %v10395, %v10112
        %v10413 = vsel %vm10405, %v10396, %v10114
        %v10414 = vsel %vm10405, %v10397, %v10116
        %v10415 = vsel %vm10405, %v10398, %v10118
        %v10416 = vsel %vm10405, %v10399, %v10120
        %v10417 = vsel %vm10405, %v10400, %v10122
        %v10418 = vsel %vm10405, %v10401, %v10124
        %v10419 = vsel %vm10405, %v10402, %v10126
        %v10420 = vsel %vm10405, %v10403, %v10128
        %v10421 = vsel %vm10405, %v10404, %v10130
        %vm10422 = vcmask 392192
        %v10423 = vsel %vm10422, %v10100, %v10164
        %v10424 = vsel %vm10422, %v10102, %v10166
        %v10425 = vsel %vm10422, %v10104, %v10168
        %v10426 = vsel %vm10422, %v10106, %v10170
        %v10427 = vsel %vm10422, %v10108, %v10172
        %v10428 = vsel %vm10422, %v10110, %v10174
        %v10429 = vsel %vm10422, %v10112, %v10176
        %v10430 = vsel %vm10422, %v10114, %v10178
        %v10431 = vsel %vm10422, %v10116, %v10180
        %v10432 = vsel %vm10422, %v10118, %v10182
        %v10433 = vsel %vm10422, %v10120, %v10184
        %v10434 = vsel %vm10422, %v10122, %v10186
        %v10435 = vsel %vm10422, %v10124, %v10188
        %v10436 = vsel %vm10422, %v10126, %v10190
        %v10437 = vsel %vm10422, %v10128, %v10192
        %v10438 = vsel %vm10422, %v10130, %v10194
        %vm10439 = vcmask 982016
        %v10440 = vsel %vm10439, %v10423, %v10228
        %v10441 = vsel %vm10439, %v10424, %v10230
        %v10442 = vsel %vm10439, %v10425, %v10232
        %v10443 = vsel %vm10439, %v10426, %v10234
        %v10444 = vsel %vm10439, %v10427, %v10236
        %v10445 = vsel %vm10439, %v10428, %v10238
        %v10446 = vsel %vm10439, %v10429, %v10240
        %v10447 = vsel %vm10439, %v10430, %v10242
        %v10448 = vsel %vm10439, %v10431, %v10244
        %v10449 = vsel %vm10439, %v10432, %v10246
        %v10450 = vsel %vm10439, %v10433, %v10248
        %v10451 = vsel %vm10439, %v10434, %v10250
        %v10452 = vsel %vm10439, %v10435, %v10252
        %v10453 = vsel %vm10439, %v10436, %v10254
        %v10454 = vsel %vm10439, %v10437, %v10256
        %v10455 = vsel %vm10439, %v10438, %v10258
        %vm10456 = vcmask 523264
        %v10457 = vsel %vm10456, %v10228, %v10292
        %v10458 = vsel %vm10456, %v10230, %v10294
        %v10459 = vsel %vm10456, %v10232, %v10296
        %v10460 = vsel %vm10456, %v10234, %v10298
        %v10461 = vsel %vm10456, %v10236, %v10300
        %v10462 = vsel %vm10456, %v10238, %v10302
        %v10463 = vsel %vm10456, %v10240, %v10304
        %v10464 = vsel %vm10456, %v10242, %v10306
        %v10465 = vsel %vm10456, %v10244, %v10308
        %v10466 = vsel %vm10456, %v10246, %v10310
        %v10467 = vsel %vm10456, %v10248, %v10312
        %v10468 = vsel %vm10456, %v10250, %v10314
        %v10469 = vsel %vm10456, %v10252, %v10316
        %v10470 = vsel %vm10456, %v10254, %v10318
        %v10471 = vsel %vm10456, %v10256, %v10320
        %v10472 = vsel %vm10456, %v10258, %v10322
        %v10473 = vld [vmem:[%s7] sm:$0xff]
        %v10474 = vld [vmem:[%s7 + $0x8] sm:$0xff]
        %v10475 = vld [vmem:[%s7 + $0x10] sm:$0xff]
        %v10476 = vld [vmem:[%s7 + $0x18] sm:$0xff]
        %v10477 = vld [vmem:[%s7 + $0x20] sm:$0xff]
        %v10478 = vld [vmem:[%s7 + $0x28] sm:$0xff]
        %v10479 = vld [vmem:[%s7 + $0x30] sm:$0xff]
        %v10480 = vld [vmem:[%s7 + $0x38] sm:$0xff]
        %v10481 = vld [vmem:[%s7 + $0x40] sm:$0xff]
        %v10482 = vld [vmem:[%s7 + $0x48] sm:$0xff]
        %v10483 = vld [vmem:[%s7 + $0x50] sm:$0xff]
        %v10484 = vld [vmem:[%s7 + $0x58] sm:$0xff]
        %v10485 = vld [vmem:[%s7 + $0x60] sm:$0xff]
        %v10486 = vld [vmem:[%s7 + $0x68] sm:$0xff]
        %v10487 = vld [vmem:[%s7 + $0x70] sm:$0xff]
        %v10488 = vld [vmem:[%s7 + $0x78] sm:$0xff]
        %v10489 = vld [vmem:[%s7 + $0x80] sm:$0xff]
        %v10490 = vld [vmem:[%s7 + $0x88] sm:$0xff]
        %v10491 = vld [vmem:[%s7 + $0x90] sm:$0xff]
        %v10492 = vld [vmem:[%s7 + $0x98] sm:$0xff]
        %v10493 = vld [vmem:[%s7 + $0xa0] sm:$0xff]
        %v10494 = vld [vmem:[%s7 + $0xa8] sm:$0xff]
        %v10495 = vld [vmem:[%s7 + $0xb0] sm:$0xff]
        %v10496 = vld [vmem:[%s7 + $0xb8] sm:$0xff]
        %v10497 = vld [vmem:[%s7 + $0xc0] sm:$0xff]
        %v10498 = vld [vmem:[%s7 + $0xc8] sm:$0xff]
        %v10499 = vld [vmem:[%s7 + $0xd0] sm:$0xff]
        %v10500 = vld [vmem:[%s7 + $0xd8] sm:$0xff]
        %v10501 = vld [vmem:[%s7 + $0xe0] sm:$0xff]
        %v10502 = vld [vmem:[%s7 + $0xe8] sm:$0xff]
        %v10503 = vld [vmem:[%s7 + $0xf0] sm:$0xff]
        %v10504 = vld [vmem:[%s7 + $0xf8] sm:$0xff]
        %v10505 = vld [vmem:[%s7 + $0x100] sm:$0xff]
        %v10506 = vld [vmem:[%s7 + $0x108] sm:$0xff]
        %v10507 = vld [vmem:[%s7 + $0x110] sm:$0xff]
        %v10508 = vld [vmem:[%s7 + $0x118] sm:$0xff]
        %v10509 = vld [vmem:[%s7 + $0x120] sm:$0xff]
        %v10510 = vld [vmem:[%s7 + $0x128] sm:$0xff]
        %v10511 = vld [vmem:[%s7 + $0x130] sm:$0xff]
        %v10512 = vld [vmem:[%s7 + $0x138] sm:$0xff]
        %v10513 = vld [vmem:[%s7 + $0x140] sm:$0xff]
        %v10514 = vld [vmem:[%s7 + $0x148] sm:$0xff]
        %v10515 = vld [vmem:[%s7 + $0x150] sm:$0xff]
        %v10516 = vld [vmem:[%s7 + $0x158] sm:$0xff]
        %v10517 = vld [vmem:[%s7 + $0x160] sm:$0xff]
        %v10518 = vld [vmem:[%s7 + $0x168] sm:$0xff]
        %v10519 = vld [vmem:[%s7 + $0x170] sm:$0xff]
        %v10520 = vld [vmem:[%s7 + $0x178] sm:$0xff]
        %v10521 = vld [vmem:[%s7 + $0x180] sm:$0xff]
        %v10522 = vld [vmem:[%s7 + $0x188] sm:$0xff]
        %v10523 = vld [vmem:[%s7 + $0x190] sm:$0xff]
        %v10524 = vld [vmem:[%s7 + $0x198] sm:$0xff]
        %v10525 = vld [vmem:[%s7 + $0x1a0] sm:$0xff]
        %v10526 = vld [vmem:[%s7 + $0x1a8] sm:$0xff]
        %v10527 = vld [vmem:[%s7 + $0x1b0] sm:$0xff]
        %v10528 = vld [vmem:[%s7 + $0x1b8] sm:$0xff]
        %v10529 = vld [vmem:[%s7 + $0x1c0] sm:$0xff]
        %v10530 = vld [vmem:[%s7 + $0x1c8] sm:$0xff]
        %v10531 = vld [vmem:[%s7 + $0x1d0] sm:$0xff]
        %v10532 = vld [vmem:[%s7 + $0x1d8] sm:$0xff]
        %v10533 = vld [vmem:[%s7 + $0x1e0] sm:$0xff]
        %v10534 = vld [vmem:[%s7 + $0x1e8] sm:$0xff]
        %v10535 = vld [vmem:[%s7 + $0x1f0] sm:$0xff]
        %v10536 = vld [vmem:[%s7 + $0x1f8] sm:$0xff]
        %v10537 = vld [vmem:[%s7 + $0x200] sm:$0xff]
        %v10538 = vld [vmem:[%s7 + $0x208] sm:$0xff]
        %v10539 = vld [vmem:[%s7 + $0x210] sm:$0xff]
        %v10540 = vld [vmem:[%s7 + $0x218] sm:$0xff]
        %v10541 = vld [vmem:[%s7 + $0x220] sm:$0xff]
        %v10542 = vld [vmem:[%s7 + $0x228] sm:$0xff]
        %v10543 = vld [vmem:[%s7 + $0x230] sm:$0xff]
        %v10544 = vld [vmem:[%s7 + $0x238] sm:$0xff]
        %v10545 = vld [vmem:[%s7 + $0x240] sm:$0xff]
        %v10546 = vld [vmem:[%s7 + $0x248] sm:$0xff]
        %v10547 = vld [vmem:[%s7 + $0x250] sm:$0xff]
        %v10548 = vld [vmem:[%s7 + $0x258] sm:$0xff]
        %v10549 = vld [vmem:[%s7 + $0x260] sm:$0xff]
        %v10550 = vld [vmem:[%s7 + $0x268] sm:$0xff]
        %v10551 = vld [vmem:[%s7 + $0x270] sm:$0xff]
        %v10552 = vld [vmem:[%s7 + $0x278] sm:$0xff]
        %v10553 = vld [vmem:[%s7 + $0x280] sm:$0xff]
        %v10554 = vld [vmem:[%s8] sm:$0x1]
        %v10556 = vperm.slane %v10554, 0
        %v10558 = vsel %vm975, %v10292, 0
        %v10560 = vsel %vm975, %v10294, 0
        %v10562 = vsel %vm975, %v10296, 0
        %v10564 = vsel %vm975, %v10298, 0
        %v10566 = vsel %vm975, %v10300, 0
        %v10568 = vsel %vm975, %v10302, 0
        %v10570 = vsel %vm975, %v10304, 0
        %v10572 = vsel %vm975, %v10306, 0
        %v10574 = vsel %vm975, %v10308, 0
        %v10576 = vsel %vm975, %v10310, 0
        %v10578 = vsel %vm975, %v10312, 0
        %v10580 = vsel %vm975, %v10314, 0
        %v10582 = vsel %vm975, %v10316, 0
        %v10584 = vsel %vm975, %v10318, 0
        %v10586 = vsel %vm975, %v10320, 0
        %v10588 = vsel %vm975, %v10322, 0
        %10590 = vmatpush.msra.mxu0 %v10488
        %10591 = vmatpush.msra.mxu0 %v10487
        %10592 = vmatpush.msra.mxu0 %v10486
        %10593 = vmatpush.msra.mxu0 %v10485
        %10594 = vmatpush.msra.mxu0 %v10484
        %10595 = vmatpush.msra.mxu0 %v10483
        %10596 = vmatpush.msra.mxu0 %v10482
        %10597 = vmatpush.msra.mxu0 %v10481
        %10598 = vmatpush.msra.mxu0 %v10480
        %10599 = vmatpush.msra.mxu0 %v10479
        %10600 = vmatpush.msra.mxu0 %v10478
        %10601 = vmatpush.msra.mxu0 %v10477
        %10602 = vmatpush.msra.mxu0 %v10476
        %10603 = vmatpush.msra.mxu0 %v10475
        %10604 = vmatpush.msra.mxu0 %v10474
        %10605 = vmatpush.msra.mxu0 %v10473
        %10606 = vmatmul.f32.gmra.mxu0 %v10340
        %v10607 = vpop.f32.mrf.mxu0
        %v10608 = vadd.f32 %v10556, %v10607
        %10609 = vmatmul.f32.gmra.mxu0 %v10341
        %v10610 = vpop.f32.mrf.mxu0
        %v10611 = vadd.f32 %v10556, %v10610
        %10612 = vmatmul.f32.gmra.mxu0 %v10342
        %v10613 = vpop.f32.mrf.mxu0
        %v10614 = vadd.f32 %v10556, %v10613
        %10615 = vmatmul.f32.gmra.mxu0 %v10343
        %v10616 = vpop.f32.mrf.mxu0
        %v10617 = vadd.f32 %v10556, %v10616
        %10618 = vmatmul.f32.gmra.mxu0 %v10344
        %v10619 = vpop.f32.mrf.mxu0
        %v10620 = vadd.f32 %v10556, %v10619
        %10621 = vmatmul.f32.gmra.mxu0 %v10345
        %v10622 = vpop.f32.mrf.mxu0
        %v10623 = vadd.f32 %v10556, %v10622
        %10624 = vmatmul.f32.gmra.mxu0 %v10346
        %v10625 = vpop.f32.mrf.mxu0
        %v10626 = vadd.f32 %v10556, %v10625
        %10627 = vmatmul.f32.gmra.mxu0 %v10347
        %v10628 = vpop.f32.mrf.mxu0
        %v10629 = vadd.f32 %v10556, %v10628
        %10630 = vmatmul.f32.gmra.mxu0 %v10348
        %v10631 = vpop.f32.mrf.mxu0
        %v10632 = vadd.f32 %v10556, %v10631
        %10633 = vmatmul.f32.gmra.mxu0 %v10349
        %v10634 = vpop.f32.mrf.mxu0
        %v10635 = vadd.f32 %v10556, %v10634
        %10636 = vmatmul.f32.gmra.mxu0 %v10350
        %v10637 = vpop.f32.mrf.mxu0
        %v10638 = vadd.f32 %v10556, %v10637
        %10639 = vmatmul.f32.gmra.mxu0 %v10351
        %v10640 = vpop.f32.mrf.mxu0
        %v10641 = vadd.f32 %v10556, %v10640
        %10642 = vmatmul.f32.gmra.mxu0 %v10352
        %v10643 = vpop.f32.mrf.mxu0
        %v10644 = vadd.f32 %v10556, %v10643
        %10645 = vmatmul.f32.gmra.mxu0 %v10353
        %v10646 = vpop.f32.mrf.mxu0
        %v10647 = vadd.f32 %v10556, %v10646
        %10648 = vmatmul.f32.gmra.mxu0 %v10354
        %v10649 = vpop.f32.mrf.mxu0
        %v10650 = vadd.f32 %v10556, %v10649
        %10651 = vmatmul.f32.gmra.mxu0 %v10355
        %v10652 = vpop.f32.mrf.mxu0
        %v10653 = vadd.f32 %v10556, %v10652
        %10654 = vdwg.mxu0
        %10655 = vmatpush.msra.mxu0 %v10504
        %10656 = vmatpush.msra.mxu0 %v10503
        %10657 = vmatpush.msra.mxu0 %v10502
        %10658 = vmatpush.msra.mxu0 %v10501
        %10659 = vmatpush.msra.mxu0 %v10500
        %10660 = vmatpush.msra.mxu0 %v10499
        %10661 = vmatpush.msra.mxu0 %v10498
        %10662 = vmatpush.msra.mxu0 %v10497
        %10663 = vmatpush.msra.mxu0 %v10496
        %10664 = vmatpush.msra.mxu0 %v10495
        %10665 = vmatpush.msra.mxu0 %v10494
        %10666 = vmatpush.msra.mxu0 %v10493
        %10667 = vmatpush.msra.mxu0 %v10492
        %10668 = vmatpush.msra.mxu0 %v10491
        %10669 = vmatpush.msra.mxu0 %v10490
        %10670 = vmatpush.msra.mxu0 %v10489
        %10671 = vmatmul.f32.gmra.mxu0 %v10373
        %v10672 = vpop.f32.mrf.mxu0
        %v10673 = vadd.f32 %v10608, %v10672
        %10674 = vmatmul.f32.gmra.mxu0 %v10374
        %v10675 = vpop.f32.mrf.mxu0
        %v10676 = vadd.f32 %v10611, %v10675
        %10677 = vmatmul.f32.gmra.mxu0 %v10375
        %v10678 = vpop.f32.mrf.mxu0
        %v10679 = vadd.f32 %v10614, %v10678
        %10680 = vmatmul.f32.gmra.mxu0 %v10376
        %v10681 = vpop.f32.mrf.mxu0
        %v10682 = vadd.f32 %v10617, %v10681
        %10683 = vmatmul.f32.gmra.mxu0 %v10377
        %v10684 = vpop.f32.mrf.mxu0
        %v10685 = vadd.f32 %v10620, %v10684
        %10686 = vmatmul.f32.gmra.mxu0 %v10378
        %v10687 = vpop.f32.mrf.mxu0
        %v10688 = vadd.f32 %v10623, %v10687
        %10689 = vmatmul.f32.gmra.mxu0 %v10379
        %v10690 = vpop.f32.mrf.mxu0
        %v10691 = vadd.f32 %v10626, %v10690
        %10692 = vmatmul.f32.gmra.mxu0 %v10380
        %v10693 = vpop.f32.mrf.mxu0
        %v10694 = vadd.f32 %v10629, %v10693
        %10695 = vmatmul.f32.gmra.mxu0 %v10381
        %v10696 = vpop.f32.mrf.mxu0
        %v10697 = vadd.f32 %v10632, %v10696
        %10698 = vmatmul.f32.gmra.mxu0 %v10382
        %v10699 = vpop.f32.mrf.mxu0
        %v10700 = vadd.f32 %v10635, %v10699
        %10701 = vmatmul.f32.gmra.mxu0 %v10383
        %v10702 = vpop.f32.mrf.mxu0
        %v10703 = vadd.f32 %v10638, %v10702
        %10704 = vmatmul.f32.gmra.mxu0 %v10384
        %v10705 = vpop.f32.mrf.mxu0
        %v10706 = vadd.f32 %v10641, %v10705
        %10707 = vmatmul.f32.gmra.mxu0 %v10385
        %v10708 = vpop.f32.mrf.mxu0
        %v10709 = vadd.f32 %v10644, %v10708
        %10710 = vmatmul.f32.gmra.mxu0 %v10386
        %v10711 = vpop.f32.mrf.mxu0
        %v10712 = vadd.f32 %v10647, %v10711
        %10713 = vmatmul.f32.gmra.mxu0 %v10387
        %v10714 = vpop.f32.mrf.mxu0
        %v10715 = vadd.f32 %v10650, %v10714
        %10716 = vmatmul.f32.gmra.mxu0 %v10388
        %v10717 = vpop.f32.mrf.mxu0
        %v10718 = vadd.f32 %v10653, %v10717
        %10719 = vdwg.mxu0
        %10720 = vmatpush.msra.mxu0 %v10520
        %10721 = vmatpush.msra.mxu0 %v10519
        %10722 = vmatpush.msra.mxu0 %v10518
        %10723 = vmatpush.msra.mxu0 %v10517
        %10724 = vmatpush.msra.mxu0 %v10516
        %10725 = vmatpush.msra.mxu0 %v10515
        %10726 = vmatpush.msra.mxu0 %v10514
        %10727 = vmatpush.msra.mxu0 %v10513
        %10728 = vmatpush.msra.mxu0 %v10512
        %10729 = vmatpush.msra.mxu0 %v10511
        %10730 = vmatpush.msra.mxu0 %v10510
        %10731 = vmatpush.msra.mxu0 %v10509
        %10732 = vmatpush.msra.mxu0 %v10508
        %10733 = vmatpush.msra.mxu0 %v10507
        %10734 = vmatpush.msra.mxu0 %v10506
        %10735 = vmatpush.msra.mxu0 %v10505
        %10736 = vmatmul.f32.gmra.mxu0 %v10406
        %v10737 = vpop.f32.mrf.mxu0
        %v10738 = vadd.f32 %v10673, %v10737
        %10739 = vmatmul.f32.gmra.mxu0 %v10407
        %v10740 = vpop.f32.mrf.mxu0
        %v10741 = vadd.f32 %v10676, %v10740
        %10742 = vmatmul.f32.gmra.mxu0 %v10408
        %v10743 = vpop.f32.mrf.mxu0
        %v10744 = vadd.f32 %v10679, %v10743
        %10745 = vmatmul.f32.gmra.mxu0 %v10409
        %v10746 = vpop.f32.mrf.mxu0
        %v10747 = vadd.f32 %v10682, %v10746
        %10748 = vmatmul.f32.gmra.mxu0 %v10410
        %v10749 = vpop.f32.mrf.mxu0
        %v10750 = vadd.f32 %v10685, %v10749
        %10751 = vmatmul.f32.gmra.mxu0 %v10411
        %v10752 = vpop.f32.mrf.mxu0
        %v10753 = vadd.f32 %v10688, %v10752
        %10754 = vmatmul.f32.gmra.mxu0 %v10412
        %v10755 = vpop.f32.mrf.mxu0
        %v10756 = vadd.f32 %v10691, %v10755
        %10757 = vmatmul.f32.gmra.mxu0 %v10413
        %v10758 = vpop.f32.mrf.mxu0
        %v10759 = vadd.f32 %v10694, %v10758
        %10760 = vmatmul.f32.gmra.mxu0 %v10414
        %v10761 = vpop.f32.mrf.mxu0
        %v10762 = vadd.f32 %v10697, %v10761
        %10763 = vmatmul.f32.gmra.mxu0 %v10415
        %v10764 = vpop.f32.mrf.mxu0
        %v10765 = vadd.f32 %v10700, %v10764
        %10766 = vmatmul.f32.gmra.mxu0 %v10416
        %v10767 = vpop.f32.mrf.mxu0
        %v10768 = vadd.f32 %v10703, %v10767
        %10769 = vmatmul.f32.gmra.mxu0 %v10417
        %v10770 = vpop.f32.mrf.mxu0
        %v10771 = vadd.f32 %v10706, %v10770
        %10772 = vmatmul.f32.gmra.mxu0 %v10418
        %v10773 = vpop.f32.mrf.mxu0
        %v10774 = vadd.f32 %v10709, %v10773
        %10775 = vmatmul.f32.gmra.mxu0 %v10419
        %v10776 = vpop.f32.mrf.mxu0
        %v10777 = vadd.f32 %v10712, %v10776
        %10778 = vmatmul.f32.gmra.mxu0 %v10420
        %v10779 = vpop.f32.mrf.mxu0
        %v10780 = vadd.f32 %v10715, %v10779
        %10781 = vmatmul.f32.gmra.mxu0 %v10421
        %v10782 = vpop.f32.mrf.mxu0
        %v10783 = vadd.f32 %v10718, %v10782
        %10784 = vdwg.mxu0
        %10785 = vmatpush.msra.mxu0 %v10536
        %10786 = vmatpush.msra.mxu0 %v10535
        %10787 = vmatpush.msra.mxu0 %v10534
        %10788 = vmatpush.msra.mxu0 %v10533
        %10789 = vmatpush.msra.mxu0 %v10532
        %10790 = vmatpush.msra.mxu0 %v10531
        %10791 = vmatpush.msra.mxu0 %v10530
        %10792 = vmatpush.msra.mxu0 %v10529
        %10793 = vmatpush.msra.mxu0 %v10528
        %10794 = vmatpush.msra.mxu0 %v10527
        %10795 = vmatpush.msra.mxu0 %v10526
        %10796 = vmatpush.msra.mxu0 %v10525
        %10797 = vmatpush.msra.mxu0 %v10524
        %10798 = vmatpush.msra.mxu0 %v10523
        %10799 = vmatpush.msra.mxu0 %v10522
        %10800 = vmatpush.msra.mxu0 %v10521
        %10801 = vmatmul.f32.gmra.mxu0 %v10440
        %v10802 = vpop.f32.mrf.mxu0
        %v10803 = vadd.f32 %v10738, %v10802
        %10804 = vmatmul.f32.gmra.mxu0 %v10441
        %v10805 = vpop.f32.mrf.mxu0
        %v10806 = vadd.f32 %v10741, %v10805
        %10807 = vmatmul.f32.gmra.mxu0 %v10442
        %v10808 = vpop.f32.mrf.mxu0
        %v10809 = vadd.f32 %v10744, %v10808
        %10810 = vmatmul.f32.gmra.mxu0 %v10443
        %v10811 = vpop.f32.mrf.mxu0
        %v10812 = vadd.f32 %v10747, %v10811
        %10813 = vmatmul.f32.gmra.mxu0 %v10444
        %v10814 = vpop.f32.mrf.mxu0
        %v10815 = vadd.f32 %v10750, %v10814
        %10816 = vmatmul.f32.gmra.mxu0 %v10445
        %v10817 = vpop.f32.mrf.mxu0
        %v10818 = vadd.f32 %v10753, %v10817
        %10819 = vmatmul.f32.gmra.mxu0 %v10446
        %v10820 = vpop.f32.mrf.mxu0
        %v10821 = vadd.f32 %v10756, %v10820
        %10822 = vmatmul.f32.gmra.mxu0 %v10447
        %v10823 = vpop.f32.mrf.mxu0
        %v10824 = vadd.f32 %v10759, %v10823
        %10825 = vmatmul.f32.gmra.mxu0 %v10448
        %v10826 = vpop.f32.mrf.mxu0
        %v10827 = vadd.f32 %v10762, %v10826
        %10828 = vmatmul.f32.gmra.mxu0 %v10449
        %v10829 = vpop.f32.mrf.mxu0
        %v10830 = vadd.f32 %v10765, %v10829
        %10831 = vmatmul.f32.gmra.mxu0 %v10450
        %v10832 = vpop.f32.mrf.mxu0
        %v10833 = vadd.f32 %v10768, %v10832
        %10834 = vmatmul.f32.gmra.mxu0 %v10451
        %v10835 = vpop.f32.mrf.mxu0
        %v10836 = vadd.f32 %v10771, %v10835
        %10837 = vmatmul.f32.gmra.mxu0 %v10452
        %v10838 = vpop.f32.mrf.mxu0
        %v10839 = vadd.f32 %v10774, %v10838
        %10840 = vmatmul.f32.gmra.mxu0 %v10453
        %v10841 = vpop.f32.mrf.mxu0
        %v10842 = vadd.f32 %v10777, %v10841
        %10843 = vmatmul.f32.gmra.mxu0 %v10454
        %v10844 = vpop.f32.mrf.mxu0
        %v10845 = vadd.f32 %v10780, %v10844
        %10846 = vmatmul.f32.gmra.mxu0 %v10455
        %v10847 = vpop.f32.mrf.mxu0
        %v10848 = vadd.f32 %v10783, %v10847
        %10849 = vdwg.mxu0
        %10850 = vmatpush.msra.mxu0 %v10552
        %10851 = vmatpush.msra.mxu0 %v10551
        %10852 = vmatpush.msra.mxu0 %v10550
        %10853 = vmatpush.msra.mxu0 %v10549
        %10854 = vmatpush.msra.mxu0 %v10548
        %10855 = vmatpush.msra.mxu0 %v10547
        %10856 = vmatpush.msra.mxu0 %v10546
        %10857 = vmatpush.msra.mxu0 %v10545
        %10858 = vmatpush.msra.mxu0 %v10544
        %10859 = vmatpush.msra.mxu0 %v10543
        %10860 = vmatpush.msra.mxu0 %v10542
        %10861 = vmatpush.msra.mxu0 %v10541
        %10862 = vmatpush.msra.mxu0 %v10540
        %10863 = vmatpush.msra.mxu0 %v10539
        %10864 = vmatpush.msra.mxu0 %v10538
        %10865 = vmatpush.msra.mxu0 %v10537
        %10866 = vmatmul.f32.gmra.mxu0 %v10457
        %v10867 = vpop.f32.mrf.mxu0
        %v10868 = vadd.f32 %v10803, %v10867
        %10869 = vmatmul.f32.gmra.mxu0 %v10458
        %v10870 = vpop.f32.mrf.mxu0
        %v10871 = vadd.f32 %v10806, %v10870
        %10872 = vmatmul.f32.gmra.mxu0 %v10459
        %v10873 = vpop.f32.mrf.mxu0
        %v10874 = vadd.f32 %v10809, %v10873
        %10875 = vmatmul.f32.gmra.mxu0 %v10460
        %v10876 = vpop.f32.mrf.mxu0
        %v10877 = vadd.f32 %v10812, %v10876
        %10878 = vmatmul.f32.gmra.mxu0 %v10461
        %v10879 = vpop.f32.mrf.mxu0
        %v10880 = vadd.f32 %v10815, %v10879
        %10881 = vmatmul.f32.gmra.mxu0 %v10462
        %v10882 = vpop.f32.mrf.mxu0
        %v10883 = vadd.f32 %v10818, %v10882
        %10884 = vmatmul.f32.gmra.mxu0 %v10463
        %v10885 = vpop.f32.mrf.mxu0
        %v10886 = vadd.f32 %v10821, %v10885
        %10887 = vmatmul.f32.gmra.mxu0 %v10464
        %v10888 = vpop.f32.mrf.mxu0
        %v10889 = vadd.f32 %v10824, %v10888
        %10890 = vmatmul.f32.gmra.mxu0 %v10465
        %v10891 = vpop.f32.mrf.mxu0
        %v10892 = vadd.f32 %v10827, %v10891
        %10893 = vmatmul.f32.gmra.mxu0 %v10466
        %v10894 = vpop.f32.mrf.mxu0
        %v10895 = vadd.f32 %v10830, %v10894
        %10896 = vmatmul.f32.gmra.mxu0 %v10467
        %v10897 = vpop.f32.mrf.mxu0
        %v10898 = vadd.f32 %v10833, %v10897
        %10899 = vmatmul.f32.gmra.mxu0 %v10468
        %v10900 = vpop.f32.mrf.mxu0
        %v10901 = vadd.f32 %v10836, %v10900
        %10902 = vmatmul.f32.gmra.mxu0 %v10469
        %v10903 = vpop.f32.mrf.mxu0
        %v10904 = vadd.f32 %v10839, %v10903
        %10905 = vmatmul.f32.gmra.mxu0 %v10470
        %v10906 = vpop.f32.mrf.mxu0
        %v10907 = vadd.f32 %v10842, %v10906
        %10908 = vmatmul.f32.gmra.mxu0 %v10471
        %v10909 = vpop.f32.mrf.mxu0
        %v10910 = vadd.f32 %v10845, %v10909
        %10911 = vmatmul.f32.gmra.mxu0 %v10472
        %v10912 = vpop.f32.mrf.mxu0
        %v10913 = vadd.f32 %v10848, %v10912
        %10914 = vdwg.mxu0
        %10915 = vmatpush.msra.mxu0 0.0
        %10916 = vmatpush.msra.mxu0 0.0
        %10917 = vmatpush.msra.mxu0 0.0
        %10918 = vmatpush.msra.mxu0 0.0
        %10919 = vmatpush.msra.mxu0 0.0
        %10920 = vmatpush.msra.mxu0 0.0
        %10921 = vmatpush.msra.mxu0 0.0
        %10922 = vmatpush.msra.mxu0 0.0
        %10923 = vmatpush.msra.mxu0 0.0
        %10924 = vmatpush.msra.mxu0 0.0
        %10925 = vmatpush.msra.mxu0 0.0
        %10926 = vmatpush.msra.mxu0 0.0
        %10927 = vmatpush.msra.mxu0 0.0
        %10928 = vmatpush.msra.mxu0 0.0
        %10929 = vmatpush.msra.mxu0 0.0
        %10930 = vmatpush.msra.mxu0 %v10553
        %10931 = vmatmul.f32.gmra.mxu0 %v10558
        %v10932 = vpop.f32.mrf.mxu0
        %v10933 = vadd.f32 %v10868, %v10932
        %10934 = vmatmul.f32.gmra.mxu0 %v10560
        %v10935 = vpop.f32.mrf.mxu0
        %v10936 = vadd.f32 %v10871, %v10935
        %10937 = vmatmul.f32.gmra.mxu0 %v10562
        %v10938 = vpop.f32.mrf.mxu0
        %v10939 = vadd.f32 %v10874, %v10938
        %10940 = vmatmul.f32.gmra.mxu0 %v10564
        %v10941 = vpop.f32.mrf.mxu0
        %v10942 = vadd.f32 %v10877, %v10941
        %10943 = vmatmul.f32.gmra.mxu0 %v10566
        %v10944 = vpop.f32.mrf.mxu0
        %v10945 = vadd.f32 %v10880, %v10944
        %10946 = vmatmul.f32.gmra.mxu0 %v10568
        %v10947 = vpop.f32.mrf.mxu0
        %v10948 = vadd.f32 %v10883, %v10947
        %10949 = vmatmul.f32.gmra.mxu0 %v10570
        %v10950 = vpop.f32.mrf.mxu0
        %v10951 = vadd.f32 %v10886, %v10950
        %10952 = vmatmul.f32.gmra.mxu0 %v10572
        %v10953 = vpop.f32.mrf.mxu0
        %v10954 = vadd.f32 %v10889, %v10953
        %10955 = vmatmul.f32.gmra.mxu0 %v10574
        %v10956 = vpop.f32.mrf.mxu0
        %v10957 = vadd.f32 %v10892, %v10956
        %10958 = vmatmul.f32.gmra.mxu0 %v10576
        %v10959 = vpop.f32.mrf.mxu0
        %v10960 = vadd.f32 %v10895, %v10959
        %10961 = vmatmul.f32.gmra.mxu0 %v10578
        %v10962 = vpop.f32.mrf.mxu0
        %v10963 = vadd.f32 %v10898, %v10962
        %10964 = vmatmul.f32.gmra.mxu0 %v10580
        %v10965 = vpop.f32.mrf.mxu0
        %v10966 = vadd.f32 %v10901, %v10965
        %10967 = vmatmul.f32.gmra.mxu0 %v10582
        %v10968 = vpop.f32.mrf.mxu0
        %v10969 = vadd.f32 %v10904, %v10968
        %10970 = vmatmul.f32.gmra.mxu0 %v10584
        %v10971 = vpop.f32.mrf.mxu0
        %v10972 = vadd.f32 %v10907, %v10971
        %10973 = vmatmul.f32.gmra.mxu0 %v10586
        %v10974 = vpop.f32.mrf.mxu0
        %v10975 = vadd.f32 %v10910, %v10974
        %10976 = vmatmul.f32.gmra.mxu0 %v10588
        %v10977 = vpop.f32.mrf.mxu0
        %v10978 = vadd.f32 %v10913, %v10977
        %10979 = vdwg.mxu0
        %10980 = vxpose.xlu0.b32.start [1/16] %v10933, 128
        %10981 = vxpose.xlu0.b32.cont [2/16] %v10936, 128
        %10982 = vxpose.xlu0.b32.cont [3/16] %v10939, 128
        %10983 = vxpose.xlu0.b32.cont [4/16] %v10942, 128
        %10984 = vxpose.xlu0.b32.cont [5/16] %v10945, 128
        %10985 = vxpose.xlu0.b32.cont [6/16] %v10948, 128
        %10986 = vxpose.xlu0.b32.cont [7/16] %v10951, 128
        %10987 = vxpose.xlu0.b32.cont [8/16] %v10954, 128
        %10988 = vxpose.xlu0.b32.cont [9/16] %v10957, 128
        %10989 = vxpose.xlu0.b32.cont [10/16] %v10960, 128
        %10990 = vxpose.xlu0.b32.cont [11/16] %v10963, 128
        %10991 = vxpose.xlu0.b32.cont [12/16] %v10966, 128
        %10992 = vxpose.xlu0.b32.cont [13/16] %v10969, 128
        %10993 = vxpose.xlu0.b32.cont [14/16] %v10972, 128
        %10994 = vxpose.xlu0.b32.cont [15/16] %v10975, 128
        %10995 = vxpose.xlu0.b32.end [16/16] %v10978, 128
        %v10996 = vpop.trf.xlu0
        %v10997 = vpop.trf.xlu0
        %v10998 = vpop.trf.xlu0
        %v10999 = vpop.trf.xlu0
        %v11000 = vpop.trf.xlu0
        %v11001 = vpop.trf.xlu0
        %v11002 = vpop.trf.xlu0
        %v11003 = vpop.trf.xlu0
        %v11004 = vpop.trf.xlu0
        %v11005 = vpop.trf.xlu0
        %v11006 = vpop.trf.xlu0
        %v11007 = vpop.trf.xlu0
        %v11008 = vpop.trf.xlu0
        %v11009 = vpop.trf.xlu0
        %v11010 = vpop.trf.xlu0
        %v11011 = vpop.trf.xlu0
        %11012 = vst [vmem:[%s386] sm:$0xff] %v10996
        %s11013 = sand.u32 %s254, 1
        %s11014 = scalar_lea.sflag [#allocation3], %s11013
        %s11015 = sand.u32 %s254, 1
        %s11016 = smul.addr %s11015, 8
        %s11017 = scalar_lea.vmem [#allocation2], %s11016
        // Predicated region
        $region57: #{tpu_custom_call.1} parent=55 // pred_check
          %p11018 = pneg %p264
        $region58: #{tpu_custom_call.1} parent=55 // pred_check_branch
          %11020 = sbr.rel (%p11018) target = $region60
        $region59: #{tpu_custom_call.1} parent=55 // pred_region
          %11022 = vsyncadd %s11014, 0
          %s11023 = smul.addr %s27, 2
          %s11024 = sadd.s32 %s28, %s11023
          %s11025 = smul.addr %s11024, 8
          %s11026 = scalar_lea.hbm %s9, %s11025
          %s11028 = sshll.u32 %s11017, 4
          %s11029 = int_to_ptr.vmem [resolvable:$true] %s11028
          %s11030 = sshll.u32 %s11026, 4
          %s11031 = int_to_ptr.hbm [resolvable:$true] %s11030
          %11033 = dma.vmem_to_hbm [thread:$0]  %s11029, 128, %s11031, %s11014
        $region60: #{tpu_custom_call.1} parent=55 // pred_fallthru
          _
      $region56: #{tpu_custom_call.1} parent=5 // pred_fallthru
        _
      %p11034 = scmp.le.s32.totalorder 2, %s18
      // Predicated region
      $region61: #{tpu_custom_call.1} parent=5 // pred_check
        %p11035 = pneg %p11034
      $region62: #{tpu_custom_call.1} parent=5 // pred_check_branch
        %11037 = sbr.rel (%p11035) target = $region64
      $region63: #{tpu_custom_call.1} parent=5 // pred_region
        %s11038 = ssub.s32 %s18, 2
        // Predicated region
        $region65: #{tpu_custom_call.1} parent=63 // pred_check
          %p11039 = pneg %p270
        $region66: #{tpu_custom_call.1} parent=63 // pred_check_branch
          %11041 = sbr.rel (%p11039) target = $region68
        $region67: #{tpu_custom_call.1} parent=63 // pred_region
          %s11042 = sand.u32 %s255, 1
          %s11043 = scalar_lea.sflag [#allocation3], %s11042
          %s11044 = sand.u32 %s255, 1
          %s11045 = smul.addr %s11044, 8
          %s11046 = scalar_lea.vmem [#allocation2], %s11045
          %11048 = dma.done %s11043, 128
        $region68: #{tpu_custom_call.1} parent=63 // pred_fallthru
          _
      $region64: #{tpu_custom_call.1} parent=5 // pred_fallthru
        _
    $region6: #{tpu_custom_call.1} parent=1 // loop_footer
      %s22 = sadd.s32 1, %s18
    $region7: #{tpu_custom_call.1} parent=1 // loop_footer_branch
      %17 = sbr.rel target = $region3
    $region8: #{tpu_custom_call.1} parent=1 // loop_exit
      _
    %11049 = vsyncpa [#allocation3], 1
    %s11050 = scalar_lea.sflag [#allocation3], 1
    %11051 = vsyncpa %s11050, 1

</llo_original>
